<compile_context>
chip_gen: v7x
topology: tpu7x:2x2x1
jax: 0.10.0
libtpu: 0.0.40
codegen_flags: <defaults>
</compile_context>

<pallas_src>
import functools

import jax
import jax.numpy as jnp
from jax import lax
from jax.experimental import pallas as pl
from jax.experimental.pallas import tpu as pltpu

NUM_GROUPS = 32
EPS = 1e-6


def spatial_cross_attention_kernel(
    x_ref,
    gdown_ref, gup_ref, gamma_ref, beta_ref,
    wq_ref, bq_ref, wk_ref, bk_ref, wv_ref, bv_ref,
    wo_ref, bo_ref,
    out_ref,
    q_scr, kT_scr, v_scr, omrg_scr,
    *, heads, dim_head, tq, exp_bf16):
  """Grid = (batch, n // tq). Per-batch prep at qt == 0, attention per query tile."""
  qt = pl.program_id(1)
  n = x_ref.shape[1]
  c = x_ref.shape[2]
  bf16 = jnp.bfloat16
  f32 = jnp.float32

  # ---------------------------------------------------------------- per-batch prep
  @pl.when(qt == 0)
  def _prep():
    x_f = x_ref[0].astype(f32)                                  # (n, c) f32 (from bf16)

    # GroupNorm, two-pass f32 stats. Group reduce / broadcast via tiny (c,32)/(32,c)
    # 0/1 maps hoisted to the wrapper (identical math to reshape-reduce).
    count = jnp.float32(n * (c // NUM_GROUPS))
    s1 = jnp.sum(x_f, axis=0, keepdims=True)                    # (1, c)
    g1 = jnp.dot(s1, gdown_ref[...], preferred_element_type=f32)  # (1, 32)
    mean_c = jnp.dot(g1 / count, gup_ref[...], preferred_element_type=f32)  # (1, c)
    d = x_f - mean_c
    s2 = jnp.sum(d * d, axis=0, keepdims=True)                  # (1, c)
    g2 = jnp.dot(s2, gdown_ref[...], preferred_element_type=f32)
    rstd_c = jnp.dot(lax.rsqrt(g2 / count + EPS), gup_ref[...],
                     preferred_element_type=f32)                # (1, c)
    xn = (d * rstd_c * gamma_ref[...] + beta_ref[...]).astype(bf16)

    # Fused projections (proj_in folded into q, proj_in_context folded into k/v,
    # dim_head^-0.5 folded into the q weights/bias). Three K=c GEMMs total.
    q_scr[...] = (jnp.dot(xn, wq_ref[...], preferred_element_type=f32)
                  + bq_ref[...]).astype(bf16)                   # (n, inner), pre-scaled
    k_full = (jnp.dot(xn, wk_ref[...], preferred_element_type=f32)
              + bk_ref[...])                                    # (n, inner) f32
    kT_scr[...] = jnp.transpose(k_full).astype(bf16)            # (inner, n), lane-dense
    v_scr[...] = (jnp.dot(xn, wv_ref[...], preferred_element_type=f32)
                  + bv_ref[...]).astype(bf16)                   # (n, inner)

  # ---------------------------------------------------------------- per-query-tile attention
  row = pl.multiple_of(qt * tq, tq)
  x_tile = x_ref[0, pl.ds(row, tq), :].astype(f32)              # residual, f32 add

  for h in range(heads):                                        # static unroll
    lo = h * dim_head
    hi = lo + dim_head
    q_h = q_scr[pl.ds(row, tq), lo:hi]                          # (tq, dh) bf16
    kT_h = kT_scr[lo:hi, :]                                     # (dh, n)  bf16 (RHS-ready)
    v_h = v_scr[:, lo:hi]                                       # (n, dh)  bf16

    sim = jnp.dot(q_h, kT_h, preferred_element_type=jnp.float32)  # (tq, n) f32
    sim = sim - jnp.max(sim, axis=-1, keepdims=True)
    if exp_bf16:
      # v6e/v7x: bf16-capable EUP -> ~2x exp throughput; max already subtracted.
      p = jnp.exp(sim.astype(bf16))
      l = jnp.sum(p.astype(jnp.float32), axis=-1, keepdims=True)
      p_mm = p
    else:
      # v5e: no bf16 VPU/EUP path -> keep exp/sum in f32.
      p = jnp.exp(sim)
      l = jnp.sum(p, axis=-1, keepdims=True)
      p_mm = p.astype(bf16)
    o_h = jnp.dot(p_mm, v_h, preferred_element_type=jnp.float32)   # (tq, dh) f32
    omrg_scr[:, lo:hi] = o_h * pl.reciprocal(l, approx=True)       # merge heads

  # Fused to_out + proj_out: one (tq, inner) @ (inner, c) GEMM with full-K MXU fill.
  out_c = (jnp.dot(omrg_scr[...].astype(bf16), wo_ref[...],
                   preferred_element_type=jnp.float32) + bo_ref[...])
  out_ref[0] = out_c + x_tile


def _pick_tq(n, q_tile, vmem_limit):
  # Score temps per tile ~ tq * n * 16 B (one head live at a time); keep <= 1/4 budget.
  cap = max(8, (vmem_limit // 4) // max(1, n * 16))
  cap = min(cap, q_tile, n)
  best = 8
  d = 8
  while d <= cap:
    if n % d == 0:
      best = d
    d += 8
  return best


def spatial_cross_attention_seq(x_bnc, params, *, heads, dim_head, q_tile=256):
  """Channels-last core entry point: x (b, n, c) -> (b, n, c) f32."""
  b, n, c = x_bnc.shape
  inner = heads * dim_head
  assert c % NUM_GROUPS == 0, "GroupNorm(32) requires channels divisible by 32"
  assert inner == c, "module wiring requires in_channels == heads * dim_head"
  assert n % 8 == 0

  f32 = jnp.float32
  bf16 = jnp.bfloat16
  gs = c // NUM_GROUPS

  # VMEM budget with headroom: ~48 MiB on v7x (64 MiB TC), up to 112 MiB on v5e/v6e.
  try:
    vmem_cap = int(pltpu.get_tpu_info().vmem_capacity_bytes)
  except Exception:
    vmem_cap = 128 * 1024 * 1024
  vmem_limit = int(min(vmem_cap - 16 * 1024 * 1024, 112 * 1024 * 1024))
  vmem_limit = max(vmem_limit, 32 * 1024 * 1024)

  tq = _pick_tq(n, q_tile, vmem_limit)
  nqt = n // tq

  # bf16 exp only where the EUP supports it (v6e / v7x); f32 on v5e and older.
  try:
    kind = jax.devices()[0].device_kind.lower()
  except Exception:
    kind = ""
  exp_bf16 = any(t in kind for t in ("v6", "v7", "7x"))

  # ------------------------------------------------ algebraic weight pre-fusion (f32)
  scale = float(dim_head) ** -0.5
  w_pi_t = params["w_proj_in"].astype(f32).T        # (c, inner)
  w_pic_t = params["w_proj_in_ctx"].astype(f32).T   # (c, inner)
  w_q_t = params["w_q"].astype(f32).T               # (c, inner)   (c == inner)
  w_k_t = params["w_k"].astype(f32).T
  w_v_t = params["w_v"].astype(f32).T
  w_o_t = params["w_out"].astype(f32).T              # (inner, c)
  w_po_t = params["w_proj_out"].astype(f32).T        # (inner, c)
  b_pi = params["b_proj_in"].astype(f32).reshape(1, inner)
  b_pic = params["b_proj_in_ctx"].astype(f32).reshape(1, inner)
  b_o = params["b_out"].astype(f32).reshape(1, c)
  b_po = params["b_proj_out"].astype(f32).reshape(1, c)

  wq_f = (w_pi_t @ w_q_t) * scale                   # (c, inner), scale folded in
  bq_f = (b_pi @ w_q_t) * scale                     # (1, inner)
  wk_f = w_pic_t @ w_k_t
  bk_f = b_pic @ w_k_t
  wv_f = w_pic_t @ w_v_t
  bv_f = b_pic @ w_v_t
  wo_f = w_o_t @ w_po_t                             # (inner, c)  (to_out + proj_out)
  bo_f = b_o @ w_po_t + b_po                        # (1, c)

  # Small group-reduce / broadcast maps (replaces the old (c, c) block-diag map).
  gidx = jnp.arange(c, dtype=jnp.int32) // gs
  gsel = (gidx[:, None] == jnp.arange(NUM_GROUPS, dtype=jnp.int32)[None, :]).astype(f32)
  gdown = gsel                                      # (c, 32)
  gup = gsel.T                                      # (32, c)

  consts = [
      gdown, gup,
      params["gamma"].astype(f32).reshape(1, c),
      params["beta"].astype(f32).reshape(1, c),
      wq_f.astype(bf16), bq_f,
      wk_f.astype(bf16), bk_f,
      wv_f.astype(bf16), bv_f,
      wo_f.astype(bf16), bo_f,
  ]

  x_bf = x_bnc.astype(bf16)   # halves x HBM traffic and its VMEM block

  kernel = functools.partial(spatial_cross_attention_kernel,
                             heads=heads, dim_head=dim_head, tq=tq,
                             exp_bf16=exp_bf16)

  def run(single_buffer):
    def const_spec(a):
      idx = lambda bi, qi: (0,) * a.ndim           # constant across the grid
      if single_buffer:
        return pl.BlockSpec(a.shape, idx, pipeline_mode=pl.Buffered(1))
      return pl.BlockSpec(a.shape, idx)

    if single_buffer:
      x_spec = pl.BlockSpec((1, n, c), lambda bi, qi: (bi, 0, 0),
                            pipeline_mode=pl.Buffered(1))
    else:
      x_spec = pl.BlockSpec((1, n, c), lambda bi, qi: (bi, 0, 0))

    return pl.pallas_call(
        kernel,
        out_shape=jax.ShapeDtypeStruct((b, n, c), f32),
        grid=(b, nqt),
        in_specs=[x_spec] + [const_spec(a) for a in consts],
        out_specs=pl.BlockSpec((1, tq, c), lambda bi, qi: (bi, qi, 0)),
        scratch_shapes=[
            pltpu.VMEM((n, inner), bf16),           # Q (pre-scaled)
            pltpu.VMEM((inner, n), bf16),           # K^T (lane-dense, MXU RHS layout)
            pltpu.VMEM((n, inner), bf16),           # V
            pltpu.VMEM((tq, inner), f32),           # merged per-head attention output
        ],
        compiler_params=pltpu.CompilerParams(
            # batch axis shards across cores; q-tile axis is sequential (it reuses
            # the per-batch q/k/v scratch filled at qt == 0).
            dimension_semantics=("parallel", "arbitrary"),
            vmem_limit_bytes=vmem_limit),
    )(x_bf, *consts)

  try:
    return run(True)            # single-buffered constants / x (VMEM saving)
  except Exception:
    return run(False)           # fallback: default double buffering


def spatial_cross_attention(x_nchw, params, *, heads, dim_head, q_tile=256):
  """NCHW wrapper. The bf16 cast is fused into the layout transpose; callers that can
  keep channel-last activations should call spatial_cross_attention_seq directly."""
  b, c, h, w = x_nchw.shape
  n = h * w
  x_bnc = jnp.transpose(x_nchw.reshape(b, c, n), (0, 2, 1)).astype(jnp.bfloat16)
  out_bnc = spatial_cross_attention_seq(x_bnc, params, heads=heads,
                                        dim_head=dim_head, q_tile=q_tile)
  return jnp.transpose(out_bnc, (0, 2, 1)).reshape(b, c, h, w)


def reference(x, params, *, heads, dim_head, num_groups=NUM_GROUPS, eps=EPS):
  """Pure-JAX f32 reference matching the PyTorch forward (eval, context=None)."""
  b, c, h, w = x.shape
  inner = heads * dim_head
  n = h * w

  def gn(t):
    gs = c // num_groups
    t5 = t.reshape(b, num_groups, gs, h, w)
    mean = t5.mean(axis=(2, 3, 4), keepdims=True)
    var = ((t5 - mean) ** 2).mean(axis=(2, 3, 4), keepdims=True)
    t = ((t5 - mean) / jnp.sqrt(var + eps)).reshape(b, c, h, w)
    return t * params["gamma"].reshape(1, c, 1, 1) + params["beta"].reshape(1, c, 1, 1)

  def conv1x1(t, wmat, bias):
    out = jnp.einsum('bchw,oc->bohw', t, wmat)
    return out + bias.reshape(1, -1, 1, 1)

  xp = conv1x1(gn(x), params["w_proj_in"], params["b_proj_in"])
  cp = conv1x1(gn(x), params["w_proj_in_ctx"], params["b_proj_in_ctx"])
  xseq = xp.reshape(b, inner, n).transpose(0, 2, 1)
  cseq = cp.reshape(b, inner, n).transpose(0, 2, 1)

  q = xseq @ params["w_q"].T
  k = cseq @ params["w_k"].T
  v = cseq @ params["w_v"].T

  def split(t):
    return t.reshape(b, n, heads, dim_head).transpose(0, 2, 1, 3)

  q, k, v = split(q), split(k), split(v)
  sim = jnp.einsum('bhid,bhjd->bhij', q, k) * (dim_head ** -0.5)
  attn = jax.nn.softmax(sim, axis=-1)
  out = jnp.einsum('bhij,bhjd->bhid', attn, v)
  out = out.transpose(0, 2, 1, 3).reshape(b, n, inner)
  out = out @ params["w_out"].T + params["b_out"].reshape(1, 1, -1)
  out = out.transpose(0, 2, 1).reshape(b, c, h, w)
  out = conv1x1(out, params["w_proj_out"], params["b_proj_out"])
  return out + x


def make_params(key, in_channels, context_dim, heads, dim_head, zero_proj_out=True):
  inner = heads * dim_head
  ks = jax.random.split(key, 14)
  s = 0.1
  if zero_proj_out:
    # zero_module(Conv2d(inner, in_channels, 1)) -> exact zeros, as in the module.
    w_po = jnp.zeros((in_channels, inner), jnp.float32)
    b_po = jnp.zeros((1, in_channels), jnp.float32)
  else:
    w_po = s * jax.random.normal(ks[11], (in_channels, inner), jnp.float32)
    b_po = s * jax.random.normal(ks[12], (1, in_channels), jnp.float32)
  return {
      # GroupNorm affine
      "gamma": 1.0 + s * jax.random.normal(ks[0], (1, in_channels), jnp.float32),
      "beta": s * jax.random.normal(ks[1], (1, in_channels), jnp.float32),
      # proj_in / proj_in_context: Conv2d(C, inner, 1) -> (inner, C) weight
      "w_proj_in": s * jax.random.normal(ks[2], (inner, in_channels), jnp.float32),
      "b_proj_in": s * jax.random.normal(ks[3], (1, inner), jnp.float32),
      "w_proj_in_ctx": s * jax.random.normal(ks[4], (inner, in_channels), jnp.float32),
      "b_proj_in_ctx": s * jax.random.normal(ks[5], (1, inner), jnp.float32),
      # to_q / to_k / to_v: Linear (no bias)
      "w_q": s * jax.random.normal(ks[6], (inner, in_channels), jnp.float32),
      "w_k": s * jax.random.normal(ks[7], (inner, context_dim), jnp.float32),
      "w_v": s * jax.random.normal(ks[8], (inner, context_dim), jnp.float32),
      # to_out: Linear(inner, C) + bias (Dropout identity in eval)
      "w_out": s * jax.random.normal(ks[9], (in_channels, inner), jnp.float32),
      "b_out": s * jax.random.normal(ks[10], (1, in_channels), jnp.float32),
      "w_proj_out": w_po,
      "b_proj_out": b_po,
  }


if __name__ == "__main__":
  # Small, consistent shapes: in_channels must be divisible by 32 (GroupNorm) and,
  # per the module's own wiring, equal to heads * dim_head.
  B, C, H, W = 2, 64, 16, 16
  HEADS, DIM_HEAD = 2, 32
  CONTEXT_DIM = HEADS * DIM_HEAD  # == C

  key = jax.random.PRNGKey(0)
  kx, kp = jax.random.split(key)
  x = jax.random.normal(kx, (B, C, H, W), jnp.float32)
  # proj_out is zero-initialized in the module; use small non-zero values here so the
  # test actually exercises the full attention path rather than just the residual.
  params = make_params(kp, C, CONTEXT_DIM, HEADS, DIM_HEAD, zero_proj_out=False)

  out = spatial_cross_attention(x, params, heads=HEADS, dim_head=DIM_HEAD)
  out = jax.block_until_ready(out)

  ref = reference(x, params, heads=HEADS, dim_head=DIM_HEAD)
  assert out.shape == (B, C, H, W)
  # bf16 input / bf16 MXU operands (intentional, per perf review) vs. all-f32 reference.
  max_diff = float(jnp.max(jnp.abs(out - ref)))
  assert jnp.allclose(out, ref, rtol=3e-2, atol=3e-2), f"max abs diff {max_diff}"

  print("KERNEL_OK")
</pallas_src>

<mosaic_0001>
module attributes {stable_mosaic.version = 11 : i64} {
  func.func @spatial_cross_attention_kernel(%arg0: i32, %arg1: i32, %arg2: memref<1x256x64xbf16, #tpu.memory_space<vmem>>, %arg3: memref<64x32xf32, #tpu.memory_space<vmem>>, %arg4: memref<32x64xf32, #tpu.memory_space<vmem>>, %arg5: memref<1x64xf32, #tpu.memory_space<vmem>>, %arg6: memref<1x64xf32, #tpu.memory_space<vmem>>, %arg7: memref<64x64xbf16, #tpu.memory_space<vmem>>, %arg8: memref<1x64xf32, #tpu.memory_space<vmem>>, %arg9: memref<64x64xbf16, #tpu.memory_space<vmem>>, %arg10: memref<1x64xf32, #tpu.memory_space<vmem>>, %arg11: memref<64x64xbf16, #tpu.memory_space<vmem>>, %arg12: memref<1x64xf32, #tpu.memory_space<vmem>>, %arg13: memref<64x64xbf16, #tpu.memory_space<vmem>>, %arg14: memref<1x64xf32, #tpu.memory_space<vmem>>, %arg15: memref<1x256x64xf32, #tpu.memory_space<vmem>>, %arg16: memref<256x64xbf16, #tpu.memory_space<vmem>>, %arg17: memref<64x256xbf16, #tpu.memory_space<vmem>>, %arg18: memref<256x64xbf16, #tpu.memory_space<vmem>>, %arg19: memref<256x64xf32, #tpu.memory_space<vmem>>) attributes {dimension_semantics = [#tpu.dimension_semantics<parallel>, #tpu.dimension_semantics<arbitrary>], iteration_bounds = array<i64: 2, 1>, scalar_prefetch = 0 : i64, scratch_operands = 4 : i64, tpu.core_type = #tpu.core_type<tc>, window_params = [{pipeline_mode = #tpu.pipeline_mode<synchronous>, transform_indices = @transform_0, window_bounds = array<i64: 1, 256, 64>}, {pipeline_mode = #tpu.pipeline_mode<synchronous>, transform_indices = @transform_1, window_bounds = array<i64: 64, 32>}, {pipeline_mode = #tpu.pipeline_mode<synchronous>, transform_indices = @transform_2, window_bounds = array<i64: 32, 64>}, {pipeline_mode = #tpu.pipeline_mode<synchronous>, transform_indices = @transform_3, window_bounds = array<i64: 1, 64>}, {pipeline_mode = #tpu.pipeline_mode<synchronous>, transform_indices = @transform_4, window_bounds = array<i64: 1, 64>}, {pipeline_mode = #tpu.pipeline_mode<synchronous>, transform_indices = @transform_5, window_bounds = array<i64: 64, 64>}, {pipeline_mode = #tpu.pipeline_mode<synchronous>, transform_indices = @transform_6, window_bounds = array<i64: 1, 64>}, {pipeline_mode = #tpu.pipeline_mode<synchronous>, transform_indices = @transform_7, window_bounds = array<i64: 64, 64>}, {pipeline_mode = #tpu.pipeline_mode<synchronous>, transform_indices = @transform_8, window_bounds = array<i64: 1, 64>}, {pipeline_mode = #tpu.pipeline_mode<synchronous>, transform_indices = @transform_9, window_bounds = array<i64: 64, 64>}, {pipeline_mode = #tpu.pipeline_mode<synchronous>, transform_indices = @transform_10, window_bounds = array<i64: 1, 64>}, {pipeline_mode = #tpu.pipeline_mode<synchronous>, transform_indices = @transform_11, window_bounds = array<i64: 64, 64>}, {pipeline_mode = #tpu.pipeline_mode<synchronous>, transform_indices = @transform_12, window_bounds = array<i64: 1, 64>}, {transform_indices = @transform_13, window_bounds = array<i64: 1, 256, 64>}]} {
    %c0_i32 = arith.constant 0 : i32
    %0 = arith.cmpi eq, %arg1, %c0_i32 : i32
    %1 = arith.extui %0 : i1 to i32
    %c0_i32_0 = arith.constant 0 : i32
    %2 = arith.cmpi ne, %1, %c0_i32_0 : i32
    scf.if %2 {
      %c0_32 = arith.constant 0 : index
      %c0_33 = arith.constant 0 : index
      %c0_34 = arith.constant 0 : index
      %56 = vector.load %arg2[%c0_32, %c0_33, %c0_34] : memref<1x256x64xbf16, #tpu.memory_space<vmem>>, vector<1x256x64xbf16>
      %57 = vector.shape_cast %56 : vector<1x256x64xbf16> to vector<256x64xbf16>
      %58 = arith.extf %57 : vector<256x64xbf16> to vector<256x64xf32>
      %cst_35 = arith.constant dense<0.000000e+00> : vector<64xf32>
      %59 = vector.multi_reduction <add>, %58, %cst_35 [0] : vector<256x64xf32> to vector<64xf32>
      %60 = vector.shape_cast %59 : vector<64xf32> to vector<1x64xf32>
      %c0_36 = arith.constant 0 : index
      %c0_37 = arith.constant 0 : index
      %61 = vector.load %arg3[%c0_36, %c0_37] : memref<64x32xf32, #tpu.memory_space<vmem>>, vector<64x32xf32>
      %cst_38 = arith.constant dense<0.000000e+00> : vector<1x32xf32>
      %62 = tpu.matmul %60, %61, %cst_38 {dimension_numbers = #tpu.dot_dimension_numbers<[1], [0], [0], [1], [0, 0, 1, 1], [], []>} : vector<1x64xf32>, vector<64x32xf32>, vector<1x32xf32> -> vector<1x32xf32>
      %cst_39 = arith.constant 5.120000e+02 : f32
      %63 = vector.broadcast %cst_39 : f32 to vector<1x32xf32>
      %64 = arith.divf %62, %63 : vector<1x32xf32>
      %c0_40 = arith.constant 0 : index
      %c0_41 = arith.constant 0 : index
      %65 = vector.load %arg4[%c0_40, %c0_41] : memref<32x64xf32, #tpu.memory_space<vmem>>, vector<32x64xf32>
      %cst_42 = arith.constant dense<0.000000e+00> : vector<1x64xf32>
      %66 = tpu.matmul %64, %65, %cst_42 {dimension_numbers = #tpu.dot_dimension_numbers<[1], [0], [0], [1], [0, 0, 1, 1], [], []>} : vector<1x32xf32>, vector<32x64xf32>, vector<1x64xf32> -> vector<1x64xf32>
      %67 = vector.broadcast %66 : vector<1x64xf32> to vector<256x64xf32>
      %68 = arith.subf %58, %67 : vector<256x64xf32>
      %69 = arith.mulf %68, %68 : vector<256x64xf32>
      %cst_43 = arith.constant dense<0.000000e+00> : vector<64xf32>
      %70 = vector.multi_reduction <add>, %69, %cst_43 [0] : vector<256x64xf32> to vector<64xf32>
      %71 = vector.shape_cast %70 : vector<64xf32> to vector<1x64xf32>
      %c0_44 = arith.constant 0 : index
      %c0_45 = arith.constant 0 : index
      %72 = vector.load %arg3[%c0_44, %c0_45] : memref<64x32xf32, #tpu.memory_space<vmem>>, vector<64x32xf32>
      %cst_46 = arith.constant dense<0.000000e+00> : vector<1x32xf32>
      %73 = tpu.matmul %71, %72, %cst_46 {dimension_numbers = #tpu.dot_dimension_numbers<[1], [0], [0], [1], [0, 0, 1, 1], [], []>} : vector<1x64xf32>, vector<64x32xf32>, vector<1x32xf32> -> vector<1x32xf32>
      %cst_47 = arith.constant 5.120000e+02 : f32
      %74 = vector.broadcast %cst_47 : f32 to vector<1x32xf32>
      %75 = arith.divf %73, %74 : vector<1x32xf32>
      %cst_48 = arith.constant 9.99999997E-7 : f32
      %76 = vector.broadcast %cst_48 : f32 to vector<1x32xf32>
      %77 = arith.addf %75, %76 : vector<1x32xf32>
      %78 = math.rsqrt %77 : vector<1x32xf32>
      %c0_49 = arith.constant 0 : index
      %c0_50 = arith.constant 0 : index
      %79 = vector.load %arg4[%c0_49, %c0_50] : memref<32x64xf32, #tpu.memory_space<vmem>>, vector<32x64xf32>
      %cst_51 = arith.constant dense<0.000000e+00> : vector<1x64xf32>
      %80 = tpu.matmul %78, %79, %cst_51 {dimension_numbers = #tpu.dot_dimension_numbers<[1], [0], [0], [1], [0, 0, 1, 1], [], []>} : vector<1x32xf32>, vector<32x64xf32>, vector<1x64xf32> -> vector<1x64xf32>
      %81 = vector.broadcast %80 : vector<1x64xf32> to vector<256x64xf32>
      %82 = arith.mulf %68, %81 : vector<256x64xf32>
      %c0_52 = arith.constant 0 : index
      %c0_53 = arith.constant 0 : index
      %83 = vector.load %arg5[%c0_52, %c0_53] : memref<1x64xf32, #tpu.memory_space<vmem>>, vector<1x64xf32>
      %84 = vector.broadcast %83 : vector<1x64xf32> to vector<256x64xf32>
      %85 = arith.mulf %82, %84 : vector<256x64xf32>
      %c0_54 = arith.constant 0 : index
      %c0_55 = arith.constant 0 : index
      %86 = vector.load %arg6[%c0_54, %c0_55] : memref<1x64xf32, #tpu.memory_space<vmem>>, vector<1x64xf32>
      %87 = vector.broadcast %86 : vector<1x64xf32> to vector<256x64xf32>
      %88 = arith.addf %85, %87 : vector<256x64xf32>
      %89 = arith.truncf %88 : vector<256x64xf32> to vector<256x64xbf16>
      %c0_56 = arith.constant 0 : index
      %c0_57 = arith.constant 0 : index
      %90 = vector.load %arg7[%c0_56, %c0_57] : memref<64x64xbf16, #tpu.memory_space<vmem>>, vector<64x64xbf16>
      %cst_58 = arith.constant dense<0.000000e+00> : vector<256x64xf32>
      %91 = tpu.matmul %89, %90, %cst_58 {dimension_numbers = #tpu.dot_dimension_numbers<[1], [0], [0], [1], [0, 0, 1, 1], [], []>} : vector<256x64xbf16>, vector<64x64xbf16>, vector<256x64xf32> -> vector<256x64xf32>
      %c0_59 = arith.constant 0 : index
      %c0_60 = arith.constant 0 : index
      %92 = vector.load %arg8[%c0_59, %c0_60] : memref<1x64xf32, #tpu.memory_space<vmem>>, vector<1x64xf32>
      %93 = vector.broadcast %92 : vector<1x64xf32> to vector<256x64xf32>
      %94 = arith.addf %91, %93 : vector<256x64xf32>
      %95 = arith.truncf %94 : vector<256x64xf32> to vector<256x64xbf16>
      %c0_61 = arith.constant 0 : index
      %c0_62 = arith.constant 0 : index
      %96 = vector.load %arg16[%c0_61, %c0_62] : memref<256x64xbf16, #tpu.memory_space<vmem>>, vector<256x64xbf16>
      tpu.vector_store %arg16[%c0_61, %c0_62], %95 {strides = array<i32>} : memref<256x64xbf16, #tpu.memory_space<vmem>>, vector<256x64xbf16>,
      %c0_63 = arith.constant 0 : index
      %c0_64 = arith.constant 0 : index
      %97 = vector.load %arg9[%c0_63, %c0_64] : memref<64x64xbf16, #tpu.memory_space<vmem>>, vector<64x64xbf16>
      %cst_65 = arith.constant dense<0.000000e+00> : vector<256x64xf32>
      %98 = tpu.matmul %89, %97, %cst_65 {dimension_numbers = #tpu.dot_dimension_numbers<[1], [0], [0], [1], [0, 0, 1, 1], [], []>} : vector<256x64xbf16>, vector<64x64xbf16>, vector<256x64xf32> -> vector<256x64xf32>
      %c0_66 = arith.constant 0 : index
      %c0_67 = arith.constant 0 : index
      %99 = vector.load %arg10[%c0_66, %c0_67] : memref<1x64xf32, #tpu.memory_space<vmem>>, vector<1x64xf32>
      %100 = vector.broadcast %99 : vector<1x64xf32> to vector<256x64xf32>
      %101 = arith.addf %98, %100 : vector<256x64xf32>
      %102 = tpu.transpose %101, [1, 0] : vector<256x64xf32> -> vector<64x256xf32>
      %103 = arith.truncf %102 : vector<64x256xf32> to vector<64x256xbf16>
      %c0_68 = arith.constant 0 : index
      %c0_69 = arith.constant 0 : index
      %104 = vector.load %arg17[%c0_68, %c0_69] : memref<64x256xbf16, #tpu.memory_space<vmem>>, vector<64x256xbf16>
      tpu.vector_store %arg17[%c0_68, %c0_69], %103 {strides = array<i32>} : memref<64x256xbf16, #tpu.memory_space<vmem>>, vector<64x256xbf16>,
      %c0_70 = arith.constant 0 : index
      %c0_71 = arith.constant 0 : index
      %105 = vector.load %arg11[%c0_70, %c0_71] : memref<64x64xbf16, #tpu.memory_space<vmem>>, vector<64x64xbf16>
      %cst_72 = arith.constant dense<0.000000e+00> : vector<256x64xf32>
      %106 = tpu.matmul %89, %105, %cst_72 {dimension_numbers = #tpu.dot_dimension_numbers<[1], [0], [0], [1], [0, 0, 1, 1], [], []>} : vector<256x64xbf16>, vector<64x64xbf16>, vector<256x64xf32> -> vector<256x64xf32>
      %c0_73 = arith.constant 0 : index
      %c0_74 = arith.constant 0 : index
      %107 = vector.load %arg12[%c0_73, %c0_74] : memref<1x64xf32, #tpu.memory_space<vmem>>, vector<1x64xf32>
      %108 = vector.broadcast %107 : vector<1x64xf32> to vector<256x64xf32>
      %109 = arith.addf %106, %108 : vector<256x64xf32>
      %110 = arith.truncf %109 : vector<256x64xf32> to vector<256x64xbf16>
      %c0_75 = arith.constant 0 : index
      %c0_76 = arith.constant 0 : index
      %111 = vector.load %arg18[%c0_75, %c0_76] : memref<256x64xbf16, #tpu.memory_space<vmem>>, vector<256x64xbf16>
      tpu.vector_store %arg18[%c0_75, %c0_76], %110 {strides = array<i32>} : memref<256x64xbf16, #tpu.memory_space<vmem>>, vector<256x64xbf16>,
    } else {
    }
    %c256_i32 = arith.constant 256 : i32
    %3 = arith.muli %arg1, %c256_i32 : i32
    %4 = tpu.assume_multiple %3, 256 : i32
    %c0 = arith.constant 0 : index
    %5 = arith.index_cast %4 : i32 to index
    %c0_1 = arith.constant 0 : index
    %6 = vector.load %arg2[%c0, %5, %c0_1] : memref<1x256x64xbf16, #tpu.memory_space<vmem>>, vector<1x256x64xbf16>
    %7 = vector.shape_cast %6 : vector<1x256x64xbf16> to vector<256x64xbf16>
    %8 = arith.extf %7 : vector<256x64xbf16> to vector<256x64xf32>
    %9 = arith.index_cast %4 : i32 to index
    %c0_2 = arith.constant 0 : index
    %10 = vector.load %arg16[%9, %c0_2] : memref<256x64xbf16, #tpu.memory_space<vmem>>, vector<256x32xbf16>
    %c0_3 = arith.constant 0 : index
    %c0_4 = arith.constant 0 : index
    %11 = vector.load %arg17[%c0_3, %c0_4] : memref<64x256xbf16, #tpu.memory_space<vmem>>, vector<32x256xbf16>
    %c0_5 = arith.constant 0 : index
    %c0_6 = arith.constant 0 : index
    %12 = vector.load %arg18[%c0_5, %c0_6] : memref<256x64xbf16, #tpu.memory_space<vmem>>, vector<256x32xbf16>
    %cst = arith.constant dense<0.000000e+00> : vector<256x256xf32>
    %13 = tpu.matmul %10, %11, %cst {dimension_numbers = #tpu.dot_dimension_numbers<[1], [0], [0], [1], [0, 0, 1, 1], [], []>} : vector<256x32xbf16>, vector<32x256xbf16>, vector<256x256xf32> -> vector<256x256xf32>
    %cst_7 = arith.constant dense<0xFF800000> : vector<256xf32>
    %14 = vector.multi_reduction <maximumf>, %13, %cst_7 [1] : vector<256x256xf32> to vector<256xf32>
    %15 = vector.shape_cast %14 : vector<256xf32> to vector<256x1xf32>
    %16 = vector.broadcast %15 : vector<256x1xf32> to vector<256x256xf32>
    %17 = arith.subf %13, %16 : vector<256x256xf32>
    %18 = math.exp %17 : vector<256x256xf32>
    %cst_8 = arith.constant dense<0.000000e+00> : vector<256xf32>
    %19 = vector.multi_reduction <add>, %18, %cst_8 [1] : vector<256x256xf32> to vector<256xf32>
    %20 = vector.shape_cast %19 : vector<256xf32> to vector<256x1xf32>
    %21 = arith.truncf %18 : vector<256x256xf32> to vector<256x256xbf16>
    %cst_9 = arith.constant dense<0.000000e+00> : vector<256x32xf32>
    %22 = tpu.matmul %21, %12, %cst_9 {dimension_numbers = #tpu.dot_dimension_numbers<[1], [0], [0], [1], [0, 0, 1, 1], [], []>} : vector<256x256xbf16>, vector<256x32xbf16>, vector<256x32xf32> -> vector<256x32xf32>
    %23 = tpu.reciprocal %20 {approx = true} : vector<256x1xf32> -> vector<256x1xf32>
    %24 = vector.broadcast %23 : vector<256x1xf32> to vector<256x32xf32>
    %25 = arith.mulf %22, %24 : vector<256x32xf32>
    %c0_10 = arith.constant 0 : index
    %c0_11 = arith.constant 0 : index
    %26 = vector.load %arg19[%c0_10, %c0_11] : memref<256x64xf32, #tpu.memory_space<vmem>>, vector<256x32xf32>
    tpu.vector_store %arg19[%c0_10, %c0_11], %25 {strides = array<i32>} : memref<256x64xf32, #tpu.memory_space<vmem>>, vector<256x32xf32>,
    %27 = arith.index_cast %4 : i32 to index
    %c32 = arith.constant 32 : index
    %28 = vector.load %arg16[%27, %c32] : memref<256x64xbf16, #tpu.memory_space<vmem>>, vector<256x32xbf16>
    %c32_12 = arith.constant 32 : index
    %c0_13 = arith.constant 0 : index
    %29 = vector.load %arg17[%c32_12, %c0_13] : memref<64x256xbf16, #tpu.memory_space<vmem>>, vector<32x256xbf16>
    %c0_14 = arith.constant 0 : index
    %c32_15 = arith.constant 32 : index
    %30 = vector.load %arg18[%c0_14, %c32_15] : memref<256x64xbf16, #tpu.memory_space<vmem>>, vector<256x32xbf16>
    %cst_16 = arith.constant dense<0.000000e+00> : vector<256x256xf32>
    %31 = tpu.matmul %28, %29, %cst_16 {dimension_numbers = #tpu.dot_dimension_numbers<[1], [0], [0], [1], [0, 0, 1, 1], [], []>} : vector<256x32xbf16>, vector<32x256xbf16>, vector<256x256xf32> -> vector<256x256xf32>
    %cst_17 = arith.constant dense<0xFF800000> : vector<256xf32>
    %32 = vector.multi_reduction <maximumf>, %31, %cst_17 [1] : vector<256x256xf32> to vector<256xf32>
    %33 = vector.shape_cast %32 : vector<256xf32> to vector<256x1xf32>
    %34 = vector.broadcast %33 : vector<256x1xf32> to vector<256x256xf32>
    %35 = arith.subf %31, %34 : vector<256x256xf32>
    %36 = math.exp %35 : vector<256x256xf32>
    %cst_18 = arith.constant dense<0.000000e+00> : vector<256xf32>
    %37 = vector.multi_reduction <add>, %36, %cst_18 [1] : vector<256x256xf32> to vector<256xf32>
    %38 = vector.shape_cast %37 : vector<256xf32> to vector<256x1xf32>
    %39 = arith.truncf %36 : vector<256x256xf32> to vector<256x256xbf16>
    %cst_19 = arith.constant dense<0.000000e+00> : vector<256x32xf32>
    %40 = tpu.matmul %39, %30, %cst_19 {dimension_numbers = #tpu.dot_dimension_numbers<[1], [0], [0], [1], [0, 0, 1, 1], [], []>} : vector<256x256xbf16>, vector<256x32xbf16>, vector<256x32xf32> -> vector<256x32xf32>
    %41 = tpu.reciprocal %38 {approx = true} : vector<256x1xf32> -> vector<256x1xf32>
    %42 = vector.broadcast %41 : vector<256x1xf32> to vector<256x32xf32>
    %43 = arith.mulf %40, %42 : vector<256x32xf32>
    %c0_20 = arith.constant 0 : index
    %c32_21 = arith.constant 32 : index
    %44 = vector.load %arg19[%c0_20, %c32_21] : memref<256x64xf32, #tpu.memory_space<vmem>>, vector<256x32xf32>
    tpu.vector_store %arg19[%c0_20, %c32_21], %43 {strides = array<i32>} : memref<256x64xf32, #tpu.memory_space<vmem>>, vector<256x32xf32>,
    %c0_22 = arith.constant 0 : index
    %c0_23 = arith.constant 0 : index
    %45 = vector.load %arg19[%c0_22, %c0_23] : memref<256x64xf32, #tpu.memory_space<vmem>>, vector<256x64xf32>
    %46 = arith.truncf %45 : vector<256x64xf32> to vector<256x64xbf16>
    %c0_24 = arith.constant 0 : index
    %c0_25 = arith.constant 0 : index
    %47 = vector.load %arg13[%c0_24, %c0_25] : memref<64x64xbf16, #tpu.memory_space<vmem>>, vector<64x64xbf16>
    %cst_26 = arith.constant dense<0.000000e+00> : vector<256x64xf32>
    %48 = tpu.matmul %46, %47, %cst_26 {dimension_numbers = #tpu.dot_dimension_numbers<[1], [0], [0], [1], [0, 0, 1, 1], [], []>} : vector<256x64xbf16>, vector<64x64xbf16>, vector<256x64xf32> -> vector<256x64xf32>
    %c0_27 = arith.constant 0 : index
    %c0_28 = arith.constant 0 : index
    %49 = vector.load %arg14[%c0_27, %c0_28] : memref<1x64xf32, #tpu.memory_space<vmem>>, vector<1x64xf32>
    %50 = vector.broadcast %49 : vector<1x64xf32> to vector<256x64xf32>
    %51 = arith.addf %48, %50 : vector<256x64xf32>
    %52 = arith.addf %51, %8 : vector<256x64xf32>
    %c0_29 = arith.constant 0 : index
    %c0_30 = arith.constant 0 : index
    %c0_31 = arith.constant 0 : index
    %53 = vector.load %arg15[%c0_29, %c0_30, %c0_31] : memref<1x256x64xf32, #tpu.memory_space<vmem>>, vector<1x256x64xf32>
    %54 = vector.shape_cast %53 : vector<1x256x64xf32> to vector<256x64xf32>
    %55 = vector.shape_cast %52 : vector<256x64xf32> to vector<1x256x64xf32>
    tpu.vector_store %arg15[%c0_29, %c0_30, %c0_31], %55 {strides = array<i32>} : memref<1x256x64xf32, #tpu.memory_space<vmem>>, vector<1x256x64xf32>,
    return
  }
  func.func @transform_0(%arg0: i32, %arg1: i32) -> (i32, i32, i32) {
    %c0_i32 = arith.constant 0 : i32
    %c0_i32_0 = arith.constant 0 : i32
    %c0_i32_1 = arith.constant 0 : i32
    return %arg0, %c0_i32, %c0_i32_0 : i32, i32, i32
  }
  func.func @transform_1(%arg0: i32, %arg1: i32) -> (i32, i32) {
    %c0_i32 = arith.constant 0 : i32
    %c0_i32_0 = arith.constant 0 : i32
    %c0_i32_1 = arith.constant 0 : i32
    return %c0_i32, %c0_i32_0 : i32, i32
  }
  func.func @transform_2(%arg0: i32, %arg1: i32) -> (i32, i32) {
    %c0_i32 = arith.constant 0 : i32
    %c0_i32_0 = arith.constant 0 : i32
    %c0_i32_1 = arith.constant 0 : i32
    return %c0_i32, %c0_i32_0 : i32, i32
  }
  func.func @transform_3(%arg0: i32, %arg1: i32) -> (i32, i32) {
    %c0_i32 = arith.constant 0 : i32
    %c0_i32_0 = arith.constant 0 : i32
    %c0_i32_1 = arith.constant 0 : i32
    return %c0_i32, %c0_i32_0 : i32, i32
  }
  func.func @transform_4(%arg0: i32, %arg1: i32) -> (i32, i32) {
    %c0_i32 = arith.constant 0 : i32
    %c0_i32_0 = arith.constant 0 : i32
    %c0_i32_1 = arith.constant 0 : i32
    return %c0_i32, %c0_i32_0 : i32, i32
  }
  func.func @transform_5(%arg0: i32, %arg1: i32) -> (i32, i32) {
    %c0_i32 = arith.constant 0 : i32
    %c0_i32_0 = arith.constant 0 : i32
    %c0_i32_1 = arith.constant 0 : i32
    return %c0_i32, %c0_i32_0 : i32, i32
  }
  func.func @transform_6(%arg0: i32, %arg1: i32) -> (i32, i32) {
    %c0_i32 = arith.constant 0 : i32
    %c0_i32_0 = arith.constant 0 : i32
    %c0_i32_1 = arith.constant 0 : i32
    return %c0_i32, %c0_i32_0 : i32, i32
  }
  func.func @transform_7(%arg0: i32, %arg1: i32) -> (i32, i32) {
    %c0_i32 = arith.constant 0 : i32
    %c0_i32_0 = arith.constant 0 : i32
    %c0_i32_1 = arith.constant 0 : i32
    return %c0_i32, %c0_i32_0 : i32, i32
  }
  func.func @transform_8(%arg0: i32, %arg1: i32) -> (i32, i32) {
    %c0_i32 = arith.constant 0 : i32
    %c0_i32_0 = arith.constant 0 : i32
    %c0_i32_1 = arith.constant 0 : i32
    return %c0_i32, %c0_i32_0 : i32, i32
  }
  func.func @transform_9(%arg0: i32, %arg1: i32) -> (i32, i32) {
    %c0_i32 = arith.constant 0 : i32
    %c0_i32_0 = arith.constant 0 : i32
    %c0_i32_1 = arith.constant 0 : i32
    return %c0_i32, %c0_i32_0 : i32, i32
  }
  func.func @transform_10(%arg0: i32, %arg1: i32) -> (i32, i32) {
    %c0_i32 = arith.constant 0 : i32
    %c0_i32_0 = arith.constant 0 : i32
    %c0_i32_1 = arith.constant 0 : i32
    return %c0_i32, %c0_i32_0 : i32, i32
  }
  func.func @transform_11(%arg0: i32, %arg1: i32) -> (i32, i32) {
    %c0_i32 = arith.constant 0 : i32
    %c0_i32_0 = arith.constant 0 : i32
    %c0_i32_1 = arith.constant 0 : i32
    return %c0_i32, %c0_i32_0 : i32, i32
  }
  func.func @transform_12(%arg0: i32, %arg1: i32) -> (i32, i32) {
    %c0_i32 = arith.constant 0 : i32
    %c0_i32_0 = arith.constant 0 : i32
    %c0_i32_1 = arith.constant 0 : i32
    return %c0_i32, %c0_i32_0 : i32, i32
  }
  func.func @transform_13(%arg0: i32, %arg1: i32) -> (i32, i32, i32) {
    %c0_i32 = arith.constant 0 : i32
    %c0_i32_0 = arith.constant 0 : i32
    return %arg0, %arg1, %c0_i32 : i32, i32, i32
  }
}

module attributes {stable_mosaic.version = 11 : i64} {
  func.func @spatial_cross_attention_kernel(%arg0: i32, %arg1: i32, %arg2: memref<1x256x64xbf16, #tpu.memory_space<vmem>>, %arg3: memref<64x32xf32, #tpu.memory_space<vmem>>, %arg4: memref<32x64xf32, #tpu.memory_space<vmem>>, %arg5: memref<1x64xf32, #tpu.memory_space<vmem>>, %arg6: memref<1x64xf32, #tpu.memory_space<vmem>>, %arg7: memref<64x64xbf16, #tpu.memory_space<vmem>>, %arg8: memref<1x64xf32, #tpu.memory_space<vmem>>, %arg9: memref<64x64xbf16, #tpu.memory_space<vmem>>, %arg10: memref<1x64xf32, #tpu.memory_space<vmem>>, %arg11: memref<64x64xbf16, #tpu.memory_space<vmem>>, %arg12: memref<1x64xf32, #tpu.memory_space<vmem>>, %arg13: memref<64x64xbf16, #tpu.memory_space<vmem>>, %arg14: memref<1x64xf32, #tpu.memory_space<vmem>>, %arg15: memref<1x256x64xf32, #tpu.memory_space<vmem>>, %arg16: memref<256x64xbf16, #tpu.memory_space<vmem>>, %arg17: memref<64x256xbf16, #tpu.memory_space<vmem>>, %arg18: memref<256x64xbf16, #tpu.memory_space<vmem>>, %arg19: memref<256x64xf32, #tpu.memory_space<vmem>>) attributes {dimension_semantics = [#tpu.dimension_semantics<parallel>, #tpu.dimension_semantics<arbitrary>], iteration_bounds = array<i64: 2, 1>, scalar_prefetch = 0 : i64, scratch_operands = 4 : i64, tpu.core_type = #tpu.core_type<tc>, window_params = [{transform_indices = @transform_0, window_bounds = array<i64: 1, 256, 64>}, {pipeline_mode = #tpu.pipeline_mode<synchronous>, transform_indices = @transform_1, window_bounds = array<i64: 64, 32>}, {pipeline_mode = #tpu.pipeline_mode<synchronous>, transform_indices = @transform_2, window_bounds = array<i64: 32, 64>}, {pipeline_mode = #tpu.pipeline_mode<synchronous>, transform_indices = @transform_3, window_bounds = array<i64: 1, 64>}, {pipeline_mode = #tpu.pipeline_mode<synchronous>, transform_indices = @transform_4, window_bounds = array<i64: 1, 64>}, {pipeline_mode = #tpu.pipeline_mode<synchronous>, transform_indices = @transform_5, window_bounds = array<i64: 64, 64>}, {pipeline_mode = #tpu.pipeline_mode<synchronous>, transform_indices = @transform_6, window_bounds = array<i64: 1, 64>}, {pipeline_mode = #tpu.pipeline_mode<synchronous>, transform_indices = @transform_7, window_bounds = array<i64: 64, 64>}, {pipeline_mode = #tpu.pipeline_mode<synchronous>, transform_indices = @transform_8, window_bounds = array<i64: 1, 64>}, {pipeline_mode = #tpu.pipeline_mode<synchronous>, transform_indices = @transform_9, window_bounds = array<i64: 64, 64>}, {pipeline_mode = #tpu.pipeline_mode<synchronous>, transform_indices = @transform_10, window_bounds = array<i64: 1, 64>}, {pipeline_mode = #tpu.pipeline_mode<synchronous>, transform_indices = @transform_11, window_bounds = array<i64: 64, 64>}, {pipeline_mode = #tpu.pipeline_mode<synchronous>, transform_indices = @transform_12, window_bounds = array<i64: 1, 64>}, {transform_indices = @transform_13, window_bounds = array<i64: 1, 256, 64>}]} {
    %c0_i32 = arith.constant 0 : i32
    %0 = arith.cmpi eq, %arg1, %c0_i32 : i32
    %1 = arith.extui %0 : i1 to i32
    %c0_i32_0 = arith.constant 0 : i32
    %2 = arith.cmpi ne, %1, %c0_i32_0 : i32
    scf.if %2 {
      %c0_32 = arith.constant 0 : index
      %c0_33 = arith.constant 0 : index
      %c0_34 = arith.constant 0 : index
      %56 = vector.load %arg2[%c0_32, %c0_33, %c0_34] : memref<1x256x64xbf16, #tpu.memory_space<vmem>>, vector<1x256x64xbf16>
      %57 = vector.shape_cast %56 : vector<1x256x64xbf16> to vector<256x64xbf16>
      %58 = arith.extf %57 : vector<256x64xbf16> to vector<256x64xf32>
      %cst_35 = arith.constant dense<0.000000e+00> : vector<64xf32>
      %59 = vector.multi_reduction <add>, %58, %cst_35 [0] : vector<256x64xf32> to vector<64xf32>
      %60 = vector.shape_cast %59 : vector<64xf32> to vector<1x64xf32>
      %c0_36 = arith.constant 0 : index
      %c0_37 = arith.constant 0 : index
      %61 = vector.load %arg3[%c0_36, %c0_37] : memref<64x32xf32, #tpu.memory_space<vmem>>, vector<64x32xf32>
      %cst_38 = arith.constant dense<0.000000e+00> : vector<1x32xf32>
      %62 = tpu.matmul %60, %61, %cst_38 {dimension_numbers = #tpu.dot_dimension_numbers<[1], [0], [0], [1], [0, 0, 1, 1], [], []>} : vector<1x64xf32>, vector<64x32xf32>, vector<1x32xf32> -> vector<1x32xf32>
      %cst_39 = arith.constant 5.120000e+02 : f32
      %63 = vector.broadcast %cst_39 : f32 to vector<1x32xf32>
      %64 = arith.divf %62, %63 : vector<1x32xf32>
      %c0_40 = arith.constant 0 : index
      %c0_41 = arith.constant 0 : index
      %65 = vector.load %arg4[%c0_40, %c0_41] : memref<32x64xf32, #tpu.memory_space<vmem>>, vector<32x64xf32>
      %cst_42 = arith.constant dense<0.000000e+00> : vector<1x64xf32>
      %66 = tpu.matmul %64, %65, %cst_42 {dimension_numbers = #tpu.dot_dimension_numbers<[1], [0], [0], [1], [0, 0, 1, 1], [], []>} : vector<1x32xf32>, vector<32x64xf32>, vector<1x64xf32> -> vector<1x64xf32>
      %67 = vector.broadcast %66 : vector<1x64xf32> to vector<256x64xf32>
      %68 = arith.subf %58, %67 : vector<256x64xf32>
      %69 = arith.mulf %68, %68 : vector<256x64xf32>
      %cst_43 = arith.constant dense<0.000000e+00> : vector<64xf32>
      %70 = vector.multi_reduction <add>, %69, %cst_43 [0] : vector<256x64xf32> to vector<64xf32>
      %71 = vector.shape_cast %70 : vector<64xf32> to vector<1x64xf32>
      %c0_44 = arith.constant 0 : index
      %c0_45 = arith.constant 0 : index
      %72 = vector.load %arg3[%c0_44, %c0_45] : memref<64x32xf32, #tpu.memory_space<vmem>>, vector<64x32xf32>
      %cst_46 = arith.constant dense<0.000000e+00> : vector<1x32xf32>
      %73 = tpu.matmul %71, %72, %cst_46 {dimension_numbers = #tpu.dot_dimension_numbers<[1], [0], [0], [1], [0, 0, 1, 1], [], []>} : vector<1x64xf32>, vector<64x32xf32>, vector<1x32xf32> -> vector<1x32xf32>
      %cst_47 = arith.constant 5.120000e+02 : f32
      %74 = vector.broadcast %cst_47 : f32 to vector<1x32xf32>
      %75 = arith.divf %73, %74 : vector<1x32xf32>
      %cst_48 = arith.constant 9.99999997E-7 : f32
      %76 = vector.broadcast %cst_48 : f32 to vector<1x32xf32>
      %77 = arith.addf %75, %76 : vector<1x32xf32>
      %78 = math.rsqrt %77 : vector<1x32xf32>
      %c0_49 = arith.constant 0 : index
      %c0_50 = arith.constant 0 : index
      %79 = vector.load %arg4[%c0_49, %c0_50] : memref<32x64xf32, #tpu.memory_space<vmem>>, vector<32x64xf32>
      %cst_51 = arith.constant dense<0.000000e+00> : vector<1x64xf32>
      %80 = tpu.matmul %78, %79, %cst_51 {dimension_numbers = #tpu.dot_dimension_numbers<[1], [0], [0], [1], [0, 0, 1, 1], [], []>} : vector<1x32xf32>, vector<32x64xf32>, vector<1x64xf32> -> vector<1x64xf32>
      %81 = vector.broadcast %80 : vector<1x64xf32> to vector<256x64xf32>
      %82 = arith.mulf %68, %81 : vector<256x64xf32>
      %c0_52 = arith.constant 0 : index
      %c0_53 = arith.constant 0 : index
      %83 = vector.load %arg5[%c0_52, %c0_53] : memref<1x64xf32, #tpu.memory_space<vmem>>, vector<1x64xf32>
      %84 = vector.broadcast %83 : vector<1x64xf32> to vector<256x64xf32>
      %85 = arith.mulf %82, %84 : vector<256x64xf32>
      %c0_54 = arith.constant 0 : index
      %c0_55 = arith.constant 0 : index
      %86 = vector.load %arg6[%c0_54, %c0_55] : memref<1x64xf32, #tpu.memory_space<vmem>>, vector<1x64xf32>
      %87 = vector.broadcast %86 : vector<1x64xf32> to vector<256x64xf32>
      %88 = arith.addf %85, %87 : vector<256x64xf32>
      %89 = arith.truncf %88 : vector<256x64xf32> to vector<256x64xbf16>
      %c0_56 = arith.constant 0 : index
      %c0_57 = arith.constant 0 : index
      %90 = vector.load %arg7[%c0_56, %c0_57] : memref<64x64xbf16, #tpu.memory_space<vmem>>, vector<64x64xbf16>
      %cst_58 = arith.constant dense<0.000000e+00> : vector<256x64xf32>
      %91 = tpu.matmul %89, %90, %cst_58 {dimension_numbers = #tpu.dot_dimension_numbers<[1], [0], [0], [1], [0, 0, 1, 1], [], []>} : vector<256x64xbf16>, vector<64x64xbf16>, vector<256x64xf32> -> vector<256x64xf32>
      %c0_59 = arith.constant 0 : index
      %c0_60 = arith.constant 0 : index
      %92 = vector.load %arg8[%c0_59, %c0_60] : memref<1x64xf32, #tpu.memory_space<vmem>>, vector<1x64xf32>
      %93 = vector.broadcast %92 : vector<1x64xf32> to vector<256x64xf32>
      %94 = arith.addf %91, %93 : vector<256x64xf32>
      %95 = arith.truncf %94 : vector<256x64xf32> to vector<256x64xbf16>
      %c0_61 = arith.constant 0 : index
      %c0_62 = arith.constant 0 : index
      %96 = vector.load %arg16[%c0_61, %c0_62] : memref<256x64xbf16, #tpu.memory_space<vmem>>, vector<256x64xbf16>
      tpu.vector_store %arg16[%c0_61, %c0_62], %95 {strides = array<i32>} : memref<256x64xbf16, #tpu.memory_space<vmem>>, vector<256x64xbf16>,
      %c0_63 = arith.constant 0 : index
      %c0_64 = arith.constant 0 : index
      %97 = vector.load %arg9[%c0_63, %c0_64] : memref<64x64xbf16, #tpu.memory_space<vmem>>, vector<64x64xbf16>
      %cst_65 = arith.constant dense<0.000000e+00> : vector<256x64xf32>
      %98 = tpu.matmul %89, %97, %cst_65 {dimension_numbers = #tpu.dot_dimension_numbers<[1], [0], [0], [1], [0, 0, 1, 1], [], []>} : vector<256x64xbf16>, vector<64x64xbf16>, vector<256x64xf32> -> vector<256x64xf32>
      %c0_66 = arith.constant 0 : index
      %c0_67 = arith.constant 0 : index
      %99 = vector.load %arg10[%c0_66, %c0_67] : memref<1x64xf32, #tpu.memory_space<vmem>>, vector<1x64xf32>
      %100 = vector.broadcast %99 : vector<1x64xf32> to vector<256x64xf32>
      %101 = arith.addf %98, %100 : vector<256x64xf32>
      %102 = tpu.transpose %101, [1, 0] : vector<256x64xf32> -> vector<64x256xf32>
      %103 = arith.truncf %102 : vector<64x256xf32> to vector<64x256xbf16>
      %c0_68 = arith.constant 0 : index
      %c0_69 = arith.constant 0 : index
      %104 = vector.load %arg17[%c0_68, %c0_69] : memref<64x256xbf16, #tpu.memory_space<vmem>>, vector<64x256xbf16>
      tpu.vector_store %arg17[%c0_68, %c0_69], %103 {strides = array<i32>} : memref<64x256xbf16, #tpu.memory_space<vmem>>, vector<64x256xbf16>,
      %c0_70 = arith.constant 0 : index
      %c0_71 = arith.constant 0 : index
      %105 = vector.load %arg11[%c0_70, %c0_71] : memref<64x64xbf16, #tpu.memory_space<vmem>>, vector<64x64xbf16>
      %cst_72 = arith.constant dense<0.000000e+00> : vector<256x64xf32>
      %106 = tpu.matmul %89, %105, %cst_72 {dimension_numbers = #tpu.dot_dimension_numbers<[1], [0], [0], [1], [0, 0, 1, 1], [], []>} : vector<256x64xbf16>, vector<64x64xbf16>, vector<256x64xf32> -> vector<256x64xf32>
      %c0_73 = arith.constant 0 : index
      %c0_74 = arith.constant 0 : index
      %107 = vector.load %arg12[%c0_73, %c0_74] : memref<1x64xf32, #tpu.memory_space<vmem>>, vector<1x64xf32>
      %108 = vector.broadcast %107 : vector<1x64xf32> to vector<256x64xf32>
      %109 = arith.addf %106, %108 : vector<256x64xf32>
      %110 = arith.truncf %109 : vector<256x64xf32> to vector<256x64xbf16>
      %c0_75 = arith.constant 0 : index
      %c0_76 = arith.constant 0 : index
      %111 = vector.load %arg18[%c0_75, %c0_76] : memref<256x64xbf16, #tpu.memory_space<vmem>>, vector<256x64xbf16>
      tpu.vector_store %arg18[%c0_75, %c0_76], %110 {strides = array<i32>} : memref<256x64xbf16, #tpu.memory_space<vmem>>, vector<256x64xbf16>,
    } else {
    }
    %c256_i32 = arith.constant 256 : i32
    %3 = arith.muli %arg1, %c256_i32 : i32
    %4 = tpu.assume_multiple %3, 256 : i32
    %c0 = arith.constant 0 : index
    %5 = arith.index_cast %4 : i32 to index
    %c0_1 = arith.constant 0 : index
    %6 = vector.load %arg2[%c0, %5, %c0_1] : memref<1x256x64xbf16, #tpu.memory_space<vmem>>, vector<1x256x64xbf16>
    %7 = vector.shape_cast %6 : vector<1x256x64xbf16> to vector<256x64xbf16>
    %8 = arith.extf %7 : vector<256x64xbf16> to vector<256x64xf32>
    %9 = arith.index_cast %4 : i32 to index
    %c0_2 = arith.constant 0 : index
    %10 = vector.load %arg16[%9, %c0_2] : memref<256x64xbf16, #tpu.memory_space<vmem>>, vector<256x32xbf16>
    %c0_3 = arith.constant 0 : index
    %c0_4 = arith.constant 0 : index
    %11 = vector.load %arg17[%c0_3, %c0_4] : memref<64x256xbf16, #tpu.memory_space<vmem>>, vector<32x256xbf16>
    %c0_5 = arith.constant 0 : index
    %c0_6 = arith.constant 0 : index
    %12 = vector.load %arg18[%c0_5, %c0_6] : memref<256x64xbf16, #tpu.memory_space<vmem>>, vector<256x32xbf16>
    %cst = arith.constant dense<0.000000e+00> : vector<256x256xf32>
    %13 = tpu.matmul %10, %11, %cst {dimension_numbers = #tpu.dot_dimension_numbers<[1], [0], [0], [1], [0, 0, 1, 1], [], []>} : vector<256x32xbf16>, vector<32x256xbf16>, vector<256x256xf32> -> vector<256x256xf32>
    %cst_7 = arith.constant dense<0xFF800000> : vector<256xf32>
    %14 = vector.multi_reduction <maximumf>, %13, %cst_7 [1] : vector<256x256xf32> to vector<256xf32>
    %15 = vector.shape_cast %14 : vector<256xf32> to vector<256x1xf32>
    %16 = vector.broadcast %15 : vector<256x1xf32> to vector<256x256xf32>
    %17 = arith.subf %13, %16 : vector<256x256xf32>
    %18 = math.exp %17 : vector<256x256xf32>
    %cst_8 = arith.constant dense<0.000000e+00> : vector<256xf32>
    %19 = vector.multi_reduction <add>, %18, %cst_8 [1] : vector<256x256xf32> to vector<256xf32>
    %20 = vector.shape_cast %19 : vector<256xf32> to vector<256x1xf32>
    %21 = arith.truncf %18 : vector<256x256xf32> to vector<256x256xbf16>
    %cst_9 = arith.constant dense<0.000000e+00> : vector<256x32xf32>
    %22 = tpu.matmul %21, %12, %cst_9 {dimension_numbers = #tpu.dot_dimension_numbers<[1], [0], [0], [1], [0, 0, 1, 1], [], []>} : vector<256x256xbf16>, vector<256x32xbf16>, vector<256x32xf32> -> vector<256x32xf32>
    %23 = tpu.reciprocal %20 {approx = true} : vector<256x1xf32> -> vector<256x1xf32>
    %24 = vector.broadcast %23 : vector<256x1xf32> to vector<256x32xf32>
    %25 = arith.mulf %22, %24 : vector<256x32xf32>
    %c0_10 = arith.constant 0 : index
    %c0_11 = arith.constant 0 : index
    %26 = vector.load %arg19[%c0_10, %c0_11] : memref<256x64xf32, #tpu.memory_space<vmem>>, vector<256x32xf32>
    tpu.vector_store %arg19[%c0_10, %c0_11], %25 {strides = array<i32>} : memref<256x64xf32, #tpu.memory_space<vmem>>, vector<256x32xf32>,
    %27 = arith.index_cast %4 : i32 to index
    %c32 = arith.constant 32 : index
    %28 = vector.load %arg16[%27, %c32] : memref<256x64xbf16, #tpu.memory_space<vmem>>, vector<256x32xbf16>
    %c32_12 = arith.constant 32 : index
    %c0_13 = arith.constant 0 : index
    %29 = vector.load %arg17[%c32_12, %c0_13] : memref<64x256xbf16, #tpu.memory_space<vmem>>, vector<32x256xbf16>
    %c0_14 = arith.constant 0 : index
    %c32_15 = arith.constant 32 : index
    %30 = vector.load %arg18[%c0_14, %c32_15] : memref<256x64xbf16, #tpu.memory_space<vmem>>, vector<256x32xbf16>
    %cst_16 = arith.constant dense<0.000000e+00> : vector<256x256xf32>
    %31 = tpu.matmul %28, %29, %cst_16 {dimension_numbers = #tpu.dot_dimension_numbers<[1], [0], [0], [1], [0, 0, 1, 1], [], []>} : vector<256x32xbf16>, vector<32x256xbf16>, vector<256x256xf32> -> vector<256x256xf32>
    %cst_17 = arith.constant dense<0xFF800000> : vector<256xf32>
    %32 = vector.multi_reduction <maximumf>, %31, %cst_17 [1] : vector<256x256xf32> to vector<256xf32>
    %33 = vector.shape_cast %32 : vector<256xf32> to vector<256x1xf32>
    %34 = vector.broadcast %33 : vector<256x1xf32> to vector<256x256xf32>
    %35 = arith.subf %31, %34 : vector<256x256xf32>
    %36 = math.exp %35 : vector<256x256xf32>
    %cst_18 = arith.constant dense<0.000000e+00> : vector<256xf32>
    %37 = vector.multi_reduction <add>, %36, %cst_18 [1] : vector<256x256xf32> to vector<256xf32>
    %38 = vector.shape_cast %37 : vector<256xf32> to vector<256x1xf32>
    %39 = arith.truncf %36 : vector<256x256xf32> to vector<256x256xbf16>
    %cst_19 = arith.constant dense<0.000000e+00> : vector<256x32xf32>
    %40 = tpu.matmul %39, %30, %cst_19 {dimension_numbers = #tpu.dot_dimension_numbers<[1], [0], [0], [1], [0, 0, 1, 1], [], []>} : vector<256x256xbf16>, vector<256x32xbf16>, vector<256x32xf32> -> vector<256x32xf32>
    %41 = tpu.reciprocal %38 {approx = true} : vector<256x1xf32> -> vector<256x1xf32>
    %42 = vector.broadcast %41 : vector<256x1xf32> to vector<256x32xf32>
    %43 = arith.mulf %40, %42 : vector<256x32xf32>
    %c0_20 = arith.constant 0 : index
    %c32_21 = arith.constant 32 : index
    %44 = vector.load %arg19[%c0_20, %c32_21] : memref<256x64xf32, #tpu.memory_space<vmem>>, vector<256x32xf32>
    tpu.vector_store %arg19[%c0_20, %c32_21], %43 {strides = array<i32>} : memref<256x64xf32, #tpu.memory_space<vmem>>, vector<256x32xf32>,
    %c0_22 = arith.constant 0 : index
    %c0_23 = arith.constant 0 : index
    %45 = vector.load %arg19[%c0_22, %c0_23] : memref<256x64xf32, #tpu.memory_space<vmem>>, vector<256x64xf32>
    %46 = arith.truncf %45 : vector<256x64xf32> to vector<256x64xbf16>
    %c0_24 = arith.constant 0 : index
    %c0_25 = arith.constant 0 : index
    %47 = vector.load %arg13[%c0_24, %c0_25] : memref<64x64xbf16, #tpu.memory_space<vmem>>, vector<64x64xbf16>
    %cst_26 = arith.constant dense<0.000000e+00> : vector<256x64xf32>
    %48 = tpu.matmul %46, %47, %cst_26 {dimension_numbers = #tpu.dot_dimension_numbers<[1], [0], [0], [1], [0, 0, 1, 1], [], []>} : vector<256x64xbf16>, vector<64x64xbf16>, vector<256x64xf32> -> vector<256x64xf32>
    %c0_27 = arith.constant 0 : index
    %c0_28 = arith.constant 0 : index
    %49 = vector.load %arg14[%c0_27, %c0_28] : memref<1x64xf32, #tpu.memory_space<vmem>>, vector<1x64xf32>
    %50 = vector.broadcast %49 : vector<1x64xf32> to vector<256x64xf32>
    %51 = arith.addf %48, %50 : vector<256x64xf32>
    %52 = arith.addf %51, %8 : vector<256x64xf32>
    %c0_29 = arith.constant 0 : index
    %c0_30 = arith.constant 0 : index
    %c0_31 = arith.constant 0 : index
    %53 = vector.load %arg15[%c0_29, %c0_30, %c0_31] : memref<1x256x64xf32, #tpu.memory_space<vmem>>, vector<1x256x64xf32>
    %54 = vector.shape_cast %53 : vector<1x256x64xf32> to vector<256x64xf32>
    %55 = vector.shape_cast %52 : vector<256x64xf32> to vector<1x256x64xf32>
    tpu.vector_store %arg15[%c0_29, %c0_30, %c0_31], %55 {strides = array<i32>} : memref<1x256x64xf32, #tpu.memory_space<vmem>>, vector<1x256x64xf32>,
    return
  }
  func.func @transform_0(%arg0: i32, %arg1: i32) -> (i32, i32, i32) {
    %c0_i32 = arith.constant 0 : i32
    %c0_i32_0 = arith.constant 0 : i32
    %c0_i32_1 = arith.constant 0 : i32
    return %arg0, %c0_i32, %c0_i32_0 : i32, i32, i32
  }
  func.func @transform_1(%arg0: i32, %arg1: i32) -> (i32, i32) {
    %c0_i32 = arith.constant 0 : i32
    %c0_i32_0 = arith.constant 0 : i32
    %c0_i32_1 = arith.constant 0 : i32
    return %c0_i32, %c0_i32_0 : i32, i32
  }
  func.func @transform_2(%arg0: i32, %arg1: i32) -> (i32, i32) {
    %c0_i32 = arith.constant 0 : i32
    %c0_i32_0 = arith.constant 0 : i32
    %c0_i32_1 = arith.constant 0 : i32
    return %c0_i32, %c0_i32_0 : i32, i32
  }
  func.func @transform_3(%arg0: i32, %arg1: i32) -> (i32, i32) {
    %c0_i32 = arith.constant 0 : i32
    %c0_i32_0 = arith.constant 0 : i32
    %c0_i32_1 = arith.constant 0 : i32
    return %c0_i32, %c0_i32_0 : i32, i32
  }
  func.func @transform_4(%arg0: i32, %arg1: i32) -> (i32, i32) {
    %c0_i32 = arith.constant 0 : i32
    %c0_i32_0 = arith.constant 0 : i32
    %c0_i32_1 = arith.constant 0 : i32
    return %c0_i32, %c0_i32_0 : i32, i32
  }
  func.func @transform_5(%arg0: i32, %arg1: i32) -> (i32, i32) {
    %c0_i32 = arith.constant 0 : i32
    %c0_i32_0 = arith.constant 0 : i32
    %c0_i32_1 = arith.constant 0 : i32
    return %c0_i32, %c0_i32_0 : i32, i32
  }
  func.func @transform_6(%arg0: i32, %arg1: i32) -> (i32, i32) {
    %c0_i32 = arith.constant 0 : i32
    %c0_i32_0 = arith.constant 0 : i32
    %c0_i32_1 = arith.constant 0 : i32
    return %c0_i32, %c0_i32_0 : i32, i32
  }
  func.func @transform_7(%arg0: i32, %arg1: i32) -> (i32, i32) {
    %c0_i32 = arith.constant 0 : i32
    %c0_i32_0 = arith.constant 0 : i32
    %c0_i32_1 = arith.constant 0 : i32
    return %c0_i32, %c0_i32_0 : i32, i32
  }
  func.func @transform_8(%arg0: i32, %arg1: i32) -> (i32, i32) {
    %c0_i32 = arith.constant 0 : i32
    %c0_i32_0 = arith.constant 0 : i32
    %c0_i32_1 = arith.constant 0 : i32
    return %c0_i32, %c0_i32_0 : i32, i32
  }
  func.func @transform_9(%arg0: i32, %arg1: i32) -> (i32, i32) {
    %c0_i32 = arith.constant 0 : i32
    %c0_i32_0 = arith.constant 0 : i32
    %c0_i32_1 = arith.constant 0 : i32
    return %c0_i32, %c0_i32_0 : i32, i32
  }
  func.func @transform_10(%arg0: i32, %arg1: i32) -> (i32, i32) {
    %c0_i32 = arith.constant 0 : i32
    %c0_i32_0 = arith.constant 0 : i32
    %c0_i32_1 = arith.constant 0 : i32
    return %c0_i32, %c0_i32_0 : i32, i32
  }
  func.func @transform_11(%arg0: i32, %arg1: i32) -> (i32, i32) {
    %c0_i32 = arith.constant 0 : i32
    %c0_i32_0 = arith.constant 0 : i32
    %c0_i32_1 = arith.constant 0 : i32
    return %c0_i32, %c0_i32_0 : i32, i32
  }
  func.func @transform_12(%arg0: i32, %arg1: i32) -> (i32, i32) {
    %c0_i32 = arith.constant 0 : i32
    %c0_i32_0 = arith.constant 0 : i32
    %c0_i32_1 = arith.constant 0 : i32
    return %c0_i32, %c0_i32_0 : i32, i32
  }
  func.func @transform_13(%arg0: i32, %arg1: i32) -> (i32, i32, i32) {
    %c0_i32 = arith.constant 0 : i32
    %c0_i32_0 = arith.constant 0 : i32
    return %arg0, %arg1, %c0_i32 : i32, i32, i32
  }
}

</mosaic_0001>

<llo_original>
// kernel: tpu_custom_call.1
$region0: #{tpu_custom_call.1}
  #allocation0 [shape = 'u32[]', space=smem, size = 0x4, offset = 0x4, fixed_abs, tag = 'smem constant byte address 0x4 - core index']
  #allocation1 [shape = 'u32[144,128]{1,0:T(1,128)}', space=vmem, size = 0x12000, scoped, tag = 'internal scratch']
  #allocation2 [shape = 'bf16[256,64]{1,0:T(16,128)(2,1)}', space=vmem, size = 0x10000, scoped, tag = 'scratch operand']
  #allocation3 [shape = 'bf16[64,256]{1,0:T(16,128)(2,1)}', space=vmem, size = 0x8000, scoped, tag = 'scratch operand']
  #allocation4 [shape = 'bf16[256,64]{1,0:T(16,128)(2,1)}', space=vmem, size = 0x10000, scoped, tag = 'scratch operand']
  #allocation5 [shape = 'f32[256,64]{1,0:T(8,128)}', space=vmem, size = 0x20000, scoped, tag = 'scratch operand']
  %s0 = inlined_call_operand.hbm [shape: bf16[2,256,64], index: 0, kind: input, shape index: {}]
  %s1 = inlined_call_operand.hbm [shape: f32[64,32], index: 1, kind: input, shape index: {}]
  %s2 = inlined_call_operand.hbm [shape: f32[32,64], index: 2, kind: input, shape index: {}]
  %s3 = inlined_call_operand.hbm [shape: f32[1,64], index: 3, kind: input, shape index: {}]
  %s4 = inlined_call_operand.hbm [shape: f32[1,64], index: 4, kind: input, shape index: {}]
  %s5 = inlined_call_operand.hbm [shape: bf16[64,64], index: 5, kind: input, shape index: {}]
  %s6 = inlined_call_operand.hbm [shape: f32[1,64], index: 6, kind: input, shape index: {}]
  %s7 = inlined_call_operand.hbm [shape: bf16[64,64], index: 7, kind: input, shape index: {}]
  %s8 = inlined_call_operand.hbm [shape: f32[1,64], index: 8, kind: input, shape index: {}]
  %s9 = inlined_call_operand.hbm [shape: bf16[64,64], index: 9, kind: input, shape index: {}]
  %s10 = inlined_call_operand.hbm [shape: f32[1,64], index: 10, kind: input, shape index: {}]
  %s11 = inlined_call_operand.hbm [shape: bf16[64,64], index: 11, kind: input, shape index: {}]
  %s12 = inlined_call_operand.hbm [shape: f32[1,64], index: 12, kind: input, shape index: {}]
  %s13 = inlined_call_operand.hbm [shape: f32[2,256,64], index: 13, kind: output, shape index: {}]
  %s14 = sld [smem:[#allocation0]]
  $region141: #{tpu_custom_call.1} parent=0
    _
  %s16 = ssub.s32 1, %s14
  %s17 = scalar_select 0, %s16, %s14
  $region1: #{tpu_custom_call.1} parent=0
    #allocation6 [shape = 'u8[65536]{0}', space=vmem, size = 0x10000, scoped, tag = 'input window, operand 0, single buffered']
    #allocation7 [shape = 's32[2]{0}', space=sflag, size = 0x8, scoped, tag = 'scoped memory for tpu_custom_call.1']
    #allocation8 [shape = 's32[2]{0}', space=sflag, size = 0x8, scoped, tag = 'scoped memory for tpu_custom_call.1']
    #allocation9 [shape = 'u8[32768]{0}', space=vmem, size = 0x8000, scoped, tag = 'input window, operand 1, single buffered']
    #allocation10 [shape = 's32[1]{0}', space=sflag, size = 0x4, scoped, tag = 'scoped memory for tpu_custom_call.1']
    #allocation11 [shape = 'u8[16384]{0}', space=vmem, size = 0x4000, scoped, tag = 'input window, operand 2, single buffered']
    #allocation12 [shape = 'u8[512]{0}', space=vmem, size = 0x400, scoped, tag = 'input window, operand 3, single buffered']
    #allocation13 [shape = 's32[1]{0}', space=sflag, size = 0x4, scoped, tag = 'scoped memory for tpu_custom_call.1']
    #allocation14 [shape = 'u8[512]{0}', space=vmem, size = 0x400, scoped, tag = 'input window, operand 4, single buffered']
    #allocation15 [shape = 'u8[16384]{0}', space=vmem, size = 0x4000, scoped, tag = 'input window, operand 5, single buffered']
    #allocation16 [shape = 's32[1]{0}', space=sflag, size = 0x4, scoped, tag = 'scoped memory for tpu_custom_call.1']
    #allocation17 [shape = 'u8[512]{0}', space=vmem, size = 0x400, scoped, tag = 'input window, operand 6, single buffered']
    #allocation18 [shape = 'u8[16384]{0}', space=vmem, size = 0x4000, scoped, tag = 'input window, operand 7, single buffered']
    #allocation19 [shape = 's32[1]{0}', space=sflag, size = 0x4, scoped, tag = 'scoped memory for tpu_custom_call.1']
    #allocation20 [shape = 'u8[512]{0}', space=vmem, size = 0x400, scoped, tag = 'input window, operand 8, single buffered']
    #allocation21 [shape = 'u8[16384]{0}', space=vmem, size = 0x4000, scoped, tag = 'input window, operand 9, single buffered']
    #allocation22 [shape = 's32[1]{0}', space=sflag, size = 0x4, scoped, tag = 'scoped memory for tpu_custom_call.1']
    #allocation23 [shape = 'u8[512]{0}', space=vmem, size = 0x400, scoped, tag = 'input window, operand 10, single buffered']
    #allocation24 [shape = 'u8[16384]{0}', space=vmem, size = 0x4000, scoped, tag = 'input window, operand 11, single buffered']
    #allocation25 [shape = 's32[1]{0}', space=sflag, size = 0x4, scoped, tag = 'scoped memory for tpu_custom_call.1']
    #allocation26 [shape = 'u8[512]{0}', space=vmem, size = 0x400, scoped, tag = 'input window, operand 12, single buffered']
    #allocation27 [shape = 'u8[262144]{0}', space=vmem, size = 0x40000, scoped, tag = 'output window, operand 0']
    %18 = vsyncpa [#allocation7], 0
    %19 = vsyncpa [#allocation10], 0
    %20 = vsyncpa [#allocation13], 0
    %21 = vsyncpa [#allocation16], 0
    %22 = vsyncpa [#allocation19], 0
    %23 = vsyncpa [#allocation22], 0
    %24 = vsyncpa [#allocation25], 0
    %25 = vsyncpa [#allocation8], 0
    %s26 = scalar_lea.sflag [#allocation8], 1
    %27 = vsyncpa %s26, 0
    loop: start=0, step=1, limit=4
    $region2: #{tpu_custom_call.1} parent=1 // loop_pre_header
      _
    $region3: #{tpu_custom_call.1} parent=1 // loop_header
      %s29 = sphi 0, %s33
      %p30 = scmp.ge.s32.totalorder %s29, 4
      %s36 = sphi 0, %s48
      %s37 = sphi 0, %s44
      %s38 = sphi 0, %s36
      %s39 = sphi 0, %s37
      %s40 = sphi 0, %s38
      %s41 = sphi 0, %s39
      %s51 = sphi 0, %s53
      %s54 = sphi 0, %s51
      %s55 = sphi 0, %s54
      %s71 = sphi 0, %s55
      %s75 = sphi 0, %s75
      %s77 = sphi 0, %s75
      %s78 = sphi 0, %s77
      %s92 = sphi 0, %s78
      %s96 = sphi 0, %s96
      %s98 = sphi 0, %s96
      %s99 = sphi 0, %s98
      %s113 = sphi 0, %s99
      %s117 = sphi 0, %s117
      %s119 = sphi 0, %s117
      %s120 = sphi 0, %s119
      %s134 = sphi 0, %s120
      %s138 = sphi 0, %s138
      %s140 = sphi 0, %s138
      %s141 = sphi 0, %s140
      %s155 = sphi 0, %s141
      %s159 = sphi 0, %s159
      %s161 = sphi 0, %s159
      %s162 = sphi 0, %s161
      %s176 = sphi 0, %s162
      %s180 = sphi 0, %s180
      %s182 = sphi 0, %s180
      %s183 = sphi 0, %s182
      %s197 = sphi 0, %s183
      %s201 = sphi 0, %s201
      %s203 = sphi 0, %s201
      %s204 = sphi 0, %s203
      %s218 = sphi 0, %s204
      %s222 = sphi 0, %s222
      %s224 = sphi 0, %s222
      %s225 = sphi 0, %s224
      %s239 = sphi 0, %s225
      %s243 = sphi 0, %s243
      %s245 = sphi 0, %s243
      %s246 = sphi 0, %s245
      %s260 = sphi 0, %s246
      %s264 = sphi 0, %s264
      %s266 = sphi 0, %s264
      %s267 = sphi 0, %s266
      %s281 = sphi 0, %s267
      %s285 = sphi 0, %s285
      %s287 = sphi 0, %s285
      %s288 = sphi 0, %s287
      %s302 = sphi 0, %s288
      %s306 = sphi 0, %s306
      %s308 = sphi 0, %s306
      %s309 = sphi 0, %s308
      %s323 = sphi 0, %s309
      %s331 = sphi 0, %s333
      %s334 = sphi 0, %s331
      %s335 = sphi 0, %s334
      %s351 = sphi 0, %s335
    $region4: #{tpu_custom_call.1} parent=1 // loop_header_branch
      %32 = sbr.rel (%p30) target = $region8
    $region5: #{tpu_custom_call.1} parent=1 // loop_body
      %s34 = ssub.s32 %s29, 1
      %s35 = ssub.s32 %s29, 2
      %s42 = sadd.s32 1, %s37
      %p43 = scmp.ge.s32.totalorder %s42, 1
      %s44 = scalar_select %p43, 0, %s42
      %s45 = sadd.s32 1, %s36
      %s46 = scalar_select %p43, %s45, %s36
      %p47 = scmp.ge.s32.totalorder %s46, 2
      %s48 = scalar_select %p47, 0, %s46
      %s49 = ssub.s32 %s36, %s48
      %p50 = scmp.eq.s32.totalorder %s49, 0
      %s52 = sadd.s32 %s51, 1
      %s53 = scalar_select %p50, %s51, %s52
      %p56 = pneg %p50
      %p57 = scmp.eq.s32.totalorder %s29, 1
      %p58 = por %p56, %p57
      %p59 = scmp.ne.s32.totalorder %s51, %s54
      %p60 = scmp.eq.s32.totalorder %s29, 0
      %p61 = por %p59, %p60
      %p62 = scmp.ne.s32.totalorder %s51, %s54
      %p63 = scmp.eq.s32.totalorder %s34, 1
      %p64 = por %p62, %p63
      %p65 = scmp.ne.s32.totalorder %s54, %s55
      %p66 = scmp.eq.s32.totalorder %s34, 0
      %p67 = por %p65, %p66
      %p68 = scmp.ne.s32.totalorder %s54, %s55
      %p69 = scmp.eq.s32.totalorder %s35, 1
      %p70 = por %p68, %p69
      %p72 = scmp.ne.s32.totalorder %s55, %s71
      %p73 = scmp.eq.s32.totalorder %s35, 0
      %p74 = por %p72, %p73
      %s76 = sadd.s32 %s75, 1
      %p79 = scmp.eq.s32.totalorder %s29, 1
      %p80 = scmp.ne.s32.totalorder %s75, %s77
      %p81 = scmp.eq.s32.totalorder %s29, 0
      %p82 = por %p80, %p81
      %p83 = scmp.ne.s32.totalorder %s75, %s77
      %p84 = scmp.eq.s32.totalorder %s34, 1
      %p85 = por %p83, %p84
      %p86 = scmp.ne.s32.totalorder %s77, %s78
      %p87 = scmp.eq.s32.totalorder %s34, 0
      %p88 = por %p86, %p87
      %p89 = scmp.ne.s32.totalorder %s77, %s78
      %p90 = scmp.eq.s32.totalorder %s35, 1
      %p91 = por %p89, %p90
      %p93 = scmp.ne.s32.totalorder %s78, %s92
      %p94 = scmp.eq.s32.totalorder %s35, 0
      %p95 = por %p93, %p94
      %s97 = sadd.s32 %s96, 1
      %p100 = scmp.eq.s32.totalorder %s29, 1
      %p101 = scmp.ne.s32.totalorder %s96, %s98
      %p102 = scmp.eq.s32.totalorder %s29, 0
      %p103 = por %p101, %p102
      %p104 = scmp.ne.s32.totalorder %s96, %s98
      %p105 = scmp.eq.s32.totalorder %s34, 1
      %p106 = por %p104, %p105
      %p107 = scmp.ne.s32.totalorder %s98, %s99
      %p108 = scmp.eq.s32.totalorder %s34, 0
      %p109 = por %p107, %p108
      %p110 = scmp.ne.s32.totalorder %s98, %s99
      %p111 = scmp.eq.s32.totalorder %s35, 1
      %p112 = por %p110, %p111
      %p114 = scmp.ne.s32.totalorder %s99, %s113
      %p115 = scmp.eq.s32.totalorder %s35, 0
      %p116 = por %p114, %p115
      %s118 = sadd.s32 %s117, 1
      %p121 = scmp.eq.s32.totalorder %s29, 1
      %p122 = scmp.ne.s32.totalorder %s117, %s119
      %p123 = scmp.eq.s32.totalorder %s29, 0
      %p124 = por %p122, %p123
      %p125 = scmp.ne.s32.totalorder %s117, %s119
      %p126 = scmp.eq.s32.totalorder %s34, 1
      %p127 = por %p125, %p126
      %p128 = scmp.ne.s32.totalorder %s119, %s120
      %p129 = scmp.eq.s32.totalorder %s34, 0
      %p130 = por %p128, %p129
      %p131 = scmp.ne.s32.totalorder %s119, %s120
      %p132 = scmp.eq.s32.totalorder %s35, 1
      %p133 = por %p131, %p132
      %p135 = scmp.ne.s32.totalorder %s120, %s134
      %p136 = scmp.eq.s32.totalorder %s35, 0
      %p137 = por %p135, %p136
      %s139 = sadd.s32 %s138, 1
      %p142 = scmp.eq.s32.totalorder %s29, 1
      %p143 = scmp.ne.s32.totalorder %s138, %s140
      %p144 = scmp.eq.s32.totalorder %s29, 0
      %p145 = por %p143, %p144
      %p146 = scmp.ne.s32.totalorder %s138, %s140
      %p147 = scmp.eq.s32.totalorder %s34, 1
      %p148 = por %p146, %p147
      %p149 = scmp.ne.s32.totalorder %s140, %s141
      %p150 = scmp.eq.s32.totalorder %s34, 0
      %p151 = por %p149, %p150
      %p152 = scmp.ne.s32.totalorder %s140, %s141
      %p153 = scmp.eq.s32.totalorder %s35, 1
      %p154 = por %p152, %p153
      %p156 = scmp.ne.s32.totalorder %s141, %s155
      %p157 = scmp.eq.s32.totalorder %s35, 0
      %p158 = por %p156, %p157
      %s160 = sadd.s32 %s159, 1
      %p163 = scmp.eq.s32.totalorder %s29, 1
      %p164 = scmp.ne.s32.totalorder %s159, %s161
      %p165 = scmp.eq.s32.totalorder %s29, 0
      %p166 = por %p164, %p165
      %p167 = scmp.ne.s32.totalorder %s159, %s161
      %p168 = scmp.eq.s32.totalorder %s34, 1
      %p169 = por %p167, %p168
      %p170 = scmp.ne.s32.totalorder %s161, %s162
      %p171 = scmp.eq.s32.totalorder %s34, 0
      %p172 = por %p170, %p171
      %p173 = scmp.ne.s32.totalorder %s161, %s162
      %p174 = scmp.eq.s32.totalorder %s35, 1
      %p175 = por %p173, %p174
      %p177 = scmp.ne.s32.totalorder %s162, %s176
      %p178 = scmp.eq.s32.totalorder %s35, 0
      %p179 = por %p177, %p178
      %s181 = sadd.s32 %s180, 1
      %p184 = scmp.eq.s32.totalorder %s29, 1
      %p185 = scmp.ne.s32.totalorder %s180, %s182
      %p186 = scmp.eq.s32.totalorder %s29, 0
      %p187 = por %p185, %p186
      %p188 = scmp.ne.s32.totalorder %s180, %s182
      %p189 = scmp.eq.s32.totalorder %s34, 1
      %p190 = por %p188, %p189
      %p191 = scmp.ne.s32.totalorder %s182, %s183
      %p192 = scmp.eq.s32.totalorder %s34, 0
      %p193 = por %p191, %p192
      %p194 = scmp.ne.s32.totalorder %s182, %s183
      %p195 = scmp.eq.s32.totalorder %s35, 1
      %p196 = por %p194, %p195
      %p198 = scmp.ne.s32.totalorder %s183, %s197
      %p199 = scmp.eq.s32.totalorder %s35, 0
      %p200 = por %p198, %p199
      %s202 = sadd.s32 %s201, 1
      %p205 = scmp.eq.s32.totalorder %s29, 1
      %p206 = scmp.ne.s32.totalorder %s201, %s203
      %p207 = scmp.eq.s32.totalorder %s29, 0
      %p208 = por %p206, %p207
      %p209 = scmp.ne.s32.totalorder %s201, %s203
      %p210 = scmp.eq.s32.totalorder %s34, 1
      %p211 = por %p209, %p210
      %p212 = scmp.ne.s32.totalorder %s203, %s204
      %p213 = scmp.eq.s32.totalorder %s34, 0
      %p214 = por %p212, %p213
      %p215 = scmp.ne.s32.totalorder %s203, %s204
      %p216 = scmp.eq.s32.totalorder %s35, 1
      %p217 = por %p215, %p216
      %p219 = scmp.ne.s32.totalorder %s204, %s218
      %p220 = scmp.eq.s32.totalorder %s35, 0
      %p221 = por %p219, %p220
      %s223 = sadd.s32 %s222, 1
      %p226 = scmp.eq.s32.totalorder %s29, 1
      %p227 = scmp.ne.s32.totalorder %s222, %s224
      %p228 = scmp.eq.s32.totalorder %s29, 0
      %p229 = por %p227, %p228
      %p230 = scmp.ne.s32.totalorder %s222, %s224
      %p231 = scmp.eq.s32.totalorder %s34, 1
      %p232 = por %p230, %p231
      %p233 = scmp.ne.s32.totalorder %s224, %s225
      %p234 = scmp.eq.s32.totalorder %s34, 0
      %p235 = por %p233, %p234
      %p236 = scmp.ne.s32.totalorder %s224, %s225
      %p237 = scmp.eq.s32.totalorder %s35, 1
      %p238 = por %p236, %p237
      %p240 = scmp.ne.s32.totalorder %s225, %s239
      %p241 = scmp.eq.s32.totalorder %s35, 0
      %p242 = por %p240, %p241
      %s244 = sadd.s32 %s243, 1
      %p247 = scmp.eq.s32.totalorder %s29, 1
      %p248 = scmp.ne.s32.totalorder %s243, %s245
      %p249 = scmp.eq.s32.totalorder %s29, 0
      %p250 = por %p248, %p249
      %p251 = scmp.ne.s32.totalorder %s243, %s245
      %p252 = scmp.eq.s32.totalorder %s34, 1
      %p253 = por %p251, %p252
      %p254 = scmp.ne.s32.totalorder %s245, %s246
      %p255 = scmp.eq.s32.totalorder %s34, 0
      %p256 = por %p254, %p255
      %p257 = scmp.ne.s32.totalorder %s245, %s246
      %p258 = scmp.eq.s32.totalorder %s35, 1
      %p259 = por %p257, %p258
      %p261 = scmp.ne.s32.totalorder %s246, %s260
      %p262 = scmp.eq.s32.totalorder %s35, 0
      %p263 = por %p261, %p262
      %s265 = sadd.s32 %s264, 1
      %p268 = scmp.eq.s32.totalorder %s29, 1
      %p269 = scmp.ne.s32.totalorder %s264, %s266
      %p270 = scmp.eq.s32.totalorder %s29, 0
      %p271 = por %p269, %p270
      %p272 = scmp.ne.s32.totalorder %s264, %s266
      %p273 = scmp.eq.s32.totalorder %s34, 1
      %p274 = por %p272, %p273
      %p275 = scmp.ne.s32.totalorder %s266, %s267
      %p276 = scmp.eq.s32.totalorder %s34, 0
      %p277 = por %p275, %p276
      %p278 = scmp.ne.s32.totalorder %s266, %s267
      %p279 = scmp.eq.s32.totalorder %s35, 1
      %p280 = por %p278, %p279
      %p282 = scmp.ne.s32.totalorder %s267, %s281
      %p283 = scmp.eq.s32.totalorder %s35, 0
      %p284 = por %p282, %p283
      %s286 = sadd.s32 %s285, 1
      %p289 = scmp.eq.s32.totalorder %s29, 1
      %p290 = scmp.ne.s32.totalorder %s285, %s287
      %p291 = scmp.eq.s32.totalorder %s29, 0
      %p292 = por %p290, %p291
      %p293 = scmp.ne.s32.totalorder %s285, %s287
      %p294 = scmp.eq.s32.totalorder %s34, 1
      %p295 = por %p293, %p294
      %p296 = scmp.ne.s32.totalorder %s287, %s288
      %p297 = scmp.eq.s32.totalorder %s34, 0
      %p298 = por %p296, %p297
      %p299 = scmp.ne.s32.totalorder %s287, %s288
      %p300 = scmp.eq.s32.totalorder %s35, 1
      %p301 = por %p299, %p300
      %p303 = scmp.ne.s32.totalorder %s288, %s302
      %p304 = scmp.eq.s32.totalorder %s35, 0
      %p305 = por %p303, %p304
      %s307 = sadd.s32 %s306, 1
      %p310 = scmp.eq.s32.totalorder %s29, 1
      %p311 = scmp.ne.s32.totalorder %s306, %s308
      %p312 = scmp.eq.s32.totalorder %s29, 0
      %p313 = por %p311, %p312
      %p314 = scmp.ne.s32.totalorder %s306, %s308
      %p315 = scmp.eq.s32.totalorder %s34, 1
      %p316 = por %p314, %p315
      %p317 = scmp.ne.s32.totalorder %s308, %s309
      %p318 = scmp.eq.s32.totalorder %s34, 0
      %p319 = por %p317, %p318
      %p320 = scmp.ne.s32.totalorder %s308, %s309
      %p321 = scmp.eq.s32.totalorder %s35, 1
      %p322 = por %p320, %p321
      %p324 = scmp.ne.s32.totalorder %s309, %s323
      %p325 = scmp.eq.s32.totalorder %s35, 0
      %p326 = por %p324, %p325
      %s327 = ssub.s32 %s36, %s48
      %s328 = ssub.s32 %s37, %s44
      %s329 = sor.u32 %s327, %s328
      %p330 = scmp.eq.s32.totalorder %s329, 0
      %s332 = sadd.s32 %s331, 1
      %s333 = scalar_select %p330, %s331, %s332
      %p336 = pneg %p330
      %p337 = scmp.eq.s32.totalorder %s29, 1
      %p338 = por %p336, %p337
      %p339 = scmp.ne.s32.totalorder %s331, %s334
      %p340 = scmp.eq.s32.totalorder %s29, 0
      %p341 = por %p339, %p340
      %p342 = scmp.ne.s32.totalorder %s331, %s334
      %p343 = scmp.eq.s32.totalorder %s34, 1
      %p344 = por %p342, %p343
      %p345 = scmp.ne.s32.totalorder %s334, %s335
      %p346 = scmp.eq.s32.totalorder %s34, 0
      %p347 = por %p345, %p346
      %p348 = scmp.ne.s32.totalorder %s334, %s335
      %p349 = scmp.eq.s32.totalorder %s35, 1
      %p350 = por %p348, %p349
      %p352 = scmp.ne.s32.totalorder %s335, %s351
      %p353 = scmp.eq.s32.totalorder %s35, 0
      %p354 = por %p352, %p353
      %p355 = scmp.le.s32.totalorder 1, %s29
      %p356 = scmp.lt.s32.totalorder %s29, 3
      %p357 = pnand %p355, %p356
      %p358 = pneg %p357
      // Predicated region
      $region9: #{tpu_custom_call.1} parent=5 // pred_check
        _
      $region10: #{tpu_custom_call.1} parent=5 // pred_check_branch
        %360 = sbr.rel (%p357) target = $region12
      $region11: #{tpu_custom_call.1} parent=5 // pred_region
        %s361 = ssub.s32 %s29, 1
        // Predicated region
        $region13: #{tpu_custom_call.1} parent=11 // pred_check
          %p362 = pneg %p67
        $region14: #{tpu_custom_call.1} parent=11 // pred_check_branch
          %364 = sbr.rel (%p362) target = $region16
        $region15: #{tpu_custom_call.1} parent=11 // pred_region
          %s366 = ssub.s32 2048, 2048
          %367 = vsyncadd [#allocation7], %s366
          %s368 = smul.addr %s38, 32
          %s369 = smul.addr %s368, 64
          %s370 = scalar_lea.hbm %s0, %s369
          %s371 = sshll.u32 [#allocation6], 4
          %s372 = int_to_ptr.vmem [resolvable:$true] %s371
          %377 = dma.hbm_to_vmem [thread:$0]  %s370, 2048, %s372, [#allocation7], 64, 64, 4
        $region16: #{tpu_custom_call.1} parent=11 // pred_fallthru
          _
        // Predicated region
        $region17: #{tpu_custom_call.1} parent=11 // pred_check
          %p378 = pneg %p88
        $region18: #{tpu_custom_call.1} parent=11 // pred_check_branch
          %380 = sbr.rel (%p378) target = $region20
        $region19: #{tpu_custom_call.1} parent=11 // pred_region
          %s382 = ssub.s32 1024, 1024
          %383 = vsyncadd [#allocation10], %s382
          %s384 = sshll.u32 [#allocation9], 4
          %s385 = int_to_ptr.vmem [resolvable:$true] %s384
          %390 = dma.hbm_to_vmem [thread:$0]  %s1, 1024, %s385, [#allocation10], 128, 128, 8
        $region20: #{tpu_custom_call.1} parent=11 // pred_fallthru
          _
        // Predicated region
        $region21: #{tpu_custom_call.1} parent=11 // pred_check
          %p391 = pneg %p109
        $region22: #{tpu_custom_call.1} parent=11 // pred_check_branch
          %393 = sbr.rel (%p391) target = $region24
        $region23: #{tpu_custom_call.1} parent=11 // pred_region
          %s395 = ssub.s32 512, 512
          %396 = vsyncadd [#allocation10], %s395
          %s397 = sshll.u32 [#allocation11], 4
          %s398 = int_to_ptr.vmem [resolvable:$true] %s397
          %403 = dma.hbm_to_vmem [thread:$0]  %s2, 512, %s398, [#allocation10], 128, 128, 8
        $region24: #{tpu_custom_call.1} parent=11 // pred_fallthru
          _
        // Predicated region
        $region25: #{tpu_custom_call.1} parent=11 // pred_check
          %p404 = pneg %p130
        $region26: #{tpu_custom_call.1} parent=11 // pred_check_branch
          %406 = sbr.rel (%p404) target = $region28
        $region27: #{tpu_custom_call.1} parent=11 // pred_region
          %s408 = ssub.s32 16, 16
          %409 = vsyncadd [#allocation13], %s408
          %s411 = sshll.u32 [#allocation12], 4
          %s412 = int_to_ptr.vmem [resolvable:$true] %s411
          %414 = dma.hbm_to_vmem [thread:$0]  %s3, 16, %s412, [#allocation13]
        $region28: #{tpu_custom_call.1} parent=11 // pred_fallthru
          _
        // Predicated region
        $region29: #{tpu_custom_call.1} parent=11 // pred_check
          %p415 = pneg %p151
        $region30: #{tpu_custom_call.1} parent=11 // pred_check_branch
          %417 = sbr.rel (%p415) target = $region32
        $region31: #{tpu_custom_call.1} parent=11 // pred_region
          %s419 = ssub.s32 16, 16
          %420 = vsyncadd [#allocation13], %s419
          %s422 = sshll.u32 [#allocation14], 4
          %s423 = int_to_ptr.vmem [resolvable:$true] %s422
          %425 = dma.hbm_to_vmem [thread:$0]  %s4, 16, %s423, [#allocation13]
        $region32: #{tpu_custom_call.1} parent=11 // pred_fallthru
          _
        // Predicated region
        $region33: #{tpu_custom_call.1} parent=11 // pred_check
          %p426 = pneg %p172
        $region34: #{tpu_custom_call.1} parent=11 // pred_check_branch
          %428 = sbr.rel (%p426) target = $region36
        $region35: #{tpu_custom_call.1} parent=11 // pred_region
          %s430 = ssub.s32 512, 512
          %431 = vsyncadd [#allocation16], %s430
          %s432 = sshll.u32 [#allocation15], 4
          %s433 = int_to_ptr.vmem [resolvable:$true] %s432
          %438 = dma.hbm_to_vmem [thread:$0]  %s5, 512, %s433, [#allocation16], 64, 64, 4
        $region36: #{tpu_custom_call.1} parent=11 // pred_fallthru
          _
        // Predicated region
        $region37: #{tpu_custom_call.1} parent=11 // pred_check
          %p439 = pneg %p193
        $region38: #{tpu_custom_call.1} parent=11 // pred_check_branch
          %441 = sbr.rel (%p439) target = $region40
        $region39: #{tpu_custom_call.1} parent=11 // pred_region
          %s443 = ssub.s32 16, 16
          %444 = vsyncadd [#allocation16], %s443
          %s446 = sshll.u32 [#allocation17], 4
          %s447 = int_to_ptr.vmem [resolvable:$true] %s446
          %449 = dma.hbm_to_vmem [thread:$0]  %s6, 16, %s447, [#allocation16]
        $region40: #{tpu_custom_call.1} parent=11 // pred_fallthru
          _
        // Predicated region
        $region41: #{tpu_custom_call.1} parent=11 // pred_check
          %p450 = pneg %p214
        $region42: #{tpu_custom_call.1} parent=11 // pred_check_branch
          %452 = sbr.rel (%p450) target = $region44
        $region43: #{tpu_custom_call.1} parent=11 // pred_region
          %s454 = ssub.s32 512, 512
          %455 = vsyncadd [#allocation19], %s454
          %s456 = sshll.u32 [#allocation18], 4
          %s457 = int_to_ptr.vmem [resolvable:$true] %s456
          %462 = dma.hbm_to_vmem [thread:$0]  %s7, 512, %s457, [#allocation19], 64, 64, 4
        $region44: #{tpu_custom_call.1} parent=11 // pred_fallthru
          _
        // Predicated region
        $region45: #{tpu_custom_call.1} parent=11 // pred_check
          %p463 = pneg %p235
        $region46: #{tpu_custom_call.1} parent=11 // pred_check_branch
          %465 = sbr.rel (%p463) target = $region48
        $region47: #{tpu_custom_call.1} parent=11 // pred_region
          %s467 = ssub.s32 16, 16
          %468 = vsyncadd [#allocation19], %s467
          %s470 = sshll.u32 [#allocation20], 4
          %s471 = int_to_ptr.vmem [resolvable:$true] %s470
          %473 = dma.hbm_to_vmem [thread:$0]  %s8, 16, %s471, [#allocation19]
        $region48: #{tpu_custom_call.1} parent=11 // pred_fallthru
          _
        // Predicated region
        $region49: #{tpu_custom_call.1} parent=11 // pred_check
          %p474 = pneg %p256
        $region50: #{tpu_custom_call.1} parent=11 // pred_check_branch
          %476 = sbr.rel (%p474) target = $region52
        $region51: #{tpu_custom_call.1} parent=11 // pred_region
          %s478 = ssub.s32 512, 512
          %479 = vsyncadd [#allocation22], %s478
          %s480 = sshll.u32 [#allocation21], 4
          %s481 = int_to_ptr.vmem [resolvable:$true] %s480
          %486 = dma.hbm_to_vmem [thread:$0]  %s9, 512, %s481, [#allocation22], 64, 64, 4
        $region52: #{tpu_custom_call.1} parent=11 // pred_fallthru
          _
        // Predicated region
        $region53: #{tpu_custom_call.1} parent=11 // pred_check
          %p487 = pneg %p277
        $region54: #{tpu_custom_call.1} parent=11 // pred_check_branch
          %489 = sbr.rel (%p487) target = $region56
        $region55: #{tpu_custom_call.1} parent=11 // pred_region
          %s491 = ssub.s32 16, 16
          %492 = vsyncadd [#allocation22], %s491
          %s494 = sshll.u32 [#allocation23], 4
          %s495 = int_to_ptr.vmem [resolvable:$true] %s494
          %497 = dma.hbm_to_vmem [thread:$0]  %s10, 16, %s495, [#allocation22]
        $region56: #{tpu_custom_call.1} parent=11 // pred_fallthru
          _
        // Predicated region
        $region57: #{tpu_custom_call.1} parent=11 // pred_check
          %p498 = pneg %p298
        $region58: #{tpu_custom_call.1} parent=11 // pred_check_branch
          %500 = sbr.rel (%p498) target = $region60
        $region59: #{tpu_custom_call.1} parent=11 // pred_region
          %s502 = ssub.s32 512, 512
          %503 = vsyncadd [#allocation25], %s502
          %s504 = sshll.u32 [#allocation24], 4
          %s505 = int_to_ptr.vmem [resolvable:$true] %s504
          %510 = dma.hbm_to_vmem [thread:$0]  %s11, 512, %s505, [#allocation25], 64, 64, 4
        $region60: #{tpu_custom_call.1} parent=11 // pred_fallthru
          _
        // Predicated region
        $region61: #{tpu_custom_call.1} parent=11 // pred_check
          %p511 = pneg %p319
        $region62: #{tpu_custom_call.1} parent=11 // pred_check_branch
          %513 = sbr.rel (%p511) target = $region64
        $region63: #{tpu_custom_call.1} parent=11 // pred_region
          %s515 = ssub.s32 16, 16
          %516 = vsyncadd [#allocation25], %s515
          %s518 = sshll.u32 [#allocation26], 4
          %s519 = int_to_ptr.vmem [resolvable:$true] %s518
          %521 = dma.hbm_to_vmem [thread:$0]  %s12, 16, %s519, [#allocation25]
        $region64: #{tpu_custom_call.1} parent=11 // pred_fallthru
          _
      $region12: #{tpu_custom_call.1} parent=5 // pred_fallthru
        _
      %p522 = scmp.lt.s32.totalorder %s29, 2
      // Predicated region
      $region65: #{tpu_custom_call.1} parent=5 // pred_check
        %p523 = pneg %p522
      $region66: #{tpu_custom_call.1} parent=5 // pred_check_branch
        %525 = sbr.rel (%p523) target = $region68
      $region67: #{tpu_custom_call.1} parent=5 // pred_region
        _
      $region68: #{tpu_custom_call.1} parent=5 // pred_fallthru
        _
      %p526 = scmp.le.s32.totalorder 1, %s29
      %p527 = scmp.lt.s32.totalorder %s29, 3
      %p528 = pnand %p526, %p527
      %p529 = pneg %p528
      // Predicated region
      $region69: #{tpu_custom_call.1} parent=5 // pred_check
        _
      $region70: #{tpu_custom_call.1} parent=5 // pred_check_branch
        %531 = sbr.rel (%p528) target = $region72
      $region71: #{tpu_custom_call.1} parent=5 // pred_region
        %s532 = ssub.s32 %s29, 1
        // Predicated region
        $region73: #{tpu_custom_call.1} parent=71 // pred_check
          %p533 = pneg %p67
        $region74: #{tpu_custom_call.1} parent=71 // pred_check_branch
          %535 = sbr.rel (%p533) target = $region76
        $region75: #{tpu_custom_call.1} parent=71 // pred_region
          %536 = dma.done [#allocation7], 2048
        $region76: #{tpu_custom_call.1} parent=71 // pred_fallthru
          _
        // Predicated region
        $region77: #{tpu_custom_call.1} parent=71 // pred_check
          %p537 = pneg %p88
        $region78: #{tpu_custom_call.1} parent=71 // pred_check_branch
          %539 = sbr.rel (%p537) target = $region80
        $region79: #{tpu_custom_call.1} parent=71 // pred_region
          %540 = dma.done [#allocation10], 1024
        $region80: #{tpu_custom_call.1} parent=71 // pred_fallthru
          _
        // Predicated region
        $region81: #{tpu_custom_call.1} parent=71 // pred_check
          %p541 = pneg %p109
        $region82: #{tpu_custom_call.1} parent=71 // pred_check_branch
          %543 = sbr.rel (%p541) target = $region84
        $region83: #{tpu_custom_call.1} parent=71 // pred_region
          %544 = dma.done [#allocation10], 512
        $region84: #{tpu_custom_call.1} parent=71 // pred_fallthru
          _
        // Predicated region
        $region85: #{tpu_custom_call.1} parent=71 // pred_check
          %p545 = pneg %p130
        $region86: #{tpu_custom_call.1} parent=71 // pred_check_branch
          %547 = sbr.rel (%p545) target = $region88
        $region87: #{tpu_custom_call.1} parent=71 // pred_region
          %548 = dma.done [#allocation13], 16
        $region88: #{tpu_custom_call.1} parent=71 // pred_fallthru
          _
        // Predicated region
        $region89: #{tpu_custom_call.1} parent=71 // pred_check
          %p549 = pneg %p151
        $region90: #{tpu_custom_call.1} parent=71 // pred_check_branch
          %551 = sbr.rel (%p549) target = $region92
        $region91: #{tpu_custom_call.1} parent=71 // pred_region
          %552 = dma.done [#allocation13], 16
        $region92: #{tpu_custom_call.1} parent=71 // pred_fallthru
          _
        // Predicated region
        $region93: #{tpu_custom_call.1} parent=71 // pred_check
          %p553 = pneg %p172
        $region94: #{tpu_custom_call.1} parent=71 // pred_check_branch
          %555 = sbr.rel (%p553) target = $region96
        $region95: #{tpu_custom_call.1} parent=71 // pred_region
          %556 = dma.done [#allocation16], 512
        $region96: #{tpu_custom_call.1} parent=71 // pred_fallthru
          _
        // Predicated region
        $region97: #{tpu_custom_call.1} parent=71 // pred_check
          %p557 = pneg %p193
        $region98: #{tpu_custom_call.1} parent=71 // pred_check_branch
          %559 = sbr.rel (%p557) target = $region100
        $region99: #{tpu_custom_call.1} parent=71 // pred_region
          %560 = dma.done [#allocation16], 16
        $region100: #{tpu_custom_call.1} parent=71 // pred_fallthru
          _
        // Predicated region
        $region101: #{tpu_custom_call.1} parent=71 // pred_check
          %p561 = pneg %p214
        $region102: #{tpu_custom_call.1} parent=71 // pred_check_branch
          %563 = sbr.rel (%p561) target = $region104
        $region103: #{tpu_custom_call.1} parent=71 // pred_region
          %564 = dma.done [#allocation19], 512
        $region104: #{tpu_custom_call.1} parent=71 // pred_fallthru
          _
        // Predicated region
        $region105: #{tpu_custom_call.1} parent=71 // pred_check
          %p565 = pneg %p235
        $region106: #{tpu_custom_call.1} parent=71 // pred_check_branch
          %567 = sbr.rel (%p565) target = $region108
        $region107: #{tpu_custom_call.1} parent=71 // pred_region
          %568 = dma.done [#allocation19], 16
        $region108: #{tpu_custom_call.1} parent=71 // pred_fallthru
          _
        // Predicated region
        $region109: #{tpu_custom_call.1} parent=71 // pred_check
          %p569 = pneg %p256
        $region110: #{tpu_custom_call.1} parent=71 // pred_check_branch
          %571 = sbr.rel (%p569) target = $region112
        $region111: #{tpu_custom_call.1} parent=71 // pred_region
          %572 = dma.done [#allocation22], 512
        $region112: #{tpu_custom_call.1} parent=71 // pred_fallthru
          _
        // Predicated region
        $region113: #{tpu_custom_call.1} parent=71 // pred_check
          %p573 = pneg %p277
        $region114: #{tpu_custom_call.1} parent=71 // pred_check_branch
          %575 = sbr.rel (%p573) target = $region116
        $region115: #{tpu_custom_call.1} parent=71 // pred_region
          %576 = dma.done [#allocation22], 16
        $region116: #{tpu_custom_call.1} parent=71 // pred_fallthru
          _
        // Predicated region
        $region117: #{tpu_custom_call.1} parent=71 // pred_check
          %p577 = pneg %p298
        $region118: #{tpu_custom_call.1} parent=71 // pred_check_branch
          %579 = sbr.rel (%p577) target = $region120
        $region119: #{tpu_custom_call.1} parent=71 // pred_region
          %580 = dma.done [#allocation25], 512
        $region120: #{tpu_custom_call.1} parent=71 // pred_fallthru
          _
        // Predicated region
        $region121: #{tpu_custom_call.1} parent=71 // pred_check
          %p581 = pneg %p319
        $region122: #{tpu_custom_call.1} parent=71 // pred_check_branch
          %583 = sbr.rel (%p581) target = $region124
        $region123: #{tpu_custom_call.1} parent=71 // pred_region
          %584 = dma.done [#allocation25], 16
        $region124: #{tpu_custom_call.1} parent=71 // pred_fallthru
          _
        %p585 = pneg %p67
        %p586 = pneg %p64
        %p587 = pneg %p88
        %p588 = pneg %p85
        %p589 = pneg %p109
        %p590 = pneg %p106
        %p591 = pneg %p130
        %p592 = pneg %p127
        %p593 = pneg %p151
        %p594 = pneg %p148
        %p595 = pneg %p172
        %p596 = pneg %p169
        %p597 = pneg %p193
        %p598 = pneg %p190
        %p599 = pneg %p214
        %p600 = pneg %p211
        %p601 = pneg %p235
        %p602 = pneg %p232
        %p603 = pneg %p256
        %p604 = pneg %p253
        %p605 = pneg %p277
        %p606 = pneg %p274
        %p607 = pneg %p298
        %p608 = pneg %p295
        %p609 = pneg %p319
        %p610 = pneg %p316
        %p611 = pneg %p347
        %p612 = pneg %p344
        %s613 = sand.u32 %s334, 1
        %s614 = scalar_lea.sflag [#allocation8], %s613
        %s615 = sand.u32 %s334, 1
        %s616 = smul.addr %s615, 256
        %s617 = scalar_lea.vmem [#allocation27], %s616
        %s618 = smul.u32 32, %s39
        %p620 = scmp.eq.s32.totalorder %s39, 0
        // Predicated region
        $region125: #{tpu_custom_call.1} parent=71 // pred_check
          %p621 = pneg %p620
        $region126: #{tpu_custom_call.1} parent=71 // pred_check_branch
          %623 = sbr.rel (%p621) target = $region128
        $region127: #{tpu_custom_call.1} parent=71 // pred_region
          %v624 = vld [vmem:[#allocation6] sm:$0xf]
          %v625 = vld [vmem:[#allocation6 + $0x4] sm:$0xf]
          %v626 = vld [vmem:[#allocation6 + $0x8] sm:$0xf]
          %v627 = vld [vmem:[#allocation6 + $0xc] sm:$0xf]
          %v628 = vld [vmem:[#allocation6 + $0x10] sm:$0xf]
          %v629 = vld [vmem:[#allocation6 + $0x14] sm:$0xf]
          %v630 = vld [vmem:[#allocation6 + $0x18] sm:$0xf]
          %v631 = vld [vmem:[#allocation6 + $0x1c] sm:$0xf]
          %v632 = vld [vmem:[#allocation6 + $0x20] sm:$0xf]
          %v633 = vld [vmem:[#allocation6 + $0x24] sm:$0xf]
          %v634 = vld [vmem:[#allocation6 + $0x28] sm:$0xf]
          %v635 = vld [vmem:[#allocation6 + $0x2c] sm:$0xf]
          %v636 = vld [vmem:[#allocation6 + $0x30] sm:$0xf]
          %v637 = vld [vmem:[#allocation6 + $0x34] sm:$0xf]
          %v638 = vld [vmem:[#allocation6 + $0x38] sm:$0xf]
          %v639 = vld [vmem:[#allocation6 + $0x3c] sm:$0xf]
          %v640 = vld [vmem:[#allocation6 + $0x40] sm:$0xf]
          %v641 = vld [vmem:[#allocation6 + $0x44] sm:$0xf]
          %v642 = vld [vmem:[#allocation6 + $0x48] sm:$0xf]
          %v643 = vld [vmem:[#allocation6 + $0x4c] sm:$0xf]
          %v644 = vld [vmem:[#allocation6 + $0x50] sm:$0xf]
          %v645 = vld [vmem:[#allocation6 + $0x54] sm:$0xf]
          %v646 = vld [vmem:[#allocation6 + $0x58] sm:$0xf]
          %v647 = vld [vmem:[#allocation6 + $0x5c] sm:$0xf]
          %v648 = vld [vmem:[#allocation6 + $0x60] sm:$0xf]
          %v649 = vld [vmem:[#allocation6 + $0x64] sm:$0xf]
          %v650 = vld [vmem:[#allocation6 + $0x68] sm:$0xf]
          %v651 = vld [vmem:[#allocation6 + $0x6c] sm:$0xf]
          %v652 = vld [vmem:[#allocation6 + $0x70] sm:$0xf]
          %v653 = vld [vmem:[#allocation6 + $0x74] sm:$0xf]
          %v654 = vld [vmem:[#allocation6 + $0x78] sm:$0xf]
          %v655 = vld [vmem:[#allocation6 + $0x7c] sm:$0xf]
          %v656 = vunpack.c.l.bf16 %v624
          %v657 = vunpack.c.l.bf16 %v625
          %v658 = vunpack.c.l.bf16 %v626
          %v659 = vunpack.c.l.bf16 %v627
          %v660 = vunpack.c.l.bf16 %v628
          %v661 = vunpack.c.l.bf16 %v629
          %v662 = vunpack.c.l.bf16 %v630
          %v663 = vunpack.c.l.bf16 %v631
          %v664 = vunpack.c.l.bf16 %v632
          %v665 = vunpack.c.l.bf16 %v633
          %v666 = vunpack.c.l.bf16 %v634
          %v667 = vunpack.c.l.bf16 %v635
          %v668 = vunpack.c.l.bf16 %v636
          %v669 = vunpack.c.l.bf16 %v637
          %v670 = vunpack.c.l.bf16 %v638
          %v671 = vunpack.c.l.bf16 %v639
          %v672 = vunpack.c.l.bf16 %v640
          %v673 = vunpack.c.l.bf16 %v641
          %v674 = vunpack.c.l.bf16 %v642
          %v675 = vunpack.c.l.bf16 %v643
          %v676 = vunpack.c.l.bf16 %v644
          %v677 = vunpack.c.l.bf16 %v645
          %v678 = vunpack.c.l.bf16 %v646
          %v679 = vunpack.c.l.bf16 %v647
          %v680 = vunpack.c.l.bf16 %v648
          %v681 = vunpack.c.l.bf16 %v649
          %v682 = vunpack.c.l.bf16 %v650
          %v683 = vunpack.c.l.bf16 %v651
          %v684 = vunpack.c.l.bf16 %v652
          %v685 = vunpack.c.l.bf16 %v653
          %v686 = vunpack.c.l.bf16 %v654
          %v687 = vunpack.c.l.bf16 %v655
          %vm688 = vcmask 523264
          %v689 = vsel %vm688, %v656, 0.0
          %v690 = vsel %vm688, %v657, 0.0
          %v691 = vadd.f32 %v689, %v690
          %v692 = vsel %vm688, %v658, 0.0
          %v693 = vadd.f32 %v691, %v692
          %v694 = vsel %vm688, %v659, 0.0
          %v695 = vadd.f32 %v693, %v694
          %v696 = vsel %vm688, %v660, 0.0
          %v697 = vadd.f32 %v695, %v696
          %v698 = vsel %vm688, %v661, 0.0
          %v699 = vadd.f32 %v697, %v698
          %v700 = vsel %vm688, %v662, 0.0
          %v701 = vadd.f32 %v699, %v700
          %v702 = vsel %vm688, %v663, 0.0
          %v703 = vadd.f32 %v701, %v702
          %v704 = vsel %vm688, %v664, 0.0
          %v705 = vadd.f32 %v703, %v704
          %v706 = vsel %vm688, %v665, 0.0
          %v707 = vadd.f32 %v705, %v706
          %v708 = vsel %vm688, %v666, 0.0
          %v709 = vadd.f32 %v707, %v708
          %v710 = vsel %vm688, %v667, 0.0
          %v711 = vadd.f32 %v709, %v710
          %v712 = vsel %vm688, %v668, 0.0
          %v713 = vadd.f32 %v711, %v712
          %v714 = vsel %vm688, %v669, 0.0
          %v715 = vadd.f32 %v713, %v714
          %v716 = vsel %vm688, %v670, 0.0
          %v717 = vadd.f32 %v715, %v716
          %v718 = vsel %vm688, %v671, 0.0
          %v719 = vadd.f32 %v717, %v718
          %v720 = vsel %vm688, %v672, 0.0
          %v721 = vadd.f32 %v719, %v720
          %v722 = vsel %vm688, %v673, 0.0
          %v723 = vadd.f32 %v721, %v722
          %v724 = vsel %vm688, %v674, 0.0
          %v725 = vadd.f32 %v723, %v724
          %v726 = vsel %vm688, %v675, 0.0
          %v727 = vadd.f32 %v725, %v726
          %v728 = vsel %vm688, %v676, 0.0
          %v729 = vadd.f32 %v727, %v728
          %v730 = vsel %vm688, %v677, 0.0
          %v731 = vadd.f32 %v729, %v730
          %v732 = vsel %vm688, %v678, 0.0
          %v733 = vadd.f32 %v731, %v732
          %v734 = vsel %vm688, %v679, 0.0
          %v735 = vadd.f32 %v733, %v734
          %v736 = vsel %vm688, %v680, 0.0
          %v737 = vadd.f32 %v735, %v736
          %v738 = vsel %vm688, %v681, 0.0
          %v739 = vadd.f32 %v737, %v738
          %v740 = vsel %vm688, %v682, 0.0
          %v741 = vadd.f32 %v739, %v740
          %v742 = vsel %vm688, %v683, 0.0
          %v743 = vadd.f32 %v741, %v742
          %v744 = vsel %vm688, %v684, 0.0
          %v745 = vadd.f32 %v743, %v744
          %v746 = vsel %vm688, %v685, 0.0
          %v747 = vadd.f32 %v745, %v746
          %v748 = vsel %vm688, %v686, 0.0
          %v749 = vadd.f32 %v747, %v748
          %v750 = vsel %vm688, %v687, 0.0
          %v751 = vadd.f32 %v749, %v750
          %v752 = vrot.slane %v751, 4
          %v753 = vadd.f32 %v751, %v752
          %v754 = vrot.slane %v753, 2
          %v755 = vadd.f32 %v753, %v754
          %v756 = vrot.slane %v755, 1
          %v757 = vadd.f32 %v755, %v756
          %v758 = vld [vmem:[#allocation9] sm:$0xff]
          %v759 = vld [vmem:[#allocation9 + $0x8] sm:$0xff]
          %v760 = vld [vmem:[#allocation9 + $0x10] sm:$0xff]
          %v761 = vld [vmem:[#allocation9 + $0x18] sm:$0xff]
          %v762 = vld [vmem:[#allocation9 + $0x20] sm:$0xff]
          %v763 = vld [vmem:[#allocation9 + $0x28] sm:$0xff]
          %v764 = vld [vmem:[#allocation9 + $0x30] sm:$0xff]
          %v765 = vld [vmem:[#allocation9 + $0x38] sm:$0xff]
          %v767 = vsel %vm688, %v757, 0
          %769 = vmatprep.subr.mxu0 0.0
          %770 = vmatpush1.msra.mxu0 %v758
          %771 = vmatprep.subr.mxu0 0.0
          %772 = vmatpush1.msra.mxu0 %v759
          %773 = vmatprep.subr.mxu0 0.0
          %774 = vmatpush1.msra.mxu0 %v760
          %775 = vmatprep.subr.mxu0 0.0
          %776 = vmatpush1.msra.mxu0 %v761
          %777 = vmatprep.subr.mxu0 0.0
          %778 = vmatpush1.msra.mxu0 %v762
          %779 = vmatprep.subr.mxu0 0.0
          %780 = vmatpush1.msra.mxu0 %v763
          %781 = vmatprep.subr.mxu0 0.0
          %782 = vmatpush1.msra.mxu0 %v764
          %783 = vmatprep.subr.mxu0 0.0
          %784 = vmatpush1.msra.mxu0 %v765
          %785 = vmatprep.subr.mxu0 0.0
          %786 = vmatpush1.msra.mxu0 0.0
          %787 = vmatprep.subr.mxu0 0.0
          %788 = vmatpush1.msra.mxu0 0.0
          %789 = vmatprep.subr.mxu0 0.0
          %790 = vmatpush1.msra.mxu0 0.0
          %791 = vmatprep.subr.mxu0 0.0
          %792 = vmatpush1.msra.mxu0 0.0
          %793 = vmatprep.subr.mxu0 0.0
          %794 = vmatpush1.msra.mxu0 0.0
          %795 = vmatprep.subr.mxu0 0.0
          %796 = vmatpush1.msra.mxu0 0.0
          %797 = vmatprep.subr.mxu0 0.0
          %798 = vmatpush1.msra.mxu0 0.0
          %799 = vmatprep.subr.mxu0 0.0
          %800 = vmatpush1.msra.mxu0 0.0
          %801 = vmatprep.subr.mxu0 0.0
          %802 = vmatpush1.msra.mxu0 0.0
          %803 = vmatprep.subr.mxu0 0.0
          %804 = vmatpush1.msra.mxu0 0.0
          %805 = vmatprep.subr.mxu0 0.0
          %806 = vmatpush1.msra.mxu0 0.0
          %807 = vmatprep.subr.mxu0 0.0
          %808 = vmatpush1.msra.mxu0 0.0
          %809 = vmatprep.subr.mxu0 0.0
          %810 = vmatpush1.msra.mxu0 0.0
          %811 = vmatprep.subr.mxu0 0.0
          %812 = vmatpush1.msra.mxu0 0.0
          %813 = vmatprep.subr.mxu0 0.0
          %814 = vmatpush1.msra.mxu0 0.0
          %815 = vmatprep.subr.mxu0 0.0
          %816 = vmatpush1.msra.mxu0 0.0
          %817 = vmatprep.subr.mxu0 0.0
          %818 = vmatpush1.msra.mxu0 0.0
          %819 = vmatprep.subr.mxu0 0.0
          %820 = vmatpush1.msra.mxu0 0.0
          %821 = vmatprep.subr.mxu0 0.0
          %822 = vmatpush1.msra.mxu0 0.0
          %823 = vmatprep.subr.mxu0 0.0
          %824 = vmatpush1.msra.mxu0 0.0
          %825 = vmatprep.subr.mxu0 0.0
          %826 = vmatpush1.msra.mxu0 0.0
          %827 = vmatprep.subr.mxu0 0.0
          %828 = vmatpush1.msra.mxu0 0.0
          %829 = vmatprep.subr.mxu0 0.0
          %830 = vmatpush1.msra.mxu0 0.0
          %831 = vmatprep.subr.mxu0 0.0
          %832 = vmatpush1.msra.mxu0 0.0
          %833 = vmatprep.mubr.f32.mxu0 0.0
          %834 = vmatmul.mubr.f32.gmra.mrb[0].mxu0 %v767
          %v835 = vpop.f32.mrb[0].mxu0
          %v836 = vadd.f32 0.0, %v835
          %v837 = vpop.f32.mrb[0].mxu0
          %838 = vdwg.mxu0
          %v839 = vrcp.pop 512.0
          %v840 = vmul.f32 %v836, %v839
          %v841 = vld [vmem:[#allocation11] sm:$0xff]
          %v842 = vld [vmem:[#allocation11 + $0x8] sm:$0xff]
          %v843 = vld [vmem:[#allocation11 + $0x10] sm:$0xff]
          %v844 = vld [vmem:[#allocation11 + $0x18] sm:$0xff]
          %vm845 = vcmask 261120
          %v847 = vsel %vm845, %v840, 0
          %849 = vmatprep.subr.mxu0 0.0
          %850 = vmatpush1.msra.mxu0 %v841
          %851 = vmatprep.subr.mxu0 0.0
          %852 = vmatpush1.msra.mxu0 %v842
          %853 = vmatprep.subr.mxu0 0.0
          %854 = vmatpush1.msra.mxu0 %v843
          %855 = vmatprep.subr.mxu0 0.0
          %856 = vmatpush1.msra.mxu0 %v844
          %857 = vmatprep.subr.mxu0 0.0
          %858 = vmatpush1.msra.mxu0 0.0
          %859 = vmatprep.subr.mxu0 0.0
          %860 = vmatpush1.msra.mxu0 0.0
          %861 = vmatprep.subr.mxu0 0.0
          %862 = vmatpush1.msra.mxu0 0.0
          %863 = vmatprep.subr.mxu0 0.0
          %864 = vmatpush1.msra.mxu0 0.0
          %865 = vmatprep.subr.mxu0 0.0
          %866 = vmatpush1.msra.mxu0 0.0
          %867 = vmatprep.subr.mxu0 0.0
          %868 = vmatpush1.msra.mxu0 0.0
          %869 = vmatprep.subr.mxu0 0.0
          %870 = vmatpush1.msra.mxu0 0.0
          %871 = vmatprep.subr.mxu0 0.0
          %872 = vmatpush1.msra.mxu0 0.0
          %873 = vmatprep.subr.mxu0 0.0
          %874 = vmatpush1.msra.mxu0 0.0
          %875 = vmatprep.subr.mxu0 0.0
          %876 = vmatpush1.msra.mxu0 0.0
          %877 = vmatprep.subr.mxu0 0.0
          %878 = vmatpush1.msra.mxu0 0.0
          %879 = vmatprep.subr.mxu0 0.0
          %880 = vmatpush1.msra.mxu0 0.0
          %881 = vmatprep.subr.mxu0 0.0
          %882 = vmatpush1.msra.mxu0 0.0
          %883 = vmatprep.subr.mxu0 0.0
          %884 = vmatpush1.msra.mxu0 0.0
          %885 = vmatprep.subr.mxu0 0.0
          %886 = vmatpush1.msra.mxu0 0.0
          %887 = vmatprep.subr.mxu0 0.0
          %888 = vmatpush1.msra.mxu0 0.0
          %889 = vmatprep.subr.mxu0 0.0
          %890 = vmatpush1.msra.mxu0 0.0
          %891 = vmatprep.subr.mxu0 0.0
          %892 = vmatpush1.msra.mxu0 0.0
          %893 = vmatprep.subr.mxu0 0.0
          %894 = vmatpush1.msra.mxu0 0.0
          %895 = vmatprep.subr.mxu0 0.0
          %896 = vmatpush1.msra.mxu0 0.0
          %897 = vmatprep.subr.mxu0 0.0
          %898 = vmatpush1.msra.mxu0 0.0
          %899 = vmatprep.subr.mxu0 0.0
          %900 = vmatpush1.msra.mxu0 0.0
          %901 = vmatprep.subr.mxu0 0.0
          %902 = vmatpush1.msra.mxu0 0.0
          %903 = vmatprep.subr.mxu0 0.0
          %904 = vmatpush1.msra.mxu0 0.0
          %905 = vmatprep.subr.mxu0 0.0
          %906 = vmatpush1.msra.mxu0 0.0
          %907 = vmatprep.subr.mxu0 0.0
          %908 = vmatpush1.msra.mxu0 0.0
          %909 = vmatprep.subr.mxu0 0.0
          %910 = vmatpush1.msra.mxu0 0.0
          %911 = vmatprep.subr.mxu0 0.0
          %912 = vmatpush1.msra.mxu0 0.0
          %913 = vmatprep.mubr.f32.mxu0 0.0
          %914 = vmatmul.mubr.f32.gmra.mrb[0].mxu0 %v847
          %v915 = vpop.f32.mrb[0].mxu0
          %v916 = vadd.f32 0.0, %v915
          %v917 = vpop.f32.mrb[0].mxu0
          %918 = vdwg.mxu0
          %v919 = vlaneseq
          %v920 = vshrl.u32 %v919, 7
          %v921 = vsub.s32 0, %v920
          %v922 = vrot.slane %v916, %v921
          %v923 = vsub.f32 %v656, %v922
          %v924 = vsub.f32 %v657, %v922
          %v925 = vsub.f32 %v658, %v922
          %v926 = vsub.f32 %v659, %v922
          %v927 = vsub.f32 %v660, %v922
          %v928 = vsub.f32 %v661, %v922
          %v929 = vsub.f32 %v662, %v922
          %v930 = vsub.f32 %v663, %v922
          %v931 = vsub.f32 %v664, %v922
          %v932 = vsub.f32 %v665, %v922
          %v933 = vsub.f32 %v666, %v922
          %v934 = vsub.f32 %v667, %v922
          %v935 = vsub.f32 %v668, %v922
          %v936 = vsub.f32 %v669, %v922
          %v937 = vsub.f32 %v670, %v922
          %v938 = vsub.f32 %v671, %v922
          %v939 = vsub.f32 %v672, %v922
          %v940 = vsub.f32 %v673, %v922
          %v941 = vsub.f32 %v674, %v922
          %v942 = vsub.f32 %v675, %v922
          %v943 = vsub.f32 %v676, %v922
          %v944 = vsub.f32 %v677, %v922
          %v945 = vsub.f32 %v678, %v922
          %v946 = vsub.f32 %v679, %v922
          %v947 = vsub.f32 %v680, %v922
          %v948 = vsub.f32 %v681, %v922
          %v949 = vsub.f32 %v682, %v922
          %v950 = vsub.f32 %v683, %v922
          %v951 = vsub.f32 %v684, %v922
          %v952 = vsub.f32 %v685, %v922
          %v953 = vsub.f32 %v686, %v922
          %v954 = vsub.f32 %v687, %v922
          %v955 = vmul.f32 %v923, %v923
          %v956 = vmul.f32 %v924, %v924
          %v957 = vmul.f32 %v925, %v925
          %v958 = vmul.f32 %v926, %v926
          %v959 = vmul.f32 %v927, %v927
          %v960 = vmul.f32 %v928, %v928
          %v961 = vmul.f32 %v929, %v929
          %v962 = vmul.f32 %v930, %v930
          %v963 = vmul.f32 %v931, %v931
          %v964 = vmul.f32 %v932, %v932
          %v965 = vmul.f32 %v933, %v933
          %v966 = vmul.f32 %v934, %v934
          %v967 = vmul.f32 %v935, %v935
          %v968 = vmul.f32 %v936, %v936
          %v969 = vmul.f32 %v937, %v937
          %v970 = vmul.f32 %v938, %v938
          %v971 = vmul.f32 %v939, %v939
          %v972 = vmul.f32 %v940, %v940
          %v973 = vmul.f32 %v941, %v941
          %v974 = vmul.f32 %v942, %v942
          %v975 = vmul.f32 %v943, %v943
          %v976 = vmul.f32 %v944, %v944
          %v977 = vmul.f32 %v945, %v945
          %v978 = vmul.f32 %v946, %v946
          %v979 = vmul.f32 %v947, %v947
          %v980 = vmul.f32 %v948, %v948
          %v981 = vmul.f32 %v949, %v949
          %v982 = vmul.f32 %v950, %v950
          %v983 = vmul.f32 %v951, %v951
          %v984 = vmul.f32 %v952, %v952
          %v985 = vmul.f32 %v953, %v953
          %v986 = vmul.f32 %v954, %v954
          %v987 = vsel %vm688, %v955, 0.0
          %v988 = vsel %vm688, %v956, 0.0
          %v989 = vadd.f32 %v987, %v988
          %v990 = vsel %vm688, %v957, 0.0
          %v991 = vadd.f32 %v989, %v990
          %v992 = vsel %vm688, %v958, 0.0
          %v993 = vadd.f32 %v991, %v992
          %v994 = vsel %vm688, %v959, 0.0
          %v995 = vadd.f32 %v993, %v994
          %v996 = vsel %vm688, %v960, 0.0
          %v997 = vadd.f32 %v995, %v996
          %v998 = vsel %vm688, %v961, 0.0
          %v999 = vadd.f32 %v997, %v998
          %v1000 = vsel %vm688, %v962, 0.0
          %v1001 = vadd.f32 %v999, %v1000
          %v1002 = vsel %vm688, %v963, 0.0
          %v1003 = vadd.f32 %v1001, %v1002
          %v1004 = vsel %vm688, %v964, 0.0
          %v1005 = vadd.f32 %v1003, %v1004
          %v1006 = vsel %vm688, %v965, 0.0
          %v1007 = vadd.f32 %v1005, %v1006
          %v1008 = vsel %vm688, %v966, 0.0
          %v1009 = vadd.f32 %v1007, %v1008
          %v1010 = vsel %vm688, %v967, 0.0
          %v1011 = vadd.f32 %v1009, %v1010
          %v1012 = vsel %vm688, %v968, 0.0
          %v1013 = vadd.f32 %v1011, %v1012
          %v1014 = vsel %vm688, %v969, 0.0
          %v1015 = vadd.f32 %v1013, %v1014
          %v1016 = vsel %vm688, %v970, 0.0
          %v1017 = vadd.f32 %v1015, %v1016
          %v1018 = vsel %vm688, %v971, 0.0
          %v1019 = vadd.f32 %v1017, %v1018
          %v1020 = vsel %vm688, %v972, 0.0
          %v1021 = vadd.f32 %v1019, %v1020
          %v1022 = vsel %vm688, %v973, 0.0
          %v1023 = vadd.f32 %v1021, %v1022
          %v1024 = vsel %vm688, %v974, 0.0
          %v1025 = vadd.f32 %v1023, %v1024
          %v1026 = vsel %vm688, %v975, 0.0
          %v1027 = vadd.f32 %v1025, %v1026
          %v1028 = vsel %vm688, %v976, 0.0
          %v1029 = vadd.f32 %v1027, %v1028
          %v1030 = vsel %vm688, %v977, 0.0
          %v1031 = vadd.f32 %v1029, %v1030
          %v1032 = vsel %vm688, %v978, 0.0
          %v1033 = vadd.f32 %v1031, %v1032
          %v1034 = vsel %vm688, %v979, 0.0
          %v1035 = vadd.f32 %v1033, %v1034
          %v1036 = vsel %vm688, %v980, 0.0
          %v1037 = vadd.f32 %v1035, %v1036
          %v1038 = vsel %vm688, %v981, 0.0
          %v1039 = vadd.f32 %v1037, %v1038
          %v1040 = vsel %vm688, %v982, 0.0
          %v1041 = vadd.f32 %v1039, %v1040
          %v1042 = vsel %vm688, %v983, 0.0
          %v1043 = vadd.f32 %v1041, %v1042
          %v1044 = vsel %vm688, %v984, 0.0
          %v1045 = vadd.f32 %v1043, %v1044
          %v1046 = vsel %vm688, %v985, 0.0
          %v1047 = vadd.f32 %v1045, %v1046
          %v1048 = vsel %vm688, %v986, 0.0
          %v1049 = vadd.f32 %v1047, %v1048
          %v1050 = vrot.slane %v1049, 4
          %v1051 = vadd.f32 %v1049, %v1050
          %v1052 = vrot.slane %v1051, 2
          %v1053 = vadd.f32 %v1051, %v1052
          %v1054 = vrot.slane %v1053, 1
          %v1055 = vadd.f32 %v1053, %v1054
          %v1057 = vsel %vm688, %v1055, 0
          %1059 = vmatprep.subr.mxu0 0.0
          %1060 = vmatpush1.msra.mxu0 %v758
          %1061 = vmatprep.subr.mxu0 0.0
          %1062 = vmatpush1.msra.mxu0 %v759
          %1063 = vmatprep.subr.mxu0 0.0
          %1064 = vmatpush1.msra.mxu0 %v760
          %1065 = vmatprep.subr.mxu0 0.0
          %1066 = vmatpush1.msra.mxu0 %v761
          %1067 = vmatprep.subr.mxu0 0.0
          %1068 = vmatpush1.msra.mxu0 %v762
          %1069 = vmatprep.subr.mxu0 0.0
          %1070 = vmatpush1.msra.mxu0 %v763
          %1071 = vmatprep.subr.mxu0 0.0
          %1072 = vmatpush1.msra.mxu0 %v764
          %1073 = vmatprep.subr.mxu0 0.0
          %1074 = vmatpush1.msra.mxu0 %v765
          %1075 = vmatprep.subr.mxu0 0.0
          %1076 = vmatpush1.msra.mxu0 0.0
          %1077 = vmatprep.subr.mxu0 0.0
          %1078 = vmatpush1.msra.mxu0 0.0
          %1079 = vmatprep.subr.mxu0 0.0
          %1080 = vmatpush1.msra.mxu0 0.0
          %1081 = vmatprep.subr.mxu0 0.0
          %1082 = vmatpush1.msra.mxu0 0.0
          %1083 = vmatprep.subr.mxu0 0.0
          %1084 = vmatpush1.msra.mxu0 0.0
          %1085 = vmatprep.subr.mxu0 0.0
          %1086 = vmatpush1.msra.mxu0 0.0
          %1087 = vmatprep.subr.mxu0 0.0
          %1088 = vmatpush1.msra.mxu0 0.0
          %1089 = vmatprep.subr.mxu0 0.0
          %1090 = vmatpush1.msra.mxu0 0.0
          %1091 = vmatprep.subr.mxu0 0.0
          %1092 = vmatpush1.msra.mxu0 0.0
          %1093 = vmatprep.subr.mxu0 0.0
          %1094 = vmatpush1.msra.mxu0 0.0
          %1095 = vmatprep.subr.mxu0 0.0
          %1096 = vmatpush1.msra.mxu0 0.0
          %1097 = vmatprep.subr.mxu0 0.0
          %1098 = vmatpush1.msra.mxu0 0.0
          %1099 = vmatprep.subr.mxu0 0.0
          %1100 = vmatpush1.msra.mxu0 0.0
          %1101 = vmatprep.subr.mxu0 0.0
          %1102 = vmatpush1.msra.mxu0 0.0
          %1103 = vmatprep.subr.mxu0 0.0
          %1104 = vmatpush1.msra.mxu0 0.0
          %1105 = vmatprep.subr.mxu0 0.0
          %1106 = vmatpush1.msra.mxu0 0.0
          %1107 = vmatprep.subr.mxu0 0.0
          %1108 = vmatpush1.msra.mxu0 0.0
          %1109 = vmatprep.subr.mxu0 0.0
          %1110 = vmatpush1.msra.mxu0 0.0
          %1111 = vmatprep.subr.mxu0 0.0
          %1112 = vmatpush1.msra.mxu0 0.0
          %1113 = vmatprep.subr.mxu0 0.0
          %1114 = vmatpush1.msra.mxu0 0.0
          %1115 = vmatprep.subr.mxu0 0.0
          %1116 = vmatpush1.msra.mxu0 0.0
          %1117 = vmatprep.subr.mxu0 0.0
          %1118 = vmatpush1.msra.mxu0 0.0
          %1119 = vmatprep.subr.mxu0 0.0
          %1120 = vmatpush1.msra.mxu0 0.0
          %1121 = vmatprep.subr.mxu0 0.0
          %1122 = vmatpush1.msra.mxu0 0.0
          %1123 = vmatprep.mubr.f32.mxu0 0.0
          %1124 = vmatmul.mubr.f32.gmra.mrb[0].mxu0 %v1057
          %v1125 = vpop.f32.mrb[0].mxu0
          %v1126 = vadd.f32 0.0, %v1125
          %v1127 = vpop.f32.mrb[0].mxu0
          %1128 = vdwg.mxu0
          %v1129 = vmul.f32 %v1126, %v839
          %v1130 = vadd.f32 %v1129, 1e-06
          %v1131 = vrsqrt.pop %v1130
          %v1133 = vsel %vm845, %v1131, 0
          %1135 = vmatprep.subr.mxu0 0.0
          %1136 = vmatpush1.msra.mxu0 %v841
          %1137 = vmatprep.subr.mxu0 0.0
          %1138 = vmatpush1.msra.mxu0 %v842
          %1139 = vmatprep.subr.mxu0 0.0
          %1140 = vmatpush1.msra.mxu0 %v843
          %1141 = vmatprep.subr.mxu0 0.0
          %1142 = vmatpush1.msra.mxu0 %v844
          %1143 = vmatprep.subr.mxu0 0.0
          %1144 = vmatpush1.msra.mxu0 0.0
          %1145 = vmatprep.subr.mxu0 0.0
          %1146 = vmatpush1.msra.mxu0 0.0
          %1147 = vmatprep.subr.mxu0 0.0
          %1148 = vmatpush1.msra.mxu0 0.0
          %1149 = vmatprep.subr.mxu0 0.0
          %1150 = vmatpush1.msra.mxu0 0.0
          %1151 = vmatprep.subr.mxu0 0.0
          %1152 = vmatpush1.msra.mxu0 0.0
          %1153 = vmatprep.subr.mxu0 0.0
          %1154 = vmatpush1.msra.mxu0 0.0
          %1155 = vmatprep.subr.mxu0 0.0
          %1156 = vmatpush1.msra.mxu0 0.0
          %1157 = vmatprep.subr.mxu0 0.0
          %1158 = vmatpush1.msra.mxu0 0.0
          %1159 = vmatprep.subr.mxu0 0.0
          %1160 = vmatpush1.msra.mxu0 0.0
          %1161 = vmatprep.subr.mxu0 0.0
          %1162 = vmatpush1.msra.mxu0 0.0
          %1163 = vmatprep.subr.mxu0 0.0
          %1164 = vmatpush1.msra.mxu0 0.0
          %1165 = vmatprep.subr.mxu0 0.0
          %1166 = vmatpush1.msra.mxu0 0.0
          %1167 = vmatprep.subr.mxu0 0.0
          %1168 = vmatpush1.msra.mxu0 0.0
          %1169 = vmatprep.subr.mxu0 0.0
          %1170 = vmatpush1.msra.mxu0 0.0
          %1171 = vmatprep.subr.mxu0 0.0
          %1172 = vmatpush1.msra.mxu0 0.0
          %1173 = vmatprep.subr.mxu0 0.0
          %1174 = vmatpush1.msra.mxu0 0.0
          %1175 = vmatprep.subr.mxu0 0.0
          %1176 = vmatpush1.msra.mxu0 0.0
          %1177 = vmatprep.subr.mxu0 0.0
          %1178 = vmatpush1.msra.mxu0 0.0
          %1179 = vmatprep.subr.mxu0 0.0
          %1180 = vmatpush1.msra.mxu0 0.0
          %1181 = vmatprep.subr.mxu0 0.0
          %1182 = vmatpush1.msra.mxu0 0.0
          %1183 = vmatprep.subr.mxu0 0.0
          %1184 = vmatpush1.msra.mxu0 0.0
          %1185 = vmatprep.subr.mxu0 0.0
          %1186 = vmatpush1.msra.mxu0 0.0
          %1187 = vmatprep.subr.mxu0 0.0
          %1188 = vmatpush1.msra.mxu0 0.0
          %1189 = vmatprep.subr.mxu0 0.0
          %1190 = vmatpush1.msra.mxu0 0.0
          %1191 = vmatprep.subr.mxu0 0.0
          %1192 = vmatpush1.msra.mxu0 0.0
          %1193 = vmatprep.subr.mxu0 0.0
          %1194 = vmatpush1.msra.mxu0 0.0
          %1195 = vmatprep.subr.mxu0 0.0
          %1196 = vmatpush1.msra.mxu0 0.0
          %1197 = vmatprep.subr.mxu0 0.0
          %1198 = vmatpush1.msra.mxu0 0.0
          %1199 = vmatprep.mubr.f32.mxu0 0.0
          %1200 = vmatmul.mubr.f32.gmra.mrb[0].mxu0 %v1133
          %v1201 = vpop.f32.mrb[0].mxu0
          %v1202 = vadd.f32 0.0, %v1201
          %v1203 = vpop.f32.mrb[0].mxu0
          %1204 = vdwg.mxu0
          %v1205 = vlaneseq
          %v1206 = vshrl.u32 %v1205, 7
          %v1207 = vsub.s32 0, %v1206
          %v1208 = vrot.slane %v1202, %v1207
          %v1209 = vmul.f32 %v923, %v1208
          %v1210 = vmul.f32 %v924, %v1208
          %v1211 = vmul.f32 %v925, %v1208
          %v1212 = vmul.f32 %v926, %v1208
          %v1213 = vmul.f32 %v927, %v1208
          %v1214 = vmul.f32 %v928, %v1208
          %v1215 = vmul.f32 %v929, %v1208
          %v1216 = vmul.f32 %v930, %v1208
          %v1217 = vmul.f32 %v931, %v1208
          %v1218 = vmul.f32 %v932, %v1208
          %v1219 = vmul.f32 %v933, %v1208
          %v1220 = vmul.f32 %v934, %v1208
          %v1221 = vmul.f32 %v935, %v1208
          %v1222 = vmul.f32 %v936, %v1208
          %v1223 = vmul.f32 %v937, %v1208
          %v1224 = vmul.f32 %v938, %v1208
          %v1225 = vmul.f32 %v939, %v1208
          %v1226 = vmul.f32 %v940, %v1208
          %v1227 = vmul.f32 %v941, %v1208
          %v1228 = vmul.f32 %v942, %v1208
          %v1229 = vmul.f32 %v943, %v1208
          %v1230 = vmul.f32 %v944, %v1208
          %v1231 = vmul.f32 %v945, %v1208
          %v1232 = vmul.f32 %v946, %v1208
          %v1233 = vmul.f32 %v947, %v1208
          %v1234 = vmul.f32 %v948, %v1208
          %v1235 = vmul.f32 %v949, %v1208
          %v1236 = vmul.f32 %v950, %v1208
          %v1237 = vmul.f32 %v951, %v1208
          %v1238 = vmul.f32 %v952, %v1208
          %v1239 = vmul.f32 %v953, %v1208
          %v1240 = vmul.f32 %v954, %v1208
          %v1241 = vld [vmem:[#allocation12] sm:$0x1]
          %v1243 = vlaneseq
          %v1244 = vshrl.u32 %v1243, 7
          %v1245 = vsub.s32 0, %v1244
          %v1246 = vrot.slane %v1241, %v1245
          %v1248 = vmul.f32 %v1209, %v1246
          %v1249 = vmul.f32 %v1210, %v1246
          %v1250 = vmul.f32 %v1211, %v1246
          %v1251 = vmul.f32 %v1212, %v1246
          %v1252 = vmul.f32 %v1213, %v1246
          %v1253 = vmul.f32 %v1214, %v1246
          %v1254 = vmul.f32 %v1215, %v1246
          %v1255 = vmul.f32 %v1216, %v1246
          %v1256 = vmul.f32 %v1217, %v1246
          %v1257 = vmul.f32 %v1218, %v1246
          %v1258 = vmul.f32 %v1219, %v1246
          %v1259 = vmul.f32 %v1220, %v1246
          %v1260 = vmul.f32 %v1221, %v1246
          %v1261 = vmul.f32 %v1222, %v1246
          %v1262 = vmul.f32 %v1223, %v1246
          %v1263 = vmul.f32 %v1224, %v1246
          %v1264 = vmul.f32 %v1225, %v1246
          %v1265 = vmul.f32 %v1226, %v1246
          %v1266 = vmul.f32 %v1227, %v1246
          %v1267 = vmul.f32 %v1228, %v1246
          %v1268 = vmul.f32 %v1229, %v1246
          %v1269 = vmul.f32 %v1230, %v1246
          %v1270 = vmul.f32 %v1231, %v1246
          %v1271 = vmul.f32 %v1232, %v1246
          %v1272 = vmul.f32 %v1233, %v1246
          %v1273 = vmul.f32 %v1234, %v1246
          %v1274 = vmul.f32 %v1235, %v1246
          %v1275 = vmul.f32 %v1236, %v1246
          %v1276 = vmul.f32 %v1237, %v1246
          %v1277 = vmul.f32 %v1238, %v1246
          %v1278 = vmul.f32 %v1239, %v1246
          %v1279 = vmul.f32 %v1240, %v1246
          %v1280 = vld [vmem:[#allocation14] sm:$0x1]
          %v1282 = vlaneseq
          %v1283 = vshrl.u32 %v1282, 7
          %v1284 = vsub.s32 0, %v1283
          %v1285 = vrot.slane %v1280, %v1284
          %v1287 = vadd.f32 %v1248, %v1285
          %v1288 = vadd.f32 %v1249, %v1285
          %v1289 = vadd.f32 %v1250, %v1285
          %v1290 = vadd.f32 %v1251, %v1285
          %v1291 = vadd.f32 %v1252, %v1285
          %v1292 = vadd.f32 %v1253, %v1285
          %v1293 = vadd.f32 %v1254, %v1285
          %v1294 = vadd.f32 %v1255, %v1285
          %v1295 = vadd.f32 %v1256, %v1285
          %v1296 = vadd.f32 %v1257, %v1285
          %v1297 = vadd.f32 %v1258, %v1285
          %v1298 = vadd.f32 %v1259, %v1285
          %v1299 = vadd.f32 %v1260, %v1285
          %v1300 = vadd.f32 %v1261, %v1285
          %v1301 = vadd.f32 %v1262, %v1285
          %v1302 = vadd.f32 %v1263, %v1285
          %v1303 = vadd.f32 %v1264, %v1285
          %v1304 = vadd.f32 %v1265, %v1285
          %v1305 = vadd.f32 %v1266, %v1285
          %v1306 = vadd.f32 %v1267, %v1285
          %v1307 = vadd.f32 %v1268, %v1285
          %v1308 = vadd.f32 %v1269, %v1285
          %v1309 = vadd.f32 %v1270, %v1285
          %v1310 = vadd.f32 %v1271, %v1285
          %v1311 = vadd.f32 %v1272, %v1285
          %v1312 = vadd.f32 %v1273, %v1285
          %v1313 = vadd.f32 %v1274, %v1285
          %v1314 = vadd.f32 %v1275, %v1285
          %v1315 = vadd.f32 %v1276, %v1285
          %v1316 = vadd.f32 %v1277, %v1285
          %v1317 = vadd.f32 %v1278, %v1285
          %v1318 = vadd.f32 %v1279, %v1285
          %v1319 = vpack.c.bf16 %v1288, %v1287
          %v1320 = vpack.c.bf16 %v1290, %v1289
          %v1321 = vpack.c.bf16 %v1292, %v1291
          %v1322 = vpack.c.bf16 %v1294, %v1293
          %v1323 = vpack.c.bf16 %v1296, %v1295
          %v1324 = vpack.c.bf16 %v1298, %v1297
          %v1325 = vpack.c.bf16 %v1300, %v1299
          %v1326 = vpack.c.bf16 %v1302, %v1301
          %v1327 = vpack.c.bf16 %v1304, %v1303
          %v1328 = vpack.c.bf16 %v1306, %v1305
          %v1329 = vpack.c.bf16 %v1308, %v1307
          %v1330 = vpack.c.bf16 %v1310, %v1309
          %v1331 = vpack.c.bf16 %v1312, %v1311
          %v1332 = vpack.c.bf16 %v1314, %v1313
          %v1333 = vpack.c.bf16 %v1316, %v1315
          %v1334 = vpack.c.bf16 %v1318, %v1317
          %v1335 = vld [vmem:[#allocation15] sm:$0xf]
          %v1336 = vld [vmem:[#allocation15 + $0x4] sm:$0xf]
          %v1337 = vld [vmem:[#allocation15 + $0x8] sm:$0xf]
          %v1338 = vld [vmem:[#allocation15 + $0xc] sm:$0xf]
          %v1339 = vld [vmem:[#allocation15 + $0x10] sm:$0xf]
          %v1340 = vld [vmem:[#allocation15 + $0x14] sm:$0xf]
          %v1341 = vld [vmem:[#allocation15 + $0x18] sm:$0xf]
          %v1342 = vld [vmem:[#allocation15 + $0x1c] sm:$0xf]
          %v1343 = vld [vmem:[#allocation17] sm:$0x1]
          %v1345 = vlaneseq
          %v1346 = vshrl.u32 %v1345, 7
          %v1347 = vsub.s32 0, %v1346
          %v1348 = vrot.slane %v1343, %v1347
          %v1358 = vunpack.c.l.b16 %v1335
          %v1359 = vunpack.c.l.b16 %v1336
          %v1360 = vunpack.c.l.b16 %v1337
          %v1361 = vunpack.c.l.b16 %v1338
          %v1362 = vunpack.c.l.b16 %v1339
          %v1363 = vunpack.c.l.b16 %v1340
          %v1364 = vunpack.c.l.b16 %v1341
          %v1365 = vunpack.c.l.b16 %v1342
          %v1366 = vpack.c.b16 %v1359, %v1358
          %v1367 = vpack.c.b16 %v1361, %v1360
          %v1368 = vpack.c.b16 %v1363, %v1362
          %v1369 = vpack.c.b16 %v1365, %v1364
          %v1375 = vsel %vm688, %v1319, 0
          %v1378 = vsel %vm688, %v1320, 0
          %v1381 = vsel %vm688, %v1321, 0
          %v1384 = vsel %vm688, %v1322, 0
          %v1387 = vsel %vm688, %v1323, 0
          %v1390 = vsel %vm688, %v1324, 0
          %v1393 = vsel %vm688, %v1325, 0
          %v1396 = vsel %vm688, %v1326, 0
          %v1399 = vsel %vm688, %v1327, 0
          %v1402 = vsel %vm688, %v1328, 0
          %v1405 = vsel %vm688, %v1329, 0
          %v1408 = vsel %vm688, %v1330, 0
          %v1411 = vsel %vm688, %v1331, 0
          %v1414 = vsel %vm688, %v1332, 0
          %v1417 = vsel %vm688, %v1333, 0
          %v1420 = vsel %vm688, %v1334, 0
          %1422 = vmatprep.subr.bf16.mxu0 0
          %1423 = vmatpush1.bf16.msra.mxu0 %v1366
          %1424 = vmatprep.subr.bf16.mxu0 0
          %1425 = vmatpush1.bf16.msra.mxu0 %v1367
          %1426 = vmatprep.subr.bf16.mxu0 0
          %1427 = vmatpush1.bf16.msra.mxu0 %v1368
          %1428 = vmatprep.subr.bf16.mxu0 0
          %1429 = vmatpush1.bf16.msra.mxu0 %v1369
          %1430 = vmatprep.subr.bf16.mxu0 0
          %1431 = vmatpush1.bf16.msra.mxu0 0
          %1432 = vmatprep.subr.bf16.mxu0 0
          %1433 = vmatpush1.bf16.msra.mxu0 0
          %1434 = vmatprep.subr.bf16.mxu0 0
          %1435 = vmatpush1.bf16.msra.mxu0 0
          %1436 = vmatprep.subr.bf16.mxu0 0
          %1437 = vmatpush1.bf16.msra.mxu0 0
          %1438 = vmatprep.subr.bf16.mxu0 0
          %1439 = vmatpush1.bf16.msra.mxu0 0
          %1440 = vmatprep.subr.bf16.mxu0 0
          %1441 = vmatpush1.bf16.msra.mxu0 0
          %1442 = vmatprep.subr.bf16.mxu0 0
          %1443 = vmatpush1.bf16.msra.mxu0 0
          %1444 = vmatprep.subr.bf16.mxu0 0
          %1445 = vmatpush1.bf16.msra.mxu0 0
          %1446 = vmatprep.subr.bf16.mxu0 0
          %1447 = vmatpush1.bf16.msra.mxu0 0
          %1448 = vmatprep.subr.bf16.mxu0 0
          %1449 = vmatpush1.bf16.msra.mxu0 0
          %1450 = vmatprep.subr.bf16.mxu0 0
          %1451 = vmatpush1.bf16.msra.mxu0 0
          %1452 = vmatprep.subr.bf16.mxu0 0
          %1453 = vmatpush1.bf16.msra.mxu0 0
          %1454 = vmatprep.mubr.bf16.mxu0 0
          %1455 = vmatmul.mubr.bf16.gmra.mrb[0].mxu0 %v1375
          %v1456 = vpop.f32.mrb[0].mxu0
          %v1457 = vadd.f32 %v1348, %v1456
          %v1458 = vpop.f32.mrb[0].mxu0
          %v1459 = vpop.f32.mrb[0].mxu0
          %v1460 = vadd.f32 %v1348, %v1459
          %v1461 = vpop.f32.mrb[0].mxu0
          %1462 = vmatprep.mubr.bf16.mxu0 0
          %1463 = vmatmul.mubr.bf16.gmra.mrb[0].mxu0 %v1378
          %v1464 = vpop.f32.mrb[0].mxu0
          %v1465 = vadd.f32 %v1348, %v1464
          %v1466 = vpop.f32.mrb[0].mxu0
          %v1467 = vpop.f32.mrb[0].mxu0
          %v1468 = vadd.f32 %v1348, %v1467
          %v1469 = vpop.f32.mrb[0].mxu0
          %1470 = vmatprep.mubr.bf16.mxu0 0
          %1471 = vmatmul.mubr.bf16.gmra.mrb[0].mxu0 %v1381
          %v1472 = vpop.f32.mrb[0].mxu0
          %v1473 = vadd.f32 %v1348, %v1472
          %v1474 = vpop.f32.mrb[0].mxu0
          %v1475 = vpop.f32.mrb[0].mxu0
          %v1476 = vadd.f32 %v1348, %v1475
          %v1477 = vpop.f32.mrb[0].mxu0
          %1478 = vmatprep.mubr.bf16.mxu0 0
          %1479 = vmatmul.mubr.bf16.gmra.mrb[0].mxu0 %v1384
          %v1480 = vpop.f32.mrb[0].mxu0
          %v1481 = vadd.f32 %v1348, %v1480
          %v1482 = vpop.f32.mrb[0].mxu0
          %v1483 = vpop.f32.mrb[0].mxu0
          %v1484 = vadd.f32 %v1348, %v1483
          %v1485 = vpop.f32.mrb[0].mxu0
          %1486 = vmatprep.mubr.bf16.mxu0 0
          %1487 = vmatmul.mubr.bf16.gmra.mrb[0].mxu0 %v1387
          %v1488 = vpop.f32.mrb[0].mxu0
          %v1489 = vadd.f32 %v1348, %v1488
          %v1490 = vpop.f32.mrb[0].mxu0
          %v1491 = vpop.f32.mrb[0].mxu0
          %v1492 = vadd.f32 %v1348, %v1491
          %v1493 = vpop.f32.mrb[0].mxu0
          %1494 = vmatprep.mubr.bf16.mxu0 0
          %1495 = vmatmul.mubr.bf16.gmra.mrb[0].mxu0 %v1390
          %v1496 = vpop.f32.mrb[0].mxu0
          %v1497 = vadd.f32 %v1348, %v1496
          %v1498 = vpop.f32.mrb[0].mxu0
          %v1499 = vpop.f32.mrb[0].mxu0
          %v1500 = vadd.f32 %v1348, %v1499
          %v1501 = vpop.f32.mrb[0].mxu0
          %1502 = vmatprep.mubr.bf16.mxu0 0
          %1503 = vmatmul.mubr.bf16.gmra.mrb[0].mxu0 %v1393
          %v1504 = vpop.f32.mrb[0].mxu0
          %v1505 = vadd.f32 %v1348, %v1504
          %v1506 = vpop.f32.mrb[0].mxu0
          %v1507 = vpop.f32.mrb[0].mxu0
          %v1508 = vadd.f32 %v1348, %v1507
          %v1509 = vpop.f32.mrb[0].mxu0
          %1510 = vmatprep.mubr.bf16.mxu0 0
          %1511 = vmatmul.mubr.bf16.gmra.mrb[0].mxu0 %v1396
          %v1512 = vpop.f32.mrb[0].mxu0
          %v1513 = vadd.f32 %v1348, %v1512
          %v1514 = vpop.f32.mrb[0].mxu0
          %v1515 = vpop.f32.mrb[0].mxu0
          %v1516 = vadd.f32 %v1348, %v1515
          %v1517 = vpop.f32.mrb[0].mxu0
          %1518 = vmatprep.mubr.bf16.mxu0 0
          %1519 = vmatmul.mubr.bf16.gmra.mrb[0].mxu0 %v1399
          %v1520 = vpop.f32.mrb[0].mxu0
          %v1521 = vadd.f32 %v1348, %v1520
          %v1522 = vpop.f32.mrb[0].mxu0
          %v1523 = vpop.f32.mrb[0].mxu0
          %v1524 = vadd.f32 %v1348, %v1523
          %v1525 = vpop.f32.mrb[0].mxu0
          %1526 = vmatprep.mubr.bf16.mxu0 0
          %1527 = vmatmul.mubr.bf16.gmra.mrb[0].mxu0 %v1402
          %v1528 = vpop.f32.mrb[0].mxu0
          %v1529 = vadd.f32 %v1348, %v1528
          %v1530 = vpop.f32.mrb[0].mxu0
          %v1531 = vpop.f32.mrb[0].mxu0
          %v1532 = vadd.f32 %v1348, %v1531
          %v1533 = vpop.f32.mrb[0].mxu0
          %1534 = vmatprep.mubr.bf16.mxu0 0
          %1535 = vmatmul.mubr.bf16.gmra.mrb[0].mxu0 %v1405
          %v1536 = vpop.f32.mrb[0].mxu0
          %v1537 = vadd.f32 %v1348, %v1536
          %v1538 = vpop.f32.mrb[0].mxu0
          %v1539 = vpop.f32.mrb[0].mxu0
          %v1540 = vadd.f32 %v1348, %v1539
          %v1541 = vpop.f32.mrb[0].mxu0
          %1542 = vmatprep.mubr.bf16.mxu0 0
          %1543 = vmatmul.mubr.bf16.gmra.mrb[0].mxu0 %v1408
          %v1544 = vpop.f32.mrb[0].mxu0
          %v1545 = vadd.f32 %v1348, %v1544
          %v1546 = vpop.f32.mrb[0].mxu0
          %v1547 = vpop.f32.mrb[0].mxu0
          %v1548 = vadd.f32 %v1348, %v1547
          %v1549 = vpop.f32.mrb[0].mxu0
          %1550 = vmatprep.mubr.bf16.mxu0 0
          %1551 = vmatmul.mubr.bf16.gmra.mrb[0].mxu0 %v1411
          %v1552 = vpop.f32.mrb[0].mxu0
          %v1553 = vadd.f32 %v1348, %v1552
          %v1554 = vpop.f32.mrb[0].mxu0
          %v1555 = vpop.f32.mrb[0].mxu0
          %v1556 = vadd.f32 %v1348, %v1555
          %v1557 = vpop.f32.mrb[0].mxu0
          %1558 = vmatprep.mubr.bf16.mxu0 0
          %1559 = vmatmul.mubr.bf16.gmra.mrb[0].mxu0 %v1414
          %v1560 = vpop.f32.mrb[0].mxu0
          %v1561 = vadd.f32 %v1348, %v1560
          %v1562 = vpop.f32.mrb[0].mxu0
          %v1563 = vpop.f32.mrb[0].mxu0
          %v1564 = vadd.f32 %v1348, %v1563
          %v1565 = vpop.f32.mrb[0].mxu0
          %1566 = vmatprep.mubr.bf16.mxu0 0
          %1567 = vmatmul.mubr.bf16.gmra.mrb[0].mxu0 %v1417
          %v1568 = vpop.f32.mrb[0].mxu0
          %v1569 = vadd.f32 %v1348, %v1568
          %v1570 = vpop.f32.mrb[0].mxu0
          %v1571 = vpop.f32.mrb[0].mxu0
          %v1572 = vadd.f32 %v1348, %v1571
          %v1573 = vpop.f32.mrb[0].mxu0
          %1574 = vmatprep.mubr.bf16.mxu0 0
          %1575 = vmatmul.mubr.bf16.gmra.mrb[0].mxu0 %v1420
          %v1576 = vpop.f32.mrb[0].mxu0
          %v1577 = vadd.f32 %v1348, %v1576
          %v1578 = vpop.f32.mrb[0].mxu0
          %v1579 = vpop.f32.mrb[0].mxu0
          %v1580 = vadd.f32 %v1348, %v1579
          %v1581 = vpop.f32.mrb[0].mxu0
          %1582 = vdwg.mxu0
          %v1583 = vpack.c.bf16 %v1460, %v1457
          %v1584 = vpack.c.bf16 %v1468, %v1465
          %v1585 = vpack.c.bf16 %v1476, %v1473
          %v1586 = vpack.c.bf16 %v1484, %v1481
          %v1587 = vpack.c.bf16 %v1492, %v1489
          %v1588 = vpack.c.bf16 %v1500, %v1497
          %v1589 = vpack.c.bf16 %v1508, %v1505
          %v1590 = vpack.c.bf16 %v1516, %v1513
          %v1591 = vpack.c.bf16 %v1524, %v1521
          %v1592 = vpack.c.bf16 %v1532, %v1529
          %v1593 = vpack.c.bf16 %v1540, %v1537
          %v1594 = vpack.c.bf16 %v1548, %v1545
          %v1595 = vpack.c.bf16 %v1556, %v1553
          %v1596 = vpack.c.bf16 %v1564, %v1561
          %v1597 = vpack.c.bf16 %v1572, %v1569
          %v1598 = vpack.c.bf16 %v1580, %v1577
          %1599 = vst.msk [vmem:[#allocation2] sm:$0xff] %vm688, %v1583
          %1600 = vst.msk [vmem:[#allocation2 + $0x8] sm:$0xff] %vm688, %v1584
          %1601 = vst.msk [vmem:[#allocation2 + $0x10] sm:$0xff] %vm688, %v1585
          %1602 = vst.msk [vmem:[#allocation2 + $0x18] sm:$0xff] %vm688, %v1586
          %1603 = vst.msk [vmem:[#allocation2 + $0x20] sm:$0xff] %vm688, %v1587
          %1604 = vst.msk [vmem:[#allocation2 + $0x28] sm:$0xff] %vm688, %v1588
          %1605 = vst.msk [vmem:[#allocation2 + $0x30] sm:$0xff] %vm688, %v1589
          %1606 = vst.msk [vmem:[#allocation2 + $0x38] sm:$0xff] %vm688, %v1590
          %1607 = vst.msk [vmem:[#allocation2 + $0x40] sm:$0xff] %vm688, %v1591
          %1608 = vst.msk [vmem:[#allocation2 + $0x48] sm:$0xff] %vm688, %v1592
          %1609 = vst.msk [vmem:[#allocation2 + $0x50] sm:$0xff] %vm688, %v1593
          %1610 = vst.msk [vmem:[#allocation2 + $0x58] sm:$0xff] %vm688, %v1594
          %1611 = vst.msk [vmem:[#allocation2 + $0x60] sm:$0xff] %vm688, %v1595
          %1612 = vst.msk [vmem:[#allocation2 + $0x68] sm:$0xff] %vm688, %v1596
          %1613 = vst.msk [vmem:[#allocation2 + $0x70] sm:$0xff] %vm688, %v1597
          %1614 = vst.msk [vmem:[#allocation2 + $0x78] sm:$0xff] %vm688, %v1598
          %v1615 = vld [vmem:[#allocation18] sm:$0xf]
          %v1616 = vld [vmem:[#allocation18 + $0x4] sm:$0xf]
          %v1617 = vld [vmem:[#allocation18 + $0x8] sm:$0xf]
          %v1618 = vld [vmem:[#allocation18 + $0xc] sm:$0xf]
          %v1619 = vld [vmem:[#allocation18 + $0x10] sm:$0xf]
          %v1620 = vld [vmem:[#allocation18 + $0x14] sm:$0xf]
          %v1621 = vld [vmem:[#allocation18 + $0x18] sm:$0xf]
          %v1622 = vld [vmem:[#allocation18 + $0x1c] sm:$0xf]
          %v1623 = vld [vmem:[#allocation20] sm:$0x1]
          %v1625 = vlaneseq
          %v1626 = vshrl.u32 %v1625, 7
          %v1627 = vsub.s32 0, %v1626
          %v1628 = vrot.slane %v1623, %v1627
          %v1638 = vunpack.c.l.b16 %v1615
          %v1639 = vunpack.c.l.b16 %v1616
          %v1640 = vunpack.c.l.b16 %v1617
          %v1641 = vunpack.c.l.b16 %v1618
          %v1642 = vunpack.c.l.b16 %v1619
          %v1643 = vunpack.c.l.b16 %v1620
          %v1644 = vunpack.c.l.b16 %v1621
          %v1645 = vunpack.c.l.b16 %v1622
          %v1646 = vpack.c.b16 %v1639, %v1638
          %v1647 = vpack.c.b16 %v1641, %v1640
          %v1648 = vpack.c.b16 %v1643, %v1642
          %v1649 = vpack.c.b16 %v1645, %v1644
          %1654 = vmatprep.subr.bf16.mxu0 0
          %1655 = vmatpush1.bf16.msra.mxu0 %v1646
          %1656 = vmatprep.subr.bf16.mxu0 0
          %1657 = vmatpush1.bf16.msra.mxu0 %v1647
          %1658 = vmatprep.subr.bf16.mxu0 0
          %1659 = vmatpush1.bf16.msra.mxu0 %v1648
          %1660 = vmatprep.subr.bf16.mxu0 0
          %1661 = vmatpush1.bf16.msra.mxu0 %v1649
          %1662 = vmatprep.subr.bf16.mxu0 0
          %1663 = vmatpush1.bf16.msra.mxu0 0
          %1664 = vmatprep.subr.bf16.mxu0 0
          %1665 = vmatpush1.bf16.msra.mxu0 0
          %1666 = vmatprep.subr.bf16.mxu0 0
          %1667 = vmatpush1.bf16.msra.mxu0 0
          %1668 = vmatprep.subr.bf16.mxu0 0
          %1669 = vmatpush1.bf16.msra.mxu0 0
          %1670 = vmatprep.subr.bf16.mxu0 0
          %1671 = vmatpush1.bf16.msra.mxu0 0
          %1672 = vmatprep.subr.bf16.mxu0 0
          %1673 = vmatpush1.bf16.msra.mxu0 0
          %1674 = vmatprep.subr.bf16.mxu0 0
          %1675 = vmatpush1.bf16.msra.mxu0 0
          %1676 = vmatprep.subr.bf16.mxu0 0
          %1677 = vmatpush1.bf16.msra.mxu0 0
          %1678 = vmatprep.subr.bf16.mxu0 0
          %1679 = vmatpush1.bf16.msra.mxu0 0
          %1680 = vmatprep.subr.bf16.mxu0 0
          %1681 = vmatpush1.bf16.msra.mxu0 0
          %1682 = vmatprep.subr.bf16.mxu0 0
          %1683 = vmatpush1.bf16.msra.mxu0 0
          %1684 = vmatprep.subr.bf16.mxu0 0
          %1685 = vmatpush1.bf16.msra.mxu0 0
          %1686 = vmatprep.mubr.bf16.mxu0 0
          %1687 = vmatmul.mubr.bf16.gmra.mrb[0].mxu0 %v1375
          %v1688 = vpop.f32.mrb[0].mxu0
          %v1689 = vadd.f32 %v1628, %v1688
          %v1690 = vpop.f32.mrb[0].mxu0
          %v1691 = vpop.f32.mrb[0].mxu0
          %v1692 = vadd.f32 %v1628, %v1691
          %v1693 = vpop.f32.mrb[0].mxu0
          %1694 = vmatprep.mubr.bf16.mxu0 0
          %1695 = vmatmul.mubr.bf16.gmra.mrb[0].mxu0 %v1378
          %v1696 = vpop.f32.mrb[0].mxu0
          %v1697 = vadd.f32 %v1628, %v1696
          %v1698 = vpop.f32.mrb[0].mxu0
          %v1699 = vpop.f32.mrb[0].mxu0
          %v1700 = vadd.f32 %v1628, %v1699
          %v1701 = vpop.f32.mrb[0].mxu0
          %1702 = vmatprep.mubr.bf16.mxu0 0
          %1703 = vmatmul.mubr.bf16.gmra.mrb[0].mxu0 %v1381
          %v1704 = vpop.f32.mrb[0].mxu0
          %v1705 = vadd.f32 %v1628, %v1704
          %v1706 = vpop.f32.mrb[0].mxu0
          %v1707 = vpop.f32.mrb[0].mxu0
          %v1708 = vadd.f32 %v1628, %v1707
          %v1709 = vpop.f32.mrb[0].mxu0
          %1710 = vmatprep.mubr.bf16.mxu0 0
          %1711 = vmatmul.mubr.bf16.gmra.mrb[0].mxu0 %v1384
          %v1712 = vpop.f32.mrb[0].mxu0
          %v1713 = vadd.f32 %v1628, %v1712
          %v1714 = vpop.f32.mrb[0].mxu0
          %v1715 = vpop.f32.mrb[0].mxu0
          %v1716 = vadd.f32 %v1628, %v1715
          %v1717 = vpop.f32.mrb[0].mxu0
          %1718 = vmatprep.mubr.bf16.mxu0 0
          %1719 = vmatmul.mubr.bf16.gmra.mrb[0].mxu0 %v1387
          %v1720 = vpop.f32.mrb[0].mxu0
          %v1721 = vadd.f32 %v1628, %v1720
          %v1722 = vpop.f32.mrb[0].mxu0
          %v1723 = vpop.f32.mrb[0].mxu0
          %v1724 = vadd.f32 %v1628, %v1723
          %v1725 = vpop.f32.mrb[0].mxu0
          %1726 = vmatprep.mubr.bf16.mxu0 0
          %1727 = vmatmul.mubr.bf16.gmra.mrb[0].mxu0 %v1390
          %v1728 = vpop.f32.mrb[0].mxu0
          %v1729 = vadd.f32 %v1628, %v1728
          %v1730 = vpop.f32.mrb[0].mxu0
          %v1731 = vpop.f32.mrb[0].mxu0
          %v1732 = vadd.f32 %v1628, %v1731
          %v1733 = vpop.f32.mrb[0].mxu0
          %1734 = vmatprep.mubr.bf16.mxu0 0
          %1735 = vmatmul.mubr.bf16.gmra.mrb[0].mxu0 %v1393
          %v1736 = vpop.f32.mrb[0].mxu0
          %v1737 = vadd.f32 %v1628, %v1736
          %v1738 = vpop.f32.mrb[0].mxu0
          %v1739 = vpop.f32.mrb[0].mxu0
          %v1740 = vadd.f32 %v1628, %v1739
          %v1741 = vpop.f32.mrb[0].mxu0
          %1742 = vmatprep.mubr.bf16.mxu0 0
          %1743 = vmatmul.mubr.bf16.gmra.mrb[0].mxu0 %v1396
          %v1744 = vpop.f32.mrb[0].mxu0
          %v1745 = vadd.f32 %v1628, %v1744
          %v1746 = vpop.f32.mrb[0].mxu0
          %v1747 = vpop.f32.mrb[0].mxu0
          %v1748 = vadd.f32 %v1628, %v1747
          %v1749 = vpop.f32.mrb[0].mxu0
          %1750 = vmatprep.mubr.bf16.mxu0 0
          %1751 = vmatmul.mubr.bf16.gmra.mrb[0].mxu0 %v1399
          %v1752 = vpop.f32.mrb[0].mxu0
          %v1753 = vadd.f32 %v1628, %v1752
          %v1754 = vpop.f32.mrb[0].mxu0
          %v1755 = vpop.f32.mrb[0].mxu0
          %v1756 = vadd.f32 %v1628, %v1755
          %v1757 = vpop.f32.mrb[0].mxu0
          %1758 = vmatprep.mubr.bf16.mxu0 0
          %1759 = vmatmul.mubr.bf16.gmra.mrb[0].mxu0 %v1402
          %v1760 = vpop.f32.mrb[0].mxu0
          %v1761 = vadd.f32 %v1628, %v1760
          %v1762 = vpop.f32.mrb[0].mxu0
          %v1763 = vpop.f32.mrb[0].mxu0
          %v1764 = vadd.f32 %v1628, %v1763
          %v1765 = vpop.f32.mrb[0].mxu0
          %1766 = vmatprep.mubr.bf16.mxu0 0
          %1767 = vmatmul.mubr.bf16.gmra.mrb[0].mxu0 %v1405
          %v1768 = vpop.f32.mrb[0].mxu0
          %v1769 = vadd.f32 %v1628, %v1768
          %v1770 = vpop.f32.mrb[0].mxu0
          %v1771 = vpop.f32.mrb[0].mxu0
          %v1772 = vadd.f32 %v1628, %v1771
          %v1773 = vpop.f32.mrb[0].mxu0
          %1774 = vmatprep.mubr.bf16.mxu0 0
          %1775 = vmatmul.mubr.bf16.gmra.mrb[0].mxu0 %v1408
          %v1776 = vpop.f32.mrb[0].mxu0
          %v1777 = vadd.f32 %v1628, %v1776
          %v1778 = vpop.f32.mrb[0].mxu0
          %v1779 = vpop.f32.mrb[0].mxu0
          %v1780 = vadd.f32 %v1628, %v1779
          %v1781 = vpop.f32.mrb[0].mxu0
          %1782 = vmatprep.mubr.bf16.mxu0 0
          %1783 = vmatmul.mubr.bf16.gmra.mrb[0].mxu0 %v1411
          %v1784 = vpop.f32.mrb[0].mxu0
          %v1785 = vadd.f32 %v1628, %v1784
          %v1786 = vpop.f32.mrb[0].mxu0
          %v1787 = vpop.f32.mrb[0].mxu0
          %v1788 = vadd.f32 %v1628, %v1787
          %v1789 = vpop.f32.mrb[0].mxu0
          %1790 = vmatprep.mubr.bf16.mxu0 0
          %1791 = vmatmul.mubr.bf16.gmra.mrb[0].mxu0 %v1414
          %v1792 = vpop.f32.mrb[0].mxu0
          %v1793 = vadd.f32 %v1628, %v1792
          %v1794 = vpop.f32.mrb[0].mxu0
          %v1795 = vpop.f32.mrb[0].mxu0
          %v1796 = vadd.f32 %v1628, %v1795
          %v1797 = vpop.f32.mrb[0].mxu0
          %1798 = vmatprep.mubr.bf16.mxu0 0
          %1799 = vmatmul.mubr.bf16.gmra.mrb[0].mxu0 %v1417
          %v1800 = vpop.f32.mrb[0].mxu0
          %v1801 = vadd.f32 %v1628, %v1800
          %v1802 = vpop.f32.mrb[0].mxu0
          %v1803 = vpop.f32.mrb[0].mxu0
          %v1804 = vadd.f32 %v1628, %v1803
          %v1805 = vpop.f32.mrb[0].mxu0
          %1806 = vmatprep.mubr.bf16.mxu0 0
          %1807 = vmatmul.mubr.bf16.gmra.mrb[0].mxu0 %v1420
          %v1808 = vpop.f32.mrb[0].mxu0
          %v1809 = vadd.f32 %v1628, %v1808
          %v1810 = vpop.f32.mrb[0].mxu0
          %v1811 = vpop.f32.mrb[0].mxu0
          %v1812 = vadd.f32 %v1628, %v1811
          %v1813 = vpop.f32.mrb[0].mxu0
          %1814 = vdwg.mxu0
          %1815 = vxpose.xlu0.b32.start [1/16] %v1689, 128
          %1816 = vxpose.xlu0.b32.cont [2/16] %v1692, 128
          %1817 = vxpose.xlu0.b32.cont [3/16] %v1697, 128
          %1818 = vxpose.xlu0.b32.cont [4/16] %v1700, 128
          %1819 = vxpose.xlu0.b32.cont [5/16] %v1705, 128
          %1820 = vxpose.xlu0.b32.cont [6/16] %v1708, 128
          %1821 = vxpose.xlu0.b32.cont [7/16] %v1713, 128
          %1822 = vxpose.xlu0.b32.cont [8/16] %v1716, 128
          %1823 = vxpose.xlu0.b32.cont [9/16] %v1721, 128
          %1824 = vxpose.xlu0.b32.cont [10/16] %v1724, 128
          %1825 = vxpose.xlu0.b32.cont [11/16] %v1729, 128
          %1826 = vxpose.xlu0.b32.cont [12/16] %v1732, 128
          %1827 = vxpose.xlu0.b32.cont [13/16] %v1737, 128
          %1828 = vxpose.xlu0.b32.cont [14/16] %v1740, 128
          %1829 = vxpose.xlu0.b32.cont [15/16] %v1745, 128
          %1830 = vxpose.xlu0.b32.end [16/16] %v1748, 128
          %v1831 = vpop.trf.xlu0
          %v1832 = vpop.trf.xlu0
          %v1833 = vpop.trf.xlu0
          %v1834 = vpop.trf.xlu0
          %v1835 = vpop.trf.xlu0
          %v1836 = vpop.trf.xlu0
          %v1837 = vpop.trf.xlu0
          %v1838 = vpop.trf.xlu0
          %v1839 = vpop.trf.xlu0
          %v1840 = vpop.trf.xlu0
          %v1841 = vpop.trf.xlu0
          %v1842 = vpop.trf.xlu0
          %v1843 = vpop.trf.xlu0
          %v1844 = vpop.trf.xlu0
          %v1845 = vpop.trf.xlu0
          %v1846 = vpop.trf.xlu0
          %1847 = vxpose.xlu0.b32.start [1/16] %v1753, 128
          %1848 = vxpose.xlu0.b32.cont [2/16] %v1756, 128
          %1849 = vxpose.xlu0.b32.cont [3/16] %v1761, 128
          %1850 = vxpose.xlu0.b32.cont [4/16] %v1764, 128
          %1851 = vxpose.xlu0.b32.cont [5/16] %v1769, 128
          %1852 = vxpose.xlu0.b32.cont [6/16] %v1772, 128
          %1853 = vxpose.xlu0.b32.cont [7/16] %v1777, 128
          %1854 = vxpose.xlu0.b32.cont [8/16] %v1780, 128
          %1855 = vxpose.xlu0.b32.cont [9/16] %v1785, 128
          %1856 = vxpose.xlu0.b32.cont [10/16] %v1788, 128
          %1857 = vxpose.xlu0.b32.cont [11/16] %v1793, 128
          %1858 = vxpose.xlu0.b32.cont [12/16] %v1796, 128
          %1859 = vxpose.xlu0.b32.cont [13/16] %v1801, 128
          %1860 = vxpose.xlu0.b32.cont [14/16] %v1804, 128
          %1861 = vxpose.xlu0.b32.cont [15/16] %v1809, 128
          %1862 = vxpose.xlu0.b32.end [16/16] %v1812, 128
          %v1863 = vpop.trf.xlu0
          %v1864 = vpop.trf.xlu0
          %v1865 = vpop.trf.xlu0
          %v1866 = vpop.trf.xlu0
          %v1867 = vpop.trf.xlu0
          %v1868 = vpop.trf.xlu0
          %v1869 = vpop.trf.xlu0
          %v1870 = vpop.trf.xlu0
          %v1871 = vpop.trf.xlu0
          %v1872 = vpop.trf.xlu0
          %v1873 = vpop.trf.xlu0
          %v1874 = vpop.trf.xlu0
          %v1875 = vpop.trf.xlu0
          %v1876 = vpop.trf.xlu0
          %v1877 = vpop.trf.xlu0
          %v1878 = vpop.trf.xlu0
          %v1879 = vpack.c.bf16 %v1832, %v1831
          %v1880 = vpack.c.bf16 %v1864, %v1863
          %v1881 = vpack.c.bf16 %v1834, %v1833
          %v1882 = vpack.c.bf16 %v1866, %v1865
          %v1883 = vpack.c.bf16 %v1836, %v1835
          %v1884 = vpack.c.bf16 %v1868, %v1867
          %v1885 = vpack.c.bf16 %v1838, %v1837
          %v1886 = vpack.c.bf16 %v1870, %v1869
          %1887 = vst [vmem:[#allocation3] sm:$0xff] %v1879
          %1888 = vst [vmem:[#allocation3 + $0x8] sm:$0xff] %v1880
          %1889 = vst [vmem:[#allocation3 + $0x10] sm:$0xff] %v1881
          %1890 = vst [vmem:[#allocation3 + $0x18] sm:$0xff] %v1882
          %1891 = vst [vmem:[#allocation3 + $0x20] sm:$0xff] %v1883
          %1892 = vst [vmem:[#allocation3 + $0x28] sm:$0xff] %v1884
          %1893 = vst [vmem:[#allocation3 + $0x30] sm:$0xff] %v1885
          %1894 = vst [vmem:[#allocation3 + $0x38] sm:$0xff] %v1886
          %v1895 = vld [vmem:[#allocation21] sm:$0xf]
          %v1896 = vld [vmem:[#allocation21 + $0x4] sm:$0xf]
          %v1897 = vld [vmem:[#allocation21 + $0x8] sm:$0xf]
          %v1898 = vld [vmem:[#allocation21 + $0xc] sm:$0xf]
          %v1899 = vld [vmem:[#allocation21 + $0x10] sm:$0xf]
          %v1900 = vld [vmem:[#allocation21 + $0x14] sm:$0xf]
          %v1901 = vld [vmem:[#allocation21 + $0x18] sm:$0xf]
          %v1902 = vld [vmem:[#allocation21 + $0x1c] sm:$0xf]
          %v1903 = vld [vmem:[#allocation23] sm:$0x1]
          %v1905 = vlaneseq
          %v1906 = vshrl.u32 %v1905, 7
          %v1907 = vsub.s32 0, %v1906
          %v1908 = vrot.slane %v1903, %v1907
          %v1918 = vunpack.c.l.b16 %v1895
          %v1919 = vunpack.c.l.b16 %v1896
          %v1920 = vunpack.c.l.b16 %v1897
          %v1921 = vunpack.c.l.b16 %v1898
          %v1922 = vunpack.c.l.b16 %v1899
          %v1923 = vunpack.c.l.b16 %v1900
          %v1924 = vunpack.c.l.b16 %v1901
          %v1925 = vunpack.c.l.b16 %v1902
          %v1926 = vpack.c.b16 %v1919, %v1918
          %v1927 = vpack.c.b16 %v1921, %v1920
          %v1928 = vpack.c.b16 %v1923, %v1922
          %v1929 = vpack.c.b16 %v1925, %v1924
          %1934 = vmatprep.subr.bf16.mxu0 0
          %1935 = vmatpush1.bf16.msra.mxu0 %v1926
          %1936 = vmatprep.subr.bf16.mxu0 0
          %1937 = vmatpush1.bf16.msra.mxu0 %v1927
          %1938 = vmatprep.subr.bf16.mxu0 0
          %1939 = vmatpush1.bf16.msra.mxu0 %v1928
          %1940 = vmatprep.subr.bf16.mxu0 0
          %1941 = vmatpush1.bf16.msra.mxu0 %v1929
          %1942 = vmatprep.subr.bf16.mxu0 0
          %1943 = vmatpush1.bf16.msra.mxu0 0
          %1944 = vmatprep.subr.bf16.mxu0 0
          %1945 = vmatpush1.bf16.msra.mxu0 0
          %1946 = vmatprep.subr.bf16.mxu0 0
          %1947 = vmatpush1.bf16.msra.mxu0 0
          %1948 = vmatprep.subr.bf16.mxu0 0
          %1949 = vmatpush1.bf16.msra.mxu0 0
          %1950 = vmatprep.subr.bf16.mxu0 0
          %1951 = vmatpush1.bf16.msra.mxu0 0
          %1952 = vmatprep.subr.bf16.mxu0 0
          %1953 = vmatpush1.bf16.msra.mxu0 0
          %1954 = vmatprep.subr.bf16.mxu0 0
          %1955 = vmatpush1.bf16.msra.mxu0 0
          %1956 = vmatprep.subr.bf16.mxu0 0
          %1957 = vmatpush1.bf16.msra.mxu0 0
          %1958 = vmatprep.subr.bf16.mxu0 0
          %1959 = vmatpush1.bf16.msra.mxu0 0
          %1960 = vmatprep.subr.bf16.mxu0 0
          %1961 = vmatpush1.bf16.msra.mxu0 0
          %1962 = vmatprep.subr.bf16.mxu0 0
          %1963 = vmatpush1.bf16.msra.mxu0 0
          %1964 = vmatprep.subr.bf16.mxu0 0
          %1965 = vmatpush1.bf16.msra.mxu0 0
          %1966 = vmatprep.mubr.bf16.mxu0 0
          %1967 = vmatmul.mubr.bf16.gmra.mrb[0].mxu0 %v1375
          %v1968 = vpop.f32.mrb[0].mxu0
          %v1969 = vadd.f32 %v1908, %v1968
          %v1970 = vpop.f32.mrb[0].mxu0
          %v1971 = vpop.f32.mrb[0].mxu0
          %v1972 = vadd.f32 %v1908, %v1971
          %v1973 = vpop.f32.mrb[0].mxu0
          %1974 = vmatprep.mubr.bf16.mxu0 0
          %1975 = vmatmul.mubr.bf16.gmra.mrb[0].mxu0 %v1378
          %v1976 = vpop.f32.mrb[0].mxu0
          %v1977 = vadd.f32 %v1908, %v1976
          %v1978 = vpop.f32.mrb[0].mxu0
          %v1979 = vpop.f32.mrb[0].mxu0
          %v1980 = vadd.f32 %v1908, %v1979
          %v1981 = vpop.f32.mrb[0].mxu0
          %1982 = vmatprep.mubr.bf16.mxu0 0
          %1983 = vmatmul.mubr.bf16.gmra.mrb[0].mxu0 %v1381
          %v1984 = vpop.f32.mrb[0].mxu0
          %v1985 = vadd.f32 %v1908, %v1984
          %v1986 = vpop.f32.mrb[0].mxu0
          %v1987 = vpop.f32.mrb[0].mxu0
          %v1988 = vadd.f32 %v1908, %v1987
          %v1989 = vpop.f32.mrb[0].mxu0
          %1990 = vmatprep.mubr.bf16.mxu0 0
          %1991 = vmatmul.mubr.bf16.gmra.mrb[0].mxu0 %v1384
          %v1992 = vpop.f32.mrb[0].mxu0
          %v1993 = vadd.f32 %v1908, %v1992
          %v1994 = vpop.f32.mrb[0].mxu0
          %v1995 = vpop.f32.mrb[0].mxu0
          %v1996 = vadd.f32 %v1908, %v1995
          %v1997 = vpop.f32.mrb[0].mxu0
          %1998 = vmatprep.mubr.bf16.mxu0 0
          %1999 = vmatmul.mubr.bf16.gmra.mrb[0].mxu0 %v1387
          %v2000 = vpop.f32.mrb[0].mxu0
          %v2001 = vadd.f32 %v1908, %v2000
          %v2002 = vpop.f32.mrb[0].mxu0
          %v2003 = vpop.f32.mrb[0].mxu0
          %v2004 = vadd.f32 %v1908, %v2003
          %v2005 = vpop.f32.mrb[0].mxu0
          %2006 = vmatprep.mubr.bf16.mxu0 0
          %2007 = vmatmul.mubr.bf16.gmra.mrb[0].mxu0 %v1390
          %v2008 = vpop.f32.mrb[0].mxu0
          %v2009 = vadd.f32 %v1908, %v2008
          %v2010 = vpop.f32.mrb[0].mxu0
          %v2011 = vpop.f32.mrb[0].mxu0
          %v2012 = vadd.f32 %v1908, %v2011
          %v2013 = vpop.f32.mrb[0].mxu0
          %2014 = vmatprep.mubr.bf16.mxu0 0
          %2015 = vmatmul.mubr.bf16.gmra.mrb[0].mxu0 %v1393
          %v2016 = vpop.f32.mrb[0].mxu0
          %v2017 = vadd.f32 %v1908, %v2016
          %v2018 = vpop.f32.mrb[0].mxu0
          %v2019 = vpop.f32.mrb[0].mxu0
          %v2020 = vadd.f32 %v1908, %v2019
          %v2021 = vpop.f32.mrb[0].mxu0
          %2022 = vmatprep.mubr.bf16.mxu0 0
          %2023 = vmatmul.mubr.bf16.gmra.mrb[0].mxu0 %v1396
          %v2024 = vpop.f32.mrb[0].mxu0
          %v2025 = vadd.f32 %v1908, %v2024
          %v2026 = vpop.f32.mrb[0].mxu0
          %v2027 = vpop.f32.mrb[0].mxu0
          %v2028 = vadd.f32 %v1908, %v2027
          %v2029 = vpop.f32.mrb[0].mxu0
          %2030 = vmatprep.mubr.bf16.mxu0 0
          %2031 = vmatmul.mubr.bf16.gmra.mrb[0].mxu0 %v1399
          %v2032 = vpop.f32.mrb[0].mxu0
          %v2033 = vadd.f32 %v1908, %v2032
          %v2034 = vpop.f32.mrb[0].mxu0
          %v2035 = vpop.f32.mrb[0].mxu0
          %v2036 = vadd.f32 %v1908, %v2035
          %v2037 = vpop.f32.mrb[0].mxu0
          %2038 = vmatprep.mubr.bf16.mxu0 0
          %2039 = vmatmul.mubr.bf16.gmra.mrb[0].mxu0 %v1402
          %v2040 = vpop.f32.mrb[0].mxu0
          %v2041 = vadd.f32 %v1908, %v2040
          %v2042 = vpop.f32.mrb[0].mxu0
          %v2043 = vpop.f32.mrb[0].mxu0
          %v2044 = vadd.f32 %v1908, %v2043
          %v2045 = vpop.f32.mrb[0].mxu0
          %2046 = vmatprep.mubr.bf16.mxu0 0
          %2047 = vmatmul.mubr.bf16.gmra.mrb[0].mxu0 %v1405
          %v2048 = vpop.f32.mrb[0].mxu0
          %v2049 = vadd.f32 %v1908, %v2048
          %v2050 = vpop.f32.mrb[0].mxu0
          %v2051 = vpop.f32.mrb[0].mxu0
          %v2052 = vadd.f32 %v1908, %v2051
          %v2053 = vpop.f32.mrb[0].mxu0
          %2054 = vmatprep.mubr.bf16.mxu0 0
          %2055 = vmatmul.mubr.bf16.gmra.mrb[0].mxu0 %v1408
          %v2056 = vpop.f32.mrb[0].mxu0
          %v2057 = vadd.f32 %v1908, %v2056
          %v2058 = vpop.f32.mrb[0].mxu0
          %v2059 = vpop.f32.mrb[0].mxu0
          %v2060 = vadd.f32 %v1908, %v2059
          %v2061 = vpop.f32.mrb[0].mxu0
          %2062 = vmatprep.mubr.bf16.mxu0 0
          %2063 = vmatmul.mubr.bf16.gmra.mrb[0].mxu0 %v1411
          %v2064 = vpop.f32.mrb[0].mxu0
          %v2065 = vadd.f32 %v1908, %v2064
          %v2066 = vpop.f32.mrb[0].mxu0
          %v2067 = vpop.f32.mrb[0].mxu0
          %v2068 = vadd.f32 %v1908, %v2067
          %v2069 = vpop.f32.mrb[0].mxu0
          %2070 = vmatprep.mubr.bf16.mxu0 0
          %2071 = vmatmul.mubr.bf16.gmra.mrb[0].mxu0 %v1414
          %v2072 = vpop.f32.mrb[0].mxu0
          %v2073 = vadd.f32 %v1908, %v2072
          %v2074 = vpop.f32.mrb[0].mxu0
          %v2075 = vpop.f32.mrb[0].mxu0
          %v2076 = vadd.f32 %v1908, %v2075
          %v2077 = vpop.f32.mrb[0].mxu0
          %2078 = vmatprep.mubr.bf16.mxu0 0
          %2079 = vmatmul.mubr.bf16.gmra.mrb[0].mxu0 %v1417
          %v2080 = vpop.f32.mrb[0].mxu0
          %v2081 = vadd.f32 %v1908, %v2080
          %v2082 = vpop.f32.mrb[0].mxu0
          %v2083 = vpop.f32.mrb[0].mxu0
          %v2084 = vadd.f32 %v1908, %v2083
          %v2085 = vpop.f32.mrb[0].mxu0
          %2086 = vmatprep.mubr.bf16.mxu0 0
          %2087 = vmatmul.mubr.bf16.gmra.mrb[0].mxu0 %v1420
          %v2088 = vpop.f32.mrb[0].mxu0
          %v2089 = vadd.f32 %v1908, %v2088
          %v2090 = vpop.f32.mrb[0].mxu0
          %v2091 = vpop.f32.mrb[0].mxu0
          %v2092 = vadd.f32 %v1908, %v2091
          %v2093 = vpop.f32.mrb[0].mxu0
          %2094 = vdwg.mxu0
          %v2095 = vpack.c.bf16 %v1972, %v1969
          %v2096 = vpack.c.bf16 %v1980, %v1977
          %v2097 = vpack.c.bf16 %v1988, %v1985
          %v2098 = vpack.c.bf16 %v1996, %v1993
          %v2099 = vpack.c.bf16 %v2004, %v2001
          %v2100 = vpack.c.bf16 %v2012, %v2009
          %v2101 = vpack.c.bf16 %v2020, %v2017
          %v2102 = vpack.c.bf16 %v2028, %v2025
          %v2103 = vpack.c.bf16 %v2036, %v2033
          %v2104 = vpack.c.bf16 %v2044, %v2041
          %v2105 = vpack.c.bf16 %v2052, %v2049
          %v2106 = vpack.c.bf16 %v2060, %v2057
          %v2107 = vpack.c.bf16 %v2068, %v2065
          %v2108 = vpack.c.bf16 %v2076, %v2073
          %v2109 = vpack.c.bf16 %v2084, %v2081
          %v2110 = vpack.c.bf16 %v2092, %v2089
          %2111 = vst.msk [vmem:[#allocation4] sm:$0xff] %vm688, %v2095
          %2112 = vst.msk [vmem:[#allocation4 + $0x8] sm:$0xff] %vm688, %v2096
          %2113 = vst.msk [vmem:[#allocation4 + $0x10] sm:$0xff] %vm688, %v2097
          %2114 = vst.msk [vmem:[#allocation4 + $0x18] sm:$0xff] %vm688, %v2098
          %2115 = vst.msk [vmem:[#allocation4 + $0x20] sm:$0xff] %vm688, %v2099
          %2116 = vst.msk [vmem:[#allocation4 + $0x28] sm:$0xff] %vm688, %v2100
          %2117 = vst.msk [vmem:[#allocation4 + $0x30] sm:$0xff] %vm688, %v2101
          %2118 = vst.msk [vmem:[#allocation4 + $0x38] sm:$0xff] %vm688, %v2102
          %2119 = vst.msk [vmem:[#allocation4 + $0x40] sm:$0xff] %vm688, %v2103
          %2120 = vst.msk [vmem:[#allocation4 + $0x48] sm:$0xff] %vm688, %v2104
          %2121 = vst.msk [vmem:[#allocation4 + $0x50] sm:$0xff] %vm688, %v2105
          %2122 = vst.msk [vmem:[#allocation4 + $0x58] sm:$0xff] %vm688, %v2106
          %2123 = vst.msk [vmem:[#allocation4 + $0x60] sm:$0xff] %vm688, %v2107
          %2124 = vst.msk [vmem:[#allocation4 + $0x68] sm:$0xff] %vm688, %v2108
          %2125 = vst.msk [vmem:[#allocation4 + $0x70] sm:$0xff] %vm688, %v2109
          %2126 = vst.msk [vmem:[#allocation4 + $0x78] sm:$0xff] %vm688, %v2110
        $region128: #{tpu_custom_call.1} parent=71 // pred_fallthru
          _
        %s2127 = smul.u32 %s39, 256
        %s2128 = sshra.s32 %s2127, 3
        %s2129 = sand.u32 %s2127, 7
        %s2130 = smul.addr %s2128, 4
        %s2131 = scalar_lea.vmem [#allocation6], %s2130
        %v2132 = vld [vmem:[%s2131] sm:$0xf]
        %v2133 = vld [vmem:[%s2131 + $0x4] sm:$0xf]
        %v2134 = vld [vmem:[%s2131 + $0x8] sm:$0xf]
        %v2135 = vld [vmem:[%s2131 + $0xc] sm:$0xf]
        %v2136 = vld [vmem:[%s2131 + $0x10] sm:$0xf]
        %v2137 = vld [vmem:[%s2131 + $0x14] sm:$0xf]
        %v2138 = vld [vmem:[%s2131 + $0x18] sm:$0xf]
        %v2139 = vld [vmem:[%s2131 + $0x1c] sm:$0xf]
        %v2140 = vld [vmem:[%s2131 + $0x20] sm:$0xf]
        %v2141 = vld [vmem:[%s2131 + $0x24] sm:$0xf]
        %v2142 = vld [vmem:[%s2131 + $0x28] sm:$0xf]
        %v2143 = vld [vmem:[%s2131 + $0x2c] sm:$0xf]
        %v2144 = vld [vmem:[%s2131 + $0x30] sm:$0xf]
        %v2145 = vld [vmem:[%s2131 + $0x34] sm:$0xf]
        %v2146 = vld [vmem:[%s2131 + $0x38] sm:$0xf]
        %v2147 = vld [vmem:[%s2131 + $0x3c] sm:$0xf]
        %v2148 = vld [vmem:[%s2131 + $0x40] sm:$0xf]
        %v2149 = vld [vmem:[%s2131 + $0x44] sm:$0xf]
        %v2150 = vld [vmem:[%s2131 + $0x48] sm:$0xf]
        %v2151 = vld [vmem:[%s2131 + $0x4c] sm:$0xf]
        %v2152 = vld [vmem:[%s2131 + $0x50] sm:$0xf]
        %v2153 = vld [vmem:[%s2131 + $0x54] sm:$0xf]
        %v2154 = vld [vmem:[%s2131 + $0x58] sm:$0xf]
        %v2155 = vld [vmem:[%s2131 + $0x5c] sm:$0xf]
        %v2156 = vld [vmem:[%s2131 + $0x60] sm:$0xf]
        %v2157 = vld [vmem:[%s2131 + $0x64] sm:$0xf]
        %v2158 = vld [vmem:[%s2131 + $0x68] sm:$0xf]
        %v2159 = vld [vmem:[%s2131 + $0x6c] sm:$0xf]
        %v2160 = vld [vmem:[%s2131 + $0x70] sm:$0xf]
        %v2161 = vld [vmem:[%s2131 + $0x74] sm:$0xf]
        %v2162 = vld [vmem:[%s2131 + $0x78] sm:$0xf]
        %v2163 = vld [vmem:[%s2131 + $0x7c] sm:$0xf]
        %v2164 = vunpack.c.l.bf16 %v2132
        %v2165 = vunpack.c.l.bf16 %v2133
        %v2166 = vunpack.c.l.bf16 %v2134
        %v2167 = vunpack.c.l.bf16 %v2135
        %v2168 = vunpack.c.l.bf16 %v2136
        %v2169 = vunpack.c.l.bf16 %v2137
        %v2170 = vunpack.c.l.bf16 %v2138
        %v2171 = vunpack.c.l.bf16 %v2139
        %v2172 = vunpack.c.l.bf16 %v2140
        %v2173 = vunpack.c.l.bf16 %v2141
        %v2174 = vunpack.c.l.bf16 %v2142
        %v2175 = vunpack.c.l.bf16 %v2143
        %v2176 = vunpack.c.l.bf16 %v2144
        %v2177 = vunpack.c.l.bf16 %v2145
        %v2178 = vunpack.c.l.bf16 %v2146
        %v2179 = vunpack.c.l.bf16 %v2147
        %v2180 = vunpack.c.l.bf16 %v2148
        %v2181 = vunpack.c.l.bf16 %v2149
        %v2182 = vunpack.c.l.bf16 %v2150
        %v2183 = vunpack.c.l.bf16 %v2151
        %v2184 = vunpack.c.l.bf16 %v2152
        %v2185 = vunpack.c.l.bf16 %v2153
        %v2186 = vunpack.c.l.bf16 %v2154
        %v2187 = vunpack.c.l.bf16 %v2155
        %v2188 = vunpack.c.l.bf16 %v2156
        %v2189 = vunpack.c.l.bf16 %v2157
        %v2190 = vunpack.c.l.bf16 %v2158
        %v2191 = vunpack.c.l.bf16 %v2159
        %v2192 = vunpack.c.l.bf16 %v2160
        %v2193 = vunpack.c.l.bf16 %v2161
        %v2194 = vunpack.c.l.bf16 %v2162
        %v2195 = vunpack.c.l.bf16 %v2163
        %s2196 = sshra.s32 %s2127, 4
        %s2197 = sand.u32 %s2127, 15
        %s2198 = smul.addr %s2196, 8
        %s2199 = scalar_lea.vmem [#allocation2], %s2198
        %v2200 = vld [vmem:[%s2199] sm:$0xff]
        %v2201 = vld [vmem:[%s2199 + $0x8] sm:$0xff]
        %v2202 = vld [vmem:[%s2199 + $0x10] sm:$0xff]
        %v2203 = vld [vmem:[%s2199 + $0x18] sm:$0xff]
        %v2204 = vld [vmem:[%s2199 + $0x20] sm:$0xff]
        %v2205 = vld [vmem:[%s2199 + $0x28] sm:$0xff]
        %v2206 = vld [vmem:[%s2199 + $0x30] sm:$0xff]
        %v2207 = vld [vmem:[%s2199 + $0x38] sm:$0xff]
        %v2208 = vld [vmem:[%s2199 + $0x40] sm:$0xff]
        %v2209 = vld [vmem:[%s2199 + $0x48] sm:$0xff]
        %v2210 = vld [vmem:[%s2199 + $0x50] sm:$0xff]
        %v2211 = vld [vmem:[%s2199 + $0x58] sm:$0xff]
        %v2212 = vld [vmem:[%s2199 + $0x60] sm:$0xff]
        %v2213 = vld [vmem:[%s2199 + $0x68] sm:$0xff]
        %v2214 = vld [vmem:[%s2199 + $0x70] sm:$0xff]
        %v2215 = vld [vmem:[%s2199 + $0x78] sm:$0xff]
        %v2216 = vld [vmem:[#allocation3] sm:$0xff]
        %v2217 = vld [vmem:[#allocation3 + $0x8] sm:$0xff]
        %v2218 = vld [vmem:[#allocation3 + $0x10] sm:$0xff]
        %v2219 = vld [vmem:[#allocation3 + $0x18] sm:$0xff]
        %v2220 = vld [vmem:[#allocation4] sm:$0xff]
        %v2221 = vld [vmem:[#allocation4 + $0x8] sm:$0xff]
        %v2222 = vld [vmem:[#allocation4 + $0x10] sm:$0xff]
        %v2223 = vld [vmem:[#allocation4 + $0x18] sm:$0xff]
        %v2224 = vld [vmem:[#allocation4 + $0x20] sm:$0xff]
        %v2225 = vld [vmem:[#allocation4 + $0x28] sm:$0xff]
        %v2226 = vld [vmem:[#allocation4 + $0x30] sm:$0xff]
        %v2227 = vld [vmem:[#allocation4 + $0x38] sm:$0xff]
        %v2228 = vld [vmem:[#allocation4 + $0x40] sm:$0xff]
        %v2229 = vld [vmem:[#allocation4 + $0x48] sm:$0xff]
        %v2230 = vld [vmem:[#allocation4 + $0x50] sm:$0xff]
        %v2231 = vld [vmem:[#allocation4 + $0x58] sm:$0xff]
        %v2232 = vld [vmem:[#allocation4 + $0x60] sm:$0xff]
        %v2233 = vld [vmem:[#allocation4 + $0x68] sm:$0xff]
        %v2234 = vld [vmem:[#allocation4 + $0x70] sm:$0xff]
        %v2235 = vld [vmem:[#allocation4 + $0x78] sm:$0xff]
        %vm2236 = vcmask 261120
        %v2238 = vsel %vm2236, %v2200, 0
        %v2241 = vsel %vm2236, %v2201, 0
        %v2244 = vsel %vm2236, %v2202, 0
        %v2247 = vsel %vm2236, %v2203, 0
        %v2250 = vsel %vm2236, %v2204, 0
        %v2253 = vsel %vm2236, %v2205, 0
        %v2256 = vsel %vm2236, %v2206, 0
        %v2259 = vsel %vm2236, %v2207, 0
        %v2262 = vsel %vm2236, %v2208, 0
        %v2265 = vsel %vm2236, %v2209, 0
        %v2268 = vsel %vm2236, %v2210, 0
        %v2271 = vsel %vm2236, %v2211, 0
        %v2274 = vsel %vm2236, %v2212, 0
        %v2277 = vsel %vm2236, %v2213, 0
        %v2280 = vsel %vm2236, %v2214, 0
        %v2283 = vsel %vm2236, %v2215, 0
        %2285 = vmatprep.subr.bf16.mxu0 %v2217
        %2286 = vmatpush1.bf16.msra.mxu0 %v2216
        %2287 = vmatprep.subr.bf16.mxu0 %v2219
        %2288 = vmatpush1.bf16.msra.mxu0 %v2218
        %2289 = vmatprep.subr.bf16.mxu0 0
        %2290 = vmatpush1.bf16.msra.mxu0 0
        %2291 = vmatprep.subr.bf16.mxu0 0
        %2292 = vmatpush1.bf16.msra.mxu0 0
        %2293 = vmatprep.subr.bf16.mxu0 0
        %2294 = vmatpush1.bf16.msra.mxu0 0
        %2295 = vmatprep.subr.bf16.mxu0 0
        %2296 = vmatpush1.bf16.msra.mxu0 0
        %2297 = vmatprep.subr.bf16.mxu0 0
        %2298 = vmatpush1.bf16.msra.mxu0 0
        %2299 = vmatprep.subr.bf16.mxu0 0
        %2300 = vmatpush1.bf16.msra.mxu0 0
        %2301 = vmatprep.subr.bf16.mxu0 0
        %2302 = vmatpush1.bf16.msra.mxu0 0
        %2303 = vmatprep.subr.bf16.mxu0 0
        %2304 = vmatpush1.bf16.msra.mxu0 0
        %2305 = vmatprep.subr.bf16.mxu0 0
        %2306 = vmatpush1.bf16.msra.mxu0 0
        %2307 = vmatprep.subr.bf16.mxu0 0
        %2308 = vmatpush1.bf16.msra.mxu0 0
        %2309 = vmatprep.subr.bf16.mxu0 0
        %2310 = vmatpush1.bf16.msra.mxu0 0
        %2311 = vmatprep.subr.bf16.mxu0 0
        %2312 = vmatpush1.bf16.msra.mxu0 0
        %2313 = vmatprep.subr.bf16.mxu0 0
        %2314 = vmatpush1.bf16.msra.mxu0 0
        %2315 = vmatprep.subr.bf16.mxu0 0
        %2316 = vmatpush1.bf16.msra.mxu0 0
        %2317 = vmatprep.mubr.bf16.mxu0 0
        %2318 = vmatmul.mubr.bf16.gmra.mrb[0].mxu0 %v2238
        %v2319 = vpop.f32.mrb[0].mxu0
        %v2320 = vadd.f32 0.0, %v2319
        %v2321 = vpop.f32.mrb[0].mxu0
        %v2322 = vadd.f32 0.0, %v2321
        %v2323 = vpop.f32.mrb[0].mxu0
        %v2324 = vadd.f32 0.0, %v2323
        %v2325 = vpop.f32.mrb[0].mxu0
        %v2326 = vadd.f32 0.0, %v2325
        %2327 = vmatprep.mubr.bf16.mxu0 0
        %2328 = vmatmul.mubr.bf16.gmra.mrb[0].mxu0 %v2241
        %v2329 = vpop.f32.mrb[0].mxu0
        %v2330 = vadd.f32 0.0, %v2329
        %v2331 = vpop.f32.mrb[0].mxu0
        %v2332 = vadd.f32 0.0, %v2331
        %v2333 = vpop.f32.mrb[0].mxu0
        %v2334 = vadd.f32 0.0, %v2333
        %v2335 = vpop.f32.mrb[0].mxu0
        %v2336 = vadd.f32 0.0, %v2335
        %2337 = vmatprep.mubr.bf16.mxu0 0
        %2338 = vmatmul.mubr.bf16.gmra.mrb[0].mxu0 %v2244
        %v2339 = vpop.f32.mrb[0].mxu0
        %v2340 = vadd.f32 0.0, %v2339
        %v2341 = vpop.f32.mrb[0].mxu0
        %v2342 = vadd.f32 0.0, %v2341
        %v2343 = vpop.f32.mrb[0].mxu0
        %v2344 = vadd.f32 0.0, %v2343
        %v2345 = vpop.f32.mrb[0].mxu0
        %v2346 = vadd.f32 0.0, %v2345
        %2347 = vmatprep.mubr.bf16.mxu0 0
        %2348 = vmatmul.mubr.bf16.gmra.mrb[0].mxu0 %v2247
        %v2349 = vpop.f32.mrb[0].mxu0
        %v2350 = vadd.f32 0.0, %v2349
        %v2351 = vpop.f32.mrb[0].mxu0
        %v2352 = vadd.f32 0.0, %v2351
        %v2353 = vpop.f32.mrb[0].mxu0
        %v2354 = vadd.f32 0.0, %v2353
        %v2355 = vpop.f32.mrb[0].mxu0
        %v2356 = vadd.f32 0.0, %v2355
        %2357 = vmatprep.mubr.bf16.mxu0 0
        %2358 = vmatmul.mubr.bf16.gmra.mrb[0].mxu0 %v2250
        %v2359 = vpop.f32.mrb[0].mxu0
        %v2360 = vadd.f32 0.0, %v2359
        %v2361 = vpop.f32.mrb[0].mxu0
        %v2362 = vadd.f32 0.0, %v2361
        %v2363 = vpop.f32.mrb[0].mxu0
        %v2364 = vadd.f32 0.0, %v2363
        %v2365 = vpop.f32.mrb[0].mxu0
        %v2366 = vadd.f32 0.0, %v2365
        %2367 = vmatprep.mubr.bf16.mxu0 0
        %2368 = vmatmul.mubr.bf16.gmra.mrb[0].mxu0 %v2253
        %v2369 = vpop.f32.mrb[0].mxu0
        %v2370 = vadd.f32 0.0, %v2369
        %v2371 = vpop.f32.mrb[0].mxu0
        %v2372 = vadd.f32 0.0, %v2371
        %v2373 = vpop.f32.mrb[0].mxu0
        %v2374 = vadd.f32 0.0, %v2373
        %v2375 = vpop.f32.mrb[0].mxu0
        %v2376 = vadd.f32 0.0, %v2375
        %2377 = vmatprep.mubr.bf16.mxu0 0
        %2378 = vmatmul.mubr.bf16.gmra.mrb[0].mxu0 %v2256
        %v2379 = vpop.f32.mrb[0].mxu0
        %v2380 = vadd.f32 0.0, %v2379
        %v2381 = vpop.f32.mrb[0].mxu0
        %v2382 = vadd.f32 0.0, %v2381
        %v2383 = vpop.f32.mrb[0].mxu0
        %v2384 = vadd.f32 0.0, %v2383
        %v2385 = vpop.f32.mrb[0].mxu0
        %v2386 = vadd.f32 0.0, %v2385
        %2387 = vmatprep.mubr.bf16.mxu0 0
        %2388 = vmatmul.mubr.bf16.gmra.mrb[0].mxu0 %v2259
        %v2389 = vpop.f32.mrb[0].mxu0
        %v2390 = vadd.f32 0.0, %v2389
        %v2391 = vpop.f32.mrb[0].mxu0
        %v2392 = vadd.f32 0.0, %v2391
        %v2393 = vpop.f32.mrb[0].mxu0
        %v2394 = vadd.f32 0.0, %v2393
        %v2395 = vpop.f32.mrb[0].mxu0
        %v2396 = vadd.f32 0.0, %v2395
        %2397 = vmatprep.mubr.bf16.mxu0 0
        %2398 = vmatmul.mubr.bf16.gmra.mrb[0].mxu0 %v2262
        %v2399 = vpop.f32.mrb[0].mxu0
        %v2400 = vadd.f32 0.0, %v2399
        %v2401 = vpop.f32.mrb[0].mxu0
        %v2402 = vadd.f32 0.0, %v2401
        %v2403 = vpop.f32.mrb[0].mxu0
        %v2404 = vadd.f32 0.0, %v2403
        %v2405 = vpop.f32.mrb[0].mxu0
        %v2406 = vadd.f32 0.0, %v2405
        %2407 = vmatprep.mubr.bf16.mxu0 0
        %2408 = vmatmul.mubr.bf16.gmra.mrb[0].mxu0 %v2265
        %v2409 = vpop.f32.mrb[0].mxu0
        %v2410 = vadd.f32 0.0, %v2409
        %v2411 = vpop.f32.mrb[0].mxu0
        %v2412 = vadd.f32 0.0, %v2411
        %v2413 = vpop.f32.mrb[0].mxu0
        %v2414 = vadd.f32 0.0, %v2413
        %v2415 = vpop.f32.mrb[0].mxu0
        %v2416 = vadd.f32 0.0, %v2415
        %2417 = vmatprep.mubr.bf16.mxu0 0
        %2418 = vmatmul.mubr.bf16.gmra.mrb[0].mxu0 %v2268
        %v2419 = vpop.f32.mrb[0].mxu0
        %v2420 = vadd.f32 0.0, %v2419
        %v2421 = vpop.f32.mrb[0].mxu0
        %v2422 = vadd.f32 0.0, %v2421
        %v2423 = vpop.f32.mrb[0].mxu0
        %v2424 = vadd.f32 0.0, %v2423
        %v2425 = vpop.f32.mrb[0].mxu0
        %v2426 = vadd.f32 0.0, %v2425
        %2427 = vmatprep.mubr.bf16.mxu0 0
        %2428 = vmatmul.mubr.bf16.gmra.mrb[0].mxu0 %v2271
        %v2429 = vpop.f32.mrb[0].mxu0
        %v2430 = vadd.f32 0.0, %v2429
        %v2431 = vpop.f32.mrb[0].mxu0
        %v2432 = vadd.f32 0.0, %v2431
        %v2433 = vpop.f32.mrb[0].mxu0
        %v2434 = vadd.f32 0.0, %v2433
        %v2435 = vpop.f32.mrb[0].mxu0
        %v2436 = vadd.f32 0.0, %v2435
        %2437 = vmatprep.mubr.bf16.mxu0 0
        %2438 = vmatmul.mubr.bf16.gmra.mrb[0].mxu0 %v2274
        %v2439 = vpop.f32.mrb[0].mxu0
        %v2440 = vadd.f32 0.0, %v2439
        %v2441 = vpop.f32.mrb[0].mxu0
        %v2442 = vadd.f32 0.0, %v2441
        %v2443 = vpop.f32.mrb[0].mxu0
        %v2444 = vadd.f32 0.0, %v2443
        %v2445 = vpop.f32.mrb[0].mxu0
        %v2446 = vadd.f32 0.0, %v2445
        %2447 = vmatprep.mubr.bf16.mxu0 0
        %2448 = vmatmul.mubr.bf16.gmra.mrb[0].mxu0 %v2277
        %v2449 = vpop.f32.mrb[0].mxu0
        %v2450 = vadd.f32 0.0, %v2449
        %v2451 = vpop.f32.mrb[0].mxu0
        %v2452 = vadd.f32 0.0, %v2451
        %v2453 = vpop.f32.mrb[0].mxu0
        %v2454 = vadd.f32 0.0, %v2453
        %v2455 = vpop.f32.mrb[0].mxu0
        %v2456 = vadd.f32 0.0, %v2455
        %2457 = vmatprep.mubr.bf16.mxu0 0
        %2458 = vmatmul.mubr.bf16.gmra.mrb[0].mxu0 %v2280
        %v2459 = vpop.f32.mrb[0].mxu0
        %v2460 = vadd.f32 0.0, %v2459
        %v2461 = vpop.f32.mrb[0].mxu0
        %v2462 = vadd.f32 0.0, %v2461
        %v2463 = vpop.f32.mrb[0].mxu0
        %v2464 = vadd.f32 0.0, %v2463
        %v2465 = vpop.f32.mrb[0].mxu0
        %v2466 = vadd.f32 0.0, %v2465
        %2467 = vmatprep.mubr.bf16.mxu0 0
        %2468 = vmatmul.mubr.bf16.gmra.mrb[0].mxu0 %v2283
        %v2469 = vpop.f32.mrb[0].mxu0
        %v2470 = vadd.f32 0.0, %v2469
        %v2471 = vpop.f32.mrb[0].mxu0
        %v2472 = vadd.f32 0.0, %v2471
        %v2473 = vpop.f32.mrb[0].mxu0
        %v2474 = vadd.f32 0.0, %v2473
        %v2475 = vpop.f32.mrb[0].mxu0
        %v2476 = vadd.f32 0.0, %v2475
        %2477 = vdwg.mxu0
        %v2478 = vmax.f32 %v2320, %v2322
        %2479 = vmax.xlane.f32.xlu0 %v2478
        %v2480 = vpop.xlane.xlu0 %2479
        %v2481 = vmax.f32 %v2324, %v2326
        %2482 = vmax.xlane.f32.xlu0 %v2481
        %v2483 = vpop.xlane.xlu0 %2482
        %v2484 = vmax.f32 %v2330, %v2332
        %2485 = vmax.xlane.f32.xlu0 %v2484
        %v2486 = vpop.xlane.xlu0 %2485
        %v2487 = vmax.f32 %v2334, %v2336
        %2488 = vmax.xlane.f32.xlu0 %v2487
        %v2489 = vpop.xlane.xlu0 %2488
        %v2490 = vmax.f32 %v2340, %v2342
        %2491 = vmax.xlane.f32.xlu0 %v2490
        %v2492 = vpop.xlane.xlu0 %2491
        %v2493 = vmax.f32 %v2344, %v2346
        %2494 = vmax.xlane.f32.xlu0 %v2493
        %v2495 = vpop.xlane.xlu0 %2494
        %v2496 = vmax.f32 %v2350, %v2352
        %2497 = vmax.xlane.f32.xlu0 %v2496
        %v2498 = vpop.xlane.xlu0 %2497
        %v2499 = vmax.f32 %v2354, %v2356
        %2500 = vmax.xlane.f32.xlu0 %v2499
        %v2501 = vpop.xlane.xlu0 %2500
        %v2502 = vmax.f32 %v2360, %v2362
        %2503 = vmax.xlane.f32.xlu0 %v2502
        %v2504 = vpop.xlane.xlu0 %2503
        %v2505 = vmax.f32 %v2364, %v2366
        %2506 = vmax.xlane.f32.xlu0 %v2505
        %v2507 = vpop.xlane.xlu0 %2506
        %v2508 = vmax.f32 %v2370, %v2372
        %2509 = vmax.xlane.f32.xlu0 %v2508
        %v2510 = vpop.xlane.xlu0 %2509
        %v2511 = vmax.f32 %v2374, %v2376
        %2512 = vmax.xlane.f32.xlu0 %v2511
        %v2513 = vpop.xlane.xlu0 %2512
        %v2514 = vmax.f32 %v2380, %v2382
        %2515 = vmax.xlane.f32.xlu0 %v2514
        %v2516 = vpop.xlane.xlu0 %2515
        %v2517 = vmax.f32 %v2384, %v2386
        %2518 = vmax.xlane.f32.xlu0 %v2517
        %v2519 = vpop.xlane.xlu0 %2518
        %v2520 = vmax.f32 %v2390, %v2392
        %2521 = vmax.xlane.f32.xlu0 %v2520
        %v2522 = vpop.xlane.xlu0 %2521
        %v2523 = vmax.f32 %v2394, %v2396
        %2524 = vmax.xlane.f32.xlu0 %v2523
        %v2525 = vpop.xlane.xlu0 %2524
        %v2526 = vmax.f32 %v2400, %v2402
        %2527 = vmax.xlane.f32.xlu0 %v2526
        %v2528 = vpop.xlane.xlu0 %2527
        %v2529 = vmax.f32 %v2404, %v2406
        %2530 = vmax.xlane.f32.xlu0 %v2529
        %v2531 = vpop.xlane.xlu0 %2530
        %v2532 = vmax.f32 %v2410, %v2412
        %2533 = vmax.xlane.f32.xlu0 %v2532
        %v2534 = vpop.xlane.xlu0 %2533
        %v2535 = vmax.f32 %v2414, %v2416
        %2536 = vmax.xlane.f32.xlu0 %v2535
        %v2537 = vpop.xlane.xlu0 %2536
        %v2538 = vmax.f32 %v2420, %v2422
        %2539 = vmax.xlane.f32.xlu0 %v2538
        %v2540 = vpop.xlane.xlu0 %2539
        %v2541 = vmax.f32 %v2424, %v2426
        %2542 = vmax.xlane.f32.xlu0 %v2541
        %v2543 = vpop.xlane.xlu0 %2542
        %v2544 = vmax.f32 %v2430, %v2432
        %2545 = vmax.xlane.f32.xlu0 %v2544
        %v2546 = vpop.xlane.xlu0 %2545
        %v2547 = vmax.f32 %v2434, %v2436
        %2548 = vmax.xlane.f32.xlu0 %v2547
        %v2549 = vpop.xlane.xlu0 %2548
        %v2550 = vmax.f32 %v2440, %v2442
        %2551 = vmax.xlane.f32.xlu0 %v2550
        %v2552 = vpop.xlane.xlu0 %2551
        %v2553 = vmax.f32 %v2444, %v2446
        %2554 = vmax.xlane.f32.xlu0 %v2553
        %v2555 = vpop.xlane.xlu0 %2554
        %v2556 = vmax.f32 %v2450, %v2452
        %2557 = vmax.xlane.f32.xlu0 %v2556
        %v2558 = vpop.xlane.xlu0 %2557
        %v2559 = vmax.f32 %v2454, %v2456
        %2560 = vmax.xlane.f32.xlu0 %v2559
        %v2561 = vpop.xlane.xlu0 %2560
        %v2562 = vmax.f32 %v2460, %v2462
        %2563 = vmax.xlane.f32.xlu0 %v2562
        %v2564 = vpop.xlane.xlu0 %2563
        %v2565 = vmax.f32 %v2464, %v2466
        %2566 = vmax.xlane.f32.xlu0 %v2565
        %v2567 = vpop.xlane.xlu0 %2566
        %v2568 = vmax.f32 %v2470, %v2472
        %2569 = vmax.xlane.f32.xlu0 %v2568
        %v2570 = vpop.xlane.xlu0 %2569
        %v2571 = vmax.f32 %v2474, %v2476
        %2572 = vmax.xlane.f32.xlu0 %v2571
        %v2573 = vpop.xlane.xlu0 %2572
        %v2574 = vsub.f32 %v2320, %v2480
        %v2575 = vsub.f32 %v2322, %v2480
        %v2576 = vsub.f32 %v2324, %v2483
        %v2577 = vsub.f32 %v2326, %v2483
        %v2578 = vsub.f32 %v2330, %v2486
        %v2579 = vsub.f32 %v2332, %v2486
        %v2580 = vsub.f32 %v2334, %v2489
        %v2581 = vsub.f32 %v2336, %v2489
        %v2582 = vsub.f32 %v2340, %v2492
        %v2583 = vsub.f32 %v2342, %v2492
        %v2584 = vsub.f32 %v2344, %v2495
        %v2585 = vsub.f32 %v2346, %v2495
        %v2586 = vsub.f32 %v2350, %v2498
        %v2587 = vsub.f32 %v2352, %v2498
        %v2588 = vsub.f32 %v2354, %v2501
        %v2589 = vsub.f32 %v2356, %v2501
        %v2590 = vsub.f32 %v2360, %v2504
        %v2591 = vsub.f32 %v2362, %v2504
        %v2592 = vsub.f32 %v2364, %v2507
        %v2593 = vsub.f32 %v2366, %v2507
        %v2594 = vsub.f32 %v2370, %v2510
        %v2595 = vsub.f32 %v2372, %v2510
        %v2596 = vsub.f32 %v2374, %v2513
        %v2597 = vsub.f32 %v2376, %v2513
        %v2598 = vsub.f32 %v2380, %v2516
        %v2599 = vsub.f32 %v2382, %v2516
        %v2600 = vsub.f32 %v2384, %v2519
        %v2601 = vsub.f32 %v2386, %v2519
        %v2602 = vsub.f32 %v2390, %v2522
        %v2603 = vsub.f32 %v2392, %v2522
        %v2604 = vsub.f32 %v2394, %v2525
        %v2605 = vsub.f32 %v2396, %v2525
        %v2606 = vsub.f32 %v2400, %v2528
        %v2607 = vsub.f32 %v2402, %v2528
        %v2608 = vsub.f32 %v2404, %v2531
        %v2609 = vsub.f32 %v2406, %v2531
        %v2610 = vsub.f32 %v2410, %v2534
        %v2611 = vsub.f32 %v2412, %v2534
        %v2612 = vsub.f32 %v2414, %v2537
        %v2613 = vsub.f32 %v2416, %v2537
        %v2614 = vsub.f32 %v2420, %v2540
        %v2615 = vsub.f32 %v2422, %v2540
        %v2616 = vsub.f32 %v2424, %v2543
        %v2617 = vsub.f32 %v2426, %v2543
        %v2618 = vsub.f32 %v2430, %v2546
        %v2619 = vsub.f32 %v2432, %v2546
        %v2620 = vsub.f32 %v2434, %v2549
        %v2621 = vsub.f32 %v2436, %v2549
        %v2622 = vsub.f32 %v2440, %v2552
        %v2623 = vsub.f32 %v2442, %v2552
        %v2624 = vsub.f32 %v2444, %v2555
        %v2625 = vsub.f32 %v2446, %v2555
        %v2626 = vsub.f32 %v2450, %v2558
        %v2627 = vsub.f32 %v2452, %v2558
        %v2628 = vsub.f32 %v2454, %v2561
        %v2629 = vsub.f32 %v2456, %v2561
        %v2630 = vsub.f32 %v2460, %v2564
        %v2631 = vsub.f32 %v2462, %v2564
        %v2632 = vsub.f32 %v2464, %v2567
        %v2633 = vsub.f32 %v2466, %v2567
        %v2634 = vsub.f32 %v2470, %v2570
        %v2635 = vsub.f32 %v2472, %v2570
        %v2636 = vsub.f32 %v2474, %v2573
        %v2637 = vsub.f32 %v2476, %v2573
        %v2638 = vmul.f32 %v2574, 1.442695
        %v2639 = vpow.pop %v2638
        %v2640 = vmul.f32 %v2575, 1.442695
        %v2641 = vpow.pop %v2640
        %v2642 = vmul.f32 %v2576, 1.442695
        %v2643 = vpow.pop %v2642
        %v2644 = vmul.f32 %v2577, 1.442695
        %v2645 = vpow.pop %v2644
        %v2646 = vmul.f32 %v2578, 1.442695
        %v2647 = vpow.pop %v2646
        %v2648 = vmul.f32 %v2579, 1.442695
        %v2649 = vpow.pop %v2648
        %v2650 = vmul.f32 %v2580, 1.442695
        %v2651 = vpow.pop %v2650
        %v2652 = vmul.f32 %v2581, 1.442695
        %v2653 = vpow.pop %v2652
        %v2654 = vmul.f32 %v2582, 1.442695
        %v2655 = vpow.pop %v2654
        %v2656 = vmul.f32 %v2583, 1.442695
        %v2657 = vpow.pop %v2656
        %v2658 = vmul.f32 %v2584, 1.442695
        %v2659 = vpow.pop %v2658
        %v2660 = vmul.f32 %v2585, 1.442695
        %v2661 = vpow.pop %v2660
        %v2662 = vmul.f32 %v2586, 1.442695
        %v2663 = vpow.pop %v2662
        %v2664 = vmul.f32 %v2587, 1.442695
        %v2665 = vpow.pop %v2664
        %v2666 = vmul.f32 %v2588, 1.442695
        %v2667 = vpow.pop %v2666
        %v2668 = vmul.f32 %v2589, 1.442695
        %v2669 = vpow.pop %v2668
        %v2670 = vmul.f32 %v2590, 1.442695
        %v2671 = vpow.pop %v2670
        %v2672 = vmul.f32 %v2591, 1.442695
        %v2673 = vpow.pop %v2672
        %v2674 = vmul.f32 %v2592, 1.442695
        %v2675 = vpow.pop %v2674
        %v2676 = vmul.f32 %v2593, 1.442695
        %v2677 = vpow.pop %v2676
        %v2678 = vmul.f32 %v2594, 1.442695
        %v2679 = vpow.pop %v2678
        %v2680 = vmul.f32 %v2595, 1.442695
        %v2681 = vpow.pop %v2680
        %v2682 = vmul.f32 %v2596, 1.442695
        %v2683 = vpow.pop %v2682
        %v2684 = vmul.f32 %v2597, 1.442695
        %v2685 = vpow.pop %v2684
        %v2686 = vmul.f32 %v2598, 1.442695
        %v2687 = vpow.pop %v2686
        %v2688 = vmul.f32 %v2599, 1.442695
        %v2689 = vpow.pop %v2688
        %v2690 = vmul.f32 %v2600, 1.442695
        %v2691 = vpow.pop %v2690
        %v2692 = vmul.f32 %v2601, 1.442695
        %v2693 = vpow.pop %v2692
        %v2694 = vmul.f32 %v2602, 1.442695
        %v2695 = vpow.pop %v2694
        %v2696 = vmul.f32 %v2603, 1.442695
        %v2697 = vpow.pop %v2696
        %v2698 = vmul.f32 %v2604, 1.442695
        %v2699 = vpow.pop %v2698
        %v2700 = vmul.f32 %v2605, 1.442695
        %v2701 = vpow.pop %v2700
        %v2702 = vmul.f32 %v2606, 1.442695
        %v2703 = vpow.pop %v2702
        %v2704 = vmul.f32 %v2607, 1.442695
        %v2705 = vpow.pop %v2704
        %v2706 = vmul.f32 %v2608, 1.442695
        %v2707 = vpow.pop %v2706
        %v2708 = vmul.f32 %v2609, 1.442695
        %v2709 = vpow.pop %v2708
        %v2710 = vmul.f32 %v2610, 1.442695
        %v2711 = vpow.pop %v2710
        %v2712 = vmul.f32 %v2611, 1.442695
        %v2713 = vpow.pop %v2712
        %v2714 = vmul.f32 %v2612, 1.442695
        %v2715 = vpow.pop %v2714
        %v2716 = vmul.f32 %v2613, 1.442695
        %v2717 = vpow.pop %v2716
        %v2718 = vmul.f32 %v2614, 1.442695
        %v2719 = vpow.pop %v2718
        %v2720 = vmul.f32 %v2615, 1.442695
        %v2721 = vpow.pop %v2720
        %v2722 = vmul.f32 %v2616, 1.442695
        %v2723 = vpow.pop %v2722
        %v2724 = vmul.f32 %v2617, 1.442695
        %v2725 = vpow.pop %v2724
        %v2726 = vmul.f32 %v2618, 1.442695
        %v2727 = vpow.pop %v2726
        %v2728 = vmul.f32 %v2619, 1.442695
        %v2729 = vpow.pop %v2728
        %v2730 = vmul.f32 %v2620, 1.442695
        %v2731 = vpow.pop %v2730
        %v2732 = vmul.f32 %v2621, 1.442695
        %v2733 = vpow.pop %v2732
        %v2734 = vmul.f32 %v2622, 1.442695
        %v2735 = vpow.pop %v2734
        %v2736 = vmul.f32 %v2623, 1.442695
        %v2737 = vpow.pop %v2736
        %v2738 = vmul.f32 %v2624, 1.442695
        %v2739 = vpow.pop %v2738
        %v2740 = vmul.f32 %v2625, 1.442695
        %v2741 = vpow.pop %v2740
        %v2742 = vmul.f32 %v2626, 1.442695
        %v2743 = vpow.pop %v2742
        %v2744 = vmul.f32 %v2627, 1.442695
        %v2745 = vpow.pop %v2744
        %v2746 = vmul.f32 %v2628, 1.442695
        %v2747 = vpow.pop %v2746
        %v2748 = vmul.f32 %v2629, 1.442695
        %v2749 = vpow.pop %v2748
        %v2750 = vmul.f32 %v2630, 1.442695
        %v2751 = vpow.pop %v2750
        %v2752 = vmul.f32 %v2631, 1.442695
        %v2753 = vpow.pop %v2752
        %v2754 = vmul.f32 %v2632, 1.442695
        %v2755 = vpow.pop %v2754
        %v2756 = vmul.f32 %v2633, 1.442695
        %v2757 = vpow.pop %v2756
        %v2758 = vmul.f32 %v2634, 1.442695
        %v2759 = vpow.pop %v2758
        %v2760 = vmul.f32 %v2635, 1.442695
        %v2761 = vpow.pop %v2760
        %v2762 = vmul.f32 %v2636, 1.442695
        %v2763 = vpow.pop %v2762
        %v2764 = vmul.f32 %v2637, 1.442695
        %v2765 = vpow.pop %v2764
        %v2766 = vadd.f32 %v2639, %v2641
        %2767 = vadd.xlane.f32.xlu0 %v2766
        %v2768 = vpop.xlane.xlu0 %2767
        %v2769 = vadd.f32 %v2643, %v2645
        %2770 = vadd.xlane.f32.xlu0 %v2769
        %v2771 = vpop.xlane.xlu0 %2770
        %v2772 = vadd.f32 %v2647, %v2649
        %2773 = vadd.xlane.f32.xlu0 %v2772
        %v2774 = vpop.xlane.xlu0 %2773
        %v2775 = vadd.f32 %v2651, %v2653
        %2776 = vadd.xlane.f32.xlu0 %v2775
        %v2777 = vpop.xlane.xlu0 %2776
        %v2778 = vadd.f32 %v2655, %v2657
        %2779 = vadd.xlane.f32.xlu0 %v2778
        %v2780 = vpop.xlane.xlu0 %2779
        %v2781 = vadd.f32 %v2659, %v2661
        %2782 = vadd.xlane.f32.xlu0 %v2781
        %v2783 = vpop.xlane.xlu0 %2782
        %v2784 = vadd.f32 %v2663, %v2665
        %2785 = vadd.xlane.f32.xlu0 %v2784
        %v2786 = vpop.xlane.xlu0 %2785
        %v2787 = vadd.f32 %v2667, %v2669
        %2788 = vadd.xlane.f32.xlu0 %v2787
        %v2789 = vpop.xlane.xlu0 %2788
        %v2790 = vadd.f32 %v2671, %v2673
        %2791 = vadd.xlane.f32.xlu0 %v2790
        %v2792 = vpop.xlane.xlu0 %2791
        %v2793 = vadd.f32 %v2675, %v2677
        %2794 = vadd.xlane.f32.xlu0 %v2793
        %v2795 = vpop.xlane.xlu0 %2794
        %v2796 = vadd.f32 %v2679, %v2681
        %2797 = vadd.xlane.f32.xlu0 %v2796
        %v2798 = vpop.xlane.xlu0 %2797
        %v2799 = vadd.f32 %v2683, %v2685
        %2800 = vadd.xlane.f32.xlu0 %v2799
        %v2801 = vpop.xlane.xlu0 %2800
        %v2802 = vadd.f32 %v2687, %v2689
        %2803 = vadd.xlane.f32.xlu0 %v2802
        %v2804 = vpop.xlane.xlu0 %2803
        %v2805 = vadd.f32 %v2691, %v2693
        %2806 = vadd.xlane.f32.xlu0 %v2805
        %v2807 = vpop.xlane.xlu0 %2806
        %v2808 = vadd.f32 %v2695, %v2697
        %2809 = vadd.xlane.f32.xlu0 %v2808
        %v2810 = vpop.xlane.xlu0 %2809
        %v2811 = vadd.f32 %v2699, %v2701
        %2812 = vadd.xlane.f32.xlu0 %v2811
        %v2813 = vpop.xlane.xlu0 %2812
        %v2814 = vadd.f32 %v2703, %v2705
        %2815 = vadd.xlane.f32.xlu0 %v2814
        %v2816 = vpop.xlane.xlu0 %2815
        %v2817 = vadd.f32 %v2707, %v2709
        %2818 = vadd.xlane.f32.xlu0 %v2817
        %v2819 = vpop.xlane.xlu0 %2818
        %v2820 = vadd.f32 %v2711, %v2713
        %2821 = vadd.xlane.f32.xlu0 %v2820
        %v2822 = vpop.xlane.xlu0 %2821
        %v2823 = vadd.f32 %v2715, %v2717
        %2824 = vadd.xlane.f32.xlu0 %v2823
        %v2825 = vpop.xlane.xlu0 %2824
        %v2826 = vadd.f32 %v2719, %v2721
        %2827 = vadd.xlane.f32.xlu0 %v2826
        %v2828 = vpop.xlane.xlu0 %2827
        %v2829 = vadd.f32 %v2723, %v2725
        %2830 = vadd.xlane.f32.xlu0 %v2829
        %v2831 = vpop.xlane.xlu0 %2830
        %v2832 = vadd.f32 %v2727, %v2729
        %2833 = vadd.xlane.f32.xlu0 %v2832
        %v2834 = vpop.xlane.xlu0 %2833
        %v2835 = vadd.f32 %v2731, %v2733
        %2836 = vadd.xlane.f32.xlu0 %v2835
        %v2837 = vpop.xlane.xlu0 %2836
        %v2838 = vadd.f32 %v2735, %v2737
        %2839 = vadd.xlane.f32.xlu0 %v2838
        %v2840 = vpop.xlane.xlu0 %2839
        %v2841 = vadd.f32 %v2739, %v2741
        %2842 = vadd.xlane.f32.xlu0 %v2841
        %v2843 = vpop.xlane.xlu0 %2842
        %v2844 = vadd.f32 %v2743, %v2745
        %2845 = vadd.xlane.f32.xlu0 %v2844
        %v2846 = vpop.xlane.xlu0 %2845
        %v2847 = vadd.f32 %v2747, %v2749
        %2848 = vadd.xlane.f32.xlu0 %v2847
        %v2849 = vpop.xlane.xlu0 %2848
        %v2850 = vadd.f32 %v2751, %v2753
        %2851 = vadd.xlane.f32.xlu0 %v2850
        %v2852 = vpop.xlane.xlu0 %2851
        %v2853 = vadd.f32 %v2755, %v2757
        %2854 = vadd.xlane.f32.xlu0 %v2853
        %v2855 = vpop.xlane.xlu0 %2854
        %v2856 = vadd.f32 %v2759, %v2761
        %2857 = vadd.xlane.f32.xlu0 %v2856
        %v2858 = vpop.xlane.xlu0 %2857
        %v2859 = vadd.f32 %v2763, %v2765
        %2860 = vadd.xlane.f32.xlu0 %v2859
        %v2861 = vpop.xlane.xlu0 %2860
        %v2862 = vpack.c.bf16 %v2643, %v2639
        %v2863 = vpack.c.bf16 %v2645, %v2641
        %v2864 = vpack.c.bf16 %v2651, %v2647
        %v2865 = vpack.c.bf16 %v2653, %v2649
        %v2866 = vpack.c.bf16 %v2659, %v2655
        %v2867 = vpack.c.bf16 %v2661, %v2657
        %v2868 = vpack.c.bf16 %v2667, %v2663
        %v2869 = vpack.c.bf16 %v2669, %v2665
        %v2870 = vpack.c.bf16 %v2675, %v2671
        %v2871 = vpack.c.bf16 %v2677, %v2673
        %v2872 = vpack.c.bf16 %v2683, %v2679
        %v2873 = vpack.c.bf16 %v2685, %v2681
        %v2874 = vpack.c.bf16 %v2691, %v2687
        %v2875 = vpack.c.bf16 %v2693, %v2689
        %v2876 = vpack.c.bf16 %v2699, %v2695
        %v2877 = vpack.c.bf16 %v2701, %v2697
        %v2878 = vpack.c.bf16 %v2707, %v2703
        %v2879 = vpack.c.bf16 %v2709, %v2705
        %v2880 = vpack.c.bf16 %v2715, %v2711
        %v2881 = vpack.c.bf16 %v2717, %v2713
        %v2882 = vpack.c.bf16 %v2723, %v2719
        %v2883 = vpack.c.bf16 %v2725, %v2721
        %v2884 = vpack.c.bf16 %v2731, %v2727
        %v2885 = vpack.c.bf16 %v2733, %v2729
        %v2886 = vpack.c.bf16 %v2739, %v2735
        %v2887 = vpack.c.bf16 %v2741, %v2737
        %v2888 = vpack.c.bf16 %v2747, %v2743
        %v2889 = vpack.c.bf16 %v2749, %v2745
        %v2890 = vpack.c.bf16 %v2755, %v2751
        %v2891 = vpack.c.bf16 %v2757, %v2753
        %v2892 = vpack.c.bf16 %v2763, %v2759
        %v2893 = vpack.c.bf16 %v2765, %v2761
        %2894 = vmatprep.subr.bf16.mxu0 0
        %2895 = vmatpush1.bf16.msra.mxu0 %v2220
        %2896 = vmatprep.subr.bf16.mxu0 0
        %2897 = vmatpush1.bf16.msra.mxu0 %v2221
        %2898 = vmatprep.subr.bf16.mxu0 0
        %2899 = vmatpush1.bf16.msra.mxu0 %v2222
        %2900 = vmatprep.subr.bf16.mxu0 0
        %2901 = vmatpush1.bf16.msra.mxu0 %v2223
        %2902 = vmatprep.subr.bf16.mxu0 0
        %2903 = vmatpush1.bf16.msra.mxu0 %v2224
        %2904 = vmatprep.subr.bf16.mxu0 0
        %2905 = vmatpush1.bf16.msra.mxu0 %v2225
        %2906 = vmatprep.subr.bf16.mxu0 0
        %2907 = vmatpush1.bf16.msra.mxu0 %v2226
        %2908 = vmatprep.subr.bf16.mxu0 0
        %2909 = vmatpush1.bf16.msra.mxu0 %v2227
        %2910 = vmatprep.subr.bf16.mxu0 0
        %2911 = vmatpush1.bf16.msra.mxu0 %v2228
        %2912 = vmatprep.subr.bf16.mxu0 0
        %2913 = vmatpush1.bf16.msra.mxu0 %v2229
        %2914 = vmatprep.subr.bf16.mxu0 0
        %2915 = vmatpush1.bf16.msra.mxu0 %v2230
        %2916 = vmatprep.subr.bf16.mxu0 0
        %2917 = vmatpush1.bf16.msra.mxu0 %v2231
        %2918 = vmatprep.subr.bf16.mxu0 0
        %2919 = vmatpush1.bf16.msra.mxu0 %v2232
        %2920 = vmatprep.subr.bf16.mxu0 0
        %2921 = vmatpush1.bf16.msra.mxu0 %v2233
        %2922 = vmatprep.subr.bf16.mxu0 0
        %2923 = vmatpush1.bf16.msra.mxu0 %v2234
        %2924 = vmatprep.subr.bf16.mxu0 0
        %2925 = vmatpush1.bf16.msra.mxu0 %v2235
        %2926 = vmatprep.mubr.bf16.mxu0 %v2863
        %2927 = vmatmul.mubr.bf16.gmra.mrb[0].mxu0 %v2862
        %v2928 = vpop.f32.mrb[0].mxu0
        %v2929 = vadd.f32 0.0, %v2928
        %v2930 = vpop.f32.mrb[0].mxu0
        %v2931 = vpop.f32.mrb[0].mxu0
        %v2932 = vadd.f32 0.0, %v2931
        %v2933 = vpop.f32.mrb[0].mxu0
        %2934 = vmatprep.mubr.bf16.mxu0 %v2865
        %2935 = vmatmul.mubr.bf16.gmra.mrb[0].mxu0 %v2864
        %v2936 = vpop.f32.mrb[0].mxu0
        %v2937 = vadd.f32 0.0, %v2936
        %v2938 = vpop.f32.mrb[0].mxu0
        %v2939 = vpop.f32.mrb[0].mxu0
        %v2940 = vadd.f32 0.0, %v2939
        %v2941 = vpop.f32.mrb[0].mxu0
        %2942 = vmatprep.mubr.bf16.mxu0 %v2867
        %2943 = vmatmul.mubr.bf16.gmra.mrb[0].mxu0 %v2866
        %v2944 = vpop.f32.mrb[0].mxu0
        %v2945 = vadd.f32 0.0, %v2944
        %v2946 = vpop.f32.mrb[0].mxu0
        %v2947 = vpop.f32.mrb[0].mxu0
        %v2948 = vadd.f32 0.0, %v2947
        %v2949 = vpop.f32.mrb[0].mxu0
        %2950 = vmatprep.mubr.bf16.mxu0 %v2869
        %2951 = vmatmul.mubr.bf16.gmra.mrb[0].mxu0 %v2868
        %v2952 = vpop.f32.mrb[0].mxu0
        %v2953 = vadd.f32 0.0, %v2952
        %v2954 = vpop.f32.mrb[0].mxu0
        %v2955 = vpop.f32.mrb[0].mxu0
        %v2956 = vadd.f32 0.0, %v2955
        %v2957 = vpop.f32.mrb[0].mxu0
        %2958 = vmatprep.mubr.bf16.mxu0 %v2871
        %2959 = vmatmul.mubr.bf16.gmra.mrb[0].mxu0 %v2870
        %v2960 = vpop.f32.mrb[0].mxu0
        %v2961 = vadd.f32 0.0, %v2960
        %v2962 = vpop.f32.mrb[0].mxu0
        %v2963 = vpop.f32.mrb[0].mxu0
        %v2964 = vadd.f32 0.0, %v2963
        %v2965 = vpop.f32.mrb[0].mxu0
        %2966 = vmatprep.mubr.bf16.mxu0 %v2873
        %2967 = vmatmul.mubr.bf16.gmra.mrb[0].mxu0 %v2872
        %v2968 = vpop.f32.mrb[0].mxu0
        %v2969 = vadd.f32 0.0, %v2968
        %v2970 = vpop.f32.mrb[0].mxu0
        %v2971 = vpop.f32.mrb[0].mxu0
        %v2972 = vadd.f32 0.0, %v2971
        %v2973 = vpop.f32.mrb[0].mxu0
        %2974 = vmatprep.mubr.bf16.mxu0 %v2875
        %2975 = vmatmul.mubr.bf16.gmra.mrb[0].mxu0 %v2874
        %v2976 = vpop.f32.mrb[0].mxu0
        %v2977 = vadd.f32 0.0, %v2976
        %v2978 = vpop.f32.mrb[0].mxu0
        %v2979 = vpop.f32.mrb[0].mxu0
        %v2980 = vadd.f32 0.0, %v2979
        %v2981 = vpop.f32.mrb[0].mxu0
        %2982 = vmatprep.mubr.bf16.mxu0 %v2877
        %2983 = vmatmul.mubr.bf16.gmra.mrb[0].mxu0 %v2876
        %v2984 = vpop.f32.mrb[0].mxu0
        %v2985 = vadd.f32 0.0, %v2984
        %v2986 = vpop.f32.mrb[0].mxu0
        %v2987 = vpop.f32.mrb[0].mxu0
        %v2988 = vadd.f32 0.0, %v2987
        %v2989 = vpop.f32.mrb[0].mxu0
        %2990 = vmatprep.mubr.bf16.mxu0 %v2879
        %2991 = vmatmul.mubr.bf16.gmra.mrb[0].mxu0 %v2878
        %v2992 = vpop.f32.mrb[0].mxu0
        %v2993 = vadd.f32 0.0, %v2992
        %v2994 = vpop.f32.mrb[0].mxu0
        %v2995 = vpop.f32.mrb[0].mxu0
        %v2996 = vadd.f32 0.0, %v2995
        %v2997 = vpop.f32.mrb[0].mxu0
        %2998 = vmatprep.mubr.bf16.mxu0 %v2881
        %2999 = vmatmul.mubr.bf16.gmra.mrb[0].mxu0 %v2880
        %v3000 = vpop.f32.mrb[0].mxu0
        %v3001 = vadd.f32 0.0, %v3000
        %v3002 = vpop.f32.mrb[0].mxu0
        %v3003 = vpop.f32.mrb[0].mxu0
        %v3004 = vadd.f32 0.0, %v3003
        %v3005 = vpop.f32.mrb[0].mxu0
        %3006 = vmatprep.mubr.bf16.mxu0 %v2883
        %3007 = vmatmul.mubr.bf16.gmra.mrb[0].mxu0 %v2882
        %v3008 = vpop.f32.mrb[0].mxu0
        %v3009 = vadd.f32 0.0, %v3008
        %v3010 = vpop.f32.mrb[0].mxu0
        %v3011 = vpop.f32.mrb[0].mxu0
        %v3012 = vadd.f32 0.0, %v3011
        %v3013 = vpop.f32.mrb[0].mxu0
        %3014 = vmatprep.mubr.bf16.mxu0 %v2885
        %3015 = vmatmul.mubr.bf16.gmra.mrb[0].mxu0 %v2884
        %v3016 = vpop.f32.mrb[0].mxu0
        %v3017 = vadd.f32 0.0, %v3016
        %v3018 = vpop.f32.mrb[0].mxu0
        %v3019 = vpop.f32.mrb[0].mxu0
        %v3020 = vadd.f32 0.0, %v3019
        %v3021 = vpop.f32.mrb[0].mxu0
        %3022 = vmatprep.mubr.bf16.mxu0 %v2887
        %3023 = vmatmul.mubr.bf16.gmra.mrb[0].mxu0 %v2886
        %v3024 = vpop.f32.mrb[0].mxu0
        %v3025 = vadd.f32 0.0, %v3024
        %v3026 = vpop.f32.mrb[0].mxu0
        %v3027 = vpop.f32.mrb[0].mxu0
        %v3028 = vadd.f32 0.0, %v3027
        %v3029 = vpop.f32.mrb[0].mxu0
        %3030 = vmatprep.mubr.bf16.mxu0 %v2889
        %3031 = vmatmul.mubr.bf16.gmra.mrb[0].mxu0 %v2888
        %v3032 = vpop.f32.mrb[0].mxu0
        %v3033 = vadd.f32 0.0, %v3032
        %v3034 = vpop.f32.mrb[0].mxu0
        %v3035 = vpop.f32.mrb[0].mxu0
        %v3036 = vadd.f32 0.0, %v3035
        %v3037 = vpop.f32.mrb[0].mxu0
        %3038 = vmatprep.mubr.bf16.mxu0 %v2891
        %3039 = vmatmul.mubr.bf16.gmra.mrb[0].mxu0 %v2890
        %v3040 = vpop.f32.mrb[0].mxu0
        %v3041 = vadd.f32 0.0, %v3040
        %v3042 = vpop.f32.mrb[0].mxu0
        %v3043 = vpop.f32.mrb[0].mxu0
        %v3044 = vadd.f32 0.0, %v3043
        %v3045 = vpop.f32.mrb[0].mxu0
        %3046 = vmatprep.mubr.bf16.mxu0 %v2893
        %3047 = vmatmul.mubr.bf16.gmra.mrb[0].mxu0 %v2892
        %v3048 = vpop.f32.mrb[0].mxu0
        %v3049 = vadd.f32 0.0, %v3048
        %v3050 = vpop.f32.mrb[0].mxu0
        %v3051 = vpop.f32.mrb[0].mxu0
        %v3052 = vadd.f32 0.0, %v3051
        %v3053 = vpop.f32.mrb[0].mxu0
        %3054 = vdwg.mxu0
        %v3055 = vrcp.pop %v2768
        %v3056 = vrcp.pop %v2771
        %v3057 = vrcp.pop %v2774
        %v3058 = vrcp.pop %v2777
        %v3059 = vrcp.pop %v2780
        %v3060 = vrcp.pop %v2783
        %v3061 = vrcp.pop %v2786
        %v3062 = vrcp.pop %v2789
        %v3063 = vrcp.pop %v2792
        %v3064 = vrcp.pop %v2795
        %v3065 = vrcp.pop %v2798
        %v3066 = vrcp.pop %v2801
        %v3067 = vrcp.pop %v2804
        %v3068 = vrcp.pop %v2807
        %v3069 = vrcp.pop %v2810
        %v3070 = vrcp.pop %v2813
        %v3071 = vrcp.pop %v2816
        %v3072 = vrcp.pop %v2819
        %v3073 = vrcp.pop %v2822
        %v3074 = vrcp.pop %v2825
        %v3075 = vrcp.pop %v2828
        %v3076 = vrcp.pop %v2831
        %v3077 = vrcp.pop %v2834
        %v3078 = vrcp.pop %v2837
        %v3079 = vrcp.pop %v2840
        %v3080 = vrcp.pop %v2843
        %v3081 = vrcp.pop %v2846
        %v3082 = vrcp.pop %v2849
        %v3083 = vrcp.pop %v2852
        %v3084 = vrcp.pop %v2855
        %v3085 = vrcp.pop %v2858
        %v3086 = vrcp.pop %v2861
        %v3087 = vmul.f32 %v2929, %v3055
        %v3088 = vmul.f32 %v2932, %v3056
        %v3089 = vmul.f32 %v2937, %v3057
        %v3090 = vmul.f32 %v2940, %v3058
        %v3091 = vmul.f32 %v2945, %v3059
        %v3092 = vmul.f32 %v2948, %v3060
        %v3093 = vmul.f32 %v2953, %v3061
        %v3094 = vmul.f32 %v2956, %v3062
        %v3095 = vmul.f32 %v2961, %v3063
        %v3096 = vmul.f32 %v2964, %v3064
        %v3097 = vmul.f32 %v2969, %v3065
        %v3098 = vmul.f32 %v2972, %v3066
        %v3099 = vmul.f32 %v2977, %v3067
        %v3100 = vmul.f32 %v2980, %v3068
        %v3101 = vmul.f32 %v2985, %v3069
        %v3102 = vmul.f32 %v2988, %v3070
        %v3103 = vmul.f32 %v2993, %v3071
        %v3104 = vmul.f32 %v2996, %v3072
        %v3105 = vmul.f32 %v3001, %v3073
        %v3106 = vmul.f32 %v3004, %v3074
        %v3107 = vmul.f32 %v3009, %v3075
        %v3108 = vmul.f32 %v3012, %v3076
        %v3109 = vmul.f32 %v3017, %v3077
        %v3110 = vmul.f32 %v3020, %v3078
        %v3111 = vmul.f32 %v3025, %v3079
        %v3112 = vmul.f32 %v3028, %v3080
        %v3113 = vmul.f32 %v3033, %v3081
        %v3114 = vmul.f32 %v3036, %v3082
        %v3115 = vmul.f32 %v3041, %v3083
        %v3116 = vmul.f32 %v3044, %v3084
        %v3117 = vmul.f32 %v3049, %v3085
        %v3118 = vmul.f32 %v3052, %v3086
        %3119 = vst.msk [vmem:[#allocation5] sm:$0xff] %vm2236, %v3087
        %3120 = vst.msk [vmem:[#allocation5 + $0x8] sm:$0xff] %vm2236, %v3088
        %3121 = vst.msk [vmem:[#allocation5 + $0x10] sm:$0xff] %vm2236, %v3089
        %3122 = vst.msk [vmem:[#allocation5 + $0x18] sm:$0xff] %vm2236, %v3090
        %3123 = vst.msk [vmem:[#allocation5 + $0x20] sm:$0xff] %vm2236, %v3091
        %3124 = vst.msk [vmem:[#allocation5 + $0x28] sm:$0xff] %vm2236, %v3092
        %3125 = vst.msk [vmem:[#allocation5 + $0x30] sm:$0xff] %vm2236, %v3093
        %3126 = vst.msk [vmem:[#allocation5 + $0x38] sm:$0xff] %vm2236, %v3094
        %3127 = vst.msk [vmem:[#allocation5 + $0x40] sm:$0xff] %vm2236, %v3095
        %3128 = vst.msk [vmem:[#allocation5 + $0x48] sm:$0xff] %vm2236, %v3096
        %3129 = vst.msk [vmem:[#allocation5 + $0x50] sm:$0xff] %vm2236, %v3097
        %3130 = vst.msk [vmem:[#allocation5 + $0x58] sm:$0xff] %vm2236, %v3098
        %3131 = vst.msk [vmem:[#allocation5 + $0x60] sm:$0xff] %vm2236, %v3099
        %3132 = vst.msk [vmem:[#allocation5 + $0x68] sm:$0xff] %vm2236, %v3100
        %3133 = vst.msk [vmem:[#allocation5 + $0x70] sm:$0xff] %vm2236, %v3101
        %3134 = vst.msk [vmem:[#allocation5 + $0x78] sm:$0xff] %vm2236, %v3102
        %3135 = vst.msk [vmem:[#allocation5 + $0x80] sm:$0xff] %vm2236, %v3103
        %3136 = vst.msk [vmem:[#allocation5 + $0x88] sm:$0xff] %vm2236, %v3104
        %3137 = vst.msk [vmem:[#allocation5 + $0x90] sm:$0xff] %vm2236, %v3105
        %3138 = vst.msk [vmem:[#allocation5 + $0x98] sm:$0xff] %vm2236, %v3106
        %3139 = vst.msk [vmem:[#allocation5 + $0xa0] sm:$0xff] %vm2236, %v3107
        %3140 = vst.msk [vmem:[#allocation5 + $0xa8] sm:$0xff] %vm2236, %v3108
        %3141 = vst.msk [vmem:[#allocation5 + $0xb0] sm:$0xff] %vm2236, %v3109
        %3142 = vst.msk [vmem:[#allocation5 + $0xb8] sm:$0xff] %vm2236, %v3110
        %3143 = vst.msk [vmem:[#allocation5 + $0xc0] sm:$0xff] %vm2236, %v3111
        %3144 = vst.msk [vmem:[#allocation5 + $0xc8] sm:$0xff] %vm2236, %v3112
        %3145 = vst.msk [vmem:[#allocation5 + $0xd0] sm:$0xff] %vm2236, %v3113
        %3146 = vst.msk [vmem:[#allocation5 + $0xd8] sm:$0xff] %vm2236, %v3114
        %3147 = vst.msk [vmem:[#allocation5 + $0xe0] sm:$0xff] %vm2236, %v3115
        %3148 = vst.msk [vmem:[#allocation5 + $0xe8] sm:$0xff] %vm2236, %v3116
        %3149 = vst.msk [vmem:[#allocation5 + $0xf0] sm:$0xff] %vm2236, %v3117
        %3150 = vst.msk [vmem:[#allocation5 + $0xf8] sm:$0xff] %vm2236, %v3118
        %v3151 = vld [vmem:[%s2199] sm:$0xff]
        %v3152 = vld [vmem:[%s2199 + $0x8] sm:$0xff]
        %v3153 = vld [vmem:[%s2199 + $0x10] sm:$0xff]
        %v3154 = vld [vmem:[%s2199 + $0x18] sm:$0xff]
        %v3155 = vld [vmem:[%s2199 + $0x20] sm:$0xff]
        %v3156 = vld [vmem:[%s2199 + $0x28] sm:$0xff]
        %v3157 = vld [vmem:[%s2199 + $0x30] sm:$0xff]
        %v3158 = vld [vmem:[%s2199 + $0x38] sm:$0xff]
        %v3159 = vld [vmem:[%s2199 + $0x40] sm:$0xff]
        %v3160 = vld [vmem:[%s2199 + $0x48] sm:$0xff]
        %v3161 = vld [vmem:[%s2199 + $0x50] sm:$0xff]
        %v3162 = vld [vmem:[%s2199 + $0x58] sm:$0xff]
        %v3163 = vld [vmem:[%s2199 + $0x60] sm:$0xff]
        %v3164 = vld [vmem:[%s2199 + $0x68] sm:$0xff]
        %v3165 = vld [vmem:[%s2199 + $0x70] sm:$0xff]
        %v3166 = vld [vmem:[%s2199 + $0x78] sm:$0xff]
        %v3167 = vld [vmem:[#allocation3 + $0x20] sm:$0xff]
        %v3168 = vld [vmem:[#allocation3 + $0x28] sm:$0xff]
        %v3169 = vld [vmem:[#allocation3 + $0x30] sm:$0xff]
        %v3170 = vld [vmem:[#allocation3 + $0x38] sm:$0xff]
        %v3171 = vld [vmem:[#allocation4] sm:$0xff]
        %v3172 = vld [vmem:[#allocation4 + $0x8] sm:$0xff]
        %v3173 = vld [vmem:[#allocation4 + $0x10] sm:$0xff]
        %v3174 = vld [vmem:[#allocation4 + $0x18] sm:$0xff]
        %v3175 = vld [vmem:[#allocation4 + $0x20] sm:$0xff]
        %v3176 = vld [vmem:[#allocation4 + $0x28] sm:$0xff]
        %v3177 = vld [vmem:[#allocation4 + $0x30] sm:$0xff]
        %v3178 = vld [vmem:[#allocation4 + $0x38] sm:$0xff]
        %v3179 = vld [vmem:[#allocation4 + $0x40] sm:$0xff]
        %v3180 = vld [vmem:[#allocation4 + $0x48] sm:$0xff]
        %v3181 = vld [vmem:[#allocation4 + $0x50] sm:$0xff]
        %v3182 = vld [vmem:[#allocation4 + $0x58] sm:$0xff]
        %v3183 = vld [vmem:[#allocation4 + $0x60] sm:$0xff]
        %v3184 = vld [vmem:[#allocation4 + $0x68] sm:$0xff]
        %v3185 = vld [vmem:[#allocation4 + $0x70] sm:$0xff]
        %v3186 = vld [vmem:[#allocation4 + $0x78] sm:$0xff]
        %3203 = vrot.lane.b32.xlu0 %v3151, 96
        %v3204 = vpop.permute.xlu0 %3203
        %3205 = vrot.lane.b32.xlu0 %v3152, 96
        %v3206 = vpop.permute.xlu0 %3205
        %3207 = vrot.lane.b32.xlu0 %v3153, 96
        %v3208 = vpop.permute.xlu0 %3207
        %3209 = vrot.lane.b32.xlu0 %v3154, 96
        %v3210 = vpop.permute.xlu0 %3209
        %3211 = vrot.lane.b32.xlu0 %v3155, 96
        %v3212 = vpop.permute.xlu0 %3211
        %3213 = vrot.lane.b32.xlu0 %v3156, 96
        %v3214 = vpop.permute.xlu0 %3213
        %3215 = vrot.lane.b32.xlu0 %v3157, 96
        %v3216 = vpop.permute.xlu0 %3215
        %3217 = vrot.lane.b32.xlu0 %v3158, 96
        %v3218 = vpop.permute.xlu0 %3217
        %3219 = vrot.lane.b32.xlu0 %v3159, 96
        %v3220 = vpop.permute.xlu0 %3219
        %3221 = vrot.lane.b32.xlu0 %v3160, 96
        %v3222 = vpop.permute.xlu0 %3221
        %3223 = vrot.lane.b32.xlu0 %v3161, 96
        %v3224 = vpop.permute.xlu0 %3223
        %3225 = vrot.lane.b32.xlu0 %v3162, 96
        %v3226 = vpop.permute.xlu0 %3225
        %3227 = vrot.lane.b32.xlu0 %v3163, 96
        %v3228 = vpop.permute.xlu0 %3227
        %3229 = vrot.lane.b32.xlu0 %v3164, 96
        %v3230 = vpop.permute.xlu0 %3229
        %3231 = vrot.lane.b32.xlu0 %v3165, 96
        %v3232 = vpop.permute.xlu0 %3231
        %3233 = vrot.lane.b32.xlu0 %v3166, 96
        %v3234 = vpop.permute.xlu0 %3233
        %v3236 = vsel %vm2236, %v3204, 0
        %v3239 = vsel %vm2236, %v3206, 0
        %v3242 = vsel %vm2236, %v3208, 0
        %v3245 = vsel %vm2236, %v3210, 0
        %v3248 = vsel %vm2236, %v3212, 0
        %v3251 = vsel %vm2236, %v3214, 0
        %v3254 = vsel %vm2236, %v3216, 0
        %v3257 = vsel %vm2236, %v3218, 0
        %v3260 = vsel %vm2236, %v3220, 0
        %v3263 = vsel %vm2236, %v3222, 0
        %v3266 = vsel %vm2236, %v3224, 0
        %v3269 = vsel %vm2236, %v3226, 0
        %v3272 = vsel %vm2236, %v3228, 0
        %v3275 = vsel %vm2236, %v3230, 0
        %v3278 = vsel %vm2236, %v3232, 0
        %v3281 = vsel %vm2236, %v3234, 0
        %3283 = vmatprep.subr.bf16.mxu0 %v3168
        %3284 = vmatpush1.bf16.msra.mxu0 %v3167
        %3285 = vmatprep.subr.bf16.mxu0 %v3170
        %3286 = vmatpush1.bf16.msra.mxu0 %v3169
        %3287 = vmatprep.subr.bf16.mxu0 0
        %3288 = vmatpush1.bf16.msra.mxu0 0
        %3289 = vmatprep.subr.bf16.mxu0 0
        %3290 = vmatpush1.bf16.msra.mxu0 0
        %3291 = vmatprep.subr.bf16.mxu0 0
        %3292 = vmatpush1.bf16.msra.mxu0 0
        %3293 = vmatprep.subr.bf16.mxu0 0
        %3294 = vmatpush1.bf16.msra.mxu0 0
        %3295 = vmatprep.subr.bf16.mxu0 0
        %3296 = vmatpush1.bf16.msra.mxu0 0
        %3297 = vmatprep.subr.bf16.mxu0 0
        %3298 = vmatpush1.bf16.msra.mxu0 0
        %3299 = vmatprep.subr.bf16.mxu0 0
        %3300 = vmatpush1.bf16.msra.mxu0 0
        %3301 = vmatprep.subr.bf16.mxu0 0
        %3302 = vmatpush1.bf16.msra.mxu0 0
        %3303 = vmatprep.subr.bf16.mxu0 0
        %3304 = vmatpush1.bf16.msra.mxu0 0
        %3305 = vmatprep.subr.bf16.mxu0 0
        %3306 = vmatpush1.bf16.msra.mxu0 0
        %3307 = vmatprep.subr.bf16.mxu0 0
        %3308 = vmatpush1.bf16.msra.mxu0 0
        %3309 = vmatprep.subr.bf16.mxu0 0
        %3310 = vmatpush1.bf16.msra.mxu0 0
        %3311 = vmatprep.subr.bf16.mxu0 0
        %3312 = vmatpush1.bf16.msra.mxu0 0
        %3313 = vmatprep.subr.bf16.mxu0 0
        %3314 = vmatpush1.bf16.msra.mxu0 0
        %3315 = vmatprep.mubr.bf16.mxu0 0
        %3316 = vmatmul.mubr.bf16.gmra.mrb[0].mxu0 %v3236
        %v3317 = vpop.f32.mrb[0].mxu0
        %v3318 = vadd.f32 0.0, %v3317
        %v3319 = vpop.f32.mrb[0].mxu0
        %v3320 = vadd.f32 0.0, %v3319
        %v3321 = vpop.f32.mrb[0].mxu0
        %v3322 = vadd.f32 0.0, %v3321
        %v3323 = vpop.f32.mrb[0].mxu0
        %v3324 = vadd.f32 0.0, %v3323
        %3325 = vmatprep.mubr.bf16.mxu0 0
        %3326 = vmatmul.mubr.bf16.gmra.mrb[0].mxu0 %v3239
        %v3327 = vpop.f32.mrb[0].mxu0
        %v3328 = vadd.f32 0.0, %v3327
        %v3329 = vpop.f32.mrb[0].mxu0
        %v3330 = vadd.f32 0.0, %v3329
        %v3331 = vpop.f32.mrb[0].mxu0
        %v3332 = vadd.f32 0.0, %v3331
        %v3333 = vpop.f32.mrb[0].mxu0
        %v3334 = vadd.f32 0.0, %v3333
        %3335 = vmatprep.mubr.bf16.mxu0 0
        %3336 = vmatmul.mubr.bf16.gmra.mrb[0].mxu0 %v3242
        %v3337 = vpop.f32.mrb[0].mxu0
        %v3338 = vadd.f32 0.0, %v3337
        %v3339 = vpop.f32.mrb[0].mxu0
        %v3340 = vadd.f32 0.0, %v3339
        %v3341 = vpop.f32.mrb[0].mxu0
        %v3342 = vadd.f32 0.0, %v3341
        %v3343 = vpop.f32.mrb[0].mxu0
        %v3344 = vadd.f32 0.0, %v3343
        %3345 = vmatprep.mubr.bf16.mxu0 0
        %3346 = vmatmul.mubr.bf16.gmra.mrb[0].mxu0 %v3245
        %v3347 = vpop.f32.mrb[0].mxu0
        %v3348 = vadd.f32 0.0, %v3347
        %v3349 = vpop.f32.mrb[0].mxu0
        %v3350 = vadd.f32 0.0, %v3349
        %v3351 = vpop.f32.mrb[0].mxu0
        %v3352 = vadd.f32 0.0, %v3351
        %v3353 = vpop.f32.mrb[0].mxu0
        %v3354 = vadd.f32 0.0, %v3353
        %3355 = vmatprep.mubr.bf16.mxu0 0
        %3356 = vmatmul.mubr.bf16.gmra.mrb[0].mxu0 %v3248
        %v3357 = vpop.f32.mrb[0].mxu0
        %v3358 = vadd.f32 0.0, %v3357
        %v3359 = vpop.f32.mrb[0].mxu0
        %v3360 = vadd.f32 0.0, %v3359
        %v3361 = vpop.f32.mrb[0].mxu0
        %v3362 = vadd.f32 0.0, %v3361
        %v3363 = vpop.f32.mrb[0].mxu0
        %v3364 = vadd.f32 0.0, %v3363
        %3365 = vmatprep.mubr.bf16.mxu0 0
        %3366 = vmatmul.mubr.bf16.gmra.mrb[0].mxu0 %v3251
        %v3367 = vpop.f32.mrb[0].mxu0
        %v3368 = vadd.f32 0.0, %v3367
        %v3369 = vpop.f32.mrb[0].mxu0
        %v3370 = vadd.f32 0.0, %v3369
        %v3371 = vpop.f32.mrb[0].mxu0
        %v3372 = vadd.f32 0.0, %v3371
        %v3373 = vpop.f32.mrb[0].mxu0
        %v3374 = vadd.f32 0.0, %v3373
        %3375 = vmatprep.mubr.bf16.mxu0 0
        %3376 = vmatmul.mubr.bf16.gmra.mrb[0].mxu0 %v3254
        %v3377 = vpop.f32.mrb[0].mxu0
        %v3378 = vadd.f32 0.0, %v3377
        %v3379 = vpop.f32.mrb[0].mxu0
        %v3380 = vadd.f32 0.0, %v3379
        %v3381 = vpop.f32.mrb[0].mxu0
        %v3382 = vadd.f32 0.0, %v3381
        %v3383 = vpop.f32.mrb[0].mxu0
        %v3384 = vadd.f32 0.0, %v3383
        %3385 = vmatprep.mubr.bf16.mxu0 0
        %3386 = vmatmul.mubr.bf16.gmra.mrb[0].mxu0 %v3257
        %v3387 = vpop.f32.mrb[0].mxu0
        %v3388 = vadd.f32 0.0, %v3387
        %v3389 = vpop.f32.mrb[0].mxu0
        %v3390 = vadd.f32 0.0, %v3389
        %v3391 = vpop.f32.mrb[0].mxu0
        %v3392 = vadd.f32 0.0, %v3391
        %v3393 = vpop.f32.mrb[0].mxu0
        %v3394 = vadd.f32 0.0, %v3393
        %3395 = vmatprep.mubr.bf16.mxu0 0
        %3396 = vmatmul.mubr.bf16.gmra.mrb[0].mxu0 %v3260
        %v3397 = vpop.f32.mrb[0].mxu0
        %v3398 = vadd.f32 0.0, %v3397
        %v3399 = vpop.f32.mrb[0].mxu0
        %v3400 = vadd.f32 0.0, %v3399
        %v3401 = vpop.f32.mrb[0].mxu0
        %v3402 = vadd.f32 0.0, %v3401
        %v3403 = vpop.f32.mrb[0].mxu0
        %v3404 = vadd.f32 0.0, %v3403
        %3405 = vmatprep.mubr.bf16.mxu0 0
        %3406 = vmatmul.mubr.bf16.gmra.mrb[0].mxu0 %v3263
        %v3407 = vpop.f32.mrb[0].mxu0
        %v3408 = vadd.f32 0.0, %v3407
        %v3409 = vpop.f32.mrb[0].mxu0
        %v3410 = vadd.f32 0.0, %v3409
        %v3411 = vpop.f32.mrb[0].mxu0
        %v3412 = vadd.f32 0.0, %v3411
        %v3413 = vpop.f32.mrb[0].mxu0
        %v3414 = vadd.f32 0.0, %v3413
        %3415 = vmatprep.mubr.bf16.mxu0 0
        %3416 = vmatmul.mubr.bf16.gmra.mrb[0].mxu0 %v3266
        %v3417 = vpop.f32.mrb[0].mxu0
        %v3418 = vadd.f32 0.0, %v3417
        %v3419 = vpop.f32.mrb[0].mxu0
        %v3420 = vadd.f32 0.0, %v3419
        %v3421 = vpop.f32.mrb[0].mxu0
        %v3422 = vadd.f32 0.0, %v3421
        %v3423 = vpop.f32.mrb[0].mxu0
        %v3424 = vadd.f32 0.0, %v3423
        %3425 = vmatprep.mubr.bf16.mxu0 0
        %3426 = vmatmul.mubr.bf16.gmra.mrb[0].mxu0 %v3269
        %v3427 = vpop.f32.mrb[0].mxu0
        %v3428 = vadd.f32 0.0, %v3427
        %v3429 = vpop.f32.mrb[0].mxu0
        %v3430 = vadd.f32 0.0, %v3429
        %v3431 = vpop.f32.mrb[0].mxu0
        %v3432 = vadd.f32 0.0, %v3431
        %v3433 = vpop.f32.mrb[0].mxu0
        %v3434 = vadd.f32 0.0, %v3433
        %3435 = vmatprep.mubr.bf16.mxu0 0
        %3436 = vmatmul.mubr.bf16.gmra.mrb[0].mxu0 %v3272
        %v3437 = vpop.f32.mrb[0].mxu0
        %v3438 = vadd.f32 0.0, %v3437
        %v3439 = vpop.f32.mrb[0].mxu0
        %v3440 = vadd.f32 0.0, %v3439
        %v3441 = vpop.f32.mrb[0].mxu0
        %v3442 = vadd.f32 0.0, %v3441
        %v3443 = vpop.f32.mrb[0].mxu0
        %v3444 = vadd.f32 0.0, %v3443
        %3445 = vmatprep.mubr.bf16.mxu0 0
        %3446 = vmatmul.mubr.bf16.gmra.mrb[0].mxu0 %v3275
        %v3447 = vpop.f32.mrb[0].mxu0
        %v3448 = vadd.f32 0.0, %v3447
        %v3449 = vpop.f32.mrb[0].mxu0
        %v3450 = vadd.f32 0.0, %v3449
        %v3451 = vpop.f32.mrb[0].mxu0
        %v3452 = vadd.f32 0.0, %v3451
        %v3453 = vpop.f32.mrb[0].mxu0
        %v3454 = vadd.f32 0.0, %v3453
        %3455 = vmatprep.mubr.bf16.mxu0 0
        %3456 = vmatmul.mubr.bf16.gmra.mrb[0].mxu0 %v3278
        %v3457 = vpop.f32.mrb[0].mxu0
        %v3458 = vadd.f32 0.0, %v3457
        %v3459 = vpop.f32.mrb[0].mxu0
        %v3460 = vadd.f32 0.0, %v3459
        %v3461 = vpop.f32.mrb[0].mxu0
        %v3462 = vadd.f32 0.0, %v3461
        %v3463 = vpop.f32.mrb[0].mxu0
        %v3464 = vadd.f32 0.0, %v3463
        %3465 = vmatprep.mubr.bf16.mxu0 0
        %3466 = vmatmul.mubr.bf16.gmra.mrb[0].mxu0 %v3281
        %v3467 = vpop.f32.mrb[0].mxu0
        %v3468 = vadd.f32 0.0, %v3467
        %v3469 = vpop.f32.mrb[0].mxu0
        %v3470 = vadd.f32 0.0, %v3469
        %v3471 = vpop.f32.mrb[0].mxu0
        %v3472 = vadd.f32 0.0, %v3471
        %v3473 = vpop.f32.mrb[0].mxu0
        %v3474 = vadd.f32 0.0, %v3473
        %3475 = vdwg.mxu0
        %v3476 = vmax.f32 %v3318, %v3320
        %3477 = vmax.xlane.f32.xlu0 %v3476
        %v3478 = vpop.xlane.xlu0 %3477
        %v3479 = vmax.f32 %v3322, %v3324
        %3480 = vmax.xlane.f32.xlu0 %v3479
        %v3481 = vpop.xlane.xlu0 %3480
        %v3482 = vmax.f32 %v3328, %v3330
        %3483 = vmax.xlane.f32.xlu0 %v3482
        %v3484 = vpop.xlane.xlu0 %3483
        %v3485 = vmax.f32 %v3332, %v3334
        %3486 = vmax.xlane.f32.xlu0 %v3485
        %v3487 = vpop.xlane.xlu0 %3486
        %v3488 = vmax.f32 %v3338, %v3340
        %3489 = vmax.xlane.f32.xlu0 %v3488
        %v3490 = vpop.xlane.xlu0 %3489
        %v3491 = vmax.f32 %v3342, %v3344
        %3492 = vmax.xlane.f32.xlu0 %v3491
        %v3493 = vpop.xlane.xlu0 %3492
        %v3494 = vmax.f32 %v3348, %v3350
        %3495 = vmax.xlane.f32.xlu0 %v3494
        %v3496 = vpop.xlane.xlu0 %3495
        %v3497 = vmax.f32 %v3352, %v3354
        %3498 = vmax.xlane.f32.xlu0 %v3497
        %v3499 = vpop.xlane.xlu0 %3498
        %v3500 = vmax.f32 %v3358, %v3360
        %3501 = vmax.xlane.f32.xlu0 %v3500
        %v3502 = vpop.xlane.xlu0 %3501
        %v3503 = vmax.f32 %v3362, %v3364
        %3504 = vmax.xlane.f32.xlu0 %v3503
        %v3505 = vpop.xlane.xlu0 %3504
        %v3506 = vmax.f32 %v3368, %v3370
        %3507 = vmax.xlane.f32.xlu0 %v3506
        %v3508 = vpop.xlane.xlu0 %3507
        %v3509 = vmax.f32 %v3372, %v3374
        %3510 = vmax.xlane.f32.xlu0 %v3509
        %v3511 = vpop.xlane.xlu0 %3510
        %v3512 = vmax.f32 %v3378, %v3380
        %3513 = vmax.xlane.f32.xlu0 %v3512
        %v3514 = vpop.xlane.xlu0 %3513
        %v3515 = vmax.f32 %v3382, %v3384
        %3516 = vmax.xlane.f32.xlu0 %v3515
        %v3517 = vpop.xlane.xlu0 %3516
        %v3518 = vmax.f32 %v3388, %v3390
        %3519 = vmax.xlane.f32.xlu0 %v3518
        %v3520 = vpop.xlane.xlu0 %3519
        %v3521 = vmax.f32 %v3392, %v3394
        %3522 = vmax.xlane.f32.xlu0 %v3521
        %v3523 = vpop.xlane.xlu0 %3522
        %v3524 = vmax.f32 %v3398, %v3400
        %3525 = vmax.xlane.f32.xlu0 %v3524
        %v3526 = vpop.xlane.xlu0 %3525
        %v3527 = vmax.f32 %v3402, %v3404
        %3528 = vmax.xlane.f32.xlu0 %v3527
        %v3529 = vpop.xlane.xlu0 %3528
        %v3530 = vmax.f32 %v3408, %v3410
        %3531 = vmax.xlane.f32.xlu0 %v3530
        %v3532 = vpop.xlane.xlu0 %3531
        %v3533 = vmax.f32 %v3412, %v3414
        %3534 = vmax.xlane.f32.xlu0 %v3533
        %v3535 = vpop.xlane.xlu0 %3534
        %v3536 = vmax.f32 %v3418, %v3420
        %3537 = vmax.xlane.f32.xlu0 %v3536
        %v3538 = vpop.xlane.xlu0 %3537
        %v3539 = vmax.f32 %v3422, %v3424
        %3540 = vmax.xlane.f32.xlu0 %v3539
        %v3541 = vpop.xlane.xlu0 %3540
        %v3542 = vmax.f32 %v3428, %v3430
        %3543 = vmax.xlane.f32.xlu0 %v3542
        %v3544 = vpop.xlane.xlu0 %3543
        %v3545 = vmax.f32 %v3432, %v3434
        %3546 = vmax.xlane.f32.xlu0 %v3545
        %v3547 = vpop.xlane.xlu0 %3546
        %v3548 = vmax.f32 %v3438, %v3440
        %3549 = vmax.xlane.f32.xlu0 %v3548
        %v3550 = vpop.xlane.xlu0 %3549
        %v3551 = vmax.f32 %v3442, %v3444
        %3552 = vmax.xlane.f32.xlu0 %v3551
        %v3553 = vpop.xlane.xlu0 %3552
        %v3554 = vmax.f32 %v3448, %v3450
        %3555 = vmax.xlane.f32.xlu0 %v3554
        %v3556 = vpop.xlane.xlu0 %3555
        %v3557 = vmax.f32 %v3452, %v3454
        %3558 = vmax.xlane.f32.xlu0 %v3557
        %v3559 = vpop.xlane.xlu0 %3558
        %v3560 = vmax.f32 %v3458, %v3460
        %3561 = vmax.xlane.f32.xlu0 %v3560
        %v3562 = vpop.xlane.xlu0 %3561
        %v3563 = vmax.f32 %v3462, %v3464
        %3564 = vmax.xlane.f32.xlu0 %v3563
        %v3565 = vpop.xlane.xlu0 %3564
        %v3566 = vmax.f32 %v3468, %v3470
        %3567 = vmax.xlane.f32.xlu0 %v3566
        %v3568 = vpop.xlane.xlu0 %3567
        %v3569 = vmax.f32 %v3472, %v3474
        %3570 = vmax.xlane.f32.xlu0 %v3569
        %v3571 = vpop.xlane.xlu0 %3570
        %v3572 = vsub.f32 %v3318, %v3478
        %v3573 = vsub.f32 %v3320, %v3478
        %v3574 = vsub.f32 %v3322, %v3481
        %v3575 = vsub.f32 %v3324, %v3481
        %v3576 = vsub.f32 %v3328, %v3484
        %v3577 = vsub.f32 %v3330, %v3484
        %v3578 = vsub.f32 %v3332, %v3487
        %v3579 = vsub.f32 %v3334, %v3487
        %v3580 = vsub.f32 %v3338, %v3490
        %v3581 = vsub.f32 %v3340, %v3490
        %v3582 = vsub.f32 %v3342, %v3493
        %v3583 = vsub.f32 %v3344, %v3493
        %v3584 = vsub.f32 %v3348, %v3496
        %v3585 = vsub.f32 %v3350, %v3496
        %v3586 = vsub.f32 %v3352, %v3499
        %v3587 = vsub.f32 %v3354, %v3499
        %v3588 = vsub.f32 %v3358, %v3502
        %v3589 = vsub.f32 %v3360, %v3502
        %v3590 = vsub.f32 %v3362, %v3505
        %v3591 = vsub.f32 %v3364, %v3505
        %v3592 = vsub.f32 %v3368, %v3508
        %v3593 = vsub.f32 %v3370, %v3508
        %v3594 = vsub.f32 %v3372, %v3511
        %v3595 = vsub.f32 %v3374, %v3511
        %v3596 = vsub.f32 %v3378, %v3514
        %v3597 = vsub.f32 %v3380, %v3514
        %v3598 = vsub.f32 %v3382, %v3517
        %v3599 = vsub.f32 %v3384, %v3517
        %v3600 = vsub.f32 %v3388, %v3520
        %v3601 = vsub.f32 %v3390, %v3520
        %v3602 = vsub.f32 %v3392, %v3523
        %v3603 = vsub.f32 %v3394, %v3523
        %v3604 = vsub.f32 %v3398, %v3526
        %v3605 = vsub.f32 %v3400, %v3526
        %v3606 = vsub.f32 %v3402, %v3529
        %v3607 = vsub.f32 %v3404, %v3529
        %v3608 = vsub.f32 %v3408, %v3532
        %v3609 = vsub.f32 %v3410, %v3532
        %v3610 = vsub.f32 %v3412, %v3535
        %v3611 = vsub.f32 %v3414, %v3535
        %v3612 = vsub.f32 %v3418, %v3538
        %v3613 = vsub.f32 %v3420, %v3538
        %v3614 = vsub.f32 %v3422, %v3541
        %v3615 = vsub.f32 %v3424, %v3541
        %v3616 = vsub.f32 %v3428, %v3544
        %v3617 = vsub.f32 %v3430, %v3544
        %v3618 = vsub.f32 %v3432, %v3547
        %v3619 = vsub.f32 %v3434, %v3547
        %v3620 = vsub.f32 %v3438, %v3550
        %v3621 = vsub.f32 %v3440, %v3550
        %v3622 = vsub.f32 %v3442, %v3553
        %v3623 = vsub.f32 %v3444, %v3553
        %v3624 = vsub.f32 %v3448, %v3556
        %v3625 = vsub.f32 %v3450, %v3556
        %v3626 = vsub.f32 %v3452, %v3559
        %v3627 = vsub.f32 %v3454, %v3559
        %v3628 = vsub.f32 %v3458, %v3562
        %v3629 = vsub.f32 %v3460, %v3562
        %v3630 = vsub.f32 %v3462, %v3565
        %v3631 = vsub.f32 %v3464, %v3565
        %v3632 = vsub.f32 %v3468, %v3568
        %v3633 = vsub.f32 %v3470, %v3568
        %v3634 = vsub.f32 %v3472, %v3571
        %v3635 = vsub.f32 %v3474, %v3571
        %v3636 = vmul.f32 %v3572, 1.442695
        %v3637 = vpow.pop %v3636
        %v3638 = vmul.f32 %v3573, 1.442695
        %v3639 = vpow.pop %v3638
        %v3640 = vmul.f32 %v3574, 1.442695
        %v3641 = vpow.pop %v3640
        %v3642 = vmul.f32 %v3575, 1.442695
        %v3643 = vpow.pop %v3642
        %v3644 = vmul.f32 %v3576, 1.442695
        %v3645 = vpow.pop %v3644
        %v3646 = vmul.f32 %v3577, 1.442695
        %v3647 = vpow.pop %v3646
        %v3648 = vmul.f32 %v3578, 1.442695
        %v3649 = vpow.pop %v3648
        %v3650 = vmul.f32 %v3579, 1.442695
        %v3651 = vpow.pop %v3650
        %v3652 = vmul.f32 %v3580, 1.442695
        %v3653 = vpow.pop %v3652
        %v3654 = vmul.f32 %v3581, 1.442695
        %v3655 = vpow.pop %v3654
        %v3656 = vmul.f32 %v3582, 1.442695
        %v3657 = vpow.pop %v3656
        %v3658 = vmul.f32 %v3583, 1.442695
        %v3659 = vpow.pop %v3658
        %v3660 = vmul.f32 %v3584, 1.442695
        %v3661 = vpow.pop %v3660
        %v3662 = vmul.f32 %v3585, 1.442695
        %v3663 = vpow.pop %v3662
        %v3664 = vmul.f32 %v3586, 1.442695
        %v3665 = vpow.pop %v3664
        %v3666 = vmul.f32 %v3587, 1.442695
        %v3667 = vpow.pop %v3666
        %v3668 = vmul.f32 %v3588, 1.442695
        %v3669 = vpow.pop %v3668
        %v3670 = vmul.f32 %v3589, 1.442695
        %v3671 = vpow.pop %v3670
        %v3672 = vmul.f32 %v3590, 1.442695
        %v3673 = vpow.pop %v3672
        %v3674 = vmul.f32 %v3591, 1.442695
        %v3675 = vpow.pop %v3674
        %v3676 = vmul.f32 %v3592, 1.442695
        %v3677 = vpow.pop %v3676
        %v3678 = vmul.f32 %v3593, 1.442695
        %v3679 = vpow.pop %v3678
        %v3680 = vmul.f32 %v3594, 1.442695
        %v3681 = vpow.pop %v3680
        %v3682 = vmul.f32 %v3595, 1.442695
        %v3683 = vpow.pop %v3682
        %v3684 = vmul.f32 %v3596, 1.442695
        %v3685 = vpow.pop %v3684
        %v3686 = vmul.f32 %v3597, 1.442695
        %v3687 = vpow.pop %v3686
        %v3688 = vmul.f32 %v3598, 1.442695
        %v3689 = vpow.pop %v3688
        %v3690 = vmul.f32 %v3599, 1.442695
        %v3691 = vpow.pop %v3690
        %v3692 = vmul.f32 %v3600, 1.442695
        %v3693 = vpow.pop %v3692
        %v3694 = vmul.f32 %v3601, 1.442695
        %v3695 = vpow.pop %v3694
        %v3696 = vmul.f32 %v3602, 1.442695
        %v3697 = vpow.pop %v3696
        %v3698 = vmul.f32 %v3603, 1.442695
        %v3699 = vpow.pop %v3698
        %v3700 = vmul.f32 %v3604, 1.442695
        %v3701 = vpow.pop %v3700
        %v3702 = vmul.f32 %v3605, 1.442695
        %v3703 = vpow.pop %v3702
        %v3704 = vmul.f32 %v3606, 1.442695
        %v3705 = vpow.pop %v3704
        %v3706 = vmul.f32 %v3607, 1.442695
        %v3707 = vpow.pop %v3706
        %v3708 = vmul.f32 %v3608, 1.442695
        %v3709 = vpow.pop %v3708
        %v3710 = vmul.f32 %v3609, 1.442695
        %v3711 = vpow.pop %v3710
        %v3712 = vmul.f32 %v3610, 1.442695
        %v3713 = vpow.pop %v3712
        %v3714 = vmul.f32 %v3611, 1.442695
        %v3715 = vpow.pop %v3714
        %v3716 = vmul.f32 %v3612, 1.442695
        %v3717 = vpow.pop %v3716
        %v3718 = vmul.f32 %v3613, 1.442695
        %v3719 = vpow.pop %v3718
        %v3720 = vmul.f32 %v3614, 1.442695
        %v3721 = vpow.pop %v3720
        %v3722 = vmul.f32 %v3615, 1.442695
        %v3723 = vpow.pop %v3722
        %v3724 = vmul.f32 %v3616, 1.442695
        %v3725 = vpow.pop %v3724
        %v3726 = vmul.f32 %v3617, 1.442695
        %v3727 = vpow.pop %v3726
        %v3728 = vmul.f32 %v3618, 1.442695
        %v3729 = vpow.pop %v3728
        %v3730 = vmul.f32 %v3619, 1.442695
        %v3731 = vpow.pop %v3730
        %v3732 = vmul.f32 %v3620, 1.442695
        %v3733 = vpow.pop %v3732
        %v3734 = vmul.f32 %v3621, 1.442695
        %v3735 = vpow.pop %v3734
        %v3736 = vmul.f32 %v3622, 1.442695
        %v3737 = vpow.pop %v3736
        %v3738 = vmul.f32 %v3623, 1.442695
        %v3739 = vpow.pop %v3738
        %v3740 = vmul.f32 %v3624, 1.442695
        %v3741 = vpow.pop %v3740
        %v3742 = vmul.f32 %v3625, 1.442695
        %v3743 = vpow.pop %v3742
        %v3744 = vmul.f32 %v3626, 1.442695
        %v3745 = vpow.pop %v3744
        %v3746 = vmul.f32 %v3627, 1.442695
        %v3747 = vpow.pop %v3746
        %v3748 = vmul.f32 %v3628, 1.442695
        %v3749 = vpow.pop %v3748
        %v3750 = vmul.f32 %v3629, 1.442695
        %v3751 = vpow.pop %v3750
        %v3752 = vmul.f32 %v3630, 1.442695
        %v3753 = vpow.pop %v3752
        %v3754 = vmul.f32 %v3631, 1.442695
        %v3755 = vpow.pop %v3754
        %v3756 = vmul.f32 %v3632, 1.442695
        %v3757 = vpow.pop %v3756
        %v3758 = vmul.f32 %v3633, 1.442695
        %v3759 = vpow.pop %v3758
        %v3760 = vmul.f32 %v3634, 1.442695
        %v3761 = vpow.pop %v3760
        %v3762 = vmul.f32 %v3635, 1.442695
        %v3763 = vpow.pop %v3762
        %v3764 = vadd.f32 %v3637, %v3639
        %3765 = vadd.xlane.f32.xlu0 %v3764
        %v3766 = vpop.xlane.xlu0 %3765
        %v3767 = vadd.f32 %v3641, %v3643
        %3768 = vadd.xlane.f32.xlu0 %v3767
        %v3769 = vpop.xlane.xlu0 %3768
        %v3770 = vadd.f32 %v3645, %v3647
        %3771 = vadd.xlane.f32.xlu0 %v3770
        %v3772 = vpop.xlane.xlu0 %3771
        %v3773 = vadd.f32 %v3649, %v3651
        %3774 = vadd.xlane.f32.xlu0 %v3773
        %v3775 = vpop.xlane.xlu0 %3774
        %v3776 = vadd.f32 %v3653, %v3655
        %3777 = vadd.xlane.f32.xlu0 %v3776
        %v3778 = vpop.xlane.xlu0 %3777
        %v3779 = vadd.f32 %v3657, %v3659
        %3780 = vadd.xlane.f32.xlu0 %v3779
        %v3781 = vpop.xlane.xlu0 %3780
        %v3782 = vadd.f32 %v3661, %v3663
        %3783 = vadd.xlane.f32.xlu0 %v3782
        %v3784 = vpop.xlane.xlu0 %3783
        %v3785 = vadd.f32 %v3665, %v3667
        %3786 = vadd.xlane.f32.xlu0 %v3785
        %v3787 = vpop.xlane.xlu0 %3786
        %v3788 = vadd.f32 %v3669, %v3671
        %3789 = vadd.xlane.f32.xlu0 %v3788
        %v3790 = vpop.xlane.xlu0 %3789
        %v3791 = vadd.f32 %v3673, %v3675
        %3792 = vadd.xlane.f32.xlu0 %v3791
        %v3793 = vpop.xlane.xlu0 %3792
        %v3794 = vadd.f32 %v3677, %v3679
        %3795 = vadd.xlane.f32.xlu0 %v3794
        %v3796 = vpop.xlane.xlu0 %3795
        %v3797 = vadd.f32 %v3681, %v3683
        %3798 = vadd.xlane.f32.xlu0 %v3797
        %v3799 = vpop.xlane.xlu0 %3798
        %v3800 = vadd.f32 %v3685, %v3687
        %3801 = vadd.xlane.f32.xlu0 %v3800
        %v3802 = vpop.xlane.xlu0 %3801
        %v3803 = vadd.f32 %v3689, %v3691
        %3804 = vadd.xlane.f32.xlu0 %v3803
        %v3805 = vpop.xlane.xlu0 %3804
        %v3806 = vadd.f32 %v3693, %v3695
        %3807 = vadd.xlane.f32.xlu0 %v3806
        %v3808 = vpop.xlane.xlu0 %3807
        %v3809 = vadd.f32 %v3697, %v3699
        %3810 = vadd.xlane.f32.xlu0 %v3809
        %v3811 = vpop.xlane.xlu0 %3810
        %v3812 = vadd.f32 %v3701, %v3703
        %3813 = vadd.xlane.f32.xlu0 %v3812
        %v3814 = vpop.xlane.xlu0 %3813
        %v3815 = vadd.f32 %v3705, %v3707
        %3816 = vadd.xlane.f32.xlu0 %v3815
        %v3817 = vpop.xlane.xlu0 %3816
        %v3818 = vadd.f32 %v3709, %v3711
        %3819 = vadd.xlane.f32.xlu0 %v3818
        %v3820 = vpop.xlane.xlu0 %3819
        %v3821 = vadd.f32 %v3713, %v3715
        %3822 = vadd.xlane.f32.xlu0 %v3821
        %v3823 = vpop.xlane.xlu0 %3822
        %v3824 = vadd.f32 %v3717, %v3719
        %3825 = vadd.xlane.f32.xlu0 %v3824
        %v3826 = vpop.xlane.xlu0 %3825
        %v3827 = vadd.f32 %v3721, %v3723
        %3828 = vadd.xlane.f32.xlu0 %v3827
        %v3829 = vpop.xlane.xlu0 %3828
        %v3830 = vadd.f32 %v3725, %v3727
        %3831 = vadd.xlane.f32.xlu0 %v3830
        %v3832 = vpop.xlane.xlu0 %3831
        %v3833 = vadd.f32 %v3729, %v3731
        %3834 = vadd.xlane.f32.xlu0 %v3833
        %v3835 = vpop.xlane.xlu0 %3834
        %v3836 = vadd.f32 %v3733, %v3735
        %3837 = vadd.xlane.f32.xlu0 %v3836
        %v3838 = vpop.xlane.xlu0 %3837
        %v3839 = vadd.f32 %v3737, %v3739
        %3840 = vadd.xlane.f32.xlu0 %v3839
        %v3841 = vpop.xlane.xlu0 %3840
        %v3842 = vadd.f32 %v3741, %v3743
        %3843 = vadd.xlane.f32.xlu0 %v3842
        %v3844 = vpop.xlane.xlu0 %3843
        %v3845 = vadd.f32 %v3745, %v3747
        %3846 = vadd.xlane.f32.xlu0 %v3845
        %v3847 = vpop.xlane.xlu0 %3846
        %v3848 = vadd.f32 %v3749, %v3751
        %3849 = vadd.xlane.f32.xlu0 %v3848
        %v3850 = vpop.xlane.xlu0 %3849
        %v3851 = vadd.f32 %v3753, %v3755
        %3852 = vadd.xlane.f32.xlu0 %v3851
        %v3853 = vpop.xlane.xlu0 %3852
        %v3854 = vadd.f32 %v3757, %v3759
        %3855 = vadd.xlane.f32.xlu0 %v3854
        %v3856 = vpop.xlane.xlu0 %3855
        %v3857 = vadd.f32 %v3761, %v3763
        %3858 = vadd.xlane.f32.xlu0 %v3857
        %v3859 = vpop.xlane.xlu0 %3858
        %v3860 = vpack.c.bf16 %v3641, %v3637
        %v3861 = vpack.c.bf16 %v3643, %v3639
        %v3862 = vpack.c.bf16 %v3649, %v3645
        %v3863 = vpack.c.bf16 %v3651, %v3647
        %v3864 = vpack.c.bf16 %v3657, %v3653
        %v3865 = vpack.c.bf16 %v3659, %v3655
        %v3866 = vpack.c.bf16 %v3665, %v3661
        %v3867 = vpack.c.bf16 %v3667, %v3663
        %v3868 = vpack.c.bf16 %v3673, %v3669
        %v3869 = vpack.c.bf16 %v3675, %v3671
        %v3870 = vpack.c.bf16 %v3681, %v3677
        %v3871 = vpack.c.bf16 %v3683, %v3679
        %v3872 = vpack.c.bf16 %v3689, %v3685
        %v3873 = vpack.c.bf16 %v3691, %v3687
        %v3874 = vpack.c.bf16 %v3697, %v3693
        %v3875 = vpack.c.bf16 %v3699, %v3695
        %v3876 = vpack.c.bf16 %v3705, %v3701
        %v3877 = vpack.c.bf16 %v3707, %v3703
        %v3878 = vpack.c.bf16 %v3713, %v3709
        %v3879 = vpack.c.bf16 %v3715, %v3711
        %v3880 = vpack.c.bf16 %v3721, %v3717
        %v3881 = vpack.c.bf16 %v3723, %v3719
        %v3882 = vpack.c.bf16 %v3729, %v3725
        %v3883 = vpack.c.bf16 %v3731, %v3727
        %v3884 = vpack.c.bf16 %v3737, %v3733
        %v3885 = vpack.c.bf16 %v3739, %v3735
        %v3886 = vpack.c.bf16 %v3745, %v3741
        %v3887 = vpack.c.bf16 %v3747, %v3743
        %v3888 = vpack.c.bf16 %v3753, %v3749
        %v3889 = vpack.c.bf16 %v3755, %v3751
        %v3890 = vpack.c.bf16 %v3761, %v3757
        %v3891 = vpack.c.bf16 %v3763, %v3759
        %3908 = vrot.lane.b32.xlu0 %v3171, 96
        %v3909 = vpop.permute.xlu0 %3908
        %3910 = vrot.lane.b32.xlu0 %v3172, 96
        %v3911 = vpop.permute.xlu0 %3910
        %3912 = vrot.lane.b32.xlu0 %v3173, 96
        %v3913 = vpop.permute.xlu0 %3912
        %3914 = vrot.lane.b32.xlu0 %v3174, 96
        %v3915 = vpop.permute.xlu0 %3914
        %3916 = vrot.lane.b32.xlu0 %v3175, 96
        %v3917 = vpop.permute.xlu0 %3916
        %3918 = vrot.lane.b32.xlu0 %v3176, 96
        %v3919 = vpop.permute.xlu0 %3918
        %3920 = vrot.lane.b32.xlu0 %v3177, 96
        %v3921 = vpop.permute.xlu0 %3920
        %3922 = vrot.lane.b32.xlu0 %v3178, 96
        %v3923 = vpop.permute.xlu0 %3922
        %3924 = vrot.lane.b32.xlu0 %v3179, 96
        %v3925 = vpop.permute.xlu0 %3924
        %3926 = vrot.lane.b32.xlu0 %v3180, 96
        %v3927 = vpop.permute.xlu0 %3926
        %3928 = vrot.lane.b32.xlu0 %v3181, 96
        %v3929 = vpop.permute.xlu0 %3928
        %3930 = vrot.lane.b32.xlu0 %v3182, 96
        %v3931 = vpop.permute.xlu0 %3930
        %3932 = vrot.lane.b32.xlu0 %v3183, 96
        %v3933 = vpop.permute.xlu0 %3932
        %3934 = vrot.lane.b32.xlu0 %v3184, 96
        %v3935 = vpop.permute.xlu0 %3934
        %3936 = vrot.lane.b32.xlu0 %v3185, 96
        %v3937 = vpop.permute.xlu0 %3936
        %3938 = vrot.lane.b32.xlu0 %v3186, 96
        %v3939 = vpop.permute.xlu0 %3938
        %3956 = vmatprep.subr.bf16.mxu0 0
        %3957 = vmatpush1.bf16.msra.mxu0 %v3909
        %3958 = vmatprep.subr.bf16.mxu0 0
        %3959 = vmatpush1.bf16.msra.mxu0 %v3911
        %3960 = vmatprep.subr.bf16.mxu0 0
        %3961 = vmatpush1.bf16.msra.mxu0 %v3913
        %3962 = vmatprep.subr.bf16.mxu0 0
        %3963 = vmatpush1.bf16.msra.mxu0 %v3915
        %3964 = vmatprep.subr.bf16.mxu0 0
        %3965 = vmatpush1.bf16.msra.mxu0 %v3917
        %3966 = vmatprep.subr.bf16.mxu0 0
        %3967 = vmatpush1.bf16.msra.mxu0 %v3919
        %3968 = vmatprep.subr.bf16.mxu0 0
        %3969 = vmatpush1.bf16.msra.mxu0 %v3921
        %3970 = vmatprep.subr.bf16.mxu0 0
        %3971 = vmatpush1.bf16.msra.mxu0 %v3923
        %3972 = vmatprep.subr.bf16.mxu0 0
        %3973 = vmatpush1.bf16.msra.mxu0 %v3925
        %3974 = vmatprep.subr.bf16.mxu0 0
        %3975 = vmatpush1.bf16.msra.mxu0 %v3927
        %3976 = vmatprep.subr.bf16.mxu0 0
        %3977 = vmatpush1.bf16.msra.mxu0 %v3929
        %3978 = vmatprep.subr.bf16.mxu0 0
        %3979 = vmatpush1.bf16.msra.mxu0 %v3931
        %3980 = vmatprep.subr.bf16.mxu0 0
        %3981 = vmatpush1.bf16.msra.mxu0 %v3933
        %3982 = vmatprep.subr.bf16.mxu0 0
        %3983 = vmatpush1.bf16.msra.mxu0 %v3935
        %3984 = vmatprep.subr.bf16.mxu0 0
        %3985 = vmatpush1.bf16.msra.mxu0 %v3937
        %3986 = vmatprep.subr.bf16.mxu0 0
        %3987 = vmatpush1.bf16.msra.mxu0 %v3939
        %3988 = vmatprep.mubr.bf16.mxu0 %v3861
        %3989 = vmatmul.mubr.bf16.gmra.mrb[0].mxu0 %v3860
        %v3990 = vpop.f32.mrb[0].mxu0
        %v3991 = vadd.f32 0.0, %v3990
        %v3992 = vpop.f32.mrb[0].mxu0
        %v3993 = vpop.f32.mrb[0].mxu0
        %v3994 = vadd.f32 0.0, %v3993
        %v3995 = vpop.f32.mrb[0].mxu0
        %3996 = vmatprep.mubr.bf16.mxu0 %v3863
        %3997 = vmatmul.mubr.bf16.gmra.mrb[0].mxu0 %v3862
        %v3998 = vpop.f32.mrb[0].mxu0
        %v3999 = vadd.f32 0.0, %v3998
        %v4000 = vpop.f32.mrb[0].mxu0
        %v4001 = vpop.f32.mrb[0].mxu0
        %v4002 = vadd.f32 0.0, %v4001
        %v4003 = vpop.f32.mrb[0].mxu0
        %4004 = vmatprep.mubr.bf16.mxu0 %v3865
        %4005 = vmatmul.mubr.bf16.gmra.mrb[0].mxu0 %v3864
        %v4006 = vpop.f32.mrb[0].mxu0
        %v4007 = vadd.f32 0.0, %v4006
        %v4008 = vpop.f32.mrb[0].mxu0
        %v4009 = vpop.f32.mrb[0].mxu0
        %v4010 = vadd.f32 0.0, %v4009
        %v4011 = vpop.f32.mrb[0].mxu0
        %4012 = vmatprep.mubr.bf16.mxu0 %v3867
        %4013 = vmatmul.mubr.bf16.gmra.mrb[0].mxu0 %v3866
        %v4014 = vpop.f32.mrb[0].mxu0
        %v4015 = vadd.f32 0.0, %v4014
        %v4016 = vpop.f32.mrb[0].mxu0
        %v4017 = vpop.f32.mrb[0].mxu0
        %v4018 = vadd.f32 0.0, %v4017
        %v4019 = vpop.f32.mrb[0].mxu0
        %4020 = vmatprep.mubr.bf16.mxu0 %v3869
        %4021 = vmatmul.mubr.bf16.gmra.mrb[0].mxu0 %v3868
        %v4022 = vpop.f32.mrb[0].mxu0
        %v4023 = vadd.f32 0.0, %v4022
        %v4024 = vpop.f32.mrb[0].mxu0
        %v4025 = vpop.f32.mrb[0].mxu0
        %v4026 = vadd.f32 0.0, %v4025
        %v4027 = vpop.f32.mrb[0].mxu0
        %4028 = vmatprep.mubr.bf16.mxu0 %v3871
        %4029 = vmatmul.mubr.bf16.gmra.mrb[0].mxu0 %v3870
        %v4030 = vpop.f32.mrb[0].mxu0
        %v4031 = vadd.f32 0.0, %v4030
        %v4032 = vpop.f32.mrb[0].mxu0
        %v4033 = vpop.f32.mrb[0].mxu0
        %v4034 = vadd.f32 0.0, %v4033
        %v4035 = vpop.f32.mrb[0].mxu0
        %4036 = vmatprep.mubr.bf16.mxu0 %v3873
        %4037 = vmatmul.mubr.bf16.gmra.mrb[0].mxu0 %v3872
        %v4038 = vpop.f32.mrb[0].mxu0
        %v4039 = vadd.f32 0.0, %v4038
        %v4040 = vpop.f32.mrb[0].mxu0
        %v4041 = vpop.f32.mrb[0].mxu0
        %v4042 = vadd.f32 0.0, %v4041
        %v4043 = vpop.f32.mrb[0].mxu0
        %4044 = vmatprep.mubr.bf16.mxu0 %v3875
        %4045 = vmatmul.mubr.bf16.gmra.mrb[0].mxu0 %v3874
        %v4046 = vpop.f32.mrb[0].mxu0
        %v4047 = vadd.f32 0.0, %v4046
        %v4048 = vpop.f32.mrb[0].mxu0
        %v4049 = vpop.f32.mrb[0].mxu0
        %v4050 = vadd.f32 0.0, %v4049
        %v4051 = vpop.f32.mrb[0].mxu0
        %4052 = vmatprep.mubr.bf16.mxu0 %v3877
        %4053 = vmatmul.mubr.bf16.gmra.mrb[0].mxu0 %v3876
        %v4054 = vpop.f32.mrb[0].mxu0
        %v4055 = vadd.f32 0.0, %v4054
        %v4056 = vpop.f32.mrb[0].mxu0
        %v4057 = vpop.f32.mrb[0].mxu0
        %v4058 = vadd.f32 0.0, %v4057
        %v4059 = vpop.f32.mrb[0].mxu0
        %4060 = vmatprep.mubr.bf16.mxu0 %v3879
        %4061 = vmatmul.mubr.bf16.gmra.mrb[0].mxu0 %v3878
        %v4062 = vpop.f32.mrb[0].mxu0
        %v4063 = vadd.f32 0.0, %v4062
        %v4064 = vpop.f32.mrb[0].mxu0
        %v4065 = vpop.f32.mrb[0].mxu0
        %v4066 = vadd.f32 0.0, %v4065
        %v4067 = vpop.f32.mrb[0].mxu0
        %4068 = vmatprep.mubr.bf16.mxu0 %v3881
        %4069 = vmatmul.mubr.bf16.gmra.mrb[0].mxu0 %v3880
        %v4070 = vpop.f32.mrb[0].mxu0
        %v4071 = vadd.f32 0.0, %v4070
        %v4072 = vpop.f32.mrb[0].mxu0
        %v4073 = vpop.f32.mrb[0].mxu0
        %v4074 = vadd.f32 0.0, %v4073
        %v4075 = vpop.f32.mrb[0].mxu0
        %4076 = vmatprep.mubr.bf16.mxu0 %v3883
        %4077 = vmatmul.mubr.bf16.gmra.mrb[0].mxu0 %v3882
        %v4078 = vpop.f32.mrb[0].mxu0
        %v4079 = vadd.f32 0.0, %v4078
        %v4080 = vpop.f32.mrb[0].mxu0
        %v4081 = vpop.f32.mrb[0].mxu0
        %v4082 = vadd.f32 0.0, %v4081
        %v4083 = vpop.f32.mrb[0].mxu0
        %4084 = vmatprep.mubr.bf16.mxu0 %v3885
        %4085 = vmatmul.mubr.bf16.gmra.mrb[0].mxu0 %v3884
        %v4086 = vpop.f32.mrb[0].mxu0
        %v4087 = vadd.f32 0.0, %v4086
        %v4088 = vpop.f32.mrb[0].mxu0
        %v4089 = vpop.f32.mrb[0].mxu0
        %v4090 = vadd.f32 0.0, %v4089
        %v4091 = vpop.f32.mrb[0].mxu0
        %4092 = vmatprep.mubr.bf16.mxu0 %v3887
        %4093 = vmatmul.mubr.bf16.gmra.mrb[0].mxu0 %v3886
        %v4094 = vpop.f32.mrb[0].mxu0
        %v4095 = vadd.f32 0.0, %v4094
        %v4096 = vpop.f32.mrb[0].mxu0
        %v4097 = vpop.f32.mrb[0].mxu0
        %v4098 = vadd.f32 0.0, %v4097
        %v4099 = vpop.f32.mrb[0].mxu0
        %4100 = vmatprep.mubr.bf16.mxu0 %v3889
        %4101 = vmatmul.mubr.bf16.gmra.mrb[0].mxu0 %v3888
        %v4102 = vpop.f32.mrb[0].mxu0
        %v4103 = vadd.f32 0.0, %v4102
        %v4104 = vpop.f32.mrb[0].mxu0
        %v4105 = vpop.f32.mrb[0].mxu0
        %v4106 = vadd.f32 0.0, %v4105
        %v4107 = vpop.f32.mrb[0].mxu0
        %4108 = vmatprep.mubr.bf16.mxu0 %v3891
        %4109 = vmatmul.mubr.bf16.gmra.mrb[0].mxu0 %v3890
        %v4110 = vpop.f32.mrb[0].mxu0
        %v4111 = vadd.f32 0.0, %v4110
        %v4112 = vpop.f32.mrb[0].mxu0
        %v4113 = vpop.f32.mrb[0].mxu0
        %v4114 = vadd.f32 0.0, %v4113
        %v4115 = vpop.f32.mrb[0].mxu0
        %4116 = vdwg.mxu0
        %v4117 = vrcp.pop %v3766
        %v4118 = vrcp.pop %v3769
        %v4119 = vrcp.pop %v3772
        %v4120 = vrcp.pop %v3775
        %v4121 = vrcp.pop %v3778
        %v4122 = vrcp.pop %v3781
        %v4123 = vrcp.pop %v3784
        %v4124 = vrcp.pop %v3787
        %v4125 = vrcp.pop %v3790
        %v4126 = vrcp.pop %v3793
        %v4127 = vrcp.pop %v3796
        %v4128 = vrcp.pop %v3799
        %v4129 = vrcp.pop %v3802
        %v4130 = vrcp.pop %v3805
        %v4131 = vrcp.pop %v3808
        %v4132 = vrcp.pop %v3811
        %v4133 = vrcp.pop %v3814
        %v4134 = vrcp.pop %v3817
        %v4135 = vrcp.pop %v3820
        %v4136 = vrcp.pop %v3823
        %v4137 = vrcp.pop %v3826
        %v4138 = vrcp.pop %v3829
        %v4139 = vrcp.pop %v3832
        %v4140 = vrcp.pop %v3835
        %v4141 = vrcp.pop %v3838
        %v4142 = vrcp.pop %v3841
        %v4143 = vrcp.pop %v3844
        %v4144 = vrcp.pop %v3847
        %v4145 = vrcp.pop %v3850
        %v4146 = vrcp.pop %v3853
        %v4147 = vrcp.pop %v3856
        %v4148 = vrcp.pop %v3859
        %v4149 = vmul.f32 %v3991, %v4117
        %v4150 = vmul.f32 %v3994, %v4118
        %v4151 = vmul.f32 %v3999, %v4119
        %v4152 = vmul.f32 %v4002, %v4120
        %v4153 = vmul.f32 %v4007, %v4121
        %v4154 = vmul.f32 %v4010, %v4122
        %v4155 = vmul.f32 %v4015, %v4123
        %v4156 = vmul.f32 %v4018, %v4124
        %v4157 = vmul.f32 %v4023, %v4125
        %v4158 = vmul.f32 %v4026, %v4126
        %v4159 = vmul.f32 %v4031, %v4127
        %v4160 = vmul.f32 %v4034, %v4128
        %v4161 = vmul.f32 %v4039, %v4129
        %v4162 = vmul.f32 %v4042, %v4130
        %v4163 = vmul.f32 %v4047, %v4131
        %v4164 = vmul.f32 %v4050, %v4132
        %v4165 = vmul.f32 %v4055, %v4133
        %v4166 = vmul.f32 %v4058, %v4134
        %v4167 = vmul.f32 %v4063, %v4135
        %v4168 = vmul.f32 %v4066, %v4136
        %v4169 = vmul.f32 %v4071, %v4137
        %v4170 = vmul.f32 %v4074, %v4138
        %v4171 = vmul.f32 %v4079, %v4139
        %v4172 = vmul.f32 %v4082, %v4140
        %v4173 = vmul.f32 %v4087, %v4141
        %v4174 = vmul.f32 %v4090, %v4142
        %v4175 = vmul.f32 %v4095, %v4143
        %v4176 = vmul.f32 %v4098, %v4144
        %v4177 = vmul.f32 %v4103, %v4145
        %v4178 = vmul.f32 %v4106, %v4146
        %v4179 = vmul.f32 %v4111, %v4147
        %v4180 = vmul.f32 %v4114, %v4148
        %4213 = vrot.lane.b32.xlu0 %v4149, 32
        %v4214 = vpop.permute.xlu0 %4213
        %4215 = vrot.lane.b32.xlu0 %v4150, 32
        %v4216 = vpop.permute.xlu0 %4215
        %4217 = vrot.lane.b32.xlu0 %v4151, 32
        %v4218 = vpop.permute.xlu0 %4217
        %4219 = vrot.lane.b32.xlu0 %v4152, 32
        %v4220 = vpop.permute.xlu0 %4219
        %4221 = vrot.lane.b32.xlu0 %v4153, 32
        %v4222 = vpop.permute.xlu0 %4221
        %4223 = vrot.lane.b32.xlu0 %v4154, 32
        %v4224 = vpop.permute.xlu0 %4223
        %4225 = vrot.lane.b32.xlu0 %v4155, 32
        %v4226 = vpop.permute.xlu0 %4225
        %4227 = vrot.lane.b32.xlu0 %v4156, 32
        %v4228 = vpop.permute.xlu0 %4227
        %4229 = vrot.lane.b32.xlu0 %v4157, 32
        %v4230 = vpop.permute.xlu0 %4229
        %4231 = vrot.lane.b32.xlu0 %v4158, 32
        %v4232 = vpop.permute.xlu0 %4231
        %4233 = vrot.lane.b32.xlu0 %v4159, 32
        %v4234 = vpop.permute.xlu0 %4233
        %4235 = vrot.lane.b32.xlu0 %v4160, 32
        %v4236 = vpop.permute.xlu0 %4235
        %4237 = vrot.lane.b32.xlu0 %v4161, 32
        %v4238 = vpop.permute.xlu0 %4237
        %4239 = vrot.lane.b32.xlu0 %v4162, 32
        %v4240 = vpop.permute.xlu0 %4239
        %4241 = vrot.lane.b32.xlu0 %v4163, 32
        %v4242 = vpop.permute.xlu0 %4241
        %4243 = vrot.lane.b32.xlu0 %v4164, 32
        %v4244 = vpop.permute.xlu0 %4243
        %4245 = vrot.lane.b32.xlu0 %v4165, 32
        %v4246 = vpop.permute.xlu0 %4245
        %4247 = vrot.lane.b32.xlu0 %v4166, 32
        %v4248 = vpop.permute.xlu0 %4247
        %4249 = vrot.lane.b32.xlu0 %v4167, 32
        %v4250 = vpop.permute.xlu0 %4249
        %4251 = vrot.lane.b32.xlu0 %v4168, 32
        %v4252 = vpop.permute.xlu0 %4251
        %4253 = vrot.lane.b32.xlu0 %v4169, 32
        %v4254 = vpop.permute.xlu0 %4253
        %4255 = vrot.lane.b32.xlu0 %v4170, 32
        %v4256 = vpop.permute.xlu0 %4255
        %4257 = vrot.lane.b32.xlu0 %v4171, 32
        %v4258 = vpop.permute.xlu0 %4257
        %4259 = vrot.lane.b32.xlu0 %v4172, 32
        %v4260 = vpop.permute.xlu0 %4259
        %4261 = vrot.lane.b32.xlu0 %v4173, 32
        %v4262 = vpop.permute.xlu0 %4261
        %4263 = vrot.lane.b32.xlu0 %v4174, 32
        %v4264 = vpop.permute.xlu0 %4263
        %4265 = vrot.lane.b32.xlu0 %v4175, 32
        %v4266 = vpop.permute.xlu0 %4265
        %4267 = vrot.lane.b32.xlu0 %v4176, 32
        %v4268 = vpop.permute.xlu0 %4267
        %4269 = vrot.lane.b32.xlu0 %v4177, 32
        %v4270 = vpop.permute.xlu0 %4269
        %4271 = vrot.lane.b32.xlu0 %v4178, 32
        %v4272 = vpop.permute.xlu0 %4271
        %4273 = vrot.lane.b32.xlu0 %v4179, 32
        %v4274 = vpop.permute.xlu0 %4273
        %4275 = vrot.lane.b32.xlu0 %v4180, 32
        %v4276 = vpop.permute.xlu0 %4275
        %vm4309 = vcmask 523520
        %4310 = vst.msk [vmem:[#allocation5] sm:$0xff] %vm4309, %v4214
        %4311 = vst.msk [vmem:[#allocation5 + $0x8] sm:$0xff] %vm4309, %v4216
        %4312 = vst.msk [vmem:[#allocation5 + $0x10] sm:$0xff] %vm4309, %v4218
        %4313 = vst.msk [vmem:[#allocation5 + $0x18] sm:$0xff] %vm4309, %v4220
        %4314 = vst.msk [vmem:[#allocation5 + $0x20] sm:$0xff] %vm4309, %v4222
        %4315 = vst.msk [vmem:[#allocation5 + $0x28] sm:$0xff] %vm4309, %v4224
        %4316 = vst.msk [vmem:[#allocation5 + $0x30] sm:$0xff] %vm4309, %v4226
        %4317 = vst.msk [vmem:[#allocation5 + $0x38] sm:$0xff] %vm4309, %v4228
        %4318 = vst.msk [vmem:[#allocation5 + $0x40] sm:$0xff] %vm4309, %v4230
        %4319 = vst.msk [vmem:[#allocation5 + $0x48] sm:$0xff] %vm4309, %v4232
        %4320 = vst.msk [vmem:[#allocation5 + $0x50] sm:$0xff] %vm4309, %v4234
        %4321 = vst.msk [vmem:[#allocation5 + $0x58] sm:$0xff] %vm4309, %v4236
        %4322 = vst.msk [vmem:[#allocation5 + $0x60] sm:$0xff] %vm4309, %v4238
        %4323 = vst.msk [vmem:[#allocation5 + $0x68] sm:$0xff] %vm4309, %v4240
        %4324 = vst.msk [vmem:[#allocation5 + $0x70] sm:$0xff] %vm4309, %v4242
        %4325 = vst.msk [vmem:[#allocation5 + $0x78] sm:$0xff] %vm4309, %v4244
        %4326 = vst.msk [vmem:[#allocation5 + $0x80] sm:$0xff] %vm4309, %v4246
        %4327 = vst.msk [vmem:[#allocation5 + $0x88] sm:$0xff] %vm4309, %v4248
        %4328 = vst.msk [vmem:[#allocation5 + $0x90] sm:$0xff] %vm4309, %v4250
        %4329 = vst.msk [vmem:[#allocation5 + $0x98] sm:$0xff] %vm4309, %v4252
        %4330 = vst.msk [vmem:[#allocation5 + $0xa0] sm:$0xff] %vm4309, %v4254
        %4331 = vst.msk [vmem:[#allocation5 + $0xa8] sm:$0xff] %vm4309, %v4256
        %4332 = vst.msk [vmem:[#allocation5 + $0xb0] sm:$0xff] %vm4309, %v4258
        %4333 = vst.msk [vmem:[#allocation5 + $0xb8] sm:$0xff] %vm4309, %v4260
        %4334 = vst.msk [vmem:[#allocation5 + $0xc0] sm:$0xff] %vm4309, %v4262
        %4335 = vst.msk [vmem:[#allocation5 + $0xc8] sm:$0xff] %vm4309, %v4264
        %4336 = vst.msk [vmem:[#allocation5 + $0xd0] sm:$0xff] %vm4309, %v4266
        %4337 = vst.msk [vmem:[#allocation5 + $0xd8] sm:$0xff] %vm4309, %v4268
        %4338 = vst.msk [vmem:[#allocation5 + $0xe0] sm:$0xff] %vm4309, %v4270
        %4339 = vst.msk [vmem:[#allocation5 + $0xe8] sm:$0xff] %vm4309, %v4272
        %4340 = vst.msk [vmem:[#allocation5 + $0xf0] sm:$0xff] %vm4309, %v4274
        %4341 = vst.msk [vmem:[#allocation5 + $0xf8] sm:$0xff] %vm4309, %v4276
        %v4342 = vld [vmem:[#allocation5] sm:$0xff]
        %v4343 = vld [vmem:[#allocation5 + $0x8] sm:$0xff]
        %v4344 = vld [vmem:[#allocation5 + $0x10] sm:$0xff]
        %v4345 = vld [vmem:[#allocation5 + $0x18] sm:$0xff]
        %v4346 = vld [vmem:[#allocation5 + $0x20] sm:$0xff]
        %v4347 = vld [vmem:[#allocation5 + $0x28] sm:$0xff]
        %v4348 = vld [vmem:[#allocation5 + $0x30] sm:$0xff]
        %v4349 = vld [vmem:[#allocation5 + $0x38] sm:$0xff]
        %v4350 = vld [vmem:[#allocation5 + $0x40] sm:$0xff]
        %v4351 = vld [vmem:[#allocation5 + $0x48] sm:$0xff]
        %v4352 = vld [vmem:[#allocation5 + $0x50] sm:$0xff]
        %v4353 = vld [vmem:[#allocation5 + $0x58] sm:$0xff]
        %v4354 = vld [vmem:[#allocation5 + $0x60] sm:$0xff]
        %v4355 = vld [vmem:[#allocation5 + $0x68] sm:$0xff]
        %v4356 = vld [vmem:[#allocation5 + $0x70] sm:$0xff]
        %v4357 = vld [vmem:[#allocation5 + $0x78] sm:$0xff]
        %v4358 = vld [vmem:[#allocation5 + $0x80] sm:$0xff]
        %v4359 = vld [vmem:[#allocation5 + $0x88] sm:$0xff]
        %v4360 = vld [vmem:[#allocation5 + $0x90] sm:$0xff]
        %v4361 = vld [vmem:[#allocation5 + $0x98] sm:$0xff]
        %v4362 = vld [vmem:[#allocation5 + $0xa0] sm:$0xff]
        %v4363 = vld [vmem:[#allocation5 + $0xa8] sm:$0xff]
        %v4364 = vld [vmem:[#allocation5 + $0xb0] sm:$0xff]
        %v4365 = vld [vmem:[#allocation5 + $0xb8] sm:$0xff]
        %v4366 = vld [vmem:[#allocation5 + $0xc0] sm:$0xff]
        %v4367 = vld [vmem:[#allocation5 + $0xc8] sm:$0xff]
        %v4368 = vld [vmem:[#allocation5 + $0xd0] sm:$0xff]
        %v4369 = vld [vmem:[#allocation5 + $0xd8] sm:$0xff]
        %v4370 = vld [vmem:[#allocation5 + $0xe0] sm:$0xff]
        %v4371 = vld [vmem:[#allocation5 + $0xe8] sm:$0xff]
        %v4372 = vld [vmem:[#allocation5 + $0xf0] sm:$0xff]
        %v4373 = vld [vmem:[#allocation5 + $0xf8] sm:$0xff]
        %v4374 = vpack.c.bf16 %v4343, %v4342
        %v4375 = vpack.c.bf16 %v4345, %v4344
        %v4376 = vpack.c.bf16 %v4347, %v4346
        %v4377 = vpack.c.bf16 %v4349, %v4348
        %v4378 = vpack.c.bf16 %v4351, %v4350
        %v4379 = vpack.c.bf16 %v4353, %v4352
        %v4380 = vpack.c.bf16 %v4355, %v4354
        %v4381 = vpack.c.bf16 %v4357, %v4356
        %v4382 = vpack.c.bf16 %v4359, %v4358
        %v4383 = vpack.c.bf16 %v4361, %v4360
        %v4384 = vpack.c.bf16 %v4363, %v4362
        %v4385 = vpack.c.bf16 %v4365, %v4364
        %v4386 = vpack.c.bf16 %v4367, %v4366
        %v4387 = vpack.c.bf16 %v4369, %v4368
        %v4388 = vpack.c.bf16 %v4371, %v4370
        %v4389 = vpack.c.bf16 %v4373, %v4372
        %v4390 = vld [vmem:[#allocation24] sm:$0xf]
        %v4391 = vld [vmem:[#allocation24 + $0x4] sm:$0xf]
        %v4392 = vld [vmem:[#allocation24 + $0x8] sm:$0xf]
        %v4393 = vld [vmem:[#allocation24 + $0xc] sm:$0xf]
        %v4394 = vld [vmem:[#allocation24 + $0x10] sm:$0xf]
        %v4395 = vld [vmem:[#allocation24 + $0x14] sm:$0xf]
        %v4396 = vld [vmem:[#allocation24 + $0x18] sm:$0xf]
        %v4397 = vld [vmem:[#allocation24 + $0x1c] sm:$0xf]
        %v4398 = vld [vmem:[#allocation26] sm:$0x1]
        %v4400 = vlaneseq
        %v4401 = vshrl.u32 %v4400, 7
        %v4402 = vsub.s32 0, %v4401
        %v4403 = vrot.slane %v4398, %v4402
        %v4413 = vunpack.c.l.b16 %v4390
        %v4414 = vunpack.c.l.b16 %v4391
        %v4415 = vunpack.c.l.b16 %v4392
        %v4416 = vunpack.c.l.b16 %v4393
        %v4417 = vunpack.c.l.b16 %v4394
        %v4418 = vunpack.c.l.b16 %v4395
        %v4419 = vunpack.c.l.b16 %v4396
        %v4420 = vunpack.c.l.b16 %v4397
        %v4421 = vpack.c.b16 %v4414, %v4413
        %v4422 = vpack.c.b16 %v4416, %v4415
        %v4423 = vpack.c.b16 %v4418, %v4417
        %v4424 = vpack.c.b16 %v4420, %v4419
        %vm4429 = vcmask 523264
        %v4431 = vsel %vm4429, %v4374, 0
        %v4434 = vsel %vm4429, %v4375, 0
        %v4437 = vsel %vm4429, %v4376, 0
        %v4440 = vsel %vm4429, %v4377, 0
        %v4443 = vsel %vm4429, %v4378, 0
        %v4446 = vsel %vm4429, %v4379, 0
        %v4449 = vsel %vm4429, %v4380, 0
        %v4452 = vsel %vm4429, %v4381, 0
        %v4455 = vsel %vm4429, %v4382, 0
        %v4458 = vsel %vm4429, %v4383, 0
        %v4461 = vsel %vm4429, %v4384, 0
        %v4464 = vsel %vm4429, %v4385, 0
        %v4467 = vsel %vm4429, %v4386, 0
        %v4470 = vsel %vm4429, %v4387, 0
        %v4473 = vsel %vm4429, %v4388, 0
        %v4476 = vsel %vm4429, %v4389, 0
        %4478 = vmatprep.subr.bf16.mxu0 0
        %4479 = vmatpush1.bf16.msra.mxu0 %v4421
        %4480 = vmatprep.subr.bf16.mxu0 0
        %4481 = vmatpush1.bf16.msra.mxu0 %v4422
        %4482 = vmatprep.subr.bf16.mxu0 0
        %4483 = vmatpush1.bf16.msra.mxu0 %v4423
        %4484 = vmatprep.subr.bf16.mxu0 0
        %4485 = vmatpush1.bf16.msra.mxu0 %v4424
        %4486 = vmatprep.subr.bf16.mxu0 0
        %4487 = vmatpush1.bf16.msra.mxu0 0
        %4488 = vmatprep.subr.bf16.mxu0 0
        %4489 = vmatpush1.bf16.msra.mxu0 0
        %4490 = vmatprep.subr.bf16.mxu0 0
        %4491 = vmatpush1.bf16.msra.mxu0 0
        %4492 = vmatprep.subr.bf16.mxu0 0
        %4493 = vmatpush1.bf16.msra.mxu0 0
        %4494 = vmatprep.subr.bf16.mxu0 0
        %4495 = vmatpush1.bf16.msra.mxu0 0
        %4496 = vmatprep.subr.bf16.mxu0 0
        %4497 = vmatpush1.bf16.msra.mxu0 0
        %4498 = vmatprep.subr.bf16.mxu0 0
        %4499 = vmatpush1.bf16.msra.mxu0 0
        %4500 = vmatprep.subr.bf16.mxu0 0
        %4501 = vmatpush1.bf16.msra.mxu0 0
        %4502 = vmatprep.subr.bf16.mxu0 0
        %4503 = vmatpush1.bf16.msra.mxu0 0
        %4504 = vmatprep.subr.bf16.mxu0 0
        %4505 = vmatpush1.bf16.msra.mxu0 0
        %4506 = vmatprep.subr.bf16.mxu0 0
        %4507 = vmatpush1.bf16.msra.mxu0 0
        %4508 = vmatprep.subr.bf16.mxu0 0
        %4509 = vmatpush1.bf16.msra.mxu0 0
        %4510 = vmatprep.mubr.bf16.mxu0 0
        %4511 = vmatmul.mubr.bf16.gmra.mrb[0].mxu0 %v4431
        %v4512 = vpop.f32.mrb[0].mxu0
        %v4513 = vadd.f32 %v4403, %v4512
        %v4514 = vpop.f32.mrb[0].mxu0
        %v4515 = vpop.f32.mrb[0].mxu0
        %v4516 = vadd.f32 %v4403, %v4515
        %v4517 = vpop.f32.mrb[0].mxu0
        %4518 = vmatprep.mubr.bf16.mxu0 0
        %4519 = vmatmul.mubr.bf16.gmra.mrb[0].mxu0 %v4434
        %v4520 = vpop.f32.mrb[0].mxu0
        %v4521 = vadd.f32 %v4403, %v4520
        %v4522 = vpop.f32.mrb[0].mxu0
        %v4523 = vpop.f32.mrb[0].mxu0
        %v4524 = vadd.f32 %v4403, %v4523
        %v4525 = vpop.f32.mrb[0].mxu0
        %4526 = vmatprep.mubr.bf16.mxu0 0
        %4527 = vmatmul.mubr.bf16.gmra.mrb[0].mxu0 %v4437
        %v4528 = vpop.f32.mrb[0].mxu0
        %v4529 = vadd.f32 %v4403, %v4528
        %v4530 = vpop.f32.mrb[0].mxu0
        %v4531 = vpop.f32.mrb[0].mxu0
        %v4532 = vadd.f32 %v4403, %v4531
        %v4533 = vpop.f32.mrb[0].mxu0
        %4534 = vmatprep.mubr.bf16.mxu0 0
        %4535 = vmatmul.mubr.bf16.gmra.mrb[0].mxu0 %v4440
        %v4536 = vpop.f32.mrb[0].mxu0
        %v4537 = vadd.f32 %v4403, %v4536
        %v4538 = vpop.f32.mrb[0].mxu0
        %v4539 = vpop.f32.mrb[0].mxu0
        %v4540 = vadd.f32 %v4403, %v4539
        %v4541 = vpop.f32.mrb[0].mxu0
        %4542 = vmatprep.mubr.bf16.mxu0 0
        %4543 = vmatmul.mubr.bf16.gmra.mrb[0].mxu0 %v4443
        %v4544 = vpop.f32.mrb[0].mxu0
        %v4545 = vadd.f32 %v4403, %v4544
        %v4546 = vpop.f32.mrb[0].mxu0
        %v4547 = vpop.f32.mrb[0].mxu0
        %v4548 = vadd.f32 %v4403, %v4547
        %v4549 = vpop.f32.mrb[0].mxu0
        %4550 = vmatprep.mubr.bf16.mxu0 0
        %4551 = vmatmul.mubr.bf16.gmra.mrb[0].mxu0 %v4446
        %v4552 = vpop.f32.mrb[0].mxu0
        %v4553 = vadd.f32 %v4403, %v4552
        %v4554 = vpop.f32.mrb[0].mxu0
        %v4555 = vpop.f32.mrb[0].mxu0
        %v4556 = vadd.f32 %v4403, %v4555
        %v4557 = vpop.f32.mrb[0].mxu0
        %4558 = vmatprep.mubr.bf16.mxu0 0
        %4559 = vmatmul.mubr.bf16.gmra.mrb[0].mxu0 %v4449
        %v4560 = vpop.f32.mrb[0].mxu0
        %v4561 = vadd.f32 %v4403, %v4560
        %v4562 = vpop.f32.mrb[0].mxu0
        %v4563 = vpop.f32.mrb[0].mxu0
        %v4564 = vadd.f32 %v4403, %v4563
        %v4565 = vpop.f32.mrb[0].mxu0
        %4566 = vmatprep.mubr.bf16.mxu0 0
        %4567 = vmatmul.mubr.bf16.gmra.mrb[0].mxu0 %v4452
        %v4568 = vpop.f32.mrb[0].mxu0
        %v4569 = vadd.f32 %v4403, %v4568
        %v4570 = vpop.f32.mrb[0].mxu0
        %v4571 = vpop.f32.mrb[0].mxu0
        %v4572 = vadd.f32 %v4403, %v4571
        %v4573 = vpop.f32.mrb[0].mxu0
        %4574 = vmatprep.mubr.bf16.mxu0 0
        %4575 = vmatmul.mubr.bf16.gmra.mrb[0].mxu0 %v4455
        %v4576 = vpop.f32.mrb[0].mxu0
        %v4577 = vadd.f32 %v4403, %v4576
        %v4578 = vpop.f32.mrb[0].mxu0
        %v4579 = vpop.f32.mrb[0].mxu0
        %v4580 = vadd.f32 %v4403, %v4579
        %v4581 = vpop.f32.mrb[0].mxu0
        %4582 = vmatprep.mubr.bf16.mxu0 0
        %4583 = vmatmul.mubr.bf16.gmra.mrb[0].mxu0 %v4458
        %v4584 = vpop.f32.mrb[0].mxu0
        %v4585 = vadd.f32 %v4403, %v4584
        %v4586 = vpop.f32.mrb[0].mxu0
        %v4587 = vpop.f32.mrb[0].mxu0
        %v4588 = vadd.f32 %v4403, %v4587
        %v4589 = vpop.f32.mrb[0].mxu0
        %4590 = vmatprep.mubr.bf16.mxu0 0
        %4591 = vmatmul.mubr.bf16.gmra.mrb[0].mxu0 %v4461
        %v4592 = vpop.f32.mrb[0].mxu0
        %v4593 = vadd.f32 %v4403, %v4592
        %v4594 = vpop.f32.mrb[0].mxu0
        %v4595 = vpop.f32.mrb[0].mxu0
        %v4596 = vadd.f32 %v4403, %v4595
        %v4597 = vpop.f32.mrb[0].mxu0
        %4598 = vmatprep.mubr.bf16.mxu0 0
        %4599 = vmatmul.mubr.bf16.gmra.mrb[0].mxu0 %v4464
        %v4600 = vpop.f32.mrb[0].mxu0
        %v4601 = vadd.f32 %v4403, %v4600
        %v4602 = vpop.f32.mrb[0].mxu0
        %v4603 = vpop.f32.mrb[0].mxu0
        %v4604 = vadd.f32 %v4403, %v4603
        %v4605 = vpop.f32.mrb[0].mxu0
        %4606 = vmatprep.mubr.bf16.mxu0 0
        %4607 = vmatmul.mubr.bf16.gmra.mrb[0].mxu0 %v4467
        %v4608 = vpop.f32.mrb[0].mxu0
        %v4609 = vadd.f32 %v4403, %v4608
        %v4610 = vpop.f32.mrb[0].mxu0
        %v4611 = vpop.f32.mrb[0].mxu0
        %v4612 = vadd.f32 %v4403, %v4611
        %v4613 = vpop.f32.mrb[0].mxu0
        %4614 = vmatprep.mubr.bf16.mxu0 0
        %4615 = vmatmul.mubr.bf16.gmra.mrb[0].mxu0 %v4470
        %v4616 = vpop.f32.mrb[0].mxu0
        %v4617 = vadd.f32 %v4403, %v4616
        %v4618 = vpop.f32.mrb[0].mxu0
        %v4619 = vpop.f32.mrb[0].mxu0
        %v4620 = vadd.f32 %v4403, %v4619
        %v4621 = vpop.f32.mrb[0].mxu0
        %4622 = vmatprep.mubr.bf16.mxu0 0
        %4623 = vmatmul.mubr.bf16.gmra.mrb[0].mxu0 %v4473
        %v4624 = vpop.f32.mrb[0].mxu0
        %v4625 = vadd.f32 %v4403, %v4624
        %v4626 = vpop.f32.mrb[0].mxu0
        %v4627 = vpop.f32.mrb[0].mxu0
        %v4628 = vadd.f32 %v4403, %v4627
        %v4629 = vpop.f32.mrb[0].mxu0
        %4630 = vmatprep.mubr.bf16.mxu0 0
        %4631 = vmatmul.mubr.bf16.gmra.mrb[0].mxu0 %v4476
        %v4632 = vpop.f32.mrb[0].mxu0
        %v4633 = vadd.f32 %v4403, %v4632
        %v4634 = vpop.f32.mrb[0].mxu0
        %v4635 = vpop.f32.mrb[0].mxu0
        %v4636 = vadd.f32 %v4403, %v4635
        %v4637 = vpop.f32.mrb[0].mxu0
        %4638 = vdwg.mxu0
        %v4639 = vadd.f32 %v4513, %v2164
        %v4640 = vadd.f32 %v4516, %v2165
        %v4641 = vadd.f32 %v4521, %v2166
        %v4642 = vadd.f32 %v4524, %v2167
        %v4643 = vadd.f32 %v4529, %v2168
        %v4644 = vadd.f32 %v4532, %v2169
        %v4645 = vadd.f32 %v4537, %v2170
        %v4646 = vadd.f32 %v4540, %v2171
        %v4647 = vadd.f32 %v4545, %v2172
        %v4648 = vadd.f32 %v4548, %v2173
        %v4649 = vadd.f32 %v4553, %v2174
        %v4650 = vadd.f32 %v4556, %v2175
        %v4651 = vadd.f32 %v4561, %v2176
        %v4652 = vadd.f32 %v4564, %v2177
        %v4653 = vadd.f32 %v4569, %v2178
        %v4654 = vadd.f32 %v4572, %v2179
        %v4655 = vadd.f32 %v4577, %v2180
        %v4656 = vadd.f32 %v4580, %v2181
        %v4657 = vadd.f32 %v4585, %v2182
        %v4658 = vadd.f32 %v4588, %v2183
        %v4659 = vadd.f32 %v4593, %v2184
        %v4660 = vadd.f32 %v4596, %v2185
        %v4661 = vadd.f32 %v4601, %v2186
        %v4662 = vadd.f32 %v4604, %v2187
        %v4663 = vadd.f32 %v4609, %v2188
        %v4664 = vadd.f32 %v4612, %v2189
        %v4665 = vadd.f32 %v4617, %v2190
        %v4666 = vadd.f32 %v4620, %v2191
        %v4667 = vadd.f32 %v4625, %v2192
        %v4668 = vadd.f32 %v4628, %v2193
        %v4669 = vadd.f32 %v4633, %v2194
        %v4670 = vadd.f32 %v4636, %v2195
        %4671 = vst.msk [vmem:[%s617] sm:$0xff] %vm4429, %v4639
        %4672 = vst.msk [vmem:[%s617 + $0x8] sm:$0xff] %vm4429, %v4640
        %4673 = vst.msk [vmem:[%s617 + $0x10] sm:$0xff] %vm4429, %v4641
        %4674 = vst.msk [vmem:[%s617 + $0x18] sm:$0xff] %vm4429, %v4642
        %4675 = vst.msk [vmem:[%s617 + $0x20] sm:$0xff] %vm4429, %v4643
        %4676 = vst.msk [vmem:[%s617 + $0x28] sm:$0xff] %vm4429, %v4644
        %4677 = vst.msk [vmem:[%s617 + $0x30] sm:$0xff] %vm4429, %v4645
        %4678 = vst.msk [vmem:[%s617 + $0x38] sm:$0xff] %vm4429, %v4646
        %4679 = vst.msk [vmem:[%s617 + $0x40] sm:$0xff] %vm4429, %v4647
        %4680 = vst.msk [vmem:[%s617 + $0x48] sm:$0xff] %vm4429, %v4648
        %4681 = vst.msk [vmem:[%s617 + $0x50] sm:$0xff] %vm4429, %v4649
        %4682 = vst.msk [vmem:[%s617 + $0x58] sm:$0xff] %vm4429, %v4650
        %4683 = vst.msk [vmem:[%s617 + $0x60] sm:$0xff] %vm4429, %v4651
        %4684 = vst.msk [vmem:[%s617 + $0x68] sm:$0xff] %vm4429, %v4652
        %4685 = vst.msk [vmem:[%s617 + $0x70] sm:$0xff] %vm4429, %v4653
        %4686 = vst.msk [vmem:[%s617 + $0x78] sm:$0xff] %vm4429, %v4654
        %4687 = vst.msk [vmem:[%s617 + $0x80] sm:$0xff] %vm4429, %v4655
        %4688 = vst.msk [vmem:[%s617 + $0x88] sm:$0xff] %vm4429, %v4656
        %4689 = vst.msk [vmem:[%s617 + $0x90] sm:$0xff] %vm4429, %v4657
        %4690 = vst.msk [vmem:[%s617 + $0x98] sm:$0xff] %vm4429, %v4658
        %4691 = vst.msk [vmem:[%s617 + $0xa0] sm:$0xff] %vm4429, %v4659
        %4692 = vst.msk [vmem:[%s617 + $0xa8] sm:$0xff] %vm4429, %v4660
        %4693 = vst.msk [vmem:[%s617 + $0xb0] sm:$0xff] %vm4429, %v4661
        %4694 = vst.msk [vmem:[%s617 + $0xb8] sm:$0xff] %vm4429, %v4662
        %4695 = vst.msk [vmem:[%s617 + $0xc0] sm:$0xff] %vm4429, %v4663
        %4696 = vst.msk [vmem:[%s617 + $0xc8] sm:$0xff] %vm4429, %v4664
        %4697 = vst.msk [vmem:[%s617 + $0xd0] sm:$0xff] %vm4429, %v4665
        %4698 = vst.msk [vmem:[%s617 + $0xd8] sm:$0xff] %vm4429, %v4666
        %4699 = vst.msk [vmem:[%s617 + $0xe0] sm:$0xff] %vm4429, %v4667
        %4700 = vst.msk [vmem:[%s617 + $0xe8] sm:$0xff] %vm4429, %v4668
        %4701 = vst.msk [vmem:[%s617 + $0xf0] sm:$0xff] %vm4429, %v4669
        %4702 = vst.msk [vmem:[%s617 + $0xf8] sm:$0xff] %vm4429, %v4670
        %s4703 = sand.u32 %s334, 1
        %s4704 = scalar_lea.sflag [#allocation8], %s4703
        %s4705 = sand.u32 %s334, 1
        %s4706 = smul.addr %s4705, 256
        %s4707 = scalar_lea.vmem [#allocation27], %s4706
        // Predicated region
        $region129: #{tpu_custom_call.1} parent=71 // pred_check
          %p4708 = pneg %p344
        $region130: #{tpu_custom_call.1} parent=71 // pred_check_branch
          %4710 = sbr.rel (%p4708) target = $region132
        $region131: #{tpu_custom_call.1} parent=71 // pred_region
          %s4711 = smul.u32 32, %s39
          %s4713 = ssub.s32 4096, 4096
          %4714 = vsyncadd %s4704, %s4713
          %s4715 = smul.addr %s38, 32
          %s4716 = sadd.s32 %s4711, %s4715
          %s4717 = smul.addr %s4716, 128
          %s4718 = scalar_lea.hbm %s13, %s4717
          %s4719 = sshll.u32 %s4707, 4
          %s4720 = int_to_ptr.vmem [resolvable:$true] %s4719
          %4725 = dma.vmem_to_hbm [thread:$0]  %s4720, 4096, %s4718, %s4704, 128, 128, 8
        $region132: #{tpu_custom_call.1} parent=71 // pred_fallthru
          _
      $region72: #{tpu_custom_call.1} parent=5 // pred_fallthru
        _
      %p4726 = scmp.le.s32.totalorder 2, %s29
      // Predicated region
      $region133: #{tpu_custom_call.1} parent=5 // pred_check
        %p4727 = pneg %p4726
      $region134: #{tpu_custom_call.1} parent=5 // pred_check_branch
        %4729 = sbr.rel (%p4727) target = $region136
      $region135: #{tpu_custom_call.1} parent=5 // pred_region
        %s4730 = ssub.s32 %s29, 2
        // Predicated region
        $region137: #{tpu_custom_call.1} parent=135 // pred_check
          %p4731 = pneg %p350
        $region138: #{tpu_custom_call.1} parent=135 // pred_check_branch
          %4733 = sbr.rel (%p4731) target = $region140
        $region139: #{tpu_custom_call.1} parent=135 // pred_region
          %s4734 = sand.u32 %s335, 1
          %s4735 = scalar_lea.sflag [#allocation8], %s4734
          %s4736 = sand.u32 %s335, 1
          %s4737 = smul.addr %s4736, 256
          %s4738 = scalar_lea.vmem [#allocation27], %s4737
          %4739 = dma.done %s4735, 4096
        $region140: #{tpu_custom_call.1} parent=135 // pred_fallthru
          _
      $region136: #{tpu_custom_call.1} parent=5 // pred_fallthru
        _
    $region6: #{tpu_custom_call.1} parent=1 // loop_footer
      %s33 = sadd.s32 1, %s29
    $region7: #{tpu_custom_call.1} parent=1 // loop_footer_branch
      %28 = sbr.rel target = $region3
    $region8: #{tpu_custom_call.1} parent=1 // loop_exit
      _
    %4740 = vsyncpa [#allocation7], 1
    %s4741 = scalar_lea.sflag [#allocation7], 1
    %4742 = vsyncpa %s4741, 1
    %4743 = vsyncpa [#allocation10], 1
    %4744 = vsyncpa [#allocation13], 1
    %4745 = vsyncpa [#allocation16], 1
    %4746 = vsyncpa [#allocation19], 1
    %4747 = vsyncpa [#allocation22], 1
    %4748 = vsyncpa [#allocation25], 1
    %4749 = vsyncpa [#allocation8], 1
    %s4750 = scalar_lea.sflag [#allocation8], 1
    %4751 = vsyncpa %s4750, 1

// kernel: tpu_custom_call.1
$region0: #{tpu_custom_call.1}
  #allocation0 [shape = 'u32[]', space=smem, size = 0x4, offset = 0x4, fixed_abs, tag = 'smem constant byte address 0x4 - core index']
  #allocation1 [shape = 'u32[144,128]{1,0:T(1,128)}', space=vmem, size = 0x12000, scoped, tag = 'internal scratch']
  #allocation2 [shape = 'bf16[256,64]{1,0:T(16,128)(2,1)}', space=vmem, size = 0x10000, scoped, tag = 'scratch operand']
  #allocation3 [shape = 'bf16[64,256]{1,0:T(16,128)(2,1)}', space=vmem, size = 0x8000, scoped, tag = 'scratch operand']
  #allocation4 [shape = 'bf16[256,64]{1,0:T(16,128)(2,1)}', space=vmem, size = 0x10000, scoped, tag = 'scratch operand']
  #allocation5 [shape = 'f32[256,64]{1,0:T(8,128)}', space=vmem, size = 0x20000, scoped, tag = 'scratch operand']
  %s0 = inlined_call_operand.hbm [shape: bf16[2,256,64], index: 0, kind: input, shape index: {}]
  %s1 = inlined_call_operand.hbm [shape: f32[64,32], index: 1, kind: input, shape index: {}]
  %s2 = inlined_call_operand.hbm [shape: f32[32,64], index: 2, kind: input, shape index: {}]
  %s3 = inlined_call_operand.hbm [shape: f32[1,64], index: 3, kind: input, shape index: {}]
  %s4 = inlined_call_operand.hbm [shape: f32[1,64], index: 4, kind: input, shape index: {}]
  %s5 = inlined_call_operand.hbm [shape: bf16[64,64], index: 5, kind: input, shape index: {}]
  %s6 = inlined_call_operand.hbm [shape: f32[1,64], index: 6, kind: input, shape index: {}]
  %s7 = inlined_call_operand.hbm [shape: bf16[64,64], index: 7, kind: input, shape index: {}]
  %s8 = inlined_call_operand.hbm [shape: f32[1,64], index: 8, kind: input, shape index: {}]
  %s9 = inlined_call_operand.hbm [shape: bf16[64,64], index: 9, kind: input, shape index: {}]
  %s10 = inlined_call_operand.hbm [shape: f32[1,64], index: 10, kind: input, shape index: {}]
  %s11 = inlined_call_operand.hbm [shape: bf16[64,64], index: 11, kind: input, shape index: {}]
  %s12 = inlined_call_operand.hbm [shape: f32[1,64], index: 12, kind: input, shape index: {}]
  %s13 = inlined_call_operand.hbm [shape: f32[2,256,64], index: 13, kind: output, shape index: {}]
  %s14 = sld [smem:[#allocation0]]
  $region141: #{tpu_custom_call.1} parent=0
    _
  %s16 = ssub.s32 1, %s14
  %s17 = scalar_select 0, %s16, %s14
  $region1: #{tpu_custom_call.1} parent=0
    #allocation6 [shape = 'u8[131072]{0}', space=vmem, size = 0x20000, scoped, tag = 'input window, operand 0']
    #allocation7 [shape = 's32[2]{0}', space=sflag, size = 0x8, scoped, tag = 'scoped memory for tpu_custom_call.1']
    #allocation8 [shape = 's32[2]{0}', space=sflag, size = 0x8, scoped, tag = 'scoped memory for tpu_custom_call.1']
    #allocation9 [shape = 'u8[32768]{0}', space=vmem, size = 0x8000, scoped, tag = 'input window, operand 1, single buffered']
    #allocation10 [shape = 's32[1]{0}', space=sflag, size = 0x4, scoped, tag = 'scoped memory for tpu_custom_call.1']
    #allocation11 [shape = 'u8[16384]{0}', space=vmem, size = 0x4000, scoped, tag = 'input window, operand 2, single buffered']
    #allocation12 [shape = 'u8[512]{0}', space=vmem, size = 0x400, scoped, tag = 'input window, operand 3, single buffered']
    #allocation13 [shape = 's32[1]{0}', space=sflag, size = 0x4, scoped, tag = 'scoped memory for tpu_custom_call.1']
    #allocation14 [shape = 'u8[512]{0}', space=vmem, size = 0x400, scoped, tag = 'input window, operand 4, single buffered']
    #allocation15 [shape = 'u8[16384]{0}', space=vmem, size = 0x4000, scoped, tag = 'input window, operand 5, single buffered']
    #allocation16 [shape = 's32[1]{0}', space=sflag, size = 0x4, scoped, tag = 'scoped memory for tpu_custom_call.1']
    #allocation17 [shape = 'u8[512]{0}', space=vmem, size = 0x400, scoped, tag = 'input window, operand 6, single buffered']
    #allocation18 [shape = 'u8[16384]{0}', space=vmem, size = 0x4000, scoped, tag = 'input window, operand 7, single buffered']
    #allocation19 [shape = 's32[1]{0}', space=sflag, size = 0x4, scoped, tag = 'scoped memory for tpu_custom_call.1']
    #allocation20 [shape = 'u8[512]{0}', space=vmem, size = 0x400, scoped, tag = 'input window, operand 8, single buffered']
    #allocation21 [shape = 'u8[16384]{0}', space=vmem, size = 0x4000, scoped, tag = 'input window, operand 9, single buffered']
    #allocation22 [shape = 's32[1]{0}', space=sflag, size = 0x4, scoped, tag = 'scoped memory for tpu_custom_call.1']
    #allocation23 [shape = 'u8[512]{0}', space=vmem, size = 0x400, scoped, tag = 'input window, operand 10, single buffered']
    #allocation24 [shape = 'u8[16384]{0}', space=vmem, size = 0x4000, scoped, tag = 'input window, operand 11, single buffered']
    #allocation25 [shape = 's32[1]{0}', space=sflag, size = 0x4, scoped, tag = 'scoped memory for tpu_custom_call.1']
    #allocation26 [shape = 'u8[512]{0}', space=vmem, size = 0x400, scoped, tag = 'input window, operand 12, single buffered']
    #allocation27 [shape = 'u8[262144]{0}', space=vmem, size = 0x40000, scoped, tag = 'output window, operand 0']
    %18 = vsyncpa [#allocation7], 0
    %s19 = scalar_lea.sflag [#allocation7], 1
    %20 = vsyncpa %s19, 0
    %21 = vsyncpa [#allocation10], 0
    %22 = vsyncpa [#allocation13], 0
    %23 = vsyncpa [#allocation16], 0
    %24 = vsyncpa [#allocation19], 0
    %25 = vsyncpa [#allocation22], 0
    %26 = vsyncpa [#allocation25], 0
    %27 = vsyncpa [#allocation8], 0
    %s28 = scalar_lea.sflag [#allocation8], 1
    %29 = vsyncpa %s28, 0
    loop: start=0, step=1, limit=4
    $region2: #{tpu_custom_call.1} parent=1 // loop_pre_header
      _
    $region3: #{tpu_custom_call.1} parent=1 // loop_header
      %s31 = sphi 0, %s35
      %p32 = scmp.ge.s32.totalorder %s31, 4
      %s38 = sphi 0, %s50
      %s39 = sphi 0, %s46
      %s40 = sphi 0, %s38
      %s41 = sphi 0, %s39
      %s42 = sphi 0, %s40
      %s43 = sphi 0, %s41
      %s53 = sphi 0, %s55
      %s56 = sphi 0, %s53
      %s57 = sphi 0, %s56
      %s73 = sphi 0, %s57
      %s77 = sphi 0, %s77
      %s79 = sphi 0, %s77
      %s80 = sphi 0, %s79
      %s94 = sphi 0, %s80
      %s98 = sphi 0, %s98
      %s100 = sphi 0, %s98
      %s101 = sphi 0, %s100
      %s115 = sphi 0, %s101
      %s119 = sphi 0, %s119
      %s121 = sphi 0, %s119
      %s122 = sphi 0, %s121
      %s136 = sphi 0, %s122
      %s140 = sphi 0, %s140
      %s142 = sphi 0, %s140
      %s143 = sphi 0, %s142
      %s157 = sphi 0, %s143
      %s161 = sphi 0, %s161
      %s163 = sphi 0, %s161
      %s164 = sphi 0, %s163
      %s178 = sphi 0, %s164
      %s182 = sphi 0, %s182
      %s184 = sphi 0, %s182
      %s185 = sphi 0, %s184
      %s199 = sphi 0, %s185
      %s203 = sphi 0, %s203
      %s205 = sphi 0, %s203
      %s206 = sphi 0, %s205
      %s220 = sphi 0, %s206
      %s224 = sphi 0, %s224
      %s226 = sphi 0, %s224
      %s227 = sphi 0, %s226
      %s241 = sphi 0, %s227
      %s245 = sphi 0, %s245
      %s247 = sphi 0, %s245
      %s248 = sphi 0, %s247
      %s262 = sphi 0, %s248
      %s266 = sphi 0, %s266
      %s268 = sphi 0, %s266
      %s269 = sphi 0, %s268
      %s283 = sphi 0, %s269
      %s287 = sphi 0, %s287
      %s289 = sphi 0, %s287
      %s290 = sphi 0, %s289
      %s304 = sphi 0, %s290
      %s308 = sphi 0, %s308
      %s310 = sphi 0, %s308
      %s311 = sphi 0, %s310
      %s325 = sphi 0, %s311
      %s333 = sphi 0, %s335
      %s336 = sphi 0, %s333
      %s337 = sphi 0, %s336
      %s353 = sphi 0, %s337
    $region4: #{tpu_custom_call.1} parent=1 // loop_header_branch
      %34 = sbr.rel (%p32) target = $region8
    $region5: #{tpu_custom_call.1} parent=1 // loop_body
      %s36 = ssub.s32 %s31, 1
      %s37 = ssub.s32 %s31, 2
      %s44 = sadd.s32 1, %s39
      %p45 = scmp.ge.s32.totalorder %s44, 1
      %s46 = scalar_select %p45, 0, %s44
      %s47 = sadd.s32 1, %s38
      %s48 = scalar_select %p45, %s47, %s38
      %p49 = scmp.ge.s32.totalorder %s48, 2
      %s50 = scalar_select %p49, 0, %s48
      %s51 = ssub.s32 %s38, %s50
      %p52 = scmp.eq.s32.totalorder %s51, 0
      %s54 = sadd.s32 %s53, 1
      %s55 = scalar_select %p52, %s53, %s54
      %p58 = pneg %p52
      %p59 = scmp.eq.s32.totalorder %s31, 1
      %p60 = por %p58, %p59
      %p61 = scmp.ne.s32.totalorder %s53, %s56
      %p62 = scmp.eq.s32.totalorder %s31, 0
      %p63 = por %p61, %p62
      %p64 = scmp.ne.s32.totalorder %s53, %s56
      %p65 = scmp.eq.s32.totalorder %s36, 1
      %p66 = por %p64, %p65
      %p67 = scmp.ne.s32.totalorder %s56, %s57
      %p68 = scmp.eq.s32.totalorder %s36, 0
      %p69 = por %p67, %p68
      %p70 = scmp.ne.s32.totalorder %s56, %s57
      %p71 = scmp.eq.s32.totalorder %s37, 1
      %p72 = por %p70, %p71
      %p74 = scmp.ne.s32.totalorder %s57, %s73
      %p75 = scmp.eq.s32.totalorder %s37, 0
      %p76 = por %p74, %p75
      %s78 = sadd.s32 %s77, 1
      %p81 = scmp.eq.s32.totalorder %s31, 1
      %p82 = scmp.ne.s32.totalorder %s77, %s79
      %p83 = scmp.eq.s32.totalorder %s31, 0
      %p84 = por %p82, %p83
      %p85 = scmp.ne.s32.totalorder %s77, %s79
      %p86 = scmp.eq.s32.totalorder %s36, 1
      %p87 = por %p85, %p86
      %p88 = scmp.ne.s32.totalorder %s79, %s80
      %p89 = scmp.eq.s32.totalorder %s36, 0
      %p90 = por %p88, %p89
      %p91 = scmp.ne.s32.totalorder %s79, %s80
      %p92 = scmp.eq.s32.totalorder %s37, 1
      %p93 = por %p91, %p92
      %p95 = scmp.ne.s32.totalorder %s80, %s94
      %p96 = scmp.eq.s32.totalorder %s37, 0
      %p97 = por %p95, %p96
      %s99 = sadd.s32 %s98, 1
      %p102 = scmp.eq.s32.totalorder %s31, 1
      %p103 = scmp.ne.s32.totalorder %s98, %s100
      %p104 = scmp.eq.s32.totalorder %s31, 0
      %p105 = por %p103, %p104
      %p106 = scmp.ne.s32.totalorder %s98, %s100
      %p107 = scmp.eq.s32.totalorder %s36, 1
      %p108 = por %p106, %p107
      %p109 = scmp.ne.s32.totalorder %s100, %s101
      %p110 = scmp.eq.s32.totalorder %s36, 0
      %p111 = por %p109, %p110
      %p112 = scmp.ne.s32.totalorder %s100, %s101
      %p113 = scmp.eq.s32.totalorder %s37, 1
      %p114 = por %p112, %p113
      %p116 = scmp.ne.s32.totalorder %s101, %s115
      %p117 = scmp.eq.s32.totalorder %s37, 0
      %p118 = por %p116, %p117
      %s120 = sadd.s32 %s119, 1
      %p123 = scmp.eq.s32.totalorder %s31, 1
      %p124 = scmp.ne.s32.totalorder %s119, %s121
      %p125 = scmp.eq.s32.totalorder %s31, 0
      %p126 = por %p124, %p125
      %p127 = scmp.ne.s32.totalorder %s119, %s121
      %p128 = scmp.eq.s32.totalorder %s36, 1
      %p129 = por %p127, %p128
      %p130 = scmp.ne.s32.totalorder %s121, %s122
      %p131 = scmp.eq.s32.totalorder %s36, 0
      %p132 = por %p130, %p131
      %p133 = scmp.ne.s32.totalorder %s121, %s122
      %p134 = scmp.eq.s32.totalorder %s37, 1
      %p135 = por %p133, %p134
      %p137 = scmp.ne.s32.totalorder %s122, %s136
      %p138 = scmp.eq.s32.totalorder %s37, 0
      %p139 = por %p137, %p138
      %s141 = sadd.s32 %s140, 1
      %p144 = scmp.eq.s32.totalorder %s31, 1
      %p145 = scmp.ne.s32.totalorder %s140, %s142
      %p146 = scmp.eq.s32.totalorder %s31, 0
      %p147 = por %p145, %p146
      %p148 = scmp.ne.s32.totalorder %s140, %s142
      %p149 = scmp.eq.s32.totalorder %s36, 1
      %p150 = por %p148, %p149
      %p151 = scmp.ne.s32.totalorder %s142, %s143
      %p152 = scmp.eq.s32.totalorder %s36, 0
      %p153 = por %p151, %p152
      %p154 = scmp.ne.s32.totalorder %s142, %s143
      %p155 = scmp.eq.s32.totalorder %s37, 1
      %p156 = por %p154, %p155
      %p158 = scmp.ne.s32.totalorder %s143, %s157
      %p159 = scmp.eq.s32.totalorder %s37, 0
      %p160 = por %p158, %p159
      %s162 = sadd.s32 %s161, 1
      %p165 = scmp.eq.s32.totalorder %s31, 1
      %p166 = scmp.ne.s32.totalorder %s161, %s163
      %p167 = scmp.eq.s32.totalorder %s31, 0
      %p168 = por %p166, %p167
      %p169 = scmp.ne.s32.totalorder %s161, %s163
      %p170 = scmp.eq.s32.totalorder %s36, 1
      %p171 = por %p169, %p170
      %p172 = scmp.ne.s32.totalorder %s163, %s164
      %p173 = scmp.eq.s32.totalorder %s36, 0
      %p174 = por %p172, %p173
      %p175 = scmp.ne.s32.totalorder %s163, %s164
      %p176 = scmp.eq.s32.totalorder %s37, 1
      %p177 = por %p175, %p176
      %p179 = scmp.ne.s32.totalorder %s164, %s178
      %p180 = scmp.eq.s32.totalorder %s37, 0
      %p181 = por %p179, %p180
      %s183 = sadd.s32 %s182, 1
      %p186 = scmp.eq.s32.totalorder %s31, 1
      %p187 = scmp.ne.s32.totalorder %s182, %s184
      %p188 = scmp.eq.s32.totalorder %s31, 0
      %p189 = por %p187, %p188
      %p190 = scmp.ne.s32.totalorder %s182, %s184
      %p191 = scmp.eq.s32.totalorder %s36, 1
      %p192 = por %p190, %p191
      %p193 = scmp.ne.s32.totalorder %s184, %s185
      %p194 = scmp.eq.s32.totalorder %s36, 0
      %p195 = por %p193, %p194
      %p196 = scmp.ne.s32.totalorder %s184, %s185
      %p197 = scmp.eq.s32.totalorder %s37, 1
      %p198 = por %p196, %p197
      %p200 = scmp.ne.s32.totalorder %s185, %s199
      %p201 = scmp.eq.s32.totalorder %s37, 0
      %p202 = por %p200, %p201
      %s204 = sadd.s32 %s203, 1
      %p207 = scmp.eq.s32.totalorder %s31, 1
      %p208 = scmp.ne.s32.totalorder %s203, %s205
      %p209 = scmp.eq.s32.totalorder %s31, 0
      %p210 = por %p208, %p209
      %p211 = scmp.ne.s32.totalorder %s203, %s205
      %p212 = scmp.eq.s32.totalorder %s36, 1
      %p213 = por %p211, %p212
      %p214 = scmp.ne.s32.totalorder %s205, %s206
      %p215 = scmp.eq.s32.totalorder %s36, 0
      %p216 = por %p214, %p215
      %p217 = scmp.ne.s32.totalorder %s205, %s206
      %p218 = scmp.eq.s32.totalorder %s37, 1
      %p219 = por %p217, %p218
      %p221 = scmp.ne.s32.totalorder %s206, %s220
      %p222 = scmp.eq.s32.totalorder %s37, 0
      %p223 = por %p221, %p222
      %s225 = sadd.s32 %s224, 1
      %p228 = scmp.eq.s32.totalorder %s31, 1
      %p229 = scmp.ne.s32.totalorder %s224, %s226
      %p230 = scmp.eq.s32.totalorder %s31, 0
      %p231 = por %p229, %p230
      %p232 = scmp.ne.s32.totalorder %s224, %s226
      %p233 = scmp.eq.s32.totalorder %s36, 1
      %p234 = por %p232, %p233
      %p235 = scmp.ne.s32.totalorder %s226, %s227
      %p236 = scmp.eq.s32.totalorder %s36, 0
      %p237 = por %p235, %p236
      %p238 = scmp.ne.s32.totalorder %s226, %s227
      %p239 = scmp.eq.s32.totalorder %s37, 1
      %p240 = por %p238, %p239
      %p242 = scmp.ne.s32.totalorder %s227, %s241
      %p243 = scmp.eq.s32.totalorder %s37, 0
      %p244 = por %p242, %p243
      %s246 = sadd.s32 %s245, 1
      %p249 = scmp.eq.s32.totalorder %s31, 1
      %p250 = scmp.ne.s32.totalorder %s245, %s247
      %p251 = scmp.eq.s32.totalorder %s31, 0
      %p252 = por %p250, %p251
      %p253 = scmp.ne.s32.totalorder %s245, %s247
      %p254 = scmp.eq.s32.totalorder %s36, 1
      %p255 = por %p253, %p254
      %p256 = scmp.ne.s32.totalorder %s247, %s248
      %p257 = scmp.eq.s32.totalorder %s36, 0
      %p258 = por %p256, %p257
      %p259 = scmp.ne.s32.totalorder %s247, %s248
      %p260 = scmp.eq.s32.totalorder %s37, 1
      %p261 = por %p259, %p260
      %p263 = scmp.ne.s32.totalorder %s248, %s262
      %p264 = scmp.eq.s32.totalorder %s37, 0
      %p265 = por %p263, %p264
      %s267 = sadd.s32 %s266, 1
      %p270 = scmp.eq.s32.totalorder %s31, 1
      %p271 = scmp.ne.s32.totalorder %s266, %s268
      %p272 = scmp.eq.s32.totalorder %s31, 0
      %p273 = por %p271, %p272
      %p274 = scmp.ne.s32.totalorder %s266, %s268
      %p275 = scmp.eq.s32.totalorder %s36, 1
      %p276 = por %p274, %p275
      %p277 = scmp.ne.s32.totalorder %s268, %s269
      %p278 = scmp.eq.s32.totalorder %s36, 0
      %p279 = por %p277, %p278
      %p280 = scmp.ne.s32.totalorder %s268, %s269
      %p281 = scmp.eq.s32.totalorder %s37, 1
      %p282 = por %p280, %p281
      %p284 = scmp.ne.s32.totalorder %s269, %s283
      %p285 = scmp.eq.s32.totalorder %s37, 0
      %p286 = por %p284, %p285
      %s288 = sadd.s32 %s287, 1
      %p291 = scmp.eq.s32.totalorder %s31, 1
      %p292 = scmp.ne.s32.totalorder %s287, %s289
      %p293 = scmp.eq.s32.totalorder %s31, 0
      %p294 = por %p292, %p293
      %p295 = scmp.ne.s32.totalorder %s287, %s289
      %p296 = scmp.eq.s32.totalorder %s36, 1
      %p297 = por %p295, %p296
      %p298 = scmp.ne.s32.totalorder %s289, %s290
      %p299 = scmp.eq.s32.totalorder %s36, 0
      %p300 = por %p298, %p299
      %p301 = scmp.ne.s32.totalorder %s289, %s290
      %p302 = scmp.eq.s32.totalorder %s37, 1
      %p303 = por %p301, %p302
      %p305 = scmp.ne.s32.totalorder %s290, %s304
      %p306 = scmp.eq.s32.totalorder %s37, 0
      %p307 = por %p305, %p306
      %s309 = sadd.s32 %s308, 1
      %p312 = scmp.eq.s32.totalorder %s31, 1
      %p313 = scmp.ne.s32.totalorder %s308, %s310
      %p314 = scmp.eq.s32.totalorder %s31, 0
      %p315 = por %p313, %p314
      %p316 = scmp.ne.s32.totalorder %s308, %s310
      %p317 = scmp.eq.s32.totalorder %s36, 1
      %p318 = por %p316, %p317
      %p319 = scmp.ne.s32.totalorder %s310, %s311
      %p320 = scmp.eq.s32.totalorder %s36, 0
      %p321 = por %p319, %p320
      %p322 = scmp.ne.s32.totalorder %s310, %s311
      %p323 = scmp.eq.s32.totalorder %s37, 1
      %p324 = por %p322, %p323
      %p326 = scmp.ne.s32.totalorder %s311, %s325
      %p327 = scmp.eq.s32.totalorder %s37, 0
      %p328 = por %p326, %p327
      %s329 = ssub.s32 %s38, %s50
      %s330 = ssub.s32 %s39, %s46
      %s331 = sor.u32 %s329, %s330
      %p332 = scmp.eq.s32.totalorder %s331, 0
      %s334 = sadd.s32 %s333, 1
      %s335 = scalar_select %p332, %s333, %s334
      %p338 = pneg %p332
      %p339 = scmp.eq.s32.totalorder %s31, 1
      %p340 = por %p338, %p339
      %p341 = scmp.ne.s32.totalorder %s333, %s336
      %p342 = scmp.eq.s32.totalorder %s31, 0
      %p343 = por %p341, %p342
      %p344 = scmp.ne.s32.totalorder %s333, %s336
      %p345 = scmp.eq.s32.totalorder %s36, 1
      %p346 = por %p344, %p345
      %p347 = scmp.ne.s32.totalorder %s336, %s337
      %p348 = scmp.eq.s32.totalorder %s36, 0
      %p349 = por %p347, %p348
      %p350 = scmp.ne.s32.totalorder %s336, %s337
      %p351 = scmp.eq.s32.totalorder %s37, 1
      %p352 = por %p350, %p351
      %p354 = scmp.ne.s32.totalorder %s337, %s353
      %p355 = scmp.eq.s32.totalorder %s37, 0
      %p356 = por %p354, %p355
      %p357 = scmp.le.s32.totalorder 1, %s31
      %p358 = scmp.lt.s32.totalorder %s31, 3
      %p359 = pnand %p357, %p358
      %p360 = pneg %p359
      // Predicated region
      $region9: #{tpu_custom_call.1} parent=5 // pred_check
        _
      $region10: #{tpu_custom_call.1} parent=5 // pred_check_branch
        %362 = sbr.rel (%p359) target = $region12
      $region11: #{tpu_custom_call.1} parent=5 // pred_region
        %s363 = ssub.s32 %s31, 1
        // Predicated region
        $region13: #{tpu_custom_call.1} parent=11 // pred_check
          %p364 = pneg %p90
        $region14: #{tpu_custom_call.1} parent=11 // pred_check_branch
          %366 = sbr.rel (%p364) target = $region16
        $region15: #{tpu_custom_call.1} parent=11 // pred_region
          %s368 = ssub.s32 1024, 1024
          %369 = vsyncadd [#allocation10], %s368
          %s370 = sshll.u32 [#allocation9], 4
          %s371 = int_to_ptr.vmem [resolvable:$true] %s370
          %376 = dma.hbm_to_vmem [thread:$0]  %s1, 1024, %s371, [#allocation10], 128, 128, 8
        $region16: #{tpu_custom_call.1} parent=11 // pred_fallthru
          _
        // Predicated region
        $region17: #{tpu_custom_call.1} parent=11 // pred_check
          %p377 = pneg %p111
        $region18: #{tpu_custom_call.1} parent=11 // pred_check_branch
          %379 = sbr.rel (%p377) target = $region20
        $region19: #{tpu_custom_call.1} parent=11 // pred_region
          %s381 = ssub.s32 512, 512
          %382 = vsyncadd [#allocation10], %s381
          %s383 = sshll.u32 [#allocation11], 4
          %s384 = int_to_ptr.vmem [resolvable:$true] %s383
          %389 = dma.hbm_to_vmem [thread:$0]  %s2, 512, %s384, [#allocation10], 128, 128, 8
        $region20: #{tpu_custom_call.1} parent=11 // pred_fallthru
          _
        // Predicated region
        $region21: #{tpu_custom_call.1} parent=11 // pred_check
          %p390 = pneg %p132
        $region22: #{tpu_custom_call.1} parent=11 // pred_check_branch
          %392 = sbr.rel (%p390) target = $region24
        $region23: #{tpu_custom_call.1} parent=11 // pred_region
          %s394 = ssub.s32 16, 16
          %395 = vsyncadd [#allocation13], %s394
          %s397 = sshll.u32 [#allocation12], 4
          %s398 = int_to_ptr.vmem [resolvable:$true] %s397
          %400 = dma.hbm_to_vmem [thread:$0]  %s3, 16, %s398, [#allocation13]
        $region24: #{tpu_custom_call.1} parent=11 // pred_fallthru
          _
        // Predicated region
        $region25: #{tpu_custom_call.1} parent=11 // pred_check
          %p401 = pneg %p153
        $region26: #{tpu_custom_call.1} parent=11 // pred_check_branch
          %403 = sbr.rel (%p401) target = $region28
        $region27: #{tpu_custom_call.1} parent=11 // pred_region
          %s405 = ssub.s32 16, 16
          %406 = vsyncadd [#allocation13], %s405
          %s408 = sshll.u32 [#allocation14], 4
          %s409 = int_to_ptr.vmem [resolvable:$true] %s408
          %411 = dma.hbm_to_vmem [thread:$0]  %s4, 16, %s409, [#allocation13]
        $region28: #{tpu_custom_call.1} parent=11 // pred_fallthru
          _
        // Predicated region
        $region29: #{tpu_custom_call.1} parent=11 // pred_check
          %p412 = pneg %p174
        $region30: #{tpu_custom_call.1} parent=11 // pred_check_branch
          %414 = sbr.rel (%p412) target = $region32
        $region31: #{tpu_custom_call.1} parent=11 // pred_region
          %s416 = ssub.s32 512, 512
          %417 = vsyncadd [#allocation16], %s416
          %s418 = sshll.u32 [#allocation15], 4
          %s419 = int_to_ptr.vmem [resolvable:$true] %s418
          %424 = dma.hbm_to_vmem [thread:$0]  %s5, 512, %s419, [#allocation16], 64, 64, 4
        $region32: #{tpu_custom_call.1} parent=11 // pred_fallthru
          _
        // Predicated region
        $region33: #{tpu_custom_call.1} parent=11 // pred_check
          %p425 = pneg %p195
        $region34: #{tpu_custom_call.1} parent=11 // pred_check_branch
          %427 = sbr.rel (%p425) target = $region36
        $region35: #{tpu_custom_call.1} parent=11 // pred_region
          %s429 = ssub.s32 16, 16
          %430 = vsyncadd [#allocation16], %s429
          %s432 = sshll.u32 [#allocation17], 4
          %s433 = int_to_ptr.vmem [resolvable:$true] %s432
          %435 = dma.hbm_to_vmem [thread:$0]  %s6, 16, %s433, [#allocation16]
        $region36: #{tpu_custom_call.1} parent=11 // pred_fallthru
          _
        // Predicated region
        $region37: #{tpu_custom_call.1} parent=11 // pred_check
          %p436 = pneg %p216
        $region38: #{tpu_custom_call.1} parent=11 // pred_check_branch
          %438 = sbr.rel (%p436) target = $region40
        $region39: #{tpu_custom_call.1} parent=11 // pred_region
          %s440 = ssub.s32 512, 512
          %441 = vsyncadd [#allocation19], %s440
          %s442 = sshll.u32 [#allocation18], 4
          %s443 = int_to_ptr.vmem [resolvable:$true] %s442
          %448 = dma.hbm_to_vmem [thread:$0]  %s7, 512, %s443, [#allocation19], 64, 64, 4
        $region40: #{tpu_custom_call.1} parent=11 // pred_fallthru
          _
        // Predicated region
        $region41: #{tpu_custom_call.1} parent=11 // pred_check
          %p449 = pneg %p237
        $region42: #{tpu_custom_call.1} parent=11 // pred_check_branch
          %451 = sbr.rel (%p449) target = $region44
        $region43: #{tpu_custom_call.1} parent=11 // pred_region
          %s453 = ssub.s32 16, 16
          %454 = vsyncadd [#allocation19], %s453
          %s456 = sshll.u32 [#allocation20], 4
          %s457 = int_to_ptr.vmem [resolvable:$true] %s456
          %459 = dma.hbm_to_vmem [thread:$0]  %s8, 16, %s457, [#allocation19]
        $region44: #{tpu_custom_call.1} parent=11 // pred_fallthru
          _
        // Predicated region
        $region45: #{tpu_custom_call.1} parent=11 // pred_check
          %p460 = pneg %p258
        $region46: #{tpu_custom_call.1} parent=11 // pred_check_branch
          %462 = sbr.rel (%p460) target = $region48
        $region47: #{tpu_custom_call.1} parent=11 // pred_region
          %s464 = ssub.s32 512, 512
          %465 = vsyncadd [#allocation22], %s464
          %s466 = sshll.u32 [#allocation21], 4
          %s467 = int_to_ptr.vmem [resolvable:$true] %s466
          %472 = dma.hbm_to_vmem [thread:$0]  %s9, 512, %s467, [#allocation22], 64, 64, 4
        $region48: #{tpu_custom_call.1} parent=11 // pred_fallthru
          _
        // Predicated region
        $region49: #{tpu_custom_call.1} parent=11 // pred_check
          %p473 = pneg %p279
        $region50: #{tpu_custom_call.1} parent=11 // pred_check_branch
          %475 = sbr.rel (%p473) target = $region52
        $region51: #{tpu_custom_call.1} parent=11 // pred_region
          %s477 = ssub.s32 16, 16
          %478 = vsyncadd [#allocation22], %s477
          %s480 = sshll.u32 [#allocation23], 4
          %s481 = int_to_ptr.vmem [resolvable:$true] %s480
          %483 = dma.hbm_to_vmem [thread:$0]  %s10, 16, %s481, [#allocation22]
        $region52: #{tpu_custom_call.1} parent=11 // pred_fallthru
          _
        // Predicated region
        $region53: #{tpu_custom_call.1} parent=11 // pred_check
          %p484 = pneg %p300
        $region54: #{tpu_custom_call.1} parent=11 // pred_check_branch
          %486 = sbr.rel (%p484) target = $region56
        $region55: #{tpu_custom_call.1} parent=11 // pred_region
          %s488 = ssub.s32 512, 512
          %489 = vsyncadd [#allocation25], %s488
          %s490 = sshll.u32 [#allocation24], 4
          %s491 = int_to_ptr.vmem [resolvable:$true] %s490
          %496 = dma.hbm_to_vmem [thread:$0]  %s11, 512, %s491, [#allocation25], 64, 64, 4
        $region56: #{tpu_custom_call.1} parent=11 // pred_fallthru
          _
        // Predicated region
        $region57: #{tpu_custom_call.1} parent=11 // pred_check
          %p497 = pneg %p321
        $region58: #{tpu_custom_call.1} parent=11 // pred_check_branch
          %499 = sbr.rel (%p497) target = $region60
        $region59: #{tpu_custom_call.1} parent=11 // pred_region
          %s501 = ssub.s32 16, 16
          %502 = vsyncadd [#allocation25], %s501
          %s504 = sshll.u32 [#allocation26], 4
          %s505 = int_to_ptr.vmem [resolvable:$true] %s504
          %507 = dma.hbm_to_vmem [thread:$0]  %s12, 16, %s505, [#allocation25]
        $region60: #{tpu_custom_call.1} parent=11 // pred_fallthru
          _
      $region12: #{tpu_custom_call.1} parent=5 // pred_fallthru
        _
      %p508 = scmp.lt.s32.totalorder %s31, 2
      // Predicated region
      $region61: #{tpu_custom_call.1} parent=5 // pred_check
        %p509 = pneg %p508
      $region62: #{tpu_custom_call.1} parent=5 // pred_check_branch
        %511 = sbr.rel (%p509) target = $region64
      $region63: #{tpu_custom_call.1} parent=5 // pred_region
        // Predicated region
        $region65: #{tpu_custom_call.1} parent=63 // pred_check
          %p512 = pneg %p63
        $region66: #{tpu_custom_call.1} parent=63 // pred_check_branch
          %514 = sbr.rel (%p512) target = $region68
        $region67: #{tpu_custom_call.1} parent=63 // pred_region
          %s515 = sand.u32 %s53, 1
          %s516 = scalar_lea.sflag [#allocation7], %s515
          %s517 = sand.u32 %s53, 1
          %s518 = smul.addr %s517, 128
          %s519 = scalar_lea.vmem [#allocation6], %s518
          %s521 = ssub.s32 2048, 2048
          %522 = vsyncadd %s516, %s521
          %s523 = smul.addr %s38, 32
          %s524 = smul.addr %s523, 64
          %s525 = scalar_lea.hbm %s0, %s524
          %s526 = sshll.u32 %s519, 4
          %s527 = int_to_ptr.vmem [resolvable:$true] %s526
          %532 = dma.hbm_to_vmem [thread:$0]  %s525, 2048, %s527, %s516, 64, 64, 4
        $region68: #{tpu_custom_call.1} parent=63 // pred_fallthru
          _
      $region64: #{tpu_custom_call.1} parent=5 // pred_fallthru
        _
      %p533 = scmp.le.s32.totalorder 1, %s31
      %p534 = scmp.lt.s32.totalorder %s31, 3
      %p535 = pnand %p533, %p534
      %p536 = pneg %p535
      // Predicated region
      $region69: #{tpu_custom_call.1} parent=5 // pred_check
        _
      $region70: #{tpu_custom_call.1} parent=5 // pred_check_branch
        %538 = sbr.rel (%p535) target = $region72
      $region71: #{tpu_custom_call.1} parent=5 // pred_region
        %s539 = ssub.s32 %s31, 1
        %s540 = sand.u32 %s56, 1
        %s541 = scalar_lea.sflag [#allocation7], %s540
        %s542 = sand.u32 %s56, 1
        %s543 = smul.addr %s542, 128
        %s544 = scalar_lea.vmem [#allocation6], %s543
        // Predicated region
        $region73: #{tpu_custom_call.1} parent=71 // pred_check
          %p545 = pneg %p69
        $region74: #{tpu_custom_call.1} parent=71 // pred_check_branch
          %547 = sbr.rel (%p545) target = $region76
        $region75: #{tpu_custom_call.1} parent=71 // pred_region
          %548 = dma.done %s541, 2048
        $region76: #{tpu_custom_call.1} parent=71 // pred_fallthru
          _
        // Predicated region
        $region77: #{tpu_custom_call.1} parent=71 // pred_check
          %p549 = pneg %p90
        $region78: #{tpu_custom_call.1} parent=71 // pred_check_branch
          %551 = sbr.rel (%p549) target = $region80
        $region79: #{tpu_custom_call.1} parent=71 // pred_region
          %552 = dma.done [#allocation10], 1024
        $region80: #{tpu_custom_call.1} parent=71 // pred_fallthru
          _
        // Predicated region
        $region81: #{tpu_custom_call.1} parent=71 // pred_check
          %p553 = pneg %p111
        $region82: #{tpu_custom_call.1} parent=71 // pred_check_branch
          %555 = sbr.rel (%p553) target = $region84
        $region83: #{tpu_custom_call.1} parent=71 // pred_region
          %556 = dma.done [#allocation10], 512
        $region84: #{tpu_custom_call.1} parent=71 // pred_fallthru
          _
        // Predicated region
        $region85: #{tpu_custom_call.1} parent=71 // pred_check
          %p557 = pneg %p132
        $region86: #{tpu_custom_call.1} parent=71 // pred_check_branch
          %559 = sbr.rel (%p557) target = $region88
        $region87: #{tpu_custom_call.1} parent=71 // pred_region
          %560 = dma.done [#allocation13], 16
        $region88: #{tpu_custom_call.1} parent=71 // pred_fallthru
          _
        // Predicated region
        $region89: #{tpu_custom_call.1} parent=71 // pred_check
          %p561 = pneg %p153
        $region90: #{tpu_custom_call.1} parent=71 // pred_check_branch
          %563 = sbr.rel (%p561) target = $region92
        $region91: #{tpu_custom_call.1} parent=71 // pred_region
          %564 = dma.done [#allocation13], 16
        $region92: #{tpu_custom_call.1} parent=71 // pred_fallthru
          _
        // Predicated region
        $region93: #{tpu_custom_call.1} parent=71 // pred_check
          %p565 = pneg %p174
        $region94: #{tpu_custom_call.1} parent=71 // pred_check_branch
          %567 = sbr.rel (%p565) target = $region96
        $region95: #{tpu_custom_call.1} parent=71 // pred_region
          %568 = dma.done [#allocation16], 512
        $region96: #{tpu_custom_call.1} parent=71 // pred_fallthru
          _
        // Predicated region
        $region97: #{tpu_custom_call.1} parent=71 // pred_check
          %p569 = pneg %p195
        $region98: #{tpu_custom_call.1} parent=71 // pred_check_branch
          %571 = sbr.rel (%p569) target = $region100
        $region99: #{tpu_custom_call.1} parent=71 // pred_region
          %572 = dma.done [#allocation16], 16
        $region100: #{tpu_custom_call.1} parent=71 // pred_fallthru
          _
        // Predicated region
        $region101: #{tpu_custom_call.1} parent=71 // pred_check
          %p573 = pneg %p216
        $region102: #{tpu_custom_call.1} parent=71 // pred_check_branch
          %575 = sbr.rel (%p573) target = $region104
        $region103: #{tpu_custom_call.1} parent=71 // pred_region
          %576 = dma.done [#allocation19], 512
        $region104: #{tpu_custom_call.1} parent=71 // pred_fallthru
          _
        // Predicated region
        $region105: #{tpu_custom_call.1} parent=71 // pred_check
          %p577 = pneg %p237
        $region106: #{tpu_custom_call.1} parent=71 // pred_check_branch
          %579 = sbr.rel (%p577) target = $region108
        $region107: #{tpu_custom_call.1} parent=71 // pred_region
          %580 = dma.done [#allocation19], 16
        $region108: #{tpu_custom_call.1} parent=71 // pred_fallthru
          _
        // Predicated region
        $region109: #{tpu_custom_call.1} parent=71 // pred_check
          %p581 = pneg %p258
        $region110: #{tpu_custom_call.1} parent=71 // pred_check_branch
          %583 = sbr.rel (%p581) target = $region112
        $region111: #{tpu_custom_call.1} parent=71 // pred_region
          %584 = dma.done [#allocation22], 512
        $region112: #{tpu_custom_call.1} parent=71 // pred_fallthru
          _
        // Predicated region
        $region113: #{tpu_custom_call.1} parent=71 // pred_check
          %p585 = pneg %p279
        $region114: #{tpu_custom_call.1} parent=71 // pred_check_branch
          %587 = sbr.rel (%p585) target = $region116
        $region115: #{tpu_custom_call.1} parent=71 // pred_region
          %588 = dma.done [#allocation22], 16
        $region116: #{tpu_custom_call.1} parent=71 // pred_fallthru
          _
        // Predicated region
        $region117: #{tpu_custom_call.1} parent=71 // pred_check
          %p589 = pneg %p300
        $region118: #{tpu_custom_call.1} parent=71 // pred_check_branch
          %591 = sbr.rel (%p589) target = $region120
        $region119: #{tpu_custom_call.1} parent=71 // pred_region
          %592 = dma.done [#allocation25], 512
        $region120: #{tpu_custom_call.1} parent=71 // pred_fallthru
          _
        // Predicated region
        $region121: #{tpu_custom_call.1} parent=71 // pred_check
          %p593 = pneg %p321
        $region122: #{tpu_custom_call.1} parent=71 // pred_check_branch
          %595 = sbr.rel (%p593) target = $region124
        $region123: #{tpu_custom_call.1} parent=71 // pred_region
          %596 = dma.done [#allocation25], 16
        $region124: #{tpu_custom_call.1} parent=71 // pred_fallthru
          _
        %s597 = sand.u32 %s56, 1
        %s598 = scalar_lea.sflag [#allocation7], %s597
        %s599 = sand.u32 %s56, 1
        %s600 = smul.addr %s599, 128
        %s601 = scalar_lea.vmem [#allocation6], %s600
        %p602 = pneg %p69
        %p603 = pneg %p66
        %p604 = pneg %p90
        %p605 = pneg %p87
        %p606 = pneg %p111
        %p607 = pneg %p108
        %p608 = pneg %p132
        %p609 = pneg %p129
        %p610 = pneg %p153
        %p611 = pneg %p150
        %p612 = pneg %p174
        %p613 = pneg %p171
        %p614 = pneg %p195
        %p615 = pneg %p192
        %p616 = pneg %p216
        %p617 = pneg %p213
        %p618 = pneg %p237
        %p619 = pneg %p234
        %p620 = pneg %p258
        %p621 = pneg %p255
        %p622 = pneg %p279
        %p623 = pneg %p276
        %p624 = pneg %p300
        %p625 = pneg %p297
        %p626 = pneg %p321
        %p627 = pneg %p318
        %p628 = pneg %p349
        %p629 = pneg %p346
        %s630 = sand.u32 %s336, 1
        %s631 = scalar_lea.sflag [#allocation8], %s630
        %s632 = sand.u32 %s336, 1
        %s633 = smul.addr %s632, 256
        %s634 = scalar_lea.vmem [#allocation27], %s633
        %s635 = smul.u32 32, %s41
        %p637 = scmp.eq.s32.totalorder %s41, 0
        // Predicated region
        $region125: #{tpu_custom_call.1} parent=71 // pred_check
          %p638 = pneg %p637
        $region126: #{tpu_custom_call.1} parent=71 // pred_check_branch
          %640 = sbr.rel (%p638) target = $region128
        $region127: #{tpu_custom_call.1} parent=71 // pred_region
          %v641 = vld [vmem:[%s544] sm:$0xf]
          %v642 = vld [vmem:[%s544 + $0x4] sm:$0xf]
          %v643 = vld [vmem:[%s544 + $0x8] sm:$0xf]
          %v644 = vld [vmem:[%s544 + $0xc] sm:$0xf]
          %v645 = vld [vmem:[%s544 + $0x10] sm:$0xf]
          %v646 = vld [vmem:[%s544 + $0x14] sm:$0xf]
          %v647 = vld [vmem:[%s544 + $0x18] sm:$0xf]
          %v648 = vld [vmem:[%s544 + $0x1c] sm:$0xf]
          %v649 = vld [vmem:[%s544 + $0x20] sm:$0xf]
          %v650 = vld [vmem:[%s544 + $0x24] sm:$0xf]
          %v651 = vld [vmem:[%s544 + $0x28] sm:$0xf]
          %v652 = vld [vmem:[%s544 + $0x2c] sm:$0xf]
          %v653 = vld [vmem:[%s544 + $0x30] sm:$0xf]
          %v654 = vld [vmem:[%s544 + $0x34] sm:$0xf]
          %v655 = vld [vmem:[%s544 + $0x38] sm:$0xf]
          %v656 = vld [vmem:[%s544 + $0x3c] sm:$0xf]
          %v657 = vld [vmem:[%s544 + $0x40] sm:$0xf]
          %v658 = vld [vmem:[%s544 + $0x44] sm:$0xf]
          %v659 = vld [vmem:[%s544 + $0x48] sm:$0xf]
          %v660 = vld [vmem:[%s544 + $0x4c] sm:$0xf]
          %v661 = vld [vmem:[%s544 + $0x50] sm:$0xf]
          %v662 = vld [vmem:[%s544 + $0x54] sm:$0xf]
          %v663 = vld [vmem:[%s544 + $0x58] sm:$0xf]
          %v664 = vld [vmem:[%s544 + $0x5c] sm:$0xf]
          %v665 = vld [vmem:[%s544 + $0x60] sm:$0xf]
          %v666 = vld [vmem:[%s544 + $0x64] sm:$0xf]
          %v667 = vld [vmem:[%s544 + $0x68] sm:$0xf]
          %v668 = vld [vmem:[%s544 + $0x6c] sm:$0xf]
          %v669 = vld [vmem:[%s544 + $0x70] sm:$0xf]
          %v670 = vld [vmem:[%s544 + $0x74] sm:$0xf]
          %v671 = vld [vmem:[%s544 + $0x78] sm:$0xf]
          %v672 = vld [vmem:[%s544 + $0x7c] sm:$0xf]
          %v673 = vunpack.c.l.bf16 %v641
          %v674 = vunpack.c.l.bf16 %v642
          %v675 = vunpack.c.l.bf16 %v643
          %v676 = vunpack.c.l.bf16 %v644
          %v677 = vunpack.c.l.bf16 %v645
          %v678 = vunpack.c.l.bf16 %v646
          %v679 = vunpack.c.l.bf16 %v647
          %v680 = vunpack.c.l.bf16 %v648
          %v681 = vunpack.c.l.bf16 %v649
          %v682 = vunpack.c.l.bf16 %v650
          %v683 = vunpack.c.l.bf16 %v651
          %v684 = vunpack.c.l.bf16 %v652
          %v685 = vunpack.c.l.bf16 %v653
          %v686 = vunpack.c.l.bf16 %v654
          %v687 = vunpack.c.l.bf16 %v655
          %v688 = vunpack.c.l.bf16 %v656
          %v689 = vunpack.c.l.bf16 %v657
          %v690 = vunpack.c.l.bf16 %v658
          %v691 = vunpack.c.l.bf16 %v659
          %v692 = vunpack.c.l.bf16 %v660
          %v693 = vunpack.c.l.bf16 %v661
          %v694 = vunpack.c.l.bf16 %v662
          %v695 = vunpack.c.l.bf16 %v663
          %v696 = vunpack.c.l.bf16 %v664
          %v697 = vunpack.c.l.bf16 %v665
          %v698 = vunpack.c.l.bf16 %v666
          %v699 = vunpack.c.l.bf16 %v667
          %v700 = vunpack.c.l.bf16 %v668
          %v701 = vunpack.c.l.bf16 %v669
          %v702 = vunpack.c.l.bf16 %v670
          %v703 = vunpack.c.l.bf16 %v671
          %v704 = vunpack.c.l.bf16 %v672
          %vm705 = vcmask 523264
          %v706 = vsel %vm705, %v673, 0.0
          %v707 = vsel %vm705, %v674, 0.0
          %v708 = vadd.f32 %v706, %v707
          %v709 = vsel %vm705, %v675, 0.0
          %v710 = vadd.f32 %v708, %v709
          %v711 = vsel %vm705, %v676, 0.0
          %v712 = vadd.f32 %v710, %v711
          %v713 = vsel %vm705, %v677, 0.0
          %v714 = vadd.f32 %v712, %v713
          %v715 = vsel %vm705, %v678, 0.0
          %v716 = vadd.f32 %v714, %v715
          %v717 = vsel %vm705, %v679, 0.0
          %v718 = vadd.f32 %v716, %v717
          %v719 = vsel %vm705, %v680, 0.0
          %v720 = vadd.f32 %v718, %v719
          %v721 = vsel %vm705, %v681, 0.0
          %v722 = vadd.f32 %v720, %v721
          %v723 = vsel %vm705, %v682, 0.0
          %v724 = vadd.f32 %v722, %v723
          %v725 = vsel %vm705, %v683, 0.0
          %v726 = vadd.f32 %v724, %v725
          %v727 = vsel %vm705, %v684, 0.0
          %v728 = vadd.f32 %v726, %v727
          %v729 = vsel %vm705, %v685, 0.0
          %v730 = vadd.f32 %v728, %v729
          %v731 = vsel %vm705, %v686, 0.0
          %v732 = vadd.f32 %v730, %v731
          %v733 = vsel %vm705, %v687, 0.0
          %v734 = vadd.f32 %v732, %v733
          %v735 = vsel %vm705, %v688, 0.0
          %v736 = vadd.f32 %v734, %v735
          %v737 = vsel %vm705, %v689, 0.0
          %v738 = vadd.f32 %v736, %v737
          %v739 = vsel %vm705, %v690, 0.0
          %v740 = vadd.f32 %v738, %v739
          %v741 = vsel %vm705, %v691, 0.0
          %v742 = vadd.f32 %v740, %v741
          %v743 = vsel %vm705, %v692, 0.0
          %v744 = vadd.f32 %v742, %v743
          %v745 = vsel %vm705, %v693, 0.0
          %v746 = vadd.f32 %v744, %v745
          %v747 = vsel %vm705, %v694, 0.0
          %v748 = vadd.f32 %v746, %v747
          %v749 = vsel %vm705, %v695, 0.0
          %v750 = vadd.f32 %v748, %v749
          %v751 = vsel %vm705, %v696, 0.0
          %v752 = vadd.f32 %v750, %v751
          %v753 = vsel %vm705, %v697, 0.0
          %v754 = vadd.f32 %v752, %v753
          %v755 = vsel %vm705, %v698, 0.0
          %v756 = vadd.f32 %v754, %v755
          %v757 = vsel %vm705, %v699, 0.0
          %v758 = vadd.f32 %v756, %v757
          %v759 = vsel %vm705, %v700, 0.0
          %v760 = vadd.f32 %v758, %v759
          %v761 = vsel %vm705, %v701, 0.0
          %v762 = vadd.f32 %v760, %v761
          %v763 = vsel %vm705, %v702, 0.0
          %v764 = vadd.f32 %v762, %v763
          %v765 = vsel %vm705, %v703, 0.0
          %v766 = vadd.f32 %v764, %v765
          %v767 = vsel %vm705, %v704, 0.0
          %v768 = vadd.f32 %v766, %v767
          %v769 = vrot.slane %v768, 4
          %v770 = vadd.f32 %v768, %v769
          %v771 = vrot.slane %v770, 2
          %v772 = vadd.f32 %v770, %v771
          %v773 = vrot.slane %v772, 1
          %v774 = vadd.f32 %v772, %v773
          %v775 = vld [vmem:[#allocation9] sm:$0xff]
          %v776 = vld [vmem:[#allocation9 + $0x8] sm:$0xff]
          %v777 = vld [vmem:[#allocation9 + $0x10] sm:$0xff]
          %v778 = vld [vmem:[#allocation9 + $0x18] sm:$0xff]
          %v779 = vld [vmem:[#allocation9 + $0x20] sm:$0xff]
          %v780 = vld [vmem:[#allocation9 + $0x28] sm:$0xff]
          %v781 = vld [vmem:[#allocation9 + $0x30] sm:$0xff]
          %v782 = vld [vmem:[#allocation9 + $0x38] sm:$0xff]
          %v784 = vsel %vm705, %v774, 0
          %786 = vmatprep.subr.mxu0 0.0
          %787 = vmatpush1.msra.mxu0 %v775
          %788 = vmatprep.subr.mxu0 0.0
          %789 = vmatpush1.msra.mxu0 %v776
          %790 = vmatprep.subr.mxu0 0.0
          %791 = vmatpush1.msra.mxu0 %v777
          %792 = vmatprep.subr.mxu0 0.0
          %793 = vmatpush1.msra.mxu0 %v778
          %794 = vmatprep.subr.mxu0 0.0
          %795 = vmatpush1.msra.mxu0 %v779
          %796 = vmatprep.subr.mxu0 0.0
          %797 = vmatpush1.msra.mxu0 %v780
          %798 = vmatprep.subr.mxu0 0.0
          %799 = vmatpush1.msra.mxu0 %v781
          %800 = vmatprep.subr.mxu0 0.0
          %801 = vmatpush1.msra.mxu0 %v782
          %802 = vmatprep.subr.mxu0 0.0
          %803 = vmatpush1.msra.mxu0 0.0
          %804 = vmatprep.subr.mxu0 0.0
          %805 = vmatpush1.msra.mxu0 0.0
          %806 = vmatprep.subr.mxu0 0.0
          %807 = vmatpush1.msra.mxu0 0.0
          %808 = vmatprep.subr.mxu0 0.0
          %809 = vmatpush1.msra.mxu0 0.0
          %810 = vmatprep.subr.mxu0 0.0
          %811 = vmatpush1.msra.mxu0 0.0
          %812 = vmatprep.subr.mxu0 0.0
          %813 = vmatpush1.msra.mxu0 0.0
          %814 = vmatprep.subr.mxu0 0.0
          %815 = vmatpush1.msra.mxu0 0.0
          %816 = vmatprep.subr.mxu0 0.0
          %817 = vmatpush1.msra.mxu0 0.0
          %818 = vmatprep.subr.mxu0 0.0
          %819 = vmatpush1.msra.mxu0 0.0
          %820 = vmatprep.subr.mxu0 0.0
          %821 = vmatpush1.msra.mxu0 0.0
          %822 = vmatprep.subr.mxu0 0.0
          %823 = vmatpush1.msra.mxu0 0.0
          %824 = vmatprep.subr.mxu0 0.0
          %825 = vmatpush1.msra.mxu0 0.0
          %826 = vmatprep.subr.mxu0 0.0
          %827 = vmatpush1.msra.mxu0 0.0
          %828 = vmatprep.subr.mxu0 0.0
          %829 = vmatpush1.msra.mxu0 0.0
          %830 = vmatprep.subr.mxu0 0.0
          %831 = vmatpush1.msra.mxu0 0.0
          %832 = vmatprep.subr.mxu0 0.0
          %833 = vmatpush1.msra.mxu0 0.0
          %834 = vmatprep.subr.mxu0 0.0
          %835 = vmatpush1.msra.mxu0 0.0
          %836 = vmatprep.subr.mxu0 0.0
          %837 = vmatpush1.msra.mxu0 0.0
          %838 = vmatprep.subr.mxu0 0.0
          %839 = vmatpush1.msra.mxu0 0.0
          %840 = vmatprep.subr.mxu0 0.0
          %841 = vmatpush1.msra.mxu0 0.0
          %842 = vmatprep.subr.mxu0 0.0
          %843 = vmatpush1.msra.mxu0 0.0
          %844 = vmatprep.subr.mxu0 0.0
          %845 = vmatpush1.msra.mxu0 0.0
          %846 = vmatprep.subr.mxu0 0.0
          %847 = vmatpush1.msra.mxu0 0.0
          %848 = vmatprep.subr.mxu0 0.0
          %849 = vmatpush1.msra.mxu0 0.0
          %850 = vmatprep.mubr.f32.mxu0 0.0
          %851 = vmatmul.mubr.f32.gmra.mrb[0].mxu0 %v784
          %v852 = vpop.f32.mrb[0].mxu0
          %v853 = vadd.f32 0.0, %v852
          %v854 = vpop.f32.mrb[0].mxu0
          %855 = vdwg.mxu0
          %v856 = vrcp.pop 512.0
          %v857 = vmul.f32 %v853, %v856
          %v858 = vld [vmem:[#allocation11] sm:$0xff]
          %v859 = vld [vmem:[#allocation11 + $0x8] sm:$0xff]
          %v860 = vld [vmem:[#allocation11 + $0x10] sm:$0xff]
          %v861 = vld [vmem:[#allocation11 + $0x18] sm:$0xff]
          %vm862 = vcmask 261120
          %v864 = vsel %vm862, %v857, 0
          %866 = vmatprep.subr.mxu0 0.0
          %867 = vmatpush1.msra.mxu0 %v858
          %868 = vmatprep.subr.mxu0 0.0
          %869 = vmatpush1.msra.mxu0 %v859
          %870 = vmatprep.subr.mxu0 0.0
          %871 = vmatpush1.msra.mxu0 %v860
          %872 = vmatprep.subr.mxu0 0.0
          %873 = vmatpush1.msra.mxu0 %v861
          %874 = vmatprep.subr.mxu0 0.0
          %875 = vmatpush1.msra.mxu0 0.0
          %876 = vmatprep.subr.mxu0 0.0
          %877 = vmatpush1.msra.mxu0 0.0
          %878 = vmatprep.subr.mxu0 0.0
          %879 = vmatpush1.msra.mxu0 0.0
          %880 = vmatprep.subr.mxu0 0.0
          %881 = vmatpush1.msra.mxu0 0.0
          %882 = vmatprep.subr.mxu0 0.0
          %883 = vmatpush1.msra.mxu0 0.0
          %884 = vmatprep.subr.mxu0 0.0
          %885 = vmatpush1.msra.mxu0 0.0
          %886 = vmatprep.subr.mxu0 0.0
          %887 = vmatpush1.msra.mxu0 0.0
          %888 = vmatprep.subr.mxu0 0.0
          %889 = vmatpush1.msra.mxu0 0.0
          %890 = vmatprep.subr.mxu0 0.0
          %891 = vmatpush1.msra.mxu0 0.0
          %892 = vmatprep.subr.mxu0 0.0
          %893 = vmatpush1.msra.mxu0 0.0
          %894 = vmatprep.subr.mxu0 0.0
          %895 = vmatpush1.msra.mxu0 0.0
          %896 = vmatprep.subr.mxu0 0.0
          %897 = vmatpush1.msra.mxu0 0.0
          %898 = vmatprep.subr.mxu0 0.0
          %899 = vmatpush1.msra.mxu0 0.0
          %900 = vmatprep.subr.mxu0 0.0
          %901 = vmatpush1.msra.mxu0 0.0
          %902 = vmatprep.subr.mxu0 0.0
          %903 = vmatpush1.msra.mxu0 0.0
          %904 = vmatprep.subr.mxu0 0.0
          %905 = vmatpush1.msra.mxu0 0.0
          %906 = vmatprep.subr.mxu0 0.0
          %907 = vmatpush1.msra.mxu0 0.0
          %908 = vmatprep.subr.mxu0 0.0
          %909 = vmatpush1.msra.mxu0 0.0
          %910 = vmatprep.subr.mxu0 0.0
          %911 = vmatpush1.msra.mxu0 0.0
          %912 = vmatprep.subr.mxu0 0.0
          %913 = vmatpush1.msra.mxu0 0.0
          %914 = vmatprep.subr.mxu0 0.0
          %915 = vmatpush1.msra.mxu0 0.0
          %916 = vmatprep.subr.mxu0 0.0
          %917 = vmatpush1.msra.mxu0 0.0
          %918 = vmatprep.subr.mxu0 0.0
          %919 = vmatpush1.msra.mxu0 0.0
          %920 = vmatprep.subr.mxu0 0.0
          %921 = vmatpush1.msra.mxu0 0.0
          %922 = vmatprep.subr.mxu0 0.0
          %923 = vmatpush1.msra.mxu0 0.0
          %924 = vmatprep.subr.mxu0 0.0
          %925 = vmatpush1.msra.mxu0 0.0
          %926 = vmatprep.subr.mxu0 0.0
          %927 = vmatpush1.msra.mxu0 0.0
          %928 = vmatprep.subr.mxu0 0.0
          %929 = vmatpush1.msra.mxu0 0.0
          %930 = vmatprep.mubr.f32.mxu0 0.0
          %931 = vmatmul.mubr.f32.gmra.mrb[0].mxu0 %v864
          %v932 = vpop.f32.mrb[0].mxu0
          %v933 = vadd.f32 0.0, %v932
          %v934 = vpop.f32.mrb[0].mxu0
          %935 = vdwg.mxu0
          %v936 = vlaneseq
          %v937 = vshrl.u32 %v936, 7
          %v938 = vsub.s32 0, %v937
          %v939 = vrot.slane %v933, %v938
          %v940 = vsub.f32 %v673, %v939
          %v941 = vsub.f32 %v674, %v939
          %v942 = vsub.f32 %v675, %v939
          %v943 = vsub.f32 %v676, %v939
          %v944 = vsub.f32 %v677, %v939
          %v945 = vsub.f32 %v678, %v939
          %v946 = vsub.f32 %v679, %v939
          %v947 = vsub.f32 %v680, %v939
          %v948 = vsub.f32 %v681, %v939
          %v949 = vsub.f32 %v682, %v939
          %v950 = vsub.f32 %v683, %v939
          %v951 = vsub.f32 %v684, %v939
          %v952 = vsub.f32 %v685, %v939
          %v953 = vsub.f32 %v686, %v939
          %v954 = vsub.f32 %v687, %v939
          %v955 = vsub.f32 %v688, %v939
          %v956 = vsub.f32 %v689, %v939
          %v957 = vsub.f32 %v690, %v939
          %v958 = vsub.f32 %v691, %v939
          %v959 = vsub.f32 %v692, %v939
          %v960 = vsub.f32 %v693, %v939
          %v961 = vsub.f32 %v694, %v939
          %v962 = vsub.f32 %v695, %v939
          %v963 = vsub.f32 %v696, %v939
          %v964 = vsub.f32 %v697, %v939
          %v965 = vsub.f32 %v698, %v939
          %v966 = vsub.f32 %v699, %v939
          %v967 = vsub.f32 %v700, %v939
          %v968 = vsub.f32 %v701, %v939
          %v969 = vsub.f32 %v702, %v939
          %v970 = vsub.f32 %v703, %v939
          %v971 = vsub.f32 %v704, %v939
          %v972 = vmul.f32 %v940, %v940
          %v973 = vmul.f32 %v941, %v941
          %v974 = vmul.f32 %v942, %v942
          %v975 = vmul.f32 %v943, %v943
          %v976 = vmul.f32 %v944, %v944
          %v977 = vmul.f32 %v945, %v945
          %v978 = vmul.f32 %v946, %v946
          %v979 = vmul.f32 %v947, %v947
          %v980 = vmul.f32 %v948, %v948
          %v981 = vmul.f32 %v949, %v949
          %v982 = vmul.f32 %v950, %v950
          %v983 = vmul.f32 %v951, %v951
          %v984 = vmul.f32 %v952, %v952
          %v985 = vmul.f32 %v953, %v953
          %v986 = vmul.f32 %v954, %v954
          %v987 = vmul.f32 %v955, %v955
          %v988 = vmul.f32 %v956, %v956
          %v989 = vmul.f32 %v957, %v957
          %v990 = vmul.f32 %v958, %v958
          %v991 = vmul.f32 %v959, %v959
          %v992 = vmul.f32 %v960, %v960
          %v993 = vmul.f32 %v961, %v961
          %v994 = vmul.f32 %v962, %v962
          %v995 = vmul.f32 %v963, %v963
          %v996 = vmul.f32 %v964, %v964
          %v997 = vmul.f32 %v965, %v965
          %v998 = vmul.f32 %v966, %v966
          %v999 = vmul.f32 %v967, %v967
          %v1000 = vmul.f32 %v968, %v968
          %v1001 = vmul.f32 %v969, %v969
          %v1002 = vmul.f32 %v970, %v970
          %v1003 = vmul.f32 %v971, %v971
          %v1004 = vsel %vm705, %v972, 0.0
          %v1005 = vsel %vm705, %v973, 0.0
          %v1006 = vadd.f32 %v1004, %v1005
          %v1007 = vsel %vm705, %v974, 0.0
          %v1008 = vadd.f32 %v1006, %v1007
          %v1009 = vsel %vm705, %v975, 0.0
          %v1010 = vadd.f32 %v1008, %v1009
          %v1011 = vsel %vm705, %v976, 0.0
          %v1012 = vadd.f32 %v1010, %v1011
          %v1013 = vsel %vm705, %v977, 0.0
          %v1014 = vadd.f32 %v1012, %v1013
          %v1015 = vsel %vm705, %v978, 0.0
          %v1016 = vadd.f32 %v1014, %v1015
          %v1017 = vsel %vm705, %v979, 0.0
          %v1018 = vadd.f32 %v1016, %v1017
          %v1019 = vsel %vm705, %v980, 0.0
          %v1020 = vadd.f32 %v1018, %v1019
          %v1021 = vsel %vm705, %v981, 0.0
          %v1022 = vadd.f32 %v1020, %v1021
          %v1023 = vsel %vm705, %v982, 0.0
          %v1024 = vadd.f32 %v1022, %v1023
          %v1025 = vsel %vm705, %v983, 0.0
          %v1026 = vadd.f32 %v1024, %v1025
          %v1027 = vsel %vm705, %v984, 0.0
          %v1028 = vadd.f32 %v1026, %v1027
          %v1029 = vsel %vm705, %v985, 0.0
          %v1030 = vadd.f32 %v1028, %v1029
          %v1031 = vsel %vm705, %v986, 0.0
          %v1032 = vadd.f32 %v1030, %v1031
          %v1033 = vsel %vm705, %v987, 0.0
          %v1034 = vadd.f32 %v1032, %v1033
          %v1035 = vsel %vm705, %v988, 0.0
          %v1036 = vadd.f32 %v1034, %v1035
          %v1037 = vsel %vm705, %v989, 0.0
          %v1038 = vadd.f32 %v1036, %v1037
          %v1039 = vsel %vm705, %v990, 0.0
          %v1040 = vadd.f32 %v1038, %v1039
          %v1041 = vsel %vm705, %v991, 0.0
          %v1042 = vadd.f32 %v1040, %v1041
          %v1043 = vsel %vm705, %v992, 0.0
          %v1044 = vadd.f32 %v1042, %v1043
          %v1045 = vsel %vm705, %v993, 0.0
          %v1046 = vadd.f32 %v1044, %v1045
          %v1047 = vsel %vm705, %v994, 0.0
          %v1048 = vadd.f32 %v1046, %v1047
          %v1049 = vsel %vm705, %v995, 0.0
          %v1050 = vadd.f32 %v1048, %v1049
          %v1051 = vsel %vm705, %v996, 0.0
          %v1052 = vadd.f32 %v1050, %v1051
          %v1053 = vsel %vm705, %v997, 0.0
          %v1054 = vadd.f32 %v1052, %v1053
          %v1055 = vsel %vm705, %v998, 0.0
          %v1056 = vadd.f32 %v1054, %v1055
          %v1057 = vsel %vm705, %v999, 0.0
          %v1058 = vadd.f32 %v1056, %v1057
          %v1059 = vsel %vm705, %v1000, 0.0
          %v1060 = vadd.f32 %v1058, %v1059
          %v1061 = vsel %vm705, %v1001, 0.0
          %v1062 = vadd.f32 %v1060, %v1061
          %v1063 = vsel %vm705, %v1002, 0.0
          %v1064 = vadd.f32 %v1062, %v1063
          %v1065 = vsel %vm705, %v1003, 0.0
          %v1066 = vadd.f32 %v1064, %v1065
          %v1067 = vrot.slane %v1066, 4
          %v1068 = vadd.f32 %v1066, %v1067
          %v1069 = vrot.slane %v1068, 2
          %v1070 = vadd.f32 %v1068, %v1069
          %v1071 = vrot.slane %v1070, 1
          %v1072 = vadd.f32 %v1070, %v1071
          %v1074 = vsel %vm705, %v1072, 0
          %1076 = vmatprep.subr.mxu0 0.0
          %1077 = vmatpush1.msra.mxu0 %v775
          %1078 = vmatprep.subr.mxu0 0.0
          %1079 = vmatpush1.msra.mxu0 %v776
          %1080 = vmatprep.subr.mxu0 0.0
          %1081 = vmatpush1.msra.mxu0 %v777
          %1082 = vmatprep.subr.mxu0 0.0
          %1083 = vmatpush1.msra.mxu0 %v778
          %1084 = vmatprep.subr.mxu0 0.0
          %1085 = vmatpush1.msra.mxu0 %v779
          %1086 = vmatprep.subr.mxu0 0.0
          %1087 = vmatpush1.msra.mxu0 %v780
          %1088 = vmatprep.subr.mxu0 0.0
          %1089 = vmatpush1.msra.mxu0 %v781
          %1090 = vmatprep.subr.mxu0 0.0
          %1091 = vmatpush1.msra.mxu0 %v782
          %1092 = vmatprep.subr.mxu0 0.0
          %1093 = vmatpush1.msra.mxu0 0.0
          %1094 = vmatprep.subr.mxu0 0.0
          %1095 = vmatpush1.msra.mxu0 0.0
          %1096 = vmatprep.subr.mxu0 0.0
          %1097 = vmatpush1.msra.mxu0 0.0
          %1098 = vmatprep.subr.mxu0 0.0
          %1099 = vmatpush1.msra.mxu0 0.0
          %1100 = vmatprep.subr.mxu0 0.0
          %1101 = vmatpush1.msra.mxu0 0.0
          %1102 = vmatprep.subr.mxu0 0.0
          %1103 = vmatpush1.msra.mxu0 0.0
          %1104 = vmatprep.subr.mxu0 0.0
          %1105 = vmatpush1.msra.mxu0 0.0
          %1106 = vmatprep.subr.mxu0 0.0
          %1107 = vmatpush1.msra.mxu0 0.0
          %1108 = vmatprep.subr.mxu0 0.0
          %1109 = vmatpush1.msra.mxu0 0.0
          %1110 = vmatprep.subr.mxu0 0.0
          %1111 = vmatpush1.msra.mxu0 0.0
          %1112 = vmatprep.subr.mxu0 0.0
          %1113 = vmatpush1.msra.mxu0 0.0
          %1114 = vmatprep.subr.mxu0 0.0
          %1115 = vmatpush1.msra.mxu0 0.0
          %1116 = vmatprep.subr.mxu0 0.0
          %1117 = vmatpush1.msra.mxu0 0.0
          %1118 = vmatprep.subr.mxu0 0.0
          %1119 = vmatpush1.msra.mxu0 0.0
          %1120 = vmatprep.subr.mxu0 0.0
          %1121 = vmatpush1.msra.mxu0 0.0
          %1122 = vmatprep.subr.mxu0 0.0
          %1123 = vmatpush1.msra.mxu0 0.0
          %1124 = vmatprep.subr.mxu0 0.0
          %1125 = vmatpush1.msra.mxu0 0.0
          %1126 = vmatprep.subr.mxu0 0.0
          %1127 = vmatpush1.msra.mxu0 0.0
          %1128 = vmatprep.subr.mxu0 0.0
          %1129 = vmatpush1.msra.mxu0 0.0
          %1130 = vmatprep.subr.mxu0 0.0
          %1131 = vmatpush1.msra.mxu0 0.0
          %1132 = vmatprep.subr.mxu0 0.0
          %1133 = vmatpush1.msra.mxu0 0.0
          %1134 = vmatprep.subr.mxu0 0.0
          %1135 = vmatpush1.msra.mxu0 0.0
          %1136 = vmatprep.subr.mxu0 0.0
          %1137 = vmatpush1.msra.mxu0 0.0
          %1138 = vmatprep.subr.mxu0 0.0
          %1139 = vmatpush1.msra.mxu0 0.0
          %1140 = vmatprep.mubr.f32.mxu0 0.0
          %1141 = vmatmul.mubr.f32.gmra.mrb[0].mxu0 %v1074
          %v1142 = vpop.f32.mrb[0].mxu0
          %v1143 = vadd.f32 0.0, %v1142
          %v1144 = vpop.f32.mrb[0].mxu0
          %1145 = vdwg.mxu0
          %v1146 = vmul.f32 %v1143, %v856
          %v1147 = vadd.f32 %v1146, 1e-06
          %v1148 = vrsqrt.pop %v1147
          %v1150 = vsel %vm862, %v1148, 0
          %1152 = vmatprep.subr.mxu0 0.0
          %1153 = vmatpush1.msra.mxu0 %v858
          %1154 = vmatprep.subr.mxu0 0.0
          %1155 = vmatpush1.msra.mxu0 %v859
          %1156 = vmatprep.subr.mxu0 0.0
          %1157 = vmatpush1.msra.mxu0 %v860
          %1158 = vmatprep.subr.mxu0 0.0
          %1159 = vmatpush1.msra.mxu0 %v861
          %1160 = vmatprep.subr.mxu0 0.0
          %1161 = vmatpush1.msra.mxu0 0.0
          %1162 = vmatprep.subr.mxu0 0.0
          %1163 = vmatpush1.msra.mxu0 0.0
          %1164 = vmatprep.subr.mxu0 0.0
          %1165 = vmatpush1.msra.mxu0 0.0
          %1166 = vmatprep.subr.mxu0 0.0
          %1167 = vmatpush1.msra.mxu0 0.0
          %1168 = vmatprep.subr.mxu0 0.0
          %1169 = vmatpush1.msra.mxu0 0.0
          %1170 = vmatprep.subr.mxu0 0.0
          %1171 = vmatpush1.msra.mxu0 0.0
          %1172 = vmatprep.subr.mxu0 0.0
          %1173 = vmatpush1.msra.mxu0 0.0
          %1174 = vmatprep.subr.mxu0 0.0
          %1175 = vmatpush1.msra.mxu0 0.0
          %1176 = vmatprep.subr.mxu0 0.0
          %1177 = vmatpush1.msra.mxu0 0.0
          %1178 = vmatprep.subr.mxu0 0.0
          %1179 = vmatpush1.msra.mxu0 0.0
          %1180 = vmatprep.subr.mxu0 0.0
          %1181 = vmatpush1.msra.mxu0 0.0
          %1182 = vmatprep.subr.mxu0 0.0
          %1183 = vmatpush1.msra.mxu0 0.0
          %1184 = vmatprep.subr.mxu0 0.0
          %1185 = vmatpush1.msra.mxu0 0.0
          %1186 = vmatprep.subr.mxu0 0.0
          %1187 = vmatpush1.msra.mxu0 0.0
          %1188 = vmatprep.subr.mxu0 0.0
          %1189 = vmatpush1.msra.mxu0 0.0
          %1190 = vmatprep.subr.mxu0 0.0
          %1191 = vmatpush1.msra.mxu0 0.0
          %1192 = vmatprep.subr.mxu0 0.0
          %1193 = vmatpush1.msra.mxu0 0.0
          %1194 = vmatprep.subr.mxu0 0.0
          %1195 = vmatpush1.msra.mxu0 0.0
          %1196 = vmatprep.subr.mxu0 0.0
          %1197 = vmatpush1.msra.mxu0 0.0
          %1198 = vmatprep.subr.mxu0 0.0
          %1199 = vmatpush1.msra.mxu0 0.0
          %1200 = vmatprep.subr.mxu0 0.0
          %1201 = vmatpush1.msra.mxu0 0.0
          %1202 = vmatprep.subr.mxu0 0.0
          %1203 = vmatpush1.msra.mxu0 0.0
          %1204 = vmatprep.subr.mxu0 0.0
          %1205 = vmatpush1.msra.mxu0 0.0
          %1206 = vmatprep.subr.mxu0 0.0
          %1207 = vmatpush1.msra.mxu0 0.0
          %1208 = vmatprep.subr.mxu0 0.0
          %1209 = vmatpush1.msra.mxu0 0.0
          %1210 = vmatprep.subr.mxu0 0.0
          %1211 = vmatpush1.msra.mxu0 0.0
          %1212 = vmatprep.subr.mxu0 0.0
          %1213 = vmatpush1.msra.mxu0 0.0
          %1214 = vmatprep.subr.mxu0 0.0
          %1215 = vmatpush1.msra.mxu0 0.0
          %1216 = vmatprep.mubr.f32.mxu0 0.0
          %1217 = vmatmul.mubr.f32.gmra.mrb[0].mxu0 %v1150
          %v1218 = vpop.f32.mrb[0].mxu0
          %v1219 = vadd.f32 0.0, %v1218
          %v1220 = vpop.f32.mrb[0].mxu0
          %1221 = vdwg.mxu0
          %v1222 = vlaneseq
          %v1223 = vshrl.u32 %v1222, 7
          %v1224 = vsub.s32 0, %v1223
          %v1225 = vrot.slane %v1219, %v1224
          %v1226 = vmul.f32 %v940, %v1225
          %v1227 = vmul.f32 %v941, %v1225
          %v1228 = vmul.f32 %v942, %v1225
          %v1229 = vmul.f32 %v943, %v1225
          %v1230 = vmul.f32 %v944, %v1225
          %v1231 = vmul.f32 %v945, %v1225
          %v1232 = vmul.f32 %v946, %v1225
          %v1233 = vmul.f32 %v947, %v1225
          %v1234 = vmul.f32 %v948, %v1225
          %v1235 = vmul.f32 %v949, %v1225
          %v1236 = vmul.f32 %v950, %v1225
          %v1237 = vmul.f32 %v951, %v1225
          %v1238 = vmul.f32 %v952, %v1225
          %v1239 = vmul.f32 %v953, %v1225
          %v1240 = vmul.f32 %v954, %v1225
          %v1241 = vmul.f32 %v955, %v1225
          %v1242 = vmul.f32 %v956, %v1225
          %v1243 = vmul.f32 %v957, %v1225
          %v1244 = vmul.f32 %v958, %v1225
          %v1245 = vmul.f32 %v959, %v1225
          %v1246 = vmul.f32 %v960, %v1225
          %v1247 = vmul.f32 %v961, %v1225
          %v1248 = vmul.f32 %v962, %v1225
          %v1249 = vmul.f32 %v963, %v1225
          %v1250 = vmul.f32 %v964, %v1225
          %v1251 = vmul.f32 %v965, %v1225
          %v1252 = vmul.f32 %v966, %v1225
          %v1253 = vmul.f32 %v967, %v1225
          %v1254 = vmul.f32 %v968, %v1225
          %v1255 = vmul.f32 %v969, %v1225
          %v1256 = vmul.f32 %v970, %v1225
          %v1257 = vmul.f32 %v971, %v1225
          %v1258 = vld [vmem:[#allocation12] sm:$0x1]
          %v1260 = vlaneseq
          %v1261 = vshrl.u32 %v1260, 7
          %v1262 = vsub.s32 0, %v1261
          %v1263 = vrot.slane %v1258, %v1262
          %v1265 = vmul.f32 %v1226, %v1263
          %v1266 = vmul.f32 %v1227, %v1263
          %v1267 = vmul.f32 %v1228, %v1263
          %v1268 = vmul.f32 %v1229, %v1263
          %v1269 = vmul.f32 %v1230, %v1263
          %v1270 = vmul.f32 %v1231, %v1263
          %v1271 = vmul.f32 %v1232, %v1263
          %v1272 = vmul.f32 %v1233, %v1263
          %v1273 = vmul.f32 %v1234, %v1263
          %v1274 = vmul.f32 %v1235, %v1263
          %v1275 = vmul.f32 %v1236, %v1263
          %v1276 = vmul.f32 %v1237, %v1263
          %v1277 = vmul.f32 %v1238, %v1263
          %v1278 = vmul.f32 %v1239, %v1263
          %v1279 = vmul.f32 %v1240, %v1263
          %v1280 = vmul.f32 %v1241, %v1263
          %v1281 = vmul.f32 %v1242, %v1263
          %v1282 = vmul.f32 %v1243, %v1263
          %v1283 = vmul.f32 %v1244, %v1263
          %v1284 = vmul.f32 %v1245, %v1263
          %v1285 = vmul.f32 %v1246, %v1263
          %v1286 = vmul.f32 %v1247, %v1263
          %v1287 = vmul.f32 %v1248, %v1263
          %v1288 = vmul.f32 %v1249, %v1263
          %v1289 = vmul.f32 %v1250, %v1263
          %v1290 = vmul.f32 %v1251, %v1263
          %v1291 = vmul.f32 %v1252, %v1263
          %v1292 = vmul.f32 %v1253, %v1263
          %v1293 = vmul.f32 %v1254, %v1263
          %v1294 = vmul.f32 %v1255, %v1263
          %v1295 = vmul.f32 %v1256, %v1263
          %v1296 = vmul.f32 %v1257, %v1263
          %v1297 = vld [vmem:[#allocation14] sm:$0x1]
          %v1299 = vlaneseq
          %v1300 = vshrl.u32 %v1299, 7
          %v1301 = vsub.s32 0, %v1300
          %v1302 = vrot.slane %v1297, %v1301
          %v1304 = vadd.f32 %v1265, %v1302
          %v1305 = vadd.f32 %v1266, %v1302
          %v1306 = vadd.f32 %v1267, %v1302
          %v1307 = vadd.f32 %v1268, %v1302
          %v1308 = vadd.f32 %v1269, %v1302
          %v1309 = vadd.f32 %v1270, %v1302
          %v1310 = vadd.f32 %v1271, %v1302
          %v1311 = vadd.f32 %v1272, %v1302
          %v1312 = vadd.f32 %v1273, %v1302
          %v1313 = vadd.f32 %v1274, %v1302
          %v1314 = vadd.f32 %v1275, %v1302
          %v1315 = vadd.f32 %v1276, %v1302
          %v1316 = vadd.f32 %v1277, %v1302
          %v1317 = vadd.f32 %v1278, %v1302
          %v1318 = vadd.f32 %v1279, %v1302
          %v1319 = vadd.f32 %v1280, %v1302
          %v1320 = vadd.f32 %v1281, %v1302
          %v1321 = vadd.f32 %v1282, %v1302
          %v1322 = vadd.f32 %v1283, %v1302
          %v1323 = vadd.f32 %v1284, %v1302
          %v1324 = vadd.f32 %v1285, %v1302
          %v1325 = vadd.f32 %v1286, %v1302
          %v1326 = vadd.f32 %v1287, %v1302
          %v1327 = vadd.f32 %v1288, %v1302
          %v1328 = vadd.f32 %v1289, %v1302
          %v1329 = vadd.f32 %v1290, %v1302
          %v1330 = vadd.f32 %v1291, %v1302
          %v1331 = vadd.f32 %v1292, %v1302
          %v1332 = vadd.f32 %v1293, %v1302
          %v1333 = vadd.f32 %v1294, %v1302
          %v1334 = vadd.f32 %v1295, %v1302
          %v1335 = vadd.f32 %v1296, %v1302
          %v1336 = vpack.c.bf16 %v1305, %v1304
          %v1337 = vpack.c.bf16 %v1307, %v1306
          %v1338 = vpack.c.bf16 %v1309, %v1308
          %v1339 = vpack.c.bf16 %v1311, %v1310
          %v1340 = vpack.c.bf16 %v1313, %v1312
          %v1341 = vpack.c.bf16 %v1315, %v1314
          %v1342 = vpack.c.bf16 %v1317, %v1316
          %v1343 = vpack.c.bf16 %v1319, %v1318
          %v1344 = vpack.c.bf16 %v1321, %v1320
          %v1345 = vpack.c.bf16 %v1323, %v1322
          %v1346 = vpack.c.bf16 %v1325, %v1324
          %v1347 = vpack.c.bf16 %v1327, %v1326
          %v1348 = vpack.c.bf16 %v1329, %v1328
          %v1349 = vpack.c.bf16 %v1331, %v1330
          %v1350 = vpack.c.bf16 %v1333, %v1332
          %v1351 = vpack.c.bf16 %v1335, %v1334
          %v1352 = vld [vmem:[#allocation15] sm:$0xf]
          %v1353 = vld [vmem:[#allocation15 + $0x4] sm:$0xf]
          %v1354 = vld [vmem:[#allocation15 + $0x8] sm:$0xf]
          %v1355 = vld [vmem:[#allocation15 + $0xc] sm:$0xf]
          %v1356 = vld [vmem:[#allocation15 + $0x10] sm:$0xf]
          %v1357 = vld [vmem:[#allocation15 + $0x14] sm:$0xf]
          %v1358 = vld [vmem:[#allocation15 + $0x18] sm:$0xf]
          %v1359 = vld [vmem:[#allocation15 + $0x1c] sm:$0xf]
          %v1360 = vld [vmem:[#allocation17] sm:$0x1]
          %v1362 = vlaneseq
          %v1363 = vshrl.u32 %v1362, 7
          %v1364 = vsub.s32 0, %v1363
          %v1365 = vrot.slane %v1360, %v1364
          %v1375 = vunpack.c.l.b16 %v1352
          %v1376 = vunpack.c.l.b16 %v1353
          %v1377 = vunpack.c.l.b16 %v1354
          %v1378 = vunpack.c.l.b16 %v1355
          %v1379 = vunpack.c.l.b16 %v1356
          %v1380 = vunpack.c.l.b16 %v1357
          %v1381 = vunpack.c.l.b16 %v1358
          %v1382 = vunpack.c.l.b16 %v1359
          %v1383 = vpack.c.b16 %v1376, %v1375
          %v1384 = vpack.c.b16 %v1378, %v1377
          %v1385 = vpack.c.b16 %v1380, %v1379
          %v1386 = vpack.c.b16 %v1382, %v1381
          %v1392 = vsel %vm705, %v1336, 0
          %v1395 = vsel %vm705, %v1337, 0
          %v1398 = vsel %vm705, %v1338, 0
          %v1401 = vsel %vm705, %v1339, 0
          %v1404 = vsel %vm705, %v1340, 0
          %v1407 = vsel %vm705, %v1341, 0
          %v1410 = vsel %vm705, %v1342, 0
          %v1413 = vsel %vm705, %v1343, 0
          %v1416 = vsel %vm705, %v1344, 0
          %v1419 = vsel %vm705, %v1345, 0
          %v1422 = vsel %vm705, %v1346, 0
          %v1425 = vsel %vm705, %v1347, 0
          %v1428 = vsel %vm705, %v1348, 0
          %v1431 = vsel %vm705, %v1349, 0
          %v1434 = vsel %vm705, %v1350, 0
          %v1437 = vsel %vm705, %v1351, 0
          %1439 = vmatprep.subr.bf16.mxu0 0
          %1440 = vmatpush1.bf16.msra.mxu0 %v1383
          %1441 = vmatprep.subr.bf16.mxu0 0
          %1442 = vmatpush1.bf16.msra.mxu0 %v1384
          %1443 = vmatprep.subr.bf16.mxu0 0
          %1444 = vmatpush1.bf16.msra.mxu0 %v1385
          %1445 = vmatprep.subr.bf16.mxu0 0
          %1446 = vmatpush1.bf16.msra.mxu0 %v1386
          %1447 = vmatprep.subr.bf16.mxu0 0
          %1448 = vmatpush1.bf16.msra.mxu0 0
          %1449 = vmatprep.subr.bf16.mxu0 0
          %1450 = vmatpush1.bf16.msra.mxu0 0
          %1451 = vmatprep.subr.bf16.mxu0 0
          %1452 = vmatpush1.bf16.msra.mxu0 0
          %1453 = vmatprep.subr.bf16.mxu0 0
          %1454 = vmatpush1.bf16.msra.mxu0 0
          %1455 = vmatprep.subr.bf16.mxu0 0
          %1456 = vmatpush1.bf16.msra.mxu0 0
          %1457 = vmatprep.subr.bf16.mxu0 0
          %1458 = vmatpush1.bf16.msra.mxu0 0
          %1459 = vmatprep.subr.bf16.mxu0 0
          %1460 = vmatpush1.bf16.msra.mxu0 0
          %1461 = vmatprep.subr.bf16.mxu0 0
          %1462 = vmatpush1.bf16.msra.mxu0 0
          %1463 = vmatprep.subr.bf16.mxu0 0
          %1464 = vmatpush1.bf16.msra.mxu0 0
          %1465 = vmatprep.subr.bf16.mxu0 0
          %1466 = vmatpush1.bf16.msra.mxu0 0
          %1467 = vmatprep.subr.bf16.mxu0 0
          %1468 = vmatpush1.bf16.msra.mxu0 0
          %1469 = vmatprep.subr.bf16.mxu0 0
          %1470 = vmatpush1.bf16.msra.mxu0 0
          %1471 = vmatprep.mubr.bf16.mxu0 0
          %1472 = vmatmul.mubr.bf16.gmra.mrb[0].mxu0 %v1392
          %v1473 = vpop.f32.mrb[0].mxu0
          %v1474 = vadd.f32 %v1365, %v1473
          %v1475 = vpop.f32.mrb[0].mxu0
          %v1476 = vpop.f32.mrb[0].mxu0
          %v1477 = vadd.f32 %v1365, %v1476
          %v1478 = vpop.f32.mrb[0].mxu0
          %1479 = vmatprep.mubr.bf16.mxu0 0
          %1480 = vmatmul.mubr.bf16.gmra.mrb[0].mxu0 %v1395
          %v1481 = vpop.f32.mrb[0].mxu0
          %v1482 = vadd.f32 %v1365, %v1481
          %v1483 = vpop.f32.mrb[0].mxu0
          %v1484 = vpop.f32.mrb[0].mxu0
          %v1485 = vadd.f32 %v1365, %v1484
          %v1486 = vpop.f32.mrb[0].mxu0
          %1487 = vmatprep.mubr.bf16.mxu0 0
          %1488 = vmatmul.mubr.bf16.gmra.mrb[0].mxu0 %v1398
          %v1489 = vpop.f32.mrb[0].mxu0
          %v1490 = vadd.f32 %v1365, %v1489
          %v1491 = vpop.f32.mrb[0].mxu0
          %v1492 = vpop.f32.mrb[0].mxu0
          %v1493 = vadd.f32 %v1365, %v1492
          %v1494 = vpop.f32.mrb[0].mxu0
          %1495 = vmatprep.mubr.bf16.mxu0 0
          %1496 = vmatmul.mubr.bf16.gmra.mrb[0].mxu0 %v1401
          %v1497 = vpop.f32.mrb[0].mxu0
          %v1498 = vadd.f32 %v1365, %v1497
          %v1499 = vpop.f32.mrb[0].mxu0
          %v1500 = vpop.f32.mrb[0].mxu0
          %v1501 = vadd.f32 %v1365, %v1500
          %v1502 = vpop.f32.mrb[0].mxu0
          %1503 = vmatprep.mubr.bf16.mxu0 0
          %1504 = vmatmul.mubr.bf16.gmra.mrb[0].mxu0 %v1404
          %v1505 = vpop.f32.mrb[0].mxu0
          %v1506 = vadd.f32 %v1365, %v1505
          %v1507 = vpop.f32.mrb[0].mxu0
          %v1508 = vpop.f32.mrb[0].mxu0
          %v1509 = vadd.f32 %v1365, %v1508
          %v1510 = vpop.f32.mrb[0].mxu0
          %1511 = vmatprep.mubr.bf16.mxu0 0
          %1512 = vmatmul.mubr.bf16.gmra.mrb[0].mxu0 %v1407
          %v1513 = vpop.f32.mrb[0].mxu0
          %v1514 = vadd.f32 %v1365, %v1513
          %v1515 = vpop.f32.mrb[0].mxu0
          %v1516 = vpop.f32.mrb[0].mxu0
          %v1517 = vadd.f32 %v1365, %v1516
          %v1518 = vpop.f32.mrb[0].mxu0
          %1519 = vmatprep.mubr.bf16.mxu0 0
          %1520 = vmatmul.mubr.bf16.gmra.mrb[0].mxu0 %v1410
          %v1521 = vpop.f32.mrb[0].mxu0
          %v1522 = vadd.f32 %v1365, %v1521
          %v1523 = vpop.f32.mrb[0].mxu0
          %v1524 = vpop.f32.mrb[0].mxu0
          %v1525 = vadd.f32 %v1365, %v1524
          %v1526 = vpop.f32.mrb[0].mxu0
          %1527 = vmatprep.mubr.bf16.mxu0 0
          %1528 = vmatmul.mubr.bf16.gmra.mrb[0].mxu0 %v1413
          %v1529 = vpop.f32.mrb[0].mxu0
          %v1530 = vadd.f32 %v1365, %v1529
          %v1531 = vpop.f32.mrb[0].mxu0
          %v1532 = vpop.f32.mrb[0].mxu0
          %v1533 = vadd.f32 %v1365, %v1532
          %v1534 = vpop.f32.mrb[0].mxu0
          %1535 = vmatprep.mubr.bf16.mxu0 0
          %1536 = vmatmul.mubr.bf16.gmra.mrb[0].mxu0 %v1416
          %v1537 = vpop.f32.mrb[0].mxu0
          %v1538 = vadd.f32 %v1365, %v1537
          %v1539 = vpop.f32.mrb[0].mxu0
          %v1540 = vpop.f32.mrb[0].mxu0
          %v1541 = vadd.f32 %v1365, %v1540
          %v1542 = vpop.f32.mrb[0].mxu0
          %1543 = vmatprep.mubr.bf16.mxu0 0
          %1544 = vmatmul.mubr.bf16.gmra.mrb[0].mxu0 %v1419
          %v1545 = vpop.f32.mrb[0].mxu0
          %v1546 = vadd.f32 %v1365, %v1545
          %v1547 = vpop.f32.mrb[0].mxu0
          %v1548 = vpop.f32.mrb[0].mxu0
          %v1549 = vadd.f32 %v1365, %v1548
          %v1550 = vpop.f32.mrb[0].mxu0
          %1551 = vmatprep.mubr.bf16.mxu0 0
          %1552 = vmatmul.mubr.bf16.gmra.mrb[0].mxu0 %v1422
          %v1553 = vpop.f32.mrb[0].mxu0
          %v1554 = vadd.f32 %v1365, %v1553
          %v1555 = vpop.f32.mrb[0].mxu0
          %v1556 = vpop.f32.mrb[0].mxu0
          %v1557 = vadd.f32 %v1365, %v1556
          %v1558 = vpop.f32.mrb[0].mxu0
          %1559 = vmatprep.mubr.bf16.mxu0 0
          %1560 = vmatmul.mubr.bf16.gmra.mrb[0].mxu0 %v1425
          %v1561 = vpop.f32.mrb[0].mxu0
          %v1562 = vadd.f32 %v1365, %v1561
          %v1563 = vpop.f32.mrb[0].mxu0
          %v1564 = vpop.f32.mrb[0].mxu0
          %v1565 = vadd.f32 %v1365, %v1564
          %v1566 = vpop.f32.mrb[0].mxu0
          %1567 = vmatprep.mubr.bf16.mxu0 0
          %1568 = vmatmul.mubr.bf16.gmra.mrb[0].mxu0 %v1428
          %v1569 = vpop.f32.mrb[0].mxu0
          %v1570 = vadd.f32 %v1365, %v1569
          %v1571 = vpop.f32.mrb[0].mxu0
          %v1572 = vpop.f32.mrb[0].mxu0
          %v1573 = vadd.f32 %v1365, %v1572
          %v1574 = vpop.f32.mrb[0].mxu0
          %1575 = vmatprep.mubr.bf16.mxu0 0
          %1576 = vmatmul.mubr.bf16.gmra.mrb[0].mxu0 %v1431
          %v1577 = vpop.f32.mrb[0].mxu0
          %v1578 = vadd.f32 %v1365, %v1577
          %v1579 = vpop.f32.mrb[0].mxu0
          %v1580 = vpop.f32.mrb[0].mxu0
          %v1581 = vadd.f32 %v1365, %v1580
          %v1582 = vpop.f32.mrb[0].mxu0
          %1583 = vmatprep.mubr.bf16.mxu0 0
          %1584 = vmatmul.mubr.bf16.gmra.mrb[0].mxu0 %v1434
          %v1585 = vpop.f32.mrb[0].mxu0
          %v1586 = vadd.f32 %v1365, %v1585
          %v1587 = vpop.f32.mrb[0].mxu0
          %v1588 = vpop.f32.mrb[0].mxu0
          %v1589 = vadd.f32 %v1365, %v1588
          %v1590 = vpop.f32.mrb[0].mxu0
          %1591 = vmatprep.mubr.bf16.mxu0 0
          %1592 = vmatmul.mubr.bf16.gmra.mrb[0].mxu0 %v1437
          %v1593 = vpop.f32.mrb[0].mxu0
          %v1594 = vadd.f32 %v1365, %v1593
          %v1595 = vpop.f32.mrb[0].mxu0
          %v1596 = vpop.f32.mrb[0].mxu0
          %v1597 = vadd.f32 %v1365, %v1596
          %v1598 = vpop.f32.mrb[0].mxu0
          %1599 = vdwg.mxu0
          %v1600 = vpack.c.bf16 %v1477, %v1474
          %v1601 = vpack.c.bf16 %v1485, %v1482
          %v1602 = vpack.c.bf16 %v1493, %v1490
          %v1603 = vpack.c.bf16 %v1501, %v1498
          %v1604 = vpack.c.bf16 %v1509, %v1506
          %v1605 = vpack.c.bf16 %v1517, %v1514
          %v1606 = vpack.c.bf16 %v1525, %v1522
          %v1607 = vpack.c.bf16 %v1533, %v1530
          %v1608 = vpack.c.bf16 %v1541, %v1538
          %v1609 = vpack.c.bf16 %v1549, %v1546
          %v1610 = vpack.c.bf16 %v1557, %v1554
          %v1611 = vpack.c.bf16 %v1565, %v1562
          %v1612 = vpack.c.bf16 %v1573, %v1570
          %v1613 = vpack.c.bf16 %v1581, %v1578
          %v1614 = vpack.c.bf16 %v1589, %v1586
          %v1615 = vpack.c.bf16 %v1597, %v1594
          %1616 = vst.msk [vmem:[#allocation2] sm:$0xff] %vm705, %v1600
          %1617 = vst.msk [vmem:[#allocation2 + $0x8] sm:$0xff] %vm705, %v1601
          %1618 = vst.msk [vmem:[#allocation2 + $0x10] sm:$0xff] %vm705, %v1602
          %1619 = vst.msk [vmem:[#allocation2 + $0x18] sm:$0xff] %vm705, %v1603
          %1620 = vst.msk [vmem:[#allocation2 + $0x20] sm:$0xff] %vm705, %v1604
          %1621 = vst.msk [vmem:[#allocation2 + $0x28] sm:$0xff] %vm705, %v1605
          %1622 = vst.msk [vmem:[#allocation2 + $0x30] sm:$0xff] %vm705, %v1606
          %1623 = vst.msk [vmem:[#allocation2 + $0x38] sm:$0xff] %vm705, %v1607
          %1624 = vst.msk [vmem:[#allocation2 + $0x40] sm:$0xff] %vm705, %v1608
          %1625 = vst.msk [vmem:[#allocation2 + $0x48] sm:$0xff] %vm705, %v1609
          %1626 = vst.msk [vmem:[#allocation2 + $0x50] sm:$0xff] %vm705, %v1610
          %1627 = vst.msk [vmem:[#allocation2 + $0x58] sm:$0xff] %vm705, %v1611
          %1628 = vst.msk [vmem:[#allocation2 + $0x60] sm:$0xff] %vm705, %v1612
          %1629 = vst.msk [vmem:[#allocation2 + $0x68] sm:$0xff] %vm705, %v1613
          %1630 = vst.msk [vmem:[#allocation2 + $0x70] sm:$0xff] %vm705, %v1614
          %1631 = vst.msk [vmem:[#allocation2 + $0x78] sm:$0xff] %vm705, %v1615
          %v1632 = vld [vmem:[#allocation18] sm:$0xf]
          %v1633 = vld [vmem:[#allocation18 + $0x4] sm:$0xf]
          %v1634 = vld [vmem:[#allocation18 + $0x8] sm:$0xf]
          %v1635 = vld [vmem:[#allocation18 + $0xc] sm:$0xf]
          %v1636 = vld [vmem:[#allocation18 + $0x10] sm:$0xf]
          %v1637 = vld [vmem:[#allocation18 + $0x14] sm:$0xf]
          %v1638 = vld [vmem:[#allocation18 + $0x18] sm:$0xf]
          %v1639 = vld [vmem:[#allocation18 + $0x1c] sm:$0xf]
          %v1640 = vld [vmem:[#allocation20] sm:$0x1]
          %v1642 = vlaneseq
          %v1643 = vshrl.u32 %v1642, 7
          %v1644 = vsub.s32 0, %v1643
          %v1645 = vrot.slane %v1640, %v1644
          %v1655 = vunpack.c.l.b16 %v1632
          %v1656 = vunpack.c.l.b16 %v1633
          %v1657 = vunpack.c.l.b16 %v1634
          %v1658 = vunpack.c.l.b16 %v1635
          %v1659 = vunpack.c.l.b16 %v1636
          %v1660 = vunpack.c.l.b16 %v1637
          %v1661 = vunpack.c.l.b16 %v1638
          %v1662 = vunpack.c.l.b16 %v1639
          %v1663 = vpack.c.b16 %v1656, %v1655
          %v1664 = vpack.c.b16 %v1658, %v1657
          %v1665 = vpack.c.b16 %v1660, %v1659
          %v1666 = vpack.c.b16 %v1662, %v1661
          %1671 = vmatprep.subr.bf16.mxu0 0
          %1672 = vmatpush1.bf16.msra.mxu0 %v1663
          %1673 = vmatprep.subr.bf16.mxu0 0
          %1674 = vmatpush1.bf16.msra.mxu0 %v1664
          %1675 = vmatprep.subr.bf16.mxu0 0
          %1676 = vmatpush1.bf16.msra.mxu0 %v1665
          %1677 = vmatprep.subr.bf16.mxu0 0
          %1678 = vmatpush1.bf16.msra.mxu0 %v1666
          %1679 = vmatprep.subr.bf16.mxu0 0
          %1680 = vmatpush1.bf16.msra.mxu0 0
          %1681 = vmatprep.subr.bf16.mxu0 0
          %1682 = vmatpush1.bf16.msra.mxu0 0
          %1683 = vmatprep.subr.bf16.mxu0 0
          %1684 = vmatpush1.bf16.msra.mxu0 0
          %1685 = vmatprep.subr.bf16.mxu0 0
          %1686 = vmatpush1.bf16.msra.mxu0 0
          %1687 = vmatprep.subr.bf16.mxu0 0
          %1688 = vmatpush1.bf16.msra.mxu0 0
          %1689 = vmatprep.subr.bf16.mxu0 0
          %1690 = vmatpush1.bf16.msra.mxu0 0
          %1691 = vmatprep.subr.bf16.mxu0 0
          %1692 = vmatpush1.bf16.msra.mxu0 0
          %1693 = vmatprep.subr.bf16.mxu0 0
          %1694 = vmatpush1.bf16.msra.mxu0 0
          %1695 = vmatprep.subr.bf16.mxu0 0
          %1696 = vmatpush1.bf16.msra.mxu0 0
          %1697 = vmatprep.subr.bf16.mxu0 0
          %1698 = vmatpush1.bf16.msra.mxu0 0
          %1699 = vmatprep.subr.bf16.mxu0 0
          %1700 = vmatpush1.bf16.msra.mxu0 0
          %1701 = vmatprep.subr.bf16.mxu0 0
          %1702 = vmatpush1.bf16.msra.mxu0 0
          %1703 = vmatprep.mubr.bf16.mxu0 0
          %1704 = vmatmul.mubr.bf16.gmra.mrb[0].mxu0 %v1392
          %v1705 = vpop.f32.mrb[0].mxu0
          %v1706 = vadd.f32 %v1645, %v1705
          %v1707 = vpop.f32.mrb[0].mxu0
          %v1708 = vpop.f32.mrb[0].mxu0
          %v1709 = vadd.f32 %v1645, %v1708
          %v1710 = vpop.f32.mrb[0].mxu0
          %1711 = vmatprep.mubr.bf16.mxu0 0
          %1712 = vmatmul.mubr.bf16.gmra.mrb[0].mxu0 %v1395
          %v1713 = vpop.f32.mrb[0].mxu0
          %v1714 = vadd.f32 %v1645, %v1713
          %v1715 = vpop.f32.mrb[0].mxu0
          %v1716 = vpop.f32.mrb[0].mxu0
          %v1717 = vadd.f32 %v1645, %v1716
          %v1718 = vpop.f32.mrb[0].mxu0
          %1719 = vmatprep.mubr.bf16.mxu0 0
          %1720 = vmatmul.mubr.bf16.gmra.mrb[0].mxu0 %v1398
          %v1721 = vpop.f32.mrb[0].mxu0
          %v1722 = vadd.f32 %v1645, %v1721
          %v1723 = vpop.f32.mrb[0].mxu0
          %v1724 = vpop.f32.mrb[0].mxu0
          %v1725 = vadd.f32 %v1645, %v1724
          %v1726 = vpop.f32.mrb[0].mxu0
          %1727 = vmatprep.mubr.bf16.mxu0 0
          %1728 = vmatmul.mubr.bf16.gmra.mrb[0].mxu0 %v1401
          %v1729 = vpop.f32.mrb[0].mxu0
          %v1730 = vadd.f32 %v1645, %v1729
          %v1731 = vpop.f32.mrb[0].mxu0
          %v1732 = vpop.f32.mrb[0].mxu0
          %v1733 = vadd.f32 %v1645, %v1732
          %v1734 = vpop.f32.mrb[0].mxu0
          %1735 = vmatprep.mubr.bf16.mxu0 0
          %1736 = vmatmul.mubr.bf16.gmra.mrb[0].mxu0 %v1404
          %v1737 = vpop.f32.mrb[0].mxu0
          %v1738 = vadd.f32 %v1645, %v1737
          %v1739 = vpop.f32.mrb[0].mxu0
          %v1740 = vpop.f32.mrb[0].mxu0
          %v1741 = vadd.f32 %v1645, %v1740
          %v1742 = vpop.f32.mrb[0].mxu0
          %1743 = vmatprep.mubr.bf16.mxu0 0
          %1744 = vmatmul.mubr.bf16.gmra.mrb[0].mxu0 %v1407
          %v1745 = vpop.f32.mrb[0].mxu0
          %v1746 = vadd.f32 %v1645, %v1745
          %v1747 = vpop.f32.mrb[0].mxu0
          %v1748 = vpop.f32.mrb[0].mxu0
          %v1749 = vadd.f32 %v1645, %v1748
          %v1750 = vpop.f32.mrb[0].mxu0
          %1751 = vmatprep.mubr.bf16.mxu0 0
          %1752 = vmatmul.mubr.bf16.gmra.mrb[0].mxu0 %v1410
          %v1753 = vpop.f32.mrb[0].mxu0
          %v1754 = vadd.f32 %v1645, %v1753
          %v1755 = vpop.f32.mrb[0].mxu0
          %v1756 = vpop.f32.mrb[0].mxu0
          %v1757 = vadd.f32 %v1645, %v1756
          %v1758 = vpop.f32.mrb[0].mxu0
          %1759 = vmatprep.mubr.bf16.mxu0 0
          %1760 = vmatmul.mubr.bf16.gmra.mrb[0].mxu0 %v1413
          %v1761 = vpop.f32.mrb[0].mxu0
          %v1762 = vadd.f32 %v1645, %v1761
          %v1763 = vpop.f32.mrb[0].mxu0
          %v1764 = vpop.f32.mrb[0].mxu0
          %v1765 = vadd.f32 %v1645, %v1764
          %v1766 = vpop.f32.mrb[0].mxu0
          %1767 = vmatprep.mubr.bf16.mxu0 0
          %1768 = vmatmul.mubr.bf16.gmra.mrb[0].mxu0 %v1416
          %v1769 = vpop.f32.mrb[0].mxu0
          %v1770 = vadd.f32 %v1645, %v1769
          %v1771 = vpop.f32.mrb[0].mxu0
          %v1772 = vpop.f32.mrb[0].mxu0
          %v1773 = vadd.f32 %v1645, %v1772
          %v1774 = vpop.f32.mrb[0].mxu0
          %1775 = vmatprep.mubr.bf16.mxu0 0
          %1776 = vmatmul.mubr.bf16.gmra.mrb[0].mxu0 %v1419
          %v1777 = vpop.f32.mrb[0].mxu0
          %v1778 = vadd.f32 %v1645, %v1777
          %v1779 = vpop.f32.mrb[0].mxu0
          %v1780 = vpop.f32.mrb[0].mxu0
          %v1781 = vadd.f32 %v1645, %v1780
          %v1782 = vpop.f32.mrb[0].mxu0
          %1783 = vmatprep.mubr.bf16.mxu0 0
          %1784 = vmatmul.mubr.bf16.gmra.mrb[0].mxu0 %v1422
          %v1785 = vpop.f32.mrb[0].mxu0
          %v1786 = vadd.f32 %v1645, %v1785
          %v1787 = vpop.f32.mrb[0].mxu0
          %v1788 = vpop.f32.mrb[0].mxu0
          %v1789 = vadd.f32 %v1645, %v1788
          %v1790 = vpop.f32.mrb[0].mxu0
          %1791 = vmatprep.mubr.bf16.mxu0 0
          %1792 = vmatmul.mubr.bf16.gmra.mrb[0].mxu0 %v1425
          %v1793 = vpop.f32.mrb[0].mxu0
          %v1794 = vadd.f32 %v1645, %v1793
          %v1795 = vpop.f32.mrb[0].mxu0
          %v1796 = vpop.f32.mrb[0].mxu0
          %v1797 = vadd.f32 %v1645, %v1796
          %v1798 = vpop.f32.mrb[0].mxu0
          %1799 = vmatprep.mubr.bf16.mxu0 0
          %1800 = vmatmul.mubr.bf16.gmra.mrb[0].mxu0 %v1428
          %v1801 = vpop.f32.mrb[0].mxu0
          %v1802 = vadd.f32 %v1645, %v1801
          %v1803 = vpop.f32.mrb[0].mxu0
          %v1804 = vpop.f32.mrb[0].mxu0
          %v1805 = vadd.f32 %v1645, %v1804
          %v1806 = vpop.f32.mrb[0].mxu0
          %1807 = vmatprep.mubr.bf16.mxu0 0
          %1808 = vmatmul.mubr.bf16.gmra.mrb[0].mxu0 %v1431
          %v1809 = vpop.f32.mrb[0].mxu0
          %v1810 = vadd.f32 %v1645, %v1809
          %v1811 = vpop.f32.mrb[0].mxu0
          %v1812 = vpop.f32.mrb[0].mxu0
          %v1813 = vadd.f32 %v1645, %v1812
          %v1814 = vpop.f32.mrb[0].mxu0
          %1815 = vmatprep.mubr.bf16.mxu0 0
          %1816 = vmatmul.mubr.bf16.gmra.mrb[0].mxu0 %v1434
          %v1817 = vpop.f32.mrb[0].mxu0
          %v1818 = vadd.f32 %v1645, %v1817
          %v1819 = vpop.f32.mrb[0].mxu0
          %v1820 = vpop.f32.mrb[0].mxu0
          %v1821 = vadd.f32 %v1645, %v1820
          %v1822 = vpop.f32.mrb[0].mxu0
          %1823 = vmatprep.mubr.bf16.mxu0 0
          %1824 = vmatmul.mubr.bf16.gmra.mrb[0].mxu0 %v1437
          %v1825 = vpop.f32.mrb[0].mxu0
          %v1826 = vadd.f32 %v1645, %v1825
          %v1827 = vpop.f32.mrb[0].mxu0
          %v1828 = vpop.f32.mrb[0].mxu0
          %v1829 = vadd.f32 %v1645, %v1828
          %v1830 = vpop.f32.mrb[0].mxu0
          %1831 = vdwg.mxu0
          %1832 = vxpose.xlu0.b32.start [1/16] %v1706, 128
          %1833 = vxpose.xlu0.b32.cont [2/16] %v1709, 128
          %1834 = vxpose.xlu0.b32.cont [3/16] %v1714, 128
          %1835 = vxpose.xlu0.b32.cont [4/16] %v1717, 128
          %1836 = vxpose.xlu0.b32.cont [5/16] %v1722, 128
          %1837 = vxpose.xlu0.b32.cont [6/16] %v1725, 128
          %1838 = vxpose.xlu0.b32.cont [7/16] %v1730, 128
          %1839 = vxpose.xlu0.b32.cont [8/16] %v1733, 128
          %1840 = vxpose.xlu0.b32.cont [9/16] %v1738, 128
          %1841 = vxpose.xlu0.b32.cont [10/16] %v1741, 128
          %1842 = vxpose.xlu0.b32.cont [11/16] %v1746, 128
          %1843 = vxpose.xlu0.b32.cont [12/16] %v1749, 128
          %1844 = vxpose.xlu0.b32.cont [13/16] %v1754, 128
          %1845 = vxpose.xlu0.b32.cont [14/16] %v1757, 128
          %1846 = vxpose.xlu0.b32.cont [15/16] %v1762, 128
          %1847 = vxpose.xlu0.b32.end [16/16] %v1765, 128
          %v1848 = vpop.trf.xlu0
          %v1849 = vpop.trf.xlu0
          %v1850 = vpop.trf.xlu0
          %v1851 = vpop.trf.xlu0
          %v1852 = vpop.trf.xlu0
          %v1853 = vpop.trf.xlu0
          %v1854 = vpop.trf.xlu0
          %v1855 = vpop.trf.xlu0
          %v1856 = vpop.trf.xlu0
          %v1857 = vpop.trf.xlu0
          %v1858 = vpop.trf.xlu0
          %v1859 = vpop.trf.xlu0
          %v1860 = vpop.trf.xlu0
          %v1861 = vpop.trf.xlu0
          %v1862 = vpop.trf.xlu0
          %v1863 = vpop.trf.xlu0
          %1864 = vxpose.xlu0.b32.start [1/16] %v1770, 128
          %1865 = vxpose.xlu0.b32.cont [2/16] %v1773, 128
          %1866 = vxpose.xlu0.b32.cont [3/16] %v1778, 128
          %1867 = vxpose.xlu0.b32.cont [4/16] %v1781, 128
          %1868 = vxpose.xlu0.b32.cont [5/16] %v1786, 128
          %1869 = vxpose.xlu0.b32.cont [6/16] %v1789, 128
          %1870 = vxpose.xlu0.b32.cont [7/16] %v1794, 128
          %1871 = vxpose.xlu0.b32.cont [8/16] %v1797, 128
          %1872 = vxpose.xlu0.b32.cont [9/16] %v1802, 128
          %1873 = vxpose.xlu0.b32.cont [10/16] %v1805, 128
          %1874 = vxpose.xlu0.b32.cont [11/16] %v1810, 128
          %1875 = vxpose.xlu0.b32.cont [12/16] %v1813, 128
          %1876 = vxpose.xlu0.b32.cont [13/16] %v1818, 128
          %1877 = vxpose.xlu0.b32.cont [14/16] %v1821, 128
          %1878 = vxpose.xlu0.b32.cont [15/16] %v1826, 128
          %1879 = vxpose.xlu0.b32.end [16/16] %v1829, 128
          %v1880 = vpop.trf.xlu0
          %v1881 = vpop.trf.xlu0
          %v1882 = vpop.trf.xlu0
          %v1883 = vpop.trf.xlu0
          %v1884 = vpop.trf.xlu0
          %v1885 = vpop.trf.xlu0
          %v1886 = vpop.trf.xlu0
          %v1887 = vpop.trf.xlu0
          %v1888 = vpop.trf.xlu0
          %v1889 = vpop.trf.xlu0
          %v1890 = vpop.trf.xlu0
          %v1891 = vpop.trf.xlu0
          %v1892 = vpop.trf.xlu0
          %v1893 = vpop.trf.xlu0
          %v1894 = vpop.trf.xlu0
          %v1895 = vpop.trf.xlu0
          %v1896 = vpack.c.bf16 %v1849, %v1848
          %v1897 = vpack.c.bf16 %v1881, %v1880
          %v1898 = vpack.c.bf16 %v1851, %v1850
          %v1899 = vpack.c.bf16 %v1883, %v1882
          %v1900 = vpack.c.bf16 %v1853, %v1852
          %v1901 = vpack.c.bf16 %v1885, %v1884
          %v1902 = vpack.c.bf16 %v1855, %v1854
          %v1903 = vpack.c.bf16 %v1887, %v1886
          %1904 = vst [vmem:[#allocation3] sm:$0xff] %v1896
          %1905 = vst [vmem:[#allocation3 + $0x8] sm:$0xff] %v1897
          %1906 = vst [vmem:[#allocation3 + $0x10] sm:$0xff] %v1898
          %1907 = vst [vmem:[#allocation3 + $0x18] sm:$0xff] %v1899
          %1908 = vst [vmem:[#allocation3 + $0x20] sm:$0xff] %v1900
          %1909 = vst [vmem:[#allocation3 + $0x28] sm:$0xff] %v1901
          %1910 = vst [vmem:[#allocation3 + $0x30] sm:$0xff] %v1902
          %1911 = vst [vmem:[#allocation3 + $0x38] sm:$0xff] %v1903
          %v1912 = vld [vmem:[#allocation21] sm:$0xf]
          %v1913 = vld [vmem:[#allocation21 + $0x4] sm:$0xf]
          %v1914 = vld [vmem:[#allocation21 + $0x8] sm:$0xf]
          %v1915 = vld [vmem:[#allocation21 + $0xc] sm:$0xf]
          %v1916 = vld [vmem:[#allocation21 + $0x10] sm:$0xf]
          %v1917 = vld [vmem:[#allocation21 + $0x14] sm:$0xf]
          %v1918 = vld [vmem:[#allocation21 + $0x18] sm:$0xf]
          %v1919 = vld [vmem:[#allocation21 + $0x1c] sm:$0xf]
          %v1920 = vld [vmem:[#allocation23] sm:$0x1]
          %v1922 = vlaneseq
          %v1923 = vshrl.u32 %v1922, 7
          %v1924 = vsub.s32 0, %v1923
          %v1925 = vrot.slane %v1920, %v1924
          %v1935 = vunpack.c.l.b16 %v1912
          %v1936 = vunpack.c.l.b16 %v1913
          %v1937 = vunpack.c.l.b16 %v1914
          %v1938 = vunpack.c.l.b16 %v1915
          %v1939 = vunpack.c.l.b16 %v1916
          %v1940 = vunpack.c.l.b16 %v1917
          %v1941 = vunpack.c.l.b16 %v1918
          %v1942 = vunpack.c.l.b16 %v1919
          %v1943 = vpack.c.b16 %v1936, %v1935
          %v1944 = vpack.c.b16 %v1938, %v1937
          %v1945 = vpack.c.b16 %v1940, %v1939
          %v1946 = vpack.c.b16 %v1942, %v1941
          %1951 = vmatprep.subr.bf16.mxu0 0
          %1952 = vmatpush1.bf16.msra.mxu0 %v1943
          %1953 = vmatprep.subr.bf16.mxu0 0
          %1954 = vmatpush1.bf16.msra.mxu0 %v1944
          %1955 = vmatprep.subr.bf16.mxu0 0
          %1956 = vmatpush1.bf16.msra.mxu0 %v1945
          %1957 = vmatprep.subr.bf16.mxu0 0
          %1958 = vmatpush1.bf16.msra.mxu0 %v1946
          %1959 = vmatprep.subr.bf16.mxu0 0
          %1960 = vmatpush1.bf16.msra.mxu0 0
          %1961 = vmatprep.subr.bf16.mxu0 0
          %1962 = vmatpush1.bf16.msra.mxu0 0
          %1963 = vmatprep.subr.bf16.mxu0 0
          %1964 = vmatpush1.bf16.msra.mxu0 0
          %1965 = vmatprep.subr.bf16.mxu0 0
          %1966 = vmatpush1.bf16.msra.mxu0 0
          %1967 = vmatprep.subr.bf16.mxu0 0
          %1968 = vmatpush1.bf16.msra.mxu0 0
          %1969 = vmatprep.subr.bf16.mxu0 0
          %1970 = vmatpush1.bf16.msra.mxu0 0
          %1971 = vmatprep.subr.bf16.mxu0 0
          %1972 = vmatpush1.bf16.msra.mxu0 0
          %1973 = vmatprep.subr.bf16.mxu0 0
          %1974 = vmatpush1.bf16.msra.mxu0 0
          %1975 = vmatprep.subr.bf16.mxu0 0
          %1976 = vmatpush1.bf16.msra.mxu0 0
          %1977 = vmatprep.subr.bf16.mxu0 0
          %1978 = vmatpush1.bf16.msra.mxu0 0
          %1979 = vmatprep.subr.bf16.mxu0 0
          %1980 = vmatpush1.bf16.msra.mxu0 0
          %1981 = vmatprep.subr.bf16.mxu0 0
          %1982 = vmatpush1.bf16.msra.mxu0 0
          %1983 = vmatprep.mubr.bf16.mxu0 0
          %1984 = vmatmul.mubr.bf16.gmra.mrb[0].mxu0 %v1392
          %v1985 = vpop.f32.mrb[0].mxu0
          %v1986 = vadd.f32 %v1925, %v1985
          %v1987 = vpop.f32.mrb[0].mxu0
          %v1988 = vpop.f32.mrb[0].mxu0
          %v1989 = vadd.f32 %v1925, %v1988
          %v1990 = vpop.f32.mrb[0].mxu0
          %1991 = vmatprep.mubr.bf16.mxu0 0
          %1992 = vmatmul.mubr.bf16.gmra.mrb[0].mxu0 %v1395
          %v1993 = vpop.f32.mrb[0].mxu0
          %v1994 = vadd.f32 %v1925, %v1993
          %v1995 = vpop.f32.mrb[0].mxu0
          %v1996 = vpop.f32.mrb[0].mxu0
          %v1997 = vadd.f32 %v1925, %v1996
          %v1998 = vpop.f32.mrb[0].mxu0
          %1999 = vmatprep.mubr.bf16.mxu0 0
          %2000 = vmatmul.mubr.bf16.gmra.mrb[0].mxu0 %v1398
          %v2001 = vpop.f32.mrb[0].mxu0
          %v2002 = vadd.f32 %v1925, %v2001
          %v2003 = vpop.f32.mrb[0].mxu0
          %v2004 = vpop.f32.mrb[0].mxu0
          %v2005 = vadd.f32 %v1925, %v2004
          %v2006 = vpop.f32.mrb[0].mxu0
          %2007 = vmatprep.mubr.bf16.mxu0 0
          %2008 = vmatmul.mubr.bf16.gmra.mrb[0].mxu0 %v1401
          %v2009 = vpop.f32.mrb[0].mxu0
          %v2010 = vadd.f32 %v1925, %v2009
          %v2011 = vpop.f32.mrb[0].mxu0
          %v2012 = vpop.f32.mrb[0].mxu0
          %v2013 = vadd.f32 %v1925, %v2012
          %v2014 = vpop.f32.mrb[0].mxu0
          %2015 = vmatprep.mubr.bf16.mxu0 0
          %2016 = vmatmul.mubr.bf16.gmra.mrb[0].mxu0 %v1404
          %v2017 = vpop.f32.mrb[0].mxu0
          %v2018 = vadd.f32 %v1925, %v2017
          %v2019 = vpop.f32.mrb[0].mxu0
          %v2020 = vpop.f32.mrb[0].mxu0
          %v2021 = vadd.f32 %v1925, %v2020
          %v2022 = vpop.f32.mrb[0].mxu0
          %2023 = vmatprep.mubr.bf16.mxu0 0
          %2024 = vmatmul.mubr.bf16.gmra.mrb[0].mxu0 %v1407
          %v2025 = vpop.f32.mrb[0].mxu0
          %v2026 = vadd.f32 %v1925, %v2025
          %v2027 = vpop.f32.mrb[0].mxu0
          %v2028 = vpop.f32.mrb[0].mxu0
          %v2029 = vadd.f32 %v1925, %v2028
          %v2030 = vpop.f32.mrb[0].mxu0
          %2031 = vmatprep.mubr.bf16.mxu0 0
          %2032 = vmatmul.mubr.bf16.gmra.mrb[0].mxu0 %v1410
          %v2033 = vpop.f32.mrb[0].mxu0
          %v2034 = vadd.f32 %v1925, %v2033
          %v2035 = vpop.f32.mrb[0].mxu0
          %v2036 = vpop.f32.mrb[0].mxu0
          %v2037 = vadd.f32 %v1925, %v2036
          %v2038 = vpop.f32.mrb[0].mxu0
          %2039 = vmatprep.mubr.bf16.mxu0 0
          %2040 = vmatmul.mubr.bf16.gmra.mrb[0].mxu0 %v1413
          %v2041 = vpop.f32.mrb[0].mxu0
          %v2042 = vadd.f32 %v1925, %v2041
          %v2043 = vpop.f32.mrb[0].mxu0
          %v2044 = vpop.f32.mrb[0].mxu0
          %v2045 = vadd.f32 %v1925, %v2044
          %v2046 = vpop.f32.mrb[0].mxu0
          %2047 = vmatprep.mubr.bf16.mxu0 0
          %2048 = vmatmul.mubr.bf16.gmra.mrb[0].mxu0 %v1416
          %v2049 = vpop.f32.mrb[0].mxu0
          %v2050 = vadd.f32 %v1925, %v2049
          %v2051 = vpop.f32.mrb[0].mxu0
          %v2052 = vpop.f32.mrb[0].mxu0
          %v2053 = vadd.f32 %v1925, %v2052
          %v2054 = vpop.f32.mrb[0].mxu0
          %2055 = vmatprep.mubr.bf16.mxu0 0
          %2056 = vmatmul.mubr.bf16.gmra.mrb[0].mxu0 %v1419
          %v2057 = vpop.f32.mrb[0].mxu0
          %v2058 = vadd.f32 %v1925, %v2057
          %v2059 = vpop.f32.mrb[0].mxu0
          %v2060 = vpop.f32.mrb[0].mxu0
          %v2061 = vadd.f32 %v1925, %v2060
          %v2062 = vpop.f32.mrb[0].mxu0
          %2063 = vmatprep.mubr.bf16.mxu0 0
          %2064 = vmatmul.mubr.bf16.gmra.mrb[0].mxu0 %v1422
          %v2065 = vpop.f32.mrb[0].mxu0
          %v2066 = vadd.f32 %v1925, %v2065
          %v2067 = vpop.f32.mrb[0].mxu0
          %v2068 = vpop.f32.mrb[0].mxu0
          %v2069 = vadd.f32 %v1925, %v2068
          %v2070 = vpop.f32.mrb[0].mxu0
          %2071 = vmatprep.mubr.bf16.mxu0 0
          %2072 = vmatmul.mubr.bf16.gmra.mrb[0].mxu0 %v1425
          %v2073 = vpop.f32.mrb[0].mxu0
          %v2074 = vadd.f32 %v1925, %v2073
          %v2075 = vpop.f32.mrb[0].mxu0
          %v2076 = vpop.f32.mrb[0].mxu0
          %v2077 = vadd.f32 %v1925, %v2076
          %v2078 = vpop.f32.mrb[0].mxu0
          %2079 = vmatprep.mubr.bf16.mxu0 0
          %2080 = vmatmul.mubr.bf16.gmra.mrb[0].mxu0 %v1428
          %v2081 = vpop.f32.mrb[0].mxu0
          %v2082 = vadd.f32 %v1925, %v2081
          %v2083 = vpop.f32.mrb[0].mxu0
          %v2084 = vpop.f32.mrb[0].mxu0
          %v2085 = vadd.f32 %v1925, %v2084
          %v2086 = vpop.f32.mrb[0].mxu0
          %2087 = vmatprep.mubr.bf16.mxu0 0
          %2088 = vmatmul.mubr.bf16.gmra.mrb[0].mxu0 %v1431
          %v2089 = vpop.f32.mrb[0].mxu0
          %v2090 = vadd.f32 %v1925, %v2089
          %v2091 = vpop.f32.mrb[0].mxu0
          %v2092 = vpop.f32.mrb[0].mxu0
          %v2093 = vadd.f32 %v1925, %v2092
          %v2094 = vpop.f32.mrb[0].mxu0
          %2095 = vmatprep.mubr.bf16.mxu0 0
          %2096 = vmatmul.mubr.bf16.gmra.mrb[0].mxu0 %v1434
          %v2097 = vpop.f32.mrb[0].mxu0
          %v2098 = vadd.f32 %v1925, %v2097
          %v2099 = vpop.f32.mrb[0].mxu0
          %v2100 = vpop.f32.mrb[0].mxu0
          %v2101 = vadd.f32 %v1925, %v2100
          %v2102 = vpop.f32.mrb[0].mxu0
          %2103 = vmatprep.mubr.bf16.mxu0 0
          %2104 = vmatmul.mubr.bf16.gmra.mrb[0].mxu0 %v1437
          %v2105 = vpop.f32.mrb[0].mxu0
          %v2106 = vadd.f32 %v1925, %v2105
          %v2107 = vpop.f32.mrb[0].mxu0
          %v2108 = vpop.f32.mrb[0].mxu0
          %v2109 = vadd.f32 %v1925, %v2108
          %v2110 = vpop.f32.mrb[0].mxu0
          %2111 = vdwg.mxu0
          %v2112 = vpack.c.bf16 %v1989, %v1986
          %v2113 = vpack.c.bf16 %v1997, %v1994
          %v2114 = vpack.c.bf16 %v2005, %v2002
          %v2115 = vpack.c.bf16 %v2013, %v2010
          %v2116 = vpack.c.bf16 %v2021, %v2018
          %v2117 = vpack.c.bf16 %v2029, %v2026
          %v2118 = vpack.c.bf16 %v2037, %v2034
          %v2119 = vpack.c.bf16 %v2045, %v2042
          %v2120 = vpack.c.bf16 %v2053, %v2050
          %v2121 = vpack.c.bf16 %v2061, %v2058
          %v2122 = vpack.c.bf16 %v2069, %v2066
          %v2123 = vpack.c.bf16 %v2077, %v2074
          %v2124 = vpack.c.bf16 %v2085, %v2082
          %v2125 = vpack.c.bf16 %v2093, %v2090
          %v2126 = vpack.c.bf16 %v2101, %v2098
          %v2127 = vpack.c.bf16 %v2109, %v2106
          %2128 = vst.msk [vmem:[#allocation4] sm:$0xff] %vm705, %v2112
          %2129 = vst.msk [vmem:[#allocation4 + $0x8] sm:$0xff] %vm705, %v2113
          %2130 = vst.msk [vmem:[#allocation4 + $0x10] sm:$0xff] %vm705, %v2114
          %2131 = vst.msk [vmem:[#allocation4 + $0x18] sm:$0xff] %vm705, %v2115
          %2132 = vst.msk [vmem:[#allocation4 + $0x20] sm:$0xff] %vm705, %v2116
          %2133 = vst.msk [vmem:[#allocation4 + $0x28] sm:$0xff] %vm705, %v2117
          %2134 = vst.msk [vmem:[#allocation4 + $0x30] sm:$0xff] %vm705, %v2118
          %2135 = vst.msk [vmem:[#allocation4 + $0x38] sm:$0xff] %vm705, %v2119
          %2136 = vst.msk [vmem:[#allocation4 + $0x40] sm:$0xff] %vm705, %v2120
          %2137 = vst.msk [vmem:[#allocation4 + $0x48] sm:$0xff] %vm705, %v2121
          %2138 = vst.msk [vmem:[#allocation4 + $0x50] sm:$0xff] %vm705, %v2122
          %2139 = vst.msk [vmem:[#allocation4 + $0x58] sm:$0xff] %vm705, %v2123
          %2140 = vst.msk [vmem:[#allocation4 + $0x60] sm:$0xff] %vm705, %v2124
          %2141 = vst.msk [vmem:[#allocation4 + $0x68] sm:$0xff] %vm705, %v2125
          %2142 = vst.msk [vmem:[#allocation4 + $0x70] sm:$0xff] %vm705, %v2126
          %2143 = vst.msk [vmem:[#allocation4 + $0x78] sm:$0xff] %vm705, %v2127
        $region128: #{tpu_custom_call.1} parent=71 // pred_fallthru
          _
        %s2144 = smul.u32 %s41, 256
        %s2145 = sshra.s32 %s2144, 3
        %s2146 = sand.u32 %s2144, 7
        %s2147 = smul.addr %s2145, 4
        %s2148 = scalar_lea.vmem %s544, %s2147 [#allocation6]
        %v2149 = vld [vmem:[%s2148] sm:$0xf]
        %v2150 = vld [vmem:[%s2148 + $0x4] sm:$0xf]
        %v2151 = vld [vmem:[%s2148 + $0x8] sm:$0xf]
        %v2152 = vld [vmem:[%s2148 + $0xc] sm:$0xf]
        %v2153 = vld [vmem:[%s2148 + $0x10] sm:$0xf]
        %v2154 = vld [vmem:[%s2148 + $0x14] sm:$0xf]
        %v2155 = vld [vmem:[%s2148 + $0x18] sm:$0xf]
        %v2156 = vld [vmem:[%s2148 + $0x1c] sm:$0xf]
        %v2157 = vld [vmem:[%s2148 + $0x20] sm:$0xf]
        %v2158 = vld [vmem:[%s2148 + $0x24] sm:$0xf]
        %v2159 = vld [vmem:[%s2148 + $0x28] sm:$0xf]
        %v2160 = vld [vmem:[%s2148 + $0x2c] sm:$0xf]
        %v2161 = vld [vmem:[%s2148 + $0x30] sm:$0xf]
        %v2162 = vld [vmem:[%s2148 + $0x34] sm:$0xf]
        %v2163 = vld [vmem:[%s2148 + $0x38] sm:$0xf]
        %v2164 = vld [vmem:[%s2148 + $0x3c] sm:$0xf]
        %v2165 = vld [vmem:[%s2148 + $0x40] sm:$0xf]
        %v2166 = vld [vmem:[%s2148 + $0x44] sm:$0xf]
        %v2167 = vld [vmem:[%s2148 + $0x48] sm:$0xf]
        %v2168 = vld [vmem:[%s2148 + $0x4c] sm:$0xf]
        %v2169 = vld [vmem:[%s2148 + $0x50] sm:$0xf]
        %v2170 = vld [vmem:[%s2148 + $0x54] sm:$0xf]
        %v2171 = vld [vmem:[%s2148 + $0x58] sm:$0xf]
        %v2172 = vld [vmem:[%s2148 + $0x5c] sm:$0xf]
        %v2173 = vld [vmem:[%s2148 + $0x60] sm:$0xf]
        %v2174 = vld [vmem:[%s2148 + $0x64] sm:$0xf]
        %v2175 = vld [vmem:[%s2148 + $0x68] sm:$0xf]
        %v2176 = vld [vmem:[%s2148 + $0x6c] sm:$0xf]
        %v2177 = vld [vmem:[%s2148 + $0x70] sm:$0xf]
        %v2178 = vld [vmem:[%s2148 + $0x74] sm:$0xf]
        %v2179 = vld [vmem:[%s2148 + $0x78] sm:$0xf]
        %v2180 = vld [vmem:[%s2148 + $0x7c] sm:$0xf]
        %v2181 = vunpack.c.l.bf16 %v2149
        %v2182 = vunpack.c.l.bf16 %v2150
        %v2183 = vunpack.c.l.bf16 %v2151
        %v2184 = vunpack.c.l.bf16 %v2152
        %v2185 = vunpack.c.l.bf16 %v2153
        %v2186 = vunpack.c.l.bf16 %v2154
        %v2187 = vunpack.c.l.bf16 %v2155
        %v2188 = vunpack.c.l.bf16 %v2156
        %v2189 = vunpack.c.l.bf16 %v2157
        %v2190 = vunpack.c.l.bf16 %v2158
        %v2191 = vunpack.c.l.bf16 %v2159
        %v2192 = vunpack.c.l.bf16 %v2160
        %v2193 = vunpack.c.l.bf16 %v2161
        %v2194 = vunpack.c.l.bf16 %v2162
        %v2195 = vunpack.c.l.bf16 %v2163
        %v2196 = vunpack.c.l.bf16 %v2164
        %v2197 = vunpack.c.l.bf16 %v2165
        %v2198 = vunpack.c.l.bf16 %v2166
        %v2199 = vunpack.c.l.bf16 %v2167
        %v2200 = vunpack.c.l.bf16 %v2168
        %v2201 = vunpack.c.l.bf16 %v2169
        %v2202 = vunpack.c.l.bf16 %v2170
        %v2203 = vunpack.c.l.bf16 %v2171
        %v2204 = vunpack.c.l.bf16 %v2172
        %v2205 = vunpack.c.l.bf16 %v2173
        %v2206 = vunpack.c.l.bf16 %v2174
        %v2207 = vunpack.c.l.bf16 %v2175
        %v2208 = vunpack.c.l.bf16 %v2176
        %v2209 = vunpack.c.l.bf16 %v2177
        %v2210 = vunpack.c.l.bf16 %v2178
        %v2211 = vunpack.c.l.bf16 %v2179
        %v2212 = vunpack.c.l.bf16 %v2180
        %s2213 = sshra.s32 %s2144, 4
        %s2214 = sand.u32 %s2144, 15
        %s2215 = smul.addr %s2213, 8
        %s2216 = scalar_lea.vmem [#allocation2], %s2215
        %v2217 = vld [vmem:[%s2216] sm:$0xff]
        %v2218 = vld [vmem:[%s2216 + $0x8] sm:$0xff]
        %v2219 = vld [vmem:[%s2216 + $0x10] sm:$0xff]
        %v2220 = vld [vmem:[%s2216 + $0x18] sm:$0xff]
        %v2221 = vld [vmem:[%s2216 + $0x20] sm:$0xff]
        %v2222 = vld [vmem:[%s2216 + $0x28] sm:$0xff]
        %v2223 = vld [vmem:[%s2216 + $0x30] sm:$0xff]
        %v2224 = vld [vmem:[%s2216 + $0x38] sm:$0xff]
        %v2225 = vld [vmem:[%s2216 + $0x40] sm:$0xff]
        %v2226 = vld [vmem:[%s2216 + $0x48] sm:$0xff]
        %v2227 = vld [vmem:[%s2216 + $0x50] sm:$0xff]
        %v2228 = vld [vmem:[%s2216 + $0x58] sm:$0xff]
        %v2229 = vld [vmem:[%s2216 + $0x60] sm:$0xff]
        %v2230 = vld [vmem:[%s2216 + $0x68] sm:$0xff]
        %v2231 = vld [vmem:[%s2216 + $0x70] sm:$0xff]
        %v2232 = vld [vmem:[%s2216 + $0x78] sm:$0xff]
        %v2233 = vld [vmem:[#allocation3] sm:$0xff]
        %v2234 = vld [vmem:[#allocation3 + $0x8] sm:$0xff]
        %v2235 = vld [vmem:[#allocation3 + $0x10] sm:$0xff]
        %v2236 = vld [vmem:[#allocation3 + $0x18] sm:$0xff]
        %v2237 = vld [vmem:[#allocation4] sm:$0xff]
        %v2238 = vld [vmem:[#allocation4 + $0x8] sm:$0xff]
        %v2239 = vld [vmem:[#allocation4 + $0x10] sm:$0xff]
        %v2240 = vld [vmem:[#allocation4 + $0x18] sm:$0xff]
        %v2241 = vld [vmem:[#allocation4 + $0x20] sm:$0xff]
        %v2242 = vld [vmem:[#allocation4 + $0x28] sm:$0xff]
        %v2243 = vld [vmem:[#allocation4 + $0x30] sm:$0xff]
        %v2244 = vld [vmem:[#allocation4 + $0x38] sm:$0xff]
        %v2245 = vld [vmem:[#allocation4 + $0x40] sm:$0xff]
        %v2246 = vld [vmem:[#allocation4 + $0x48] sm:$0xff]
        %v2247 = vld [vmem:[#allocation4 + $0x50] sm:$0xff]
        %v2248 = vld [vmem:[#allocation4 + $0x58] sm:$0xff]
        %v2249 = vld [vmem:[#allocation4 + $0x60] sm:$0xff]
        %v2250 = vld [vmem:[#allocation4 + $0x68] sm:$0xff]
        %v2251 = vld [vmem:[#allocation4 + $0x70] sm:$0xff]
        %v2252 = vld [vmem:[#allocation4 + $0x78] sm:$0xff]
        %vm2253 = vcmask 261120
        %v2255 = vsel %vm2253, %v2217, 0
        %v2258 = vsel %vm2253, %v2218, 0
        %v2261 = vsel %vm2253, %v2219, 0
        %v2264 = vsel %vm2253, %v2220, 0
        %v2267 = vsel %vm2253, %v2221, 0
        %v2270 = vsel %vm2253, %v2222, 0
        %v2273 = vsel %vm2253, %v2223, 0
        %v2276 = vsel %vm2253, %v2224, 0
        %v2279 = vsel %vm2253, %v2225, 0
        %v2282 = vsel %vm2253, %v2226, 0
        %v2285 = vsel %vm2253, %v2227, 0
        %v2288 = vsel %vm2253, %v2228, 0
        %v2291 = vsel %vm2253, %v2229, 0
        %v2294 = vsel %vm2253, %v2230, 0
        %v2297 = vsel %vm2253, %v2231, 0
        %v2300 = vsel %vm2253, %v2232, 0
        %2302 = vmatprep.subr.bf16.mxu0 %v2234
        %2303 = vmatpush1.bf16.msra.mxu0 %v2233
        %2304 = vmatprep.subr.bf16.mxu0 %v2236
        %2305 = vmatpush1.bf16.msra.mxu0 %v2235
        %2306 = vmatprep.subr.bf16.mxu0 0
        %2307 = vmatpush1.bf16.msra.mxu0 0
        %2308 = vmatprep.subr.bf16.mxu0 0
        %2309 = vmatpush1.bf16.msra.mxu0 0
        %2310 = vmatprep.subr.bf16.mxu0 0
        %2311 = vmatpush1.bf16.msra.mxu0 0
        %2312 = vmatprep.subr.bf16.mxu0 0
        %2313 = vmatpush1.bf16.msra.mxu0 0
        %2314 = vmatprep.subr.bf16.mxu0 0
        %2315 = vmatpush1.bf16.msra.mxu0 0
        %2316 = vmatprep.subr.bf16.mxu0 0
        %2317 = vmatpush1.bf16.msra.mxu0 0
        %2318 = vmatprep.subr.bf16.mxu0 0
        %2319 = vmatpush1.bf16.msra.mxu0 0
        %2320 = vmatprep.subr.bf16.mxu0 0
        %2321 = vmatpush1.bf16.msra.mxu0 0
        %2322 = vmatprep.subr.bf16.mxu0 0
        %2323 = vmatpush1.bf16.msra.mxu0 0
        %2324 = vmatprep.subr.bf16.mxu0 0
        %2325 = vmatpush1.bf16.msra.mxu0 0
        %2326 = vmatprep.subr.bf16.mxu0 0
        %2327 = vmatpush1.bf16.msra.mxu0 0
        %2328 = vmatprep.subr.bf16.mxu0 0
        %2329 = vmatpush1.bf16.msra.mxu0 0
        %2330 = vmatprep.subr.bf16.mxu0 0
        %2331 = vmatpush1.bf16.msra.mxu0 0
        %2332 = vmatprep.subr.bf16.mxu0 0
        %2333 = vmatpush1.bf16.msra.mxu0 0
        %2334 = vmatprep.mubr.bf16.mxu0 0
        %2335 = vmatmul.mubr.bf16.gmra.mrb[0].mxu0 %v2255
        %v2336 = vpop.f32.mrb[0].mxu0
        %v2337 = vadd.f32 0.0, %v2336
        %v2338 = vpop.f32.mrb[0].mxu0
        %v2339 = vadd.f32 0.0, %v2338
        %v2340 = vpop.f32.mrb[0].mxu0
        %v2341 = vadd.f32 0.0, %v2340
        %v2342 = vpop.f32.mrb[0].mxu0
        %v2343 = vadd.f32 0.0, %v2342
        %2344 = vmatprep.mubr.bf16.mxu0 0
        %2345 = vmatmul.mubr.bf16.gmra.mrb[0].mxu0 %v2258
        %v2346 = vpop.f32.mrb[0].mxu0
        %v2347 = vadd.f32 0.0, %v2346
        %v2348 = vpop.f32.mrb[0].mxu0
        %v2349 = vadd.f32 0.0, %v2348
        %v2350 = vpop.f32.mrb[0].mxu0
        %v2351 = vadd.f32 0.0, %v2350
        %v2352 = vpop.f32.mrb[0].mxu0
        %v2353 = vadd.f32 0.0, %v2352
        %2354 = vmatprep.mubr.bf16.mxu0 0
        %2355 = vmatmul.mubr.bf16.gmra.mrb[0].mxu0 %v2261
        %v2356 = vpop.f32.mrb[0].mxu0
        %v2357 = vadd.f32 0.0, %v2356
        %v2358 = vpop.f32.mrb[0].mxu0
        %v2359 = vadd.f32 0.0, %v2358
        %v2360 = vpop.f32.mrb[0].mxu0
        %v2361 = vadd.f32 0.0, %v2360
        %v2362 = vpop.f32.mrb[0].mxu0
        %v2363 = vadd.f32 0.0, %v2362
        %2364 = vmatprep.mubr.bf16.mxu0 0
        %2365 = vmatmul.mubr.bf16.gmra.mrb[0].mxu0 %v2264
        %v2366 = vpop.f32.mrb[0].mxu0
        %v2367 = vadd.f32 0.0, %v2366
        %v2368 = vpop.f32.mrb[0].mxu0
        %v2369 = vadd.f32 0.0, %v2368
        %v2370 = vpop.f32.mrb[0].mxu0
        %v2371 = vadd.f32 0.0, %v2370
        %v2372 = vpop.f32.mrb[0].mxu0
        %v2373 = vadd.f32 0.0, %v2372
        %2374 = vmatprep.mubr.bf16.mxu0 0
        %2375 = vmatmul.mubr.bf16.gmra.mrb[0].mxu0 %v2267
        %v2376 = vpop.f32.mrb[0].mxu0
        %v2377 = vadd.f32 0.0, %v2376
        %v2378 = vpop.f32.mrb[0].mxu0
        %v2379 = vadd.f32 0.0, %v2378
        %v2380 = vpop.f32.mrb[0].mxu0
        %v2381 = vadd.f32 0.0, %v2380
        %v2382 = vpop.f32.mrb[0].mxu0
        %v2383 = vadd.f32 0.0, %v2382
        %2384 = vmatprep.mubr.bf16.mxu0 0
        %2385 = vmatmul.mubr.bf16.gmra.mrb[0].mxu0 %v2270
        %v2386 = vpop.f32.mrb[0].mxu0
        %v2387 = vadd.f32 0.0, %v2386
        %v2388 = vpop.f32.mrb[0].mxu0
        %v2389 = vadd.f32 0.0, %v2388
        %v2390 = vpop.f32.mrb[0].mxu0
        %v2391 = vadd.f32 0.0, %v2390
        %v2392 = vpop.f32.mrb[0].mxu0
        %v2393 = vadd.f32 0.0, %v2392
        %2394 = vmatprep.mubr.bf16.mxu0 0
        %2395 = vmatmul.mubr.bf16.gmra.mrb[0].mxu0 %v2273
        %v2396 = vpop.f32.mrb[0].mxu0
        %v2397 = vadd.f32 0.0, %v2396
        %v2398 = vpop.f32.mrb[0].mxu0
        %v2399 = vadd.f32 0.0, %v2398
        %v2400 = vpop.f32.mrb[0].mxu0
        %v2401 = vadd.f32 0.0, %v2400
        %v2402 = vpop.f32.mrb[0].mxu0
        %v2403 = vadd.f32 0.0, %v2402
        %2404 = vmatprep.mubr.bf16.mxu0 0
        %2405 = vmatmul.mubr.bf16.gmra.mrb[0].mxu0 %v2276
        %v2406 = vpop.f32.mrb[0].mxu0
        %v2407 = vadd.f32 0.0, %v2406
        %v2408 = vpop.f32.mrb[0].mxu0
        %v2409 = vadd.f32 0.0, %v2408
        %v2410 = vpop.f32.mrb[0].mxu0
        %v2411 = vadd.f32 0.0, %v2410
        %v2412 = vpop.f32.mrb[0].mxu0
        %v2413 = vadd.f32 0.0, %v2412
        %2414 = vmatprep.mubr.bf16.mxu0 0
        %2415 = vmatmul.mubr.bf16.gmra.mrb[0].mxu0 %v2279
        %v2416 = vpop.f32.mrb[0].mxu0
        %v2417 = vadd.f32 0.0, %v2416
        %v2418 = vpop.f32.mrb[0].mxu0
        %v2419 = vadd.f32 0.0, %v2418
        %v2420 = vpop.f32.mrb[0].mxu0
        %v2421 = vadd.f32 0.0, %v2420
        %v2422 = vpop.f32.mrb[0].mxu0
        %v2423 = vadd.f32 0.0, %v2422
        %2424 = vmatprep.mubr.bf16.mxu0 0
        %2425 = vmatmul.mubr.bf16.gmra.mrb[0].mxu0 %v2282
        %v2426 = vpop.f32.mrb[0].mxu0
        %v2427 = vadd.f32 0.0, %v2426
        %v2428 = vpop.f32.mrb[0].mxu0
        %v2429 = vadd.f32 0.0, %v2428
        %v2430 = vpop.f32.mrb[0].mxu0
        %v2431 = vadd.f32 0.0, %v2430
        %v2432 = vpop.f32.mrb[0].mxu0
        %v2433 = vadd.f32 0.0, %v2432
        %2434 = vmatprep.mubr.bf16.mxu0 0
        %2435 = vmatmul.mubr.bf16.gmra.mrb[0].mxu0 %v2285
        %v2436 = vpop.f32.mrb[0].mxu0
        %v2437 = vadd.f32 0.0, %v2436
        %v2438 = vpop.f32.mrb[0].mxu0
        %v2439 = vadd.f32 0.0, %v2438
        %v2440 = vpop.f32.mrb[0].mxu0
        %v2441 = vadd.f32 0.0, %v2440
        %v2442 = vpop.f32.mrb[0].mxu0
        %v2443 = vadd.f32 0.0, %v2442
        %2444 = vmatprep.mubr.bf16.mxu0 0
        %2445 = vmatmul.mubr.bf16.gmra.mrb[0].mxu0 %v2288
        %v2446 = vpop.f32.mrb[0].mxu0
        %v2447 = vadd.f32 0.0, %v2446
        %v2448 = vpop.f32.mrb[0].mxu0
        %v2449 = vadd.f32 0.0, %v2448
        %v2450 = vpop.f32.mrb[0].mxu0
        %v2451 = vadd.f32 0.0, %v2450
        %v2452 = vpop.f32.mrb[0].mxu0
        %v2453 = vadd.f32 0.0, %v2452
        %2454 = vmatprep.mubr.bf16.mxu0 0
        %2455 = vmatmul.mubr.bf16.gmra.mrb[0].mxu0 %v2291
        %v2456 = vpop.f32.mrb[0].mxu0
        %v2457 = vadd.f32 0.0, %v2456
        %v2458 = vpop.f32.mrb[0].mxu0
        %v2459 = vadd.f32 0.0, %v2458
        %v2460 = vpop.f32.mrb[0].mxu0
        %v2461 = vadd.f32 0.0, %v2460
        %v2462 = vpop.f32.mrb[0].mxu0
        %v2463 = vadd.f32 0.0, %v2462
        %2464 = vmatprep.mubr.bf16.mxu0 0
        %2465 = vmatmul.mubr.bf16.gmra.mrb[0].mxu0 %v2294
        %v2466 = vpop.f32.mrb[0].mxu0
        %v2467 = vadd.f32 0.0, %v2466
        %v2468 = vpop.f32.mrb[0].mxu0
        %v2469 = vadd.f32 0.0, %v2468
        %v2470 = vpop.f32.mrb[0].mxu0
        %v2471 = vadd.f32 0.0, %v2470
        %v2472 = vpop.f32.mrb[0].mxu0
        %v2473 = vadd.f32 0.0, %v2472
        %2474 = vmatprep.mubr.bf16.mxu0 0
        %2475 = vmatmul.mubr.bf16.gmra.mrb[0].mxu0 %v2297
        %v2476 = vpop.f32.mrb[0].mxu0
        %v2477 = vadd.f32 0.0, %v2476
        %v2478 = vpop.f32.mrb[0].mxu0
        %v2479 = vadd.f32 0.0, %v2478
        %v2480 = vpop.f32.mrb[0].mxu0
        %v2481 = vadd.f32 0.0, %v2480
        %v2482 = vpop.f32.mrb[0].mxu0
        %v2483 = vadd.f32 0.0, %v2482
        %2484 = vmatprep.mubr.bf16.mxu0 0
        %2485 = vmatmul.mubr.bf16.gmra.mrb[0].mxu0 %v2300
        %v2486 = vpop.f32.mrb[0].mxu0
        %v2487 = vadd.f32 0.0, %v2486
        %v2488 = vpop.f32.mrb[0].mxu0
        %v2489 = vadd.f32 0.0, %v2488
        %v2490 = vpop.f32.mrb[0].mxu0
        %v2491 = vadd.f32 0.0, %v2490
        %v2492 = vpop.f32.mrb[0].mxu0
        %v2493 = vadd.f32 0.0, %v2492
        %2494 = vdwg.mxu0
        %v2495 = vmax.f32 %v2337, %v2339
        %2496 = vmax.xlane.f32.xlu0 %v2495
        %v2497 = vpop.xlane.xlu0 %2496
        %v2498 = vmax.f32 %v2341, %v2343
        %2499 = vmax.xlane.f32.xlu0 %v2498
        %v2500 = vpop.xlane.xlu0 %2499
        %v2501 = vmax.f32 %v2347, %v2349
        %2502 = vmax.xlane.f32.xlu0 %v2501
        %v2503 = vpop.xlane.xlu0 %2502
        %v2504 = vmax.f32 %v2351, %v2353
        %2505 = vmax.xlane.f32.xlu0 %v2504
        %v2506 = vpop.xlane.xlu0 %2505
        %v2507 = vmax.f32 %v2357, %v2359
        %2508 = vmax.xlane.f32.xlu0 %v2507
        %v2509 = vpop.xlane.xlu0 %2508
        %v2510 = vmax.f32 %v2361, %v2363
        %2511 = vmax.xlane.f32.xlu0 %v2510
        %v2512 = vpop.xlane.xlu0 %2511
        %v2513 = vmax.f32 %v2367, %v2369
        %2514 = vmax.xlane.f32.xlu0 %v2513
        %v2515 = vpop.xlane.xlu0 %2514
        %v2516 = vmax.f32 %v2371, %v2373
        %2517 = vmax.xlane.f32.xlu0 %v2516
        %v2518 = vpop.xlane.xlu0 %2517
        %v2519 = vmax.f32 %v2377, %v2379
        %2520 = vmax.xlane.f32.xlu0 %v2519
        %v2521 = vpop.xlane.xlu0 %2520
        %v2522 = vmax.f32 %v2381, %v2383
        %2523 = vmax.xlane.f32.xlu0 %v2522
        %v2524 = vpop.xlane.xlu0 %2523
        %v2525 = vmax.f32 %v2387, %v2389
        %2526 = vmax.xlane.f32.xlu0 %v2525
        %v2527 = vpop.xlane.xlu0 %2526
        %v2528 = vmax.f32 %v2391, %v2393
        %2529 = vmax.xlane.f32.xlu0 %v2528
        %v2530 = vpop.xlane.xlu0 %2529
        %v2531 = vmax.f32 %v2397, %v2399
        %2532 = vmax.xlane.f32.xlu0 %v2531
        %v2533 = vpop.xlane.xlu0 %2532
        %v2534 = vmax.f32 %v2401, %v2403
        %2535 = vmax.xlane.f32.xlu0 %v2534
        %v2536 = vpop.xlane.xlu0 %2535
        %v2537 = vmax.f32 %v2407, %v2409
        %2538 = vmax.xlane.f32.xlu0 %v2537
        %v2539 = vpop.xlane.xlu0 %2538
        %v2540 = vmax.f32 %v2411, %v2413
        %2541 = vmax.xlane.f32.xlu0 %v2540
        %v2542 = vpop.xlane.xlu0 %2541
        %v2543 = vmax.f32 %v2417, %v2419
        %2544 = vmax.xlane.f32.xlu0 %v2543
        %v2545 = vpop.xlane.xlu0 %2544
        %v2546 = vmax.f32 %v2421, %v2423
        %2547 = vmax.xlane.f32.xlu0 %v2546
        %v2548 = vpop.xlane.xlu0 %2547
        %v2549 = vmax.f32 %v2427, %v2429
        %2550 = vmax.xlane.f32.xlu0 %v2549
        %v2551 = vpop.xlane.xlu0 %2550
        %v2552 = vmax.f32 %v2431, %v2433
        %2553 = vmax.xlane.f32.xlu0 %v2552
        %v2554 = vpop.xlane.xlu0 %2553
        %v2555 = vmax.f32 %v2437, %v2439
        %2556 = vmax.xlane.f32.xlu0 %v2555
        %v2557 = vpop.xlane.xlu0 %2556
        %v2558 = vmax.f32 %v2441, %v2443
        %2559 = vmax.xlane.f32.xlu0 %v2558
        %v2560 = vpop.xlane.xlu0 %2559
        %v2561 = vmax.f32 %v2447, %v2449
        %2562 = vmax.xlane.f32.xlu0 %v2561
        %v2563 = vpop.xlane.xlu0 %2562
        %v2564 = vmax.f32 %v2451, %v2453
        %2565 = vmax.xlane.f32.xlu0 %v2564
        %v2566 = vpop.xlane.xlu0 %2565
        %v2567 = vmax.f32 %v2457, %v2459
        %2568 = vmax.xlane.f32.xlu0 %v2567
        %v2569 = vpop.xlane.xlu0 %2568
        %v2570 = vmax.f32 %v2461, %v2463
        %2571 = vmax.xlane.f32.xlu0 %v2570
        %v2572 = vpop.xlane.xlu0 %2571
        %v2573 = vmax.f32 %v2467, %v2469
        %2574 = vmax.xlane.f32.xlu0 %v2573
        %v2575 = vpop.xlane.xlu0 %2574
        %v2576 = vmax.f32 %v2471, %v2473
        %2577 = vmax.xlane.f32.xlu0 %v2576
        %v2578 = vpop.xlane.xlu0 %2577
        %v2579 = vmax.f32 %v2477, %v2479
        %2580 = vmax.xlane.f32.xlu0 %v2579
        %v2581 = vpop.xlane.xlu0 %2580
        %v2582 = vmax.f32 %v2481, %v2483
        %2583 = vmax.xlane.f32.xlu0 %v2582
        %v2584 = vpop.xlane.xlu0 %2583
        %v2585 = vmax.f32 %v2487, %v2489
        %2586 = vmax.xlane.f32.xlu0 %v2585
        %v2587 = vpop.xlane.xlu0 %2586
        %v2588 = vmax.f32 %v2491, %v2493
        %2589 = vmax.xlane.f32.xlu0 %v2588
        %v2590 = vpop.xlane.xlu0 %2589
        %v2591 = vsub.f32 %v2337, %v2497
        %v2592 = vsub.f32 %v2339, %v2497
        %v2593 = vsub.f32 %v2341, %v2500
        %v2594 = vsub.f32 %v2343, %v2500
        %v2595 = vsub.f32 %v2347, %v2503
        %v2596 = vsub.f32 %v2349, %v2503
        %v2597 = vsub.f32 %v2351, %v2506
        %v2598 = vsub.f32 %v2353, %v2506
        %v2599 = vsub.f32 %v2357, %v2509
        %v2600 = vsub.f32 %v2359, %v2509
        %v2601 = vsub.f32 %v2361, %v2512
        %v2602 = vsub.f32 %v2363, %v2512
        %v2603 = vsub.f32 %v2367, %v2515
        %v2604 = vsub.f32 %v2369, %v2515
        %v2605 = vsub.f32 %v2371, %v2518
        %v2606 = vsub.f32 %v2373, %v2518
        %v2607 = vsub.f32 %v2377, %v2521
        %v2608 = vsub.f32 %v2379, %v2521
        %v2609 = vsub.f32 %v2381, %v2524
        %v2610 = vsub.f32 %v2383, %v2524
        %v2611 = vsub.f32 %v2387, %v2527
        %v2612 = vsub.f32 %v2389, %v2527
        %v2613 = vsub.f32 %v2391, %v2530
        %v2614 = vsub.f32 %v2393, %v2530
        %v2615 = vsub.f32 %v2397, %v2533
        %v2616 = vsub.f32 %v2399, %v2533
        %v2617 = vsub.f32 %v2401, %v2536
        %v2618 = vsub.f32 %v2403, %v2536
        %v2619 = vsub.f32 %v2407, %v2539
        %v2620 = vsub.f32 %v2409, %v2539
        %v2621 = vsub.f32 %v2411, %v2542
        %v2622 = vsub.f32 %v2413, %v2542
        %v2623 = vsub.f32 %v2417, %v2545
        %v2624 = vsub.f32 %v2419, %v2545
        %v2625 = vsub.f32 %v2421, %v2548
        %v2626 = vsub.f32 %v2423, %v2548
        %v2627 = vsub.f32 %v2427, %v2551
        %v2628 = vsub.f32 %v2429, %v2551
        %v2629 = vsub.f32 %v2431, %v2554
        %v2630 = vsub.f32 %v2433, %v2554
        %v2631 = vsub.f32 %v2437, %v2557
        %v2632 = vsub.f32 %v2439, %v2557
        %v2633 = vsub.f32 %v2441, %v2560
        %v2634 = vsub.f32 %v2443, %v2560
        %v2635 = vsub.f32 %v2447, %v2563
        %v2636 = vsub.f32 %v2449, %v2563
        %v2637 = vsub.f32 %v2451, %v2566
        %v2638 = vsub.f32 %v2453, %v2566
        %v2639 = vsub.f32 %v2457, %v2569
        %v2640 = vsub.f32 %v2459, %v2569
        %v2641 = vsub.f32 %v2461, %v2572
        %v2642 = vsub.f32 %v2463, %v2572
        %v2643 = vsub.f32 %v2467, %v2575
        %v2644 = vsub.f32 %v2469, %v2575
        %v2645 = vsub.f32 %v2471, %v2578
        %v2646 = vsub.f32 %v2473, %v2578
        %v2647 = vsub.f32 %v2477, %v2581
        %v2648 = vsub.f32 %v2479, %v2581
        %v2649 = vsub.f32 %v2481, %v2584
        %v2650 = vsub.f32 %v2483, %v2584
        %v2651 = vsub.f32 %v2487, %v2587
        %v2652 = vsub.f32 %v2489, %v2587
        %v2653 = vsub.f32 %v2491, %v2590
        %v2654 = vsub.f32 %v2493, %v2590
        %v2655 = vmul.f32 %v2591, 1.442695
        %v2656 = vpow.pop %v2655
        %v2657 = vmul.f32 %v2592, 1.442695
        %v2658 = vpow.pop %v2657
        %v2659 = vmul.f32 %v2593, 1.442695
        %v2660 = vpow.pop %v2659
        %v2661 = vmul.f32 %v2594, 1.442695
        %v2662 = vpow.pop %v2661
        %v2663 = vmul.f32 %v2595, 1.442695
        %v2664 = vpow.pop %v2663
        %v2665 = vmul.f32 %v2596, 1.442695
        %v2666 = vpow.pop %v2665
        %v2667 = vmul.f32 %v2597, 1.442695
        %v2668 = vpow.pop %v2667
        %v2669 = vmul.f32 %v2598, 1.442695
        %v2670 = vpow.pop %v2669
        %v2671 = vmul.f32 %v2599, 1.442695
        %v2672 = vpow.pop %v2671
        %v2673 = vmul.f32 %v2600, 1.442695
        %v2674 = vpow.pop %v2673
        %v2675 = vmul.f32 %v2601, 1.442695
        %v2676 = vpow.pop %v2675
        %v2677 = vmul.f32 %v2602, 1.442695
        %v2678 = vpow.pop %v2677
        %v2679 = vmul.f32 %v2603, 1.442695
        %v2680 = vpow.pop %v2679
        %v2681 = vmul.f32 %v2604, 1.442695
        %v2682 = vpow.pop %v2681
        %v2683 = vmul.f32 %v2605, 1.442695
        %v2684 = vpow.pop %v2683
        %v2685 = vmul.f32 %v2606, 1.442695
        %v2686 = vpow.pop %v2685
        %v2687 = vmul.f32 %v2607, 1.442695
        %v2688 = vpow.pop %v2687
        %v2689 = vmul.f32 %v2608, 1.442695
        %v2690 = vpow.pop %v2689
        %v2691 = vmul.f32 %v2609, 1.442695
        %v2692 = vpow.pop %v2691
        %v2693 = vmul.f32 %v2610, 1.442695
        %v2694 = vpow.pop %v2693
        %v2695 = vmul.f32 %v2611, 1.442695
        %v2696 = vpow.pop %v2695
        %v2697 = vmul.f32 %v2612, 1.442695
        %v2698 = vpow.pop %v2697
        %v2699 = vmul.f32 %v2613, 1.442695
        %v2700 = vpow.pop %v2699
        %v2701 = vmul.f32 %v2614, 1.442695
        %v2702 = vpow.pop %v2701
        %v2703 = vmul.f32 %v2615, 1.442695
        %v2704 = vpow.pop %v2703
        %v2705 = vmul.f32 %v2616, 1.442695
        %v2706 = vpow.pop %v2705
        %v2707 = vmul.f32 %v2617, 1.442695
        %v2708 = vpow.pop %v2707
        %v2709 = vmul.f32 %v2618, 1.442695
        %v2710 = vpow.pop %v2709
        %v2711 = vmul.f32 %v2619, 1.442695
        %v2712 = vpow.pop %v2711
        %v2713 = vmul.f32 %v2620, 1.442695
        %v2714 = vpow.pop %v2713
        %v2715 = vmul.f32 %v2621, 1.442695
        %v2716 = vpow.pop %v2715
        %v2717 = vmul.f32 %v2622, 1.442695
        %v2718 = vpow.pop %v2717
        %v2719 = vmul.f32 %v2623, 1.442695
        %v2720 = vpow.pop %v2719
        %v2721 = vmul.f32 %v2624, 1.442695
        %v2722 = vpow.pop %v2721
        %v2723 = vmul.f32 %v2625, 1.442695
        %v2724 = vpow.pop %v2723
        %v2725 = vmul.f32 %v2626, 1.442695
        %v2726 = vpow.pop %v2725
        %v2727 = vmul.f32 %v2627, 1.442695
        %v2728 = vpow.pop %v2727
        %v2729 = vmul.f32 %v2628, 1.442695
        %v2730 = vpow.pop %v2729
        %v2731 = vmul.f32 %v2629, 1.442695
        %v2732 = vpow.pop %v2731
        %v2733 = vmul.f32 %v2630, 1.442695
        %v2734 = vpow.pop %v2733
        %v2735 = vmul.f32 %v2631, 1.442695
        %v2736 = vpow.pop %v2735
        %v2737 = vmul.f32 %v2632, 1.442695
        %v2738 = vpow.pop %v2737
        %v2739 = vmul.f32 %v2633, 1.442695
        %v2740 = vpow.pop %v2739
        %v2741 = vmul.f32 %v2634, 1.442695
        %v2742 = vpow.pop %v2741
        %v2743 = vmul.f32 %v2635, 1.442695
        %v2744 = vpow.pop %v2743
        %v2745 = vmul.f32 %v2636, 1.442695
        %v2746 = vpow.pop %v2745
        %v2747 = vmul.f32 %v2637, 1.442695
        %v2748 = vpow.pop %v2747
        %v2749 = vmul.f32 %v2638, 1.442695
        %v2750 = vpow.pop %v2749
        %v2751 = vmul.f32 %v2639, 1.442695
        %v2752 = vpow.pop %v2751
        %v2753 = vmul.f32 %v2640, 1.442695
        %v2754 = vpow.pop %v2753
        %v2755 = vmul.f32 %v2641, 1.442695
        %v2756 = vpow.pop %v2755
        %v2757 = vmul.f32 %v2642, 1.442695
        %v2758 = vpow.pop %v2757
        %v2759 = vmul.f32 %v2643, 1.442695
        %v2760 = vpow.pop %v2759
        %v2761 = vmul.f32 %v2644, 1.442695
        %v2762 = vpow.pop %v2761
        %v2763 = vmul.f32 %v2645, 1.442695
        %v2764 = vpow.pop %v2763
        %v2765 = vmul.f32 %v2646, 1.442695
        %v2766 = vpow.pop %v2765
        %v2767 = vmul.f32 %v2647, 1.442695
        %v2768 = vpow.pop %v2767
        %v2769 = vmul.f32 %v2648, 1.442695
        %v2770 = vpow.pop %v2769
        %v2771 = vmul.f32 %v2649, 1.442695
        %v2772 = vpow.pop %v2771
        %v2773 = vmul.f32 %v2650, 1.442695
        %v2774 = vpow.pop %v2773
        %v2775 = vmul.f32 %v2651, 1.442695
        %v2776 = vpow.pop %v2775
        %v2777 = vmul.f32 %v2652, 1.442695
        %v2778 = vpow.pop %v2777
        %v2779 = vmul.f32 %v2653, 1.442695
        %v2780 = vpow.pop %v2779
        %v2781 = vmul.f32 %v2654, 1.442695
        %v2782 = vpow.pop %v2781
        %v2783 = vadd.f32 %v2656, %v2658
        %2784 = vadd.xlane.f32.xlu0 %v2783
        %v2785 = vpop.xlane.xlu0 %2784
        %v2786 = vadd.f32 %v2660, %v2662
        %2787 = vadd.xlane.f32.xlu0 %v2786
        %v2788 = vpop.xlane.xlu0 %2787
        %v2789 = vadd.f32 %v2664, %v2666
        %2790 = vadd.xlane.f32.xlu0 %v2789
        %v2791 = vpop.xlane.xlu0 %2790
        %v2792 = vadd.f32 %v2668, %v2670
        %2793 = vadd.xlane.f32.xlu0 %v2792
        %v2794 = vpop.xlane.xlu0 %2793
        %v2795 = vadd.f32 %v2672, %v2674
        %2796 = vadd.xlane.f32.xlu0 %v2795
        %v2797 = vpop.xlane.xlu0 %2796
        %v2798 = vadd.f32 %v2676, %v2678
        %2799 = vadd.xlane.f32.xlu0 %v2798
        %v2800 = vpop.xlane.xlu0 %2799
        %v2801 = vadd.f32 %v2680, %v2682
        %2802 = vadd.xlane.f32.xlu0 %v2801
        %v2803 = vpop.xlane.xlu0 %2802
        %v2804 = vadd.f32 %v2684, %v2686
        %2805 = vadd.xlane.f32.xlu0 %v2804
        %v2806 = vpop.xlane.xlu0 %2805
        %v2807 = vadd.f32 %v2688, %v2690
        %2808 = vadd.xlane.f32.xlu0 %v2807
        %v2809 = vpop.xlane.xlu0 %2808
        %v2810 = vadd.f32 %v2692, %v2694
        %2811 = vadd.xlane.f32.xlu0 %v2810
        %v2812 = vpop.xlane.xlu0 %2811
        %v2813 = vadd.f32 %v2696, %v2698
        %2814 = vadd.xlane.f32.xlu0 %v2813
        %v2815 = vpop.xlane.xlu0 %2814
        %v2816 = vadd.f32 %v2700, %v2702
        %2817 = vadd.xlane.f32.xlu0 %v2816
        %v2818 = vpop.xlane.xlu0 %2817
        %v2819 = vadd.f32 %v2704, %v2706
        %2820 = vadd.xlane.f32.xlu0 %v2819
        %v2821 = vpop.xlane.xlu0 %2820
        %v2822 = vadd.f32 %v2708, %v2710
        %2823 = vadd.xlane.f32.xlu0 %v2822
        %v2824 = vpop.xlane.xlu0 %2823
        %v2825 = vadd.f32 %v2712, %v2714
        %2826 = vadd.xlane.f32.xlu0 %v2825
        %v2827 = vpop.xlane.xlu0 %2826
        %v2828 = vadd.f32 %v2716, %v2718
        %2829 = vadd.xlane.f32.xlu0 %v2828
        %v2830 = vpop.xlane.xlu0 %2829
        %v2831 = vadd.f32 %v2720, %v2722
        %2832 = vadd.xlane.f32.xlu0 %v2831
        %v2833 = vpop.xlane.xlu0 %2832
        %v2834 = vadd.f32 %v2724, %v2726
        %2835 = vadd.xlane.f32.xlu0 %v2834
        %v2836 = vpop.xlane.xlu0 %2835
        %v2837 = vadd.f32 %v2728, %v2730
        %2838 = vadd.xlane.f32.xlu0 %v2837
        %v2839 = vpop.xlane.xlu0 %2838
        %v2840 = vadd.f32 %v2732, %v2734
        %2841 = vadd.xlane.f32.xlu0 %v2840
        %v2842 = vpop.xlane.xlu0 %2841
        %v2843 = vadd.f32 %v2736, %v2738
        %2844 = vadd.xlane.f32.xlu0 %v2843
        %v2845 = vpop.xlane.xlu0 %2844
        %v2846 = vadd.f32 %v2740, %v2742
        %2847 = vadd.xlane.f32.xlu0 %v2846
        %v2848 = vpop.xlane.xlu0 %2847
        %v2849 = vadd.f32 %v2744, %v2746
        %2850 = vadd.xlane.f32.xlu0 %v2849
        %v2851 = vpop.xlane.xlu0 %2850
        %v2852 = vadd.f32 %v2748, %v2750
        %2853 = vadd.xlane.f32.xlu0 %v2852
        %v2854 = vpop.xlane.xlu0 %2853
        %v2855 = vadd.f32 %v2752, %v2754
        %2856 = vadd.xlane.f32.xlu0 %v2855
        %v2857 = vpop.xlane.xlu0 %2856
        %v2858 = vadd.f32 %v2756, %v2758
        %2859 = vadd.xlane.f32.xlu0 %v2858
        %v2860 = vpop.xlane.xlu0 %2859
        %v2861 = vadd.f32 %v2760, %v2762
        %2862 = vadd.xlane.f32.xlu0 %v2861
        %v2863 = vpop.xlane.xlu0 %2862
        %v2864 = vadd.f32 %v2764, %v2766
        %2865 = vadd.xlane.f32.xlu0 %v2864
        %v2866 = vpop.xlane.xlu0 %2865
        %v2867 = vadd.f32 %v2768, %v2770
        %2868 = vadd.xlane.f32.xlu0 %v2867
        %v2869 = vpop.xlane.xlu0 %2868
        %v2870 = vadd.f32 %v2772, %v2774
        %2871 = vadd.xlane.f32.xlu0 %v2870
        %v2872 = vpop.xlane.xlu0 %2871
        %v2873 = vadd.f32 %v2776, %v2778
        %2874 = vadd.xlane.f32.xlu0 %v2873
        %v2875 = vpop.xlane.xlu0 %2874
        %v2876 = vadd.f32 %v2780, %v2782
        %2877 = vadd.xlane.f32.xlu0 %v2876
        %v2878 = vpop.xlane.xlu0 %2877
        %v2879 = vpack.c.bf16 %v2660, %v2656
        %v2880 = vpack.c.bf16 %v2662, %v2658
        %v2881 = vpack.c.bf16 %v2668, %v2664
        %v2882 = vpack.c.bf16 %v2670, %v2666
        %v2883 = vpack.c.bf16 %v2676, %v2672
        %v2884 = vpack.c.bf16 %v2678, %v2674
        %v2885 = vpack.c.bf16 %v2684, %v2680
        %v2886 = vpack.c.bf16 %v2686, %v2682
        %v2887 = vpack.c.bf16 %v2692, %v2688
        %v2888 = vpack.c.bf16 %v2694, %v2690
        %v2889 = vpack.c.bf16 %v2700, %v2696
        %v2890 = vpack.c.bf16 %v2702, %v2698
        %v2891 = vpack.c.bf16 %v2708, %v2704
        %v2892 = vpack.c.bf16 %v2710, %v2706
        %v2893 = vpack.c.bf16 %v2716, %v2712
        %v2894 = vpack.c.bf16 %v2718, %v2714
        %v2895 = vpack.c.bf16 %v2724, %v2720
        %v2896 = vpack.c.bf16 %v2726, %v2722
        %v2897 = vpack.c.bf16 %v2732, %v2728
        %v2898 = vpack.c.bf16 %v2734, %v2730
        %v2899 = vpack.c.bf16 %v2740, %v2736
        %v2900 = vpack.c.bf16 %v2742, %v2738
        %v2901 = vpack.c.bf16 %v2748, %v2744
        %v2902 = vpack.c.bf16 %v2750, %v2746
        %v2903 = vpack.c.bf16 %v2756, %v2752
        %v2904 = vpack.c.bf16 %v2758, %v2754
        %v2905 = vpack.c.bf16 %v2764, %v2760
        %v2906 = vpack.c.bf16 %v2766, %v2762
        %v2907 = vpack.c.bf16 %v2772, %v2768
        %v2908 = vpack.c.bf16 %v2774, %v2770
        %v2909 = vpack.c.bf16 %v2780, %v2776
        %v2910 = vpack.c.bf16 %v2782, %v2778
        %2911 = vmatprep.subr.bf16.mxu0 0
        %2912 = vmatpush1.bf16.msra.mxu0 %v2237
        %2913 = vmatprep.subr.bf16.mxu0 0
        %2914 = vmatpush1.bf16.msra.mxu0 %v2238
        %2915 = vmatprep.subr.bf16.mxu0 0
        %2916 = vmatpush1.bf16.msra.mxu0 %v2239
        %2917 = vmatprep.subr.bf16.mxu0 0
        %2918 = vmatpush1.bf16.msra.mxu0 %v2240
        %2919 = vmatprep.subr.bf16.mxu0 0
        %2920 = vmatpush1.bf16.msra.mxu0 %v2241
        %2921 = vmatprep.subr.bf16.mxu0 0
        %2922 = vmatpush1.bf16.msra.mxu0 %v2242
        %2923 = vmatprep.subr.bf16.mxu0 0
        %2924 = vmatpush1.bf16.msra.mxu0 %v2243
        %2925 = vmatprep.subr.bf16.mxu0 0
        %2926 = vmatpush1.bf16.msra.mxu0 %v2244
        %2927 = vmatprep.subr.bf16.mxu0 0
        %2928 = vmatpush1.bf16.msra.mxu0 %v2245
        %2929 = vmatprep.subr.bf16.mxu0 0
        %2930 = vmatpush1.bf16.msra.mxu0 %v2246
        %2931 = vmatprep.subr.bf16.mxu0 0
        %2932 = vmatpush1.bf16.msra.mxu0 %v2247
        %2933 = vmatprep.subr.bf16.mxu0 0
        %2934 = vmatpush1.bf16.msra.mxu0 %v2248
        %2935 = vmatprep.subr.bf16.mxu0 0
        %2936 = vmatpush1.bf16.msra.mxu0 %v2249
        %2937 = vmatprep.subr.bf16.mxu0 0
        %2938 = vmatpush1.bf16.msra.mxu0 %v2250
        %2939 = vmatprep.subr.bf16.mxu0 0
        %2940 = vmatpush1.bf16.msra.mxu0 %v2251
        %2941 = vmatprep.subr.bf16.mxu0 0
        %2942 = vmatpush1.bf16.msra.mxu0 %v2252
        %2943 = vmatprep.mubr.bf16.mxu0 %v2880
        %2944 = vmatmul.mubr.bf16.gmra.mrb[0].mxu0 %v2879
        %v2945 = vpop.f32.mrb[0].mxu0
        %v2946 = vadd.f32 0.0, %v2945
        %v2947 = vpop.f32.mrb[0].mxu0
        %v2948 = vpop.f32.mrb[0].mxu0
        %v2949 = vadd.f32 0.0, %v2948
        %v2950 = vpop.f32.mrb[0].mxu0
        %2951 = vmatprep.mubr.bf16.mxu0 %v2882
        %2952 = vmatmul.mubr.bf16.gmra.mrb[0].mxu0 %v2881
        %v2953 = vpop.f32.mrb[0].mxu0
        %v2954 = vadd.f32 0.0, %v2953
        %v2955 = vpop.f32.mrb[0].mxu0
        %v2956 = vpop.f32.mrb[0].mxu0
        %v2957 = vadd.f32 0.0, %v2956
        %v2958 = vpop.f32.mrb[0].mxu0
        %2959 = vmatprep.mubr.bf16.mxu0 %v2884
        %2960 = vmatmul.mubr.bf16.gmra.mrb[0].mxu0 %v2883
        %v2961 = vpop.f32.mrb[0].mxu0
        %v2962 = vadd.f32 0.0, %v2961
        %v2963 = vpop.f32.mrb[0].mxu0
        %v2964 = vpop.f32.mrb[0].mxu0
        %v2965 = vadd.f32 0.0, %v2964
        %v2966 = vpop.f32.mrb[0].mxu0
        %2967 = vmatprep.mubr.bf16.mxu0 %v2886
        %2968 = vmatmul.mubr.bf16.gmra.mrb[0].mxu0 %v2885
        %v2969 = vpop.f32.mrb[0].mxu0
        %v2970 = vadd.f32 0.0, %v2969
        %v2971 = vpop.f32.mrb[0].mxu0
        %v2972 = vpop.f32.mrb[0].mxu0
        %v2973 = vadd.f32 0.0, %v2972
        %v2974 = vpop.f32.mrb[0].mxu0
        %2975 = vmatprep.mubr.bf16.mxu0 %v2888
        %2976 = vmatmul.mubr.bf16.gmra.mrb[0].mxu0 %v2887
        %v2977 = vpop.f32.mrb[0].mxu0
        %v2978 = vadd.f32 0.0, %v2977
        %v2979 = vpop.f32.mrb[0].mxu0
        %v2980 = vpop.f32.mrb[0].mxu0
        %v2981 = vadd.f32 0.0, %v2980
        %v2982 = vpop.f32.mrb[0].mxu0
        %2983 = vmatprep.mubr.bf16.mxu0 %v2890
        %2984 = vmatmul.mubr.bf16.gmra.mrb[0].mxu0 %v2889
        %v2985 = vpop.f32.mrb[0].mxu0
        %v2986 = vadd.f32 0.0, %v2985
        %v2987 = vpop.f32.mrb[0].mxu0
        %v2988 = vpop.f32.mrb[0].mxu0
        %v2989 = vadd.f32 0.0, %v2988
        %v2990 = vpop.f32.mrb[0].mxu0
        %2991 = vmatprep.mubr.bf16.mxu0 %v2892
        %2992 = vmatmul.mubr.bf16.gmra.mrb[0].mxu0 %v2891
        %v2993 = vpop.f32.mrb[0].mxu0
        %v2994 = vadd.f32 0.0, %v2993
        %v2995 = vpop.f32.mrb[0].mxu0
        %v2996 = vpop.f32.mrb[0].mxu0
        %v2997 = vadd.f32 0.0, %v2996
        %v2998 = vpop.f32.mrb[0].mxu0
        %2999 = vmatprep.mubr.bf16.mxu0 %v2894
        %3000 = vmatmul.mubr.bf16.gmra.mrb[0].mxu0 %v2893
        %v3001 = vpop.f32.mrb[0].mxu0
        %v3002 = vadd.f32 0.0, %v3001
        %v3003 = vpop.f32.mrb[0].mxu0
        %v3004 = vpop.f32.mrb[0].mxu0
        %v3005 = vadd.f32 0.0, %v3004
        %v3006 = vpop.f32.mrb[0].mxu0
        %3007 = vmatprep.mubr.bf16.mxu0 %v2896
        %3008 = vmatmul.mubr.bf16.gmra.mrb[0].mxu0 %v2895
        %v3009 = vpop.f32.mrb[0].mxu0
        %v3010 = vadd.f32 0.0, %v3009
        %v3011 = vpop.f32.mrb[0].mxu0
        %v3012 = vpop.f32.mrb[0].mxu0
        %v3013 = vadd.f32 0.0, %v3012
        %v3014 = vpop.f32.mrb[0].mxu0
        %3015 = vmatprep.mubr.bf16.mxu0 %v2898
        %3016 = vmatmul.mubr.bf16.gmra.mrb[0].mxu0 %v2897
        %v3017 = vpop.f32.mrb[0].mxu0
        %v3018 = vadd.f32 0.0, %v3017
        %v3019 = vpop.f32.mrb[0].mxu0
        %v3020 = vpop.f32.mrb[0].mxu0
        %v3021 = vadd.f32 0.0, %v3020
        %v3022 = vpop.f32.mrb[0].mxu0
        %3023 = vmatprep.mubr.bf16.mxu0 %v2900
        %3024 = vmatmul.mubr.bf16.gmra.mrb[0].mxu0 %v2899
        %v3025 = vpop.f32.mrb[0].mxu0
        %v3026 = vadd.f32 0.0, %v3025
        %v3027 = vpop.f32.mrb[0].mxu0
        %v3028 = vpop.f32.mrb[0].mxu0
        %v3029 = vadd.f32 0.0, %v3028
        %v3030 = vpop.f32.mrb[0].mxu0
        %3031 = vmatprep.mubr.bf16.mxu0 %v2902
        %3032 = vmatmul.mubr.bf16.gmra.mrb[0].mxu0 %v2901
        %v3033 = vpop.f32.mrb[0].mxu0
        %v3034 = vadd.f32 0.0, %v3033
        %v3035 = vpop.f32.mrb[0].mxu0
        %v3036 = vpop.f32.mrb[0].mxu0
        %v3037 = vadd.f32 0.0, %v3036
        %v3038 = vpop.f32.mrb[0].mxu0
        %3039 = vmatprep.mubr.bf16.mxu0 %v2904
        %3040 = vmatmul.mubr.bf16.gmra.mrb[0].mxu0 %v2903
        %v3041 = vpop.f32.mrb[0].mxu0
        %v3042 = vadd.f32 0.0, %v3041
        %v3043 = vpop.f32.mrb[0].mxu0
        %v3044 = vpop.f32.mrb[0].mxu0
        %v3045 = vadd.f32 0.0, %v3044
        %v3046 = vpop.f32.mrb[0].mxu0
        %3047 = vmatprep.mubr.bf16.mxu0 %v2906
        %3048 = vmatmul.mubr.bf16.gmra.mrb[0].mxu0 %v2905
        %v3049 = vpop.f32.mrb[0].mxu0
        %v3050 = vadd.f32 0.0, %v3049
        %v3051 = vpop.f32.mrb[0].mxu0
        %v3052 = vpop.f32.mrb[0].mxu0
        %v3053 = vadd.f32 0.0, %v3052
        %v3054 = vpop.f32.mrb[0].mxu0
        %3055 = vmatprep.mubr.bf16.mxu0 %v2908
        %3056 = vmatmul.mubr.bf16.gmra.mrb[0].mxu0 %v2907
        %v3057 = vpop.f32.mrb[0].mxu0
        %v3058 = vadd.f32 0.0, %v3057
        %v3059 = vpop.f32.mrb[0].mxu0
        %v3060 = vpop.f32.mrb[0].mxu0
        %v3061 = vadd.f32 0.0, %v3060
        %v3062 = vpop.f32.mrb[0].mxu0
        %3063 = vmatprep.mubr.bf16.mxu0 %v2910
        %3064 = vmatmul.mubr.bf16.gmra.mrb[0].mxu0 %v2909
        %v3065 = vpop.f32.mrb[0].mxu0
        %v3066 = vadd.f32 0.0, %v3065
        %v3067 = vpop.f32.mrb[0].mxu0
        %v3068 = vpop.f32.mrb[0].mxu0
        %v3069 = vadd.f32 0.0, %v3068
        %v3070 = vpop.f32.mrb[0].mxu0
        %3071 = vdwg.mxu0
        %v3072 = vrcp.pop %v2785
        %v3073 = vrcp.pop %v2788
        %v3074 = vrcp.pop %v2791
        %v3075 = vrcp.pop %v2794
        %v3076 = vrcp.pop %v2797
        %v3077 = vrcp.pop %v2800
        %v3078 = vrcp.pop %v2803
        %v3079 = vrcp.pop %v2806
        %v3080 = vrcp.pop %v2809
        %v3081 = vrcp.pop %v2812
        %v3082 = vrcp.pop %v2815
        %v3083 = vrcp.pop %v2818
        %v3084 = vrcp.pop %v2821
        %v3085 = vrcp.pop %v2824
        %v3086 = vrcp.pop %v2827
        %v3087 = vrcp.pop %v2830
        %v3088 = vrcp.pop %v2833
        %v3089 = vrcp.pop %v2836
        %v3090 = vrcp.pop %v2839
        %v3091 = vrcp.pop %v2842
        %v3092 = vrcp.pop %v2845
        %v3093 = vrcp.pop %v2848
        %v3094 = vrcp.pop %v2851
        %v3095 = vrcp.pop %v2854
        %v3096 = vrcp.pop %v2857
        %v3097 = vrcp.pop %v2860
        %v3098 = vrcp.pop %v2863
        %v3099 = vrcp.pop %v2866
        %v3100 = vrcp.pop %v2869
        %v3101 = vrcp.pop %v2872
        %v3102 = vrcp.pop %v2875
        %v3103 = vrcp.pop %v2878
        %v3104 = vmul.f32 %v2946, %v3072
        %v3105 = vmul.f32 %v2949, %v3073
        %v3106 = vmul.f32 %v2954, %v3074
        %v3107 = vmul.f32 %v2957, %v3075
        %v3108 = vmul.f32 %v2962, %v3076
        %v3109 = vmul.f32 %v2965, %v3077
        %v3110 = vmul.f32 %v2970, %v3078
        %v3111 = vmul.f32 %v2973, %v3079
        %v3112 = vmul.f32 %v2978, %v3080
        %v3113 = vmul.f32 %v2981, %v3081
        %v3114 = vmul.f32 %v2986, %v3082
        %v3115 = vmul.f32 %v2989, %v3083
        %v3116 = vmul.f32 %v2994, %v3084
        %v3117 = vmul.f32 %v2997, %v3085
        %v3118 = vmul.f32 %v3002, %v3086
        %v3119 = vmul.f32 %v3005, %v3087
        %v3120 = vmul.f32 %v3010, %v3088
        %v3121 = vmul.f32 %v3013, %v3089
        %v3122 = vmul.f32 %v3018, %v3090
        %v3123 = vmul.f32 %v3021, %v3091
        %v3124 = vmul.f32 %v3026, %v3092
        %v3125 = vmul.f32 %v3029, %v3093
        %v3126 = vmul.f32 %v3034, %v3094
        %v3127 = vmul.f32 %v3037, %v3095
        %v3128 = vmul.f32 %v3042, %v3096
        %v3129 = vmul.f32 %v3045, %v3097
        %v3130 = vmul.f32 %v3050, %v3098
        %v3131 = vmul.f32 %v3053, %v3099
        %v3132 = vmul.f32 %v3058, %v3100
        %v3133 = vmul.f32 %v3061, %v3101
        %v3134 = vmul.f32 %v3066, %v3102
        %v3135 = vmul.f32 %v3069, %v3103
        %3136 = vst.msk [vmem:[#allocation5] sm:$0xff] %vm2253, %v3104
        %3137 = vst.msk [vmem:[#allocation5 + $0x8] sm:$0xff] %vm2253, %v3105
        %3138 = vst.msk [vmem:[#allocation5 + $0x10] sm:$0xff] %vm2253, %v3106
        %3139 = vst.msk [vmem:[#allocation5 + $0x18] sm:$0xff] %vm2253, %v3107
        %3140 = vst.msk [vmem:[#allocation5 + $0x20] sm:$0xff] %vm2253, %v3108
        %3141 = vst.msk [vmem:[#allocation5 + $0x28] sm:$0xff] %vm2253, %v3109
        %3142 = vst.msk [vmem:[#allocation5 + $0x30] sm:$0xff] %vm2253, %v3110
        %3143 = vst.msk [vmem:[#allocation5 + $0x38] sm:$0xff] %vm2253, %v3111
        %3144 = vst.msk [vmem:[#allocation5 + $0x40] sm:$0xff] %vm2253, %v3112
        %3145 = vst.msk [vmem:[#allocation5 + $0x48] sm:$0xff] %vm2253, %v3113
        %3146 = vst.msk [vmem:[#allocation5 + $0x50] sm:$0xff] %vm2253, %v3114
        %3147 = vst.msk [vmem:[#allocation5 + $0x58] sm:$0xff] %vm2253, %v3115
        %3148 = vst.msk [vmem:[#allocation5 + $0x60] sm:$0xff] %vm2253, %v3116
        %3149 = vst.msk [vmem:[#allocation5 + $0x68] sm:$0xff] %vm2253, %v3117
        %3150 = vst.msk [vmem:[#allocation5 + $0x70] sm:$0xff] %vm2253, %v3118
        %3151 = vst.msk [vmem:[#allocation5 + $0x78] sm:$0xff] %vm2253, %v3119
        %3152 = vst.msk [vmem:[#allocation5 + $0x80] sm:$0xff] %vm2253, %v3120
        %3153 = vst.msk [vmem:[#allocation5 + $0x88] sm:$0xff] %vm2253, %v3121
        %3154 = vst.msk [vmem:[#allocation5 + $0x90] sm:$0xff] %vm2253, %v3122
        %3155 = vst.msk [vmem:[#allocation5 + $0x98] sm:$0xff] %vm2253, %v3123
        %3156 = vst.msk [vmem:[#allocation5 + $0xa0] sm:$0xff] %vm2253, %v3124
        %3157 = vst.msk [vmem:[#allocation5 + $0xa8] sm:$0xff] %vm2253, %v3125
        %3158 = vst.msk [vmem:[#allocation5 + $0xb0] sm:$0xff] %vm2253, %v3126
        %3159 = vst.msk [vmem:[#allocation5 + $0xb8] sm:$0xff] %vm2253, %v3127
        %3160 = vst.msk [vmem:[#allocation5 + $0xc0] sm:$0xff] %vm2253, %v3128
        %3161 = vst.msk [vmem:[#allocation5 + $0xc8] sm:$0xff] %vm2253, %v3129
        %3162 = vst.msk [vmem:[#allocation5 + $0xd0] sm:$0xff] %vm2253, %v3130
        %3163 = vst.msk [vmem:[#allocation5 + $0xd8] sm:$0xff] %vm2253, %v3131
        %3164 = vst.msk [vmem:[#allocation5 + $0xe0] sm:$0xff] %vm2253, %v3132
        %3165 = vst.msk [vmem:[#allocation5 + $0xe8] sm:$0xff] %vm2253, %v3133
        %3166 = vst.msk [vmem:[#allocation5 + $0xf0] sm:$0xff] %vm2253, %v3134
        %3167 = vst.msk [vmem:[#allocation5 + $0xf8] sm:$0xff] %vm2253, %v3135
        %v3168 = vld [vmem:[%s2216] sm:$0xff]
        %v3169 = vld [vmem:[%s2216 + $0x8] sm:$0xff]
        %v3170 = vld [vmem:[%s2216 + $0x10] sm:$0xff]
        %v3171 = vld [vmem:[%s2216 + $0x18] sm:$0xff]
        %v3172 = vld [vmem:[%s2216 + $0x20] sm:$0xff]
        %v3173 = vld [vmem:[%s2216 + $0x28] sm:$0xff]
        %v3174 = vld [vmem:[%s2216 + $0x30] sm:$0xff]
        %v3175 = vld [vmem:[%s2216 + $0x38] sm:$0xff]
        %v3176 = vld [vmem:[%s2216 + $0x40] sm:$0xff]
        %v3177 = vld [vmem:[%s2216 + $0x48] sm:$0xff]
        %v3178 = vld [vmem:[%s2216 + $0x50] sm:$0xff]
        %v3179 = vld [vmem:[%s2216 + $0x58] sm:$0xff]
        %v3180 = vld [vmem:[%s2216 + $0x60] sm:$0xff]
        %v3181 = vld [vmem:[%s2216 + $0x68] sm:$0xff]
        %v3182 = vld [vmem:[%s2216 + $0x70] sm:$0xff]
        %v3183 = vld [vmem:[%s2216 + $0x78] sm:$0xff]
        %v3184 = vld [vmem:[#allocation3 + $0x20] sm:$0xff]
        %v3185 = vld [vmem:[#allocation3 + $0x28] sm:$0xff]
        %v3186 = vld [vmem:[#allocation3 + $0x30] sm:$0xff]
        %v3187 = vld [vmem:[#allocation3 + $0x38] sm:$0xff]
        %v3188 = vld [vmem:[#allocation4] sm:$0xff]
        %v3189 = vld [vmem:[#allocation4 + $0x8] sm:$0xff]
        %v3190 = vld [vmem:[#allocation4 + $0x10] sm:$0xff]
        %v3191 = vld [vmem:[#allocation4 + $0x18] sm:$0xff]
        %v3192 = vld [vmem:[#allocation4 + $0x20] sm:$0xff]
        %v3193 = vld [vmem:[#allocation4 + $0x28] sm:$0xff]
        %v3194 = vld [vmem:[#allocation4 + $0x30] sm:$0xff]
        %v3195 = vld [vmem:[#allocation4 + $0x38] sm:$0xff]
        %v3196 = vld [vmem:[#allocation4 + $0x40] sm:$0xff]
        %v3197 = vld [vmem:[#allocation4 + $0x48] sm:$0xff]
        %v3198 = vld [vmem:[#allocation4 + $0x50] sm:$0xff]
        %v3199 = vld [vmem:[#allocation4 + $0x58] sm:$0xff]
        %v3200 = vld [vmem:[#allocation4 + $0x60] sm:$0xff]
        %v3201 = vld [vmem:[#allocation4 + $0x68] sm:$0xff]
        %v3202 = vld [vmem:[#allocation4 + $0x70] sm:$0xff]
        %v3203 = vld [vmem:[#allocation4 + $0x78] sm:$0xff]
        %3220 = vrot.lane.b32.xlu0 %v3168, 96
        %v3221 = vpop.permute.xlu0 %3220
        %3222 = vrot.lane.b32.xlu0 %v3169, 96
        %v3223 = vpop.permute.xlu0 %3222
        %3224 = vrot.lane.b32.xlu0 %v3170, 96
        %v3225 = vpop.permute.xlu0 %3224
        %3226 = vrot.lane.b32.xlu0 %v3171, 96
        %v3227 = vpop.permute.xlu0 %3226
        %3228 = vrot.lane.b32.xlu0 %v3172, 96
        %v3229 = vpop.permute.xlu0 %3228
        %3230 = vrot.lane.b32.xlu0 %v3173, 96
        %v3231 = vpop.permute.xlu0 %3230
        %3232 = vrot.lane.b32.xlu0 %v3174, 96
        %v3233 = vpop.permute.xlu0 %3232
        %3234 = vrot.lane.b32.xlu0 %v3175, 96
        %v3235 = vpop.permute.xlu0 %3234
        %3236 = vrot.lane.b32.xlu0 %v3176, 96
        %v3237 = vpop.permute.xlu0 %3236
        %3238 = vrot.lane.b32.xlu0 %v3177, 96
        %v3239 = vpop.permute.xlu0 %3238
        %3240 = vrot.lane.b32.xlu0 %v3178, 96
        %v3241 = vpop.permute.xlu0 %3240
        %3242 = vrot.lane.b32.xlu0 %v3179, 96
        %v3243 = vpop.permute.xlu0 %3242
        %3244 = vrot.lane.b32.xlu0 %v3180, 96
        %v3245 = vpop.permute.xlu0 %3244
        %3246 = vrot.lane.b32.xlu0 %v3181, 96
        %v3247 = vpop.permute.xlu0 %3246
        %3248 = vrot.lane.b32.xlu0 %v3182, 96
        %v3249 = vpop.permute.xlu0 %3248
        %3250 = vrot.lane.b32.xlu0 %v3183, 96
        %v3251 = vpop.permute.xlu0 %3250
        %v3253 = vsel %vm2253, %v3221, 0
        %v3256 = vsel %vm2253, %v3223, 0
        %v3259 = vsel %vm2253, %v3225, 0
        %v3262 = vsel %vm2253, %v3227, 0
        %v3265 = vsel %vm2253, %v3229, 0
        %v3268 = vsel %vm2253, %v3231, 0
        %v3271 = vsel %vm2253, %v3233, 0
        %v3274 = vsel %vm2253, %v3235, 0
        %v3277 = vsel %vm2253, %v3237, 0
        %v3280 = vsel %vm2253, %v3239, 0
        %v3283 = vsel %vm2253, %v3241, 0
        %v3286 = vsel %vm2253, %v3243, 0
        %v3289 = vsel %vm2253, %v3245, 0
        %v3292 = vsel %vm2253, %v3247, 0
        %v3295 = vsel %vm2253, %v3249, 0
        %v3298 = vsel %vm2253, %v3251, 0
        %3300 = vmatprep.subr.bf16.mxu0 %v3185
        %3301 = vmatpush1.bf16.msra.mxu0 %v3184
        %3302 = vmatprep.subr.bf16.mxu0 %v3187
        %3303 = vmatpush1.bf16.msra.mxu0 %v3186
        %3304 = vmatprep.subr.bf16.mxu0 0
        %3305 = vmatpush1.bf16.msra.mxu0 0
        %3306 = vmatprep.subr.bf16.mxu0 0
        %3307 = vmatpush1.bf16.msra.mxu0 0
        %3308 = vmatprep.subr.bf16.mxu0 0
        %3309 = vmatpush1.bf16.msra.mxu0 0
        %3310 = vmatprep.subr.bf16.mxu0 0
        %3311 = vmatpush1.bf16.msra.mxu0 0
        %3312 = vmatprep.subr.bf16.mxu0 0
        %3313 = vmatpush1.bf16.msra.mxu0 0
        %3314 = vmatprep.subr.bf16.mxu0 0
        %3315 = vmatpush1.bf16.msra.mxu0 0
        %3316 = vmatprep.subr.bf16.mxu0 0
        %3317 = vmatpush1.bf16.msra.mxu0 0
        %3318 = vmatprep.subr.bf16.mxu0 0
        %3319 = vmatpush1.bf16.msra.mxu0 0
        %3320 = vmatprep.subr.bf16.mxu0 0
        %3321 = vmatpush1.bf16.msra.mxu0 0
        %3322 = vmatprep.subr.bf16.mxu0 0
        %3323 = vmatpush1.bf16.msra.mxu0 0
        %3324 = vmatprep.subr.bf16.mxu0 0
        %3325 = vmatpush1.bf16.msra.mxu0 0
        %3326 = vmatprep.subr.bf16.mxu0 0
        %3327 = vmatpush1.bf16.msra.mxu0 0
        %3328 = vmatprep.subr.bf16.mxu0 0
        %3329 = vmatpush1.bf16.msra.mxu0 0
        %3330 = vmatprep.subr.bf16.mxu0 0
        %3331 = vmatpush1.bf16.msra.mxu0 0
        %3332 = vmatprep.mubr.bf16.mxu0 0
        %3333 = vmatmul.mubr.bf16.gmra.mrb[0].mxu0 %v3253
        %v3334 = vpop.f32.mrb[0].mxu0
        %v3335 = vadd.f32 0.0, %v3334
        %v3336 = vpop.f32.mrb[0].mxu0
        %v3337 = vadd.f32 0.0, %v3336
        %v3338 = vpop.f32.mrb[0].mxu0
        %v3339 = vadd.f32 0.0, %v3338
        %v3340 = vpop.f32.mrb[0].mxu0
        %v3341 = vadd.f32 0.0, %v3340
        %3342 = vmatprep.mubr.bf16.mxu0 0
        %3343 = vmatmul.mubr.bf16.gmra.mrb[0].mxu0 %v3256
        %v3344 = vpop.f32.mrb[0].mxu0
        %v3345 = vadd.f32 0.0, %v3344
        %v3346 = vpop.f32.mrb[0].mxu0
        %v3347 = vadd.f32 0.0, %v3346
        %v3348 = vpop.f32.mrb[0].mxu0
        %v3349 = vadd.f32 0.0, %v3348
        %v3350 = vpop.f32.mrb[0].mxu0
        %v3351 = vadd.f32 0.0, %v3350
        %3352 = vmatprep.mubr.bf16.mxu0 0
        %3353 = vmatmul.mubr.bf16.gmra.mrb[0].mxu0 %v3259
        %v3354 = vpop.f32.mrb[0].mxu0
        %v3355 = vadd.f32 0.0, %v3354
        %v3356 = vpop.f32.mrb[0].mxu0
        %v3357 = vadd.f32 0.0, %v3356
        %v3358 = vpop.f32.mrb[0].mxu0
        %v3359 = vadd.f32 0.0, %v3358
        %v3360 = vpop.f32.mrb[0].mxu0
        %v3361 = vadd.f32 0.0, %v3360
        %3362 = vmatprep.mubr.bf16.mxu0 0
        %3363 = vmatmul.mubr.bf16.gmra.mrb[0].mxu0 %v3262
        %v3364 = vpop.f32.mrb[0].mxu0
        %v3365 = vadd.f32 0.0, %v3364
        %v3366 = vpop.f32.mrb[0].mxu0
        %v3367 = vadd.f32 0.0, %v3366
        %v3368 = vpop.f32.mrb[0].mxu0
        %v3369 = vadd.f32 0.0, %v3368
        %v3370 = vpop.f32.mrb[0].mxu0
        %v3371 = vadd.f32 0.0, %v3370
        %3372 = vmatprep.mubr.bf16.mxu0 0
        %3373 = vmatmul.mubr.bf16.gmra.mrb[0].mxu0 %v3265
        %v3374 = vpop.f32.mrb[0].mxu0
        %v3375 = vadd.f32 0.0, %v3374
        %v3376 = vpop.f32.mrb[0].mxu0
        %v3377 = vadd.f32 0.0, %v3376
        %v3378 = vpop.f32.mrb[0].mxu0
        %v3379 = vadd.f32 0.0, %v3378
        %v3380 = vpop.f32.mrb[0].mxu0
        %v3381 = vadd.f32 0.0, %v3380
        %3382 = vmatprep.mubr.bf16.mxu0 0
        %3383 = vmatmul.mubr.bf16.gmra.mrb[0].mxu0 %v3268
        %v3384 = vpop.f32.mrb[0].mxu0
        %v3385 = vadd.f32 0.0, %v3384
        %v3386 = vpop.f32.mrb[0].mxu0
        %v3387 = vadd.f32 0.0, %v3386
        %v3388 = vpop.f32.mrb[0].mxu0
        %v3389 = vadd.f32 0.0, %v3388
        %v3390 = vpop.f32.mrb[0].mxu0
        %v3391 = vadd.f32 0.0, %v3390
        %3392 = vmatprep.mubr.bf16.mxu0 0
        %3393 = vmatmul.mubr.bf16.gmra.mrb[0].mxu0 %v3271
        %v3394 = vpop.f32.mrb[0].mxu0
        %v3395 = vadd.f32 0.0, %v3394
        %v3396 = vpop.f32.mrb[0].mxu0
        %v3397 = vadd.f32 0.0, %v3396
        %v3398 = vpop.f32.mrb[0].mxu0
        %v3399 = vadd.f32 0.0, %v3398
        %v3400 = vpop.f32.mrb[0].mxu0
        %v3401 = vadd.f32 0.0, %v3400
        %3402 = vmatprep.mubr.bf16.mxu0 0
        %3403 = vmatmul.mubr.bf16.gmra.mrb[0].mxu0 %v3274
        %v3404 = vpop.f32.mrb[0].mxu0
        %v3405 = vadd.f32 0.0, %v3404
        %v3406 = vpop.f32.mrb[0].mxu0
        %v3407 = vadd.f32 0.0, %v3406
        %v3408 = vpop.f32.mrb[0].mxu0
        %v3409 = vadd.f32 0.0, %v3408
        %v3410 = vpop.f32.mrb[0].mxu0
        %v3411 = vadd.f32 0.0, %v3410
        %3412 = vmatprep.mubr.bf16.mxu0 0
        %3413 = vmatmul.mubr.bf16.gmra.mrb[0].mxu0 %v3277
        %v3414 = vpop.f32.mrb[0].mxu0
        %v3415 = vadd.f32 0.0, %v3414
        %v3416 = vpop.f32.mrb[0].mxu0
        %v3417 = vadd.f32 0.0, %v3416
        %v3418 = vpop.f32.mrb[0].mxu0
        %v3419 = vadd.f32 0.0, %v3418
        %v3420 = vpop.f32.mrb[0].mxu0
        %v3421 = vadd.f32 0.0, %v3420
        %3422 = vmatprep.mubr.bf16.mxu0 0
        %3423 = vmatmul.mubr.bf16.gmra.mrb[0].mxu0 %v3280
        %v3424 = vpop.f32.mrb[0].mxu0
        %v3425 = vadd.f32 0.0, %v3424
        %v3426 = vpop.f32.mrb[0].mxu0
        %v3427 = vadd.f32 0.0, %v3426
        %v3428 = vpop.f32.mrb[0].mxu0
        %v3429 = vadd.f32 0.0, %v3428
        %v3430 = vpop.f32.mrb[0].mxu0
        %v3431 = vadd.f32 0.0, %v3430
        %3432 = vmatprep.mubr.bf16.mxu0 0
        %3433 = vmatmul.mubr.bf16.gmra.mrb[0].mxu0 %v3283
        %v3434 = vpop.f32.mrb[0].mxu0
        %v3435 = vadd.f32 0.0, %v3434
        %v3436 = vpop.f32.mrb[0].mxu0
        %v3437 = vadd.f32 0.0, %v3436
        %v3438 = vpop.f32.mrb[0].mxu0
        %v3439 = vadd.f32 0.0, %v3438
        %v3440 = vpop.f32.mrb[0].mxu0
        %v3441 = vadd.f32 0.0, %v3440
        %3442 = vmatprep.mubr.bf16.mxu0 0
        %3443 = vmatmul.mubr.bf16.gmra.mrb[0].mxu0 %v3286
        %v3444 = vpop.f32.mrb[0].mxu0
        %v3445 = vadd.f32 0.0, %v3444
        %v3446 = vpop.f32.mrb[0].mxu0
        %v3447 = vadd.f32 0.0, %v3446
        %v3448 = vpop.f32.mrb[0].mxu0
        %v3449 = vadd.f32 0.0, %v3448
        %v3450 = vpop.f32.mrb[0].mxu0
        %v3451 = vadd.f32 0.0, %v3450
        %3452 = vmatprep.mubr.bf16.mxu0 0
        %3453 = vmatmul.mubr.bf16.gmra.mrb[0].mxu0 %v3289
        %v3454 = vpop.f32.mrb[0].mxu0
        %v3455 = vadd.f32 0.0, %v3454
        %v3456 = vpop.f32.mrb[0].mxu0
        %v3457 = vadd.f32 0.0, %v3456
        %v3458 = vpop.f32.mrb[0].mxu0
        %v3459 = vadd.f32 0.0, %v3458
        %v3460 = vpop.f32.mrb[0].mxu0
        %v3461 = vadd.f32 0.0, %v3460
        %3462 = vmatprep.mubr.bf16.mxu0 0
        %3463 = vmatmul.mubr.bf16.gmra.mrb[0].mxu0 %v3292
        %v3464 = vpop.f32.mrb[0].mxu0
        %v3465 = vadd.f32 0.0, %v3464
        %v3466 = vpop.f32.mrb[0].mxu0
        %v3467 = vadd.f32 0.0, %v3466
        %v3468 = vpop.f32.mrb[0].mxu0
        %v3469 = vadd.f32 0.0, %v3468
        %v3470 = vpop.f32.mrb[0].mxu0
        %v3471 = vadd.f32 0.0, %v3470
        %3472 = vmatprep.mubr.bf16.mxu0 0
        %3473 = vmatmul.mubr.bf16.gmra.mrb[0].mxu0 %v3295
        %v3474 = vpop.f32.mrb[0].mxu0
        %v3475 = vadd.f32 0.0, %v3474
        %v3476 = vpop.f32.mrb[0].mxu0
        %v3477 = vadd.f32 0.0, %v3476
        %v3478 = vpop.f32.mrb[0].mxu0
        %v3479 = vadd.f32 0.0, %v3478
        %v3480 = vpop.f32.mrb[0].mxu0
        %v3481 = vadd.f32 0.0, %v3480
        %3482 = vmatprep.mubr.bf16.mxu0 0
        %3483 = vmatmul.mubr.bf16.gmra.mrb[0].mxu0 %v3298
        %v3484 = vpop.f32.mrb[0].mxu0
        %v3485 = vadd.f32 0.0, %v3484
        %v3486 = vpop.f32.mrb[0].mxu0
        %v3487 = vadd.f32 0.0, %v3486
        %v3488 = vpop.f32.mrb[0].mxu0
        %v3489 = vadd.f32 0.0, %v3488
        %v3490 = vpop.f32.mrb[0].mxu0
        %v3491 = vadd.f32 0.0, %v3490
        %3492 = vdwg.mxu0
        %v3493 = vmax.f32 %v3335, %v3337
        %3494 = vmax.xlane.f32.xlu0 %v3493
        %v3495 = vpop.xlane.xlu0 %3494
        %v3496 = vmax.f32 %v3339, %v3341
        %3497 = vmax.xlane.f32.xlu0 %v3496
        %v3498 = vpop.xlane.xlu0 %3497
        %v3499 = vmax.f32 %v3345, %v3347
        %3500 = vmax.xlane.f32.xlu0 %v3499
        %v3501 = vpop.xlane.xlu0 %3500
        %v3502 = vmax.f32 %v3349, %v3351
        %3503 = vmax.xlane.f32.xlu0 %v3502
        %v3504 = vpop.xlane.xlu0 %3503
        %v3505 = vmax.f32 %v3355, %v3357
        %3506 = vmax.xlane.f32.xlu0 %v3505
        %v3507 = vpop.xlane.xlu0 %3506
        %v3508 = vmax.f32 %v3359, %v3361
        %3509 = vmax.xlane.f32.xlu0 %v3508
        %v3510 = vpop.xlane.xlu0 %3509
        %v3511 = vmax.f32 %v3365, %v3367
        %3512 = vmax.xlane.f32.xlu0 %v3511
        %v3513 = vpop.xlane.xlu0 %3512
        %v3514 = vmax.f32 %v3369, %v3371
        %3515 = vmax.xlane.f32.xlu0 %v3514
        %v3516 = vpop.xlane.xlu0 %3515
        %v3517 = vmax.f32 %v3375, %v3377
        %3518 = vmax.xlane.f32.xlu0 %v3517
        %v3519 = vpop.xlane.xlu0 %3518
        %v3520 = vmax.f32 %v3379, %v3381
        %3521 = vmax.xlane.f32.xlu0 %v3520
        %v3522 = vpop.xlane.xlu0 %3521
        %v3523 = vmax.f32 %v3385, %v3387
        %3524 = vmax.xlane.f32.xlu0 %v3523
        %v3525 = vpop.xlane.xlu0 %3524
        %v3526 = vmax.f32 %v3389, %v3391
        %3527 = vmax.xlane.f32.xlu0 %v3526
        %v3528 = vpop.xlane.xlu0 %3527
        %v3529 = vmax.f32 %v3395, %v3397
        %3530 = vmax.xlane.f32.xlu0 %v3529
        %v3531 = vpop.xlane.xlu0 %3530
        %v3532 = vmax.f32 %v3399, %v3401
        %3533 = vmax.xlane.f32.xlu0 %v3532
        %v3534 = vpop.xlane.xlu0 %3533
        %v3535 = vmax.f32 %v3405, %v3407
        %3536 = vmax.xlane.f32.xlu0 %v3535
        %v3537 = vpop.xlane.xlu0 %3536
        %v3538 = vmax.f32 %v3409, %v3411
        %3539 = vmax.xlane.f32.xlu0 %v3538
        %v3540 = vpop.xlane.xlu0 %3539
        %v3541 = vmax.f32 %v3415, %v3417
        %3542 = vmax.xlane.f32.xlu0 %v3541
        %v3543 = vpop.xlane.xlu0 %3542
        %v3544 = vmax.f32 %v3419, %v3421
        %3545 = vmax.xlane.f32.xlu0 %v3544
        %v3546 = vpop.xlane.xlu0 %3545
        %v3547 = vmax.f32 %v3425, %v3427
        %3548 = vmax.xlane.f32.xlu0 %v3547
        %v3549 = vpop.xlane.xlu0 %3548
        %v3550 = vmax.f32 %v3429, %v3431
        %3551 = vmax.xlane.f32.xlu0 %v3550
        %v3552 = vpop.xlane.xlu0 %3551
        %v3553 = vmax.f32 %v3435, %v3437
        %3554 = vmax.xlane.f32.xlu0 %v3553
        %v3555 = vpop.xlane.xlu0 %3554
        %v3556 = vmax.f32 %v3439, %v3441
        %3557 = vmax.xlane.f32.xlu0 %v3556
        %v3558 = vpop.xlane.xlu0 %3557
        %v3559 = vmax.f32 %v3445, %v3447
        %3560 = vmax.xlane.f32.xlu0 %v3559
        %v3561 = vpop.xlane.xlu0 %3560
        %v3562 = vmax.f32 %v3449, %v3451
        %3563 = vmax.xlane.f32.xlu0 %v3562
        %v3564 = vpop.xlane.xlu0 %3563
        %v3565 = vmax.f32 %v3455, %v3457
        %3566 = vmax.xlane.f32.xlu0 %v3565
        %v3567 = vpop.xlane.xlu0 %3566
        %v3568 = vmax.f32 %v3459, %v3461
        %3569 = vmax.xlane.f32.xlu0 %v3568
        %v3570 = vpop.xlane.xlu0 %3569
        %v3571 = vmax.f32 %v3465, %v3467
        %3572 = vmax.xlane.f32.xlu0 %v3571
        %v3573 = vpop.xlane.xlu0 %3572
        %v3574 = vmax.f32 %v3469, %v3471
        %3575 = vmax.xlane.f32.xlu0 %v3574
        %v3576 = vpop.xlane.xlu0 %3575
        %v3577 = vmax.f32 %v3475, %v3477
        %3578 = vmax.xlane.f32.xlu0 %v3577
        %v3579 = vpop.xlane.xlu0 %3578
        %v3580 = vmax.f32 %v3479, %v3481
        %3581 = vmax.xlane.f32.xlu0 %v3580
        %v3582 = vpop.xlane.xlu0 %3581
        %v3583 = vmax.f32 %v3485, %v3487
        %3584 = vmax.xlane.f32.xlu0 %v3583
        %v3585 = vpop.xlane.xlu0 %3584
        %v3586 = vmax.f32 %v3489, %v3491
        %3587 = vmax.xlane.f32.xlu0 %v3586
        %v3588 = vpop.xlane.xlu0 %3587
        %v3589 = vsub.f32 %v3335, %v3495
        %v3590 = vsub.f32 %v3337, %v3495
        %v3591 = vsub.f32 %v3339, %v3498
        %v3592 = vsub.f32 %v3341, %v3498
        %v3593 = vsub.f32 %v3345, %v3501
        %v3594 = vsub.f32 %v3347, %v3501
        %v3595 = vsub.f32 %v3349, %v3504
        %v3596 = vsub.f32 %v3351, %v3504
        %v3597 = vsub.f32 %v3355, %v3507
        %v3598 = vsub.f32 %v3357, %v3507
        %v3599 = vsub.f32 %v3359, %v3510
        %v3600 = vsub.f32 %v3361, %v3510
        %v3601 = vsub.f32 %v3365, %v3513
        %v3602 = vsub.f32 %v3367, %v3513
        %v3603 = vsub.f32 %v3369, %v3516
        %v3604 = vsub.f32 %v3371, %v3516
        %v3605 = vsub.f32 %v3375, %v3519
        %v3606 = vsub.f32 %v3377, %v3519
        %v3607 = vsub.f32 %v3379, %v3522
        %v3608 = vsub.f32 %v3381, %v3522
        %v3609 = vsub.f32 %v3385, %v3525
        %v3610 = vsub.f32 %v3387, %v3525
        %v3611 = vsub.f32 %v3389, %v3528
        %v3612 = vsub.f32 %v3391, %v3528
        %v3613 = vsub.f32 %v3395, %v3531
        %v3614 = vsub.f32 %v3397, %v3531
        %v3615 = vsub.f32 %v3399, %v3534
        %v3616 = vsub.f32 %v3401, %v3534
        %v3617 = vsub.f32 %v3405, %v3537
        %v3618 = vsub.f32 %v3407, %v3537
        %v3619 = vsub.f32 %v3409, %v3540
        %v3620 = vsub.f32 %v3411, %v3540
        %v3621 = vsub.f32 %v3415, %v3543
        %v3622 = vsub.f32 %v3417, %v3543
        %v3623 = vsub.f32 %v3419, %v3546
        %v3624 = vsub.f32 %v3421, %v3546
        %v3625 = vsub.f32 %v3425, %v3549
        %v3626 = vsub.f32 %v3427, %v3549
        %v3627 = vsub.f32 %v3429, %v3552
        %v3628 = vsub.f32 %v3431, %v3552
        %v3629 = vsub.f32 %v3435, %v3555
        %v3630 = vsub.f32 %v3437, %v3555
        %v3631 = vsub.f32 %v3439, %v3558
        %v3632 = vsub.f32 %v3441, %v3558
        %v3633 = vsub.f32 %v3445, %v3561
        %v3634 = vsub.f32 %v3447, %v3561
        %v3635 = vsub.f32 %v3449, %v3564
        %v3636 = vsub.f32 %v3451, %v3564
        %v3637 = vsub.f32 %v3455, %v3567
        %v3638 = vsub.f32 %v3457, %v3567
        %v3639 = vsub.f32 %v3459, %v3570
        %v3640 = vsub.f32 %v3461, %v3570
        %v3641 = vsub.f32 %v3465, %v3573
        %v3642 = vsub.f32 %v3467, %v3573
        %v3643 = vsub.f32 %v3469, %v3576
        %v3644 = vsub.f32 %v3471, %v3576
        %v3645 = vsub.f32 %v3475, %v3579
        %v3646 = vsub.f32 %v3477, %v3579
        %v3647 = vsub.f32 %v3479, %v3582
        %v3648 = vsub.f32 %v3481, %v3582
        %v3649 = vsub.f32 %v3485, %v3585
        %v3650 = vsub.f32 %v3487, %v3585
        %v3651 = vsub.f32 %v3489, %v3588
        %v3652 = vsub.f32 %v3491, %v3588
        %v3653 = vmul.f32 %v3589, 1.442695
        %v3654 = vpow.pop %v3653
        %v3655 = vmul.f32 %v3590, 1.442695
        %v3656 = vpow.pop %v3655
        %v3657 = vmul.f32 %v3591, 1.442695
        %v3658 = vpow.pop %v3657
        %v3659 = vmul.f32 %v3592, 1.442695
        %v3660 = vpow.pop %v3659
        %v3661 = vmul.f32 %v3593, 1.442695
        %v3662 = vpow.pop %v3661
        %v3663 = vmul.f32 %v3594, 1.442695
        %v3664 = vpow.pop %v3663
        %v3665 = vmul.f32 %v3595, 1.442695
        %v3666 = vpow.pop %v3665
        %v3667 = vmul.f32 %v3596, 1.442695
        %v3668 = vpow.pop %v3667
        %v3669 = vmul.f32 %v3597, 1.442695
        %v3670 = vpow.pop %v3669
        %v3671 = vmul.f32 %v3598, 1.442695
        %v3672 = vpow.pop %v3671
        %v3673 = vmul.f32 %v3599, 1.442695
        %v3674 = vpow.pop %v3673
        %v3675 = vmul.f32 %v3600, 1.442695
        %v3676 = vpow.pop %v3675
        %v3677 = vmul.f32 %v3601, 1.442695
        %v3678 = vpow.pop %v3677
        %v3679 = vmul.f32 %v3602, 1.442695
        %v3680 = vpow.pop %v3679
        %v3681 = vmul.f32 %v3603, 1.442695
        %v3682 = vpow.pop %v3681
        %v3683 = vmul.f32 %v3604, 1.442695
        %v3684 = vpow.pop %v3683
        %v3685 = vmul.f32 %v3605, 1.442695
        %v3686 = vpow.pop %v3685
        %v3687 = vmul.f32 %v3606, 1.442695
        %v3688 = vpow.pop %v3687
        %v3689 = vmul.f32 %v3607, 1.442695
        %v3690 = vpow.pop %v3689
        %v3691 = vmul.f32 %v3608, 1.442695
        %v3692 = vpow.pop %v3691
        %v3693 = vmul.f32 %v3609, 1.442695
        %v3694 = vpow.pop %v3693
        %v3695 = vmul.f32 %v3610, 1.442695
        %v3696 = vpow.pop %v3695
        %v3697 = vmul.f32 %v3611, 1.442695
        %v3698 = vpow.pop %v3697
        %v3699 = vmul.f32 %v3612, 1.442695
        %v3700 = vpow.pop %v3699
        %v3701 = vmul.f32 %v3613, 1.442695
        %v3702 = vpow.pop %v3701
        %v3703 = vmul.f32 %v3614, 1.442695
        %v3704 = vpow.pop %v3703
        %v3705 = vmul.f32 %v3615, 1.442695
        %v3706 = vpow.pop %v3705
        %v3707 = vmul.f32 %v3616, 1.442695
        %v3708 = vpow.pop %v3707
        %v3709 = vmul.f32 %v3617, 1.442695
        %v3710 = vpow.pop %v3709
        %v3711 = vmul.f32 %v3618, 1.442695
        %v3712 = vpow.pop %v3711
        %v3713 = vmul.f32 %v3619, 1.442695
        %v3714 = vpow.pop %v3713
        %v3715 = vmul.f32 %v3620, 1.442695
        %v3716 = vpow.pop %v3715
        %v3717 = vmul.f32 %v3621, 1.442695
        %v3718 = vpow.pop %v3717
        %v3719 = vmul.f32 %v3622, 1.442695
        %v3720 = vpow.pop %v3719
        %v3721 = vmul.f32 %v3623, 1.442695
        %v3722 = vpow.pop %v3721
        %v3723 = vmul.f32 %v3624, 1.442695
        %v3724 = vpow.pop %v3723
        %v3725 = vmul.f32 %v3625, 1.442695
        %v3726 = vpow.pop %v3725
        %v3727 = vmul.f32 %v3626, 1.442695
        %v3728 = vpow.pop %v3727
        %v3729 = vmul.f32 %v3627, 1.442695
        %v3730 = vpow.pop %v3729
        %v3731 = vmul.f32 %v3628, 1.442695
        %v3732 = vpow.pop %v3731
        %v3733 = vmul.f32 %v3629, 1.442695
        %v3734 = vpow.pop %v3733
        %v3735 = vmul.f32 %v3630, 1.442695
        %v3736 = vpow.pop %v3735
        %v3737 = vmul.f32 %v3631, 1.442695
        %v3738 = vpow.pop %v3737
        %v3739 = vmul.f32 %v3632, 1.442695
        %v3740 = vpow.pop %v3739
        %v3741 = vmul.f32 %v3633, 1.442695
        %v3742 = vpow.pop %v3741
        %v3743 = vmul.f32 %v3634, 1.442695
        %v3744 = vpow.pop %v3743
        %v3745 = vmul.f32 %v3635, 1.442695
        %v3746 = vpow.pop %v3745
        %v3747 = vmul.f32 %v3636, 1.442695
        %v3748 = vpow.pop %v3747
        %v3749 = vmul.f32 %v3637, 1.442695
        %v3750 = vpow.pop %v3749
        %v3751 = vmul.f32 %v3638, 1.442695
        %v3752 = vpow.pop %v3751
        %v3753 = vmul.f32 %v3639, 1.442695
        %v3754 = vpow.pop %v3753
        %v3755 = vmul.f32 %v3640, 1.442695
        %v3756 = vpow.pop %v3755
        %v3757 = vmul.f32 %v3641, 1.442695
        %v3758 = vpow.pop %v3757
        %v3759 = vmul.f32 %v3642, 1.442695
        %v3760 = vpow.pop %v3759
        %v3761 = vmul.f32 %v3643, 1.442695
        %v3762 = vpow.pop %v3761
        %v3763 = vmul.f32 %v3644, 1.442695
        %v3764 = vpow.pop %v3763
        %v3765 = vmul.f32 %v3645, 1.442695
        %v3766 = vpow.pop %v3765
        %v3767 = vmul.f32 %v3646, 1.442695
        %v3768 = vpow.pop %v3767
        %v3769 = vmul.f32 %v3647, 1.442695
        %v3770 = vpow.pop %v3769
        %v3771 = vmul.f32 %v3648, 1.442695
        %v3772 = vpow.pop %v3771
        %v3773 = vmul.f32 %v3649, 1.442695
        %v3774 = vpow.pop %v3773
        %v3775 = vmul.f32 %v3650, 1.442695
        %v3776 = vpow.pop %v3775
        %v3777 = vmul.f32 %v3651, 1.442695
        %v3778 = vpow.pop %v3777
        %v3779 = vmul.f32 %v3652, 1.442695
        %v3780 = vpow.pop %v3779
        %v3781 = vadd.f32 %v3654, %v3656
        %3782 = vadd.xlane.f32.xlu0 %v3781
        %v3783 = vpop.xlane.xlu0 %3782
        %v3784 = vadd.f32 %v3658, %v3660
        %3785 = vadd.xlane.f32.xlu0 %v3784
        %v3786 = vpop.xlane.xlu0 %3785
        %v3787 = vadd.f32 %v3662, %v3664
        %3788 = vadd.xlane.f32.xlu0 %v3787
        %v3789 = vpop.xlane.xlu0 %3788
        %v3790 = vadd.f32 %v3666, %v3668
        %3791 = vadd.xlane.f32.xlu0 %v3790
        %v3792 = vpop.xlane.xlu0 %3791
        %v3793 = vadd.f32 %v3670, %v3672
        %3794 = vadd.xlane.f32.xlu0 %v3793
        %v3795 = vpop.xlane.xlu0 %3794
        %v3796 = vadd.f32 %v3674, %v3676
        %3797 = vadd.xlane.f32.xlu0 %v3796
        %v3798 = vpop.xlane.xlu0 %3797
        %v3799 = vadd.f32 %v3678, %v3680
        %3800 = vadd.xlane.f32.xlu0 %v3799
        %v3801 = vpop.xlane.xlu0 %3800
        %v3802 = vadd.f32 %v3682, %v3684
        %3803 = vadd.xlane.f32.xlu0 %v3802
        %v3804 = vpop.xlane.xlu0 %3803
        %v3805 = vadd.f32 %v3686, %v3688
        %3806 = vadd.xlane.f32.xlu0 %v3805
        %v3807 = vpop.xlane.xlu0 %3806
        %v3808 = vadd.f32 %v3690, %v3692
        %3809 = vadd.xlane.f32.xlu0 %v3808
        %v3810 = vpop.xlane.xlu0 %3809
        %v3811 = vadd.f32 %v3694, %v3696
        %3812 = vadd.xlane.f32.xlu0 %v3811
        %v3813 = vpop.xlane.xlu0 %3812
        %v3814 = vadd.f32 %v3698, %v3700
        %3815 = vadd.xlane.f32.xlu0 %v3814
        %v3816 = vpop.xlane.xlu0 %3815
        %v3817 = vadd.f32 %v3702, %v3704
        %3818 = vadd.xlane.f32.xlu0 %v3817
        %v3819 = vpop.xlane.xlu0 %3818
        %v3820 = vadd.f32 %v3706, %v3708
        %3821 = vadd.xlane.f32.xlu0 %v3820
        %v3822 = vpop.xlane.xlu0 %3821
        %v3823 = vadd.f32 %v3710, %v3712
        %3824 = vadd.xlane.f32.xlu0 %v3823
        %v3825 = vpop.xlane.xlu0 %3824
        %v3826 = vadd.f32 %v3714, %v3716
        %3827 = vadd.xlane.f32.xlu0 %v3826
        %v3828 = vpop.xlane.xlu0 %3827
        %v3829 = vadd.f32 %v3718, %v3720
        %3830 = vadd.xlane.f32.xlu0 %v3829
        %v3831 = vpop.xlane.xlu0 %3830
        %v3832 = vadd.f32 %v3722, %v3724
        %3833 = vadd.xlane.f32.xlu0 %v3832
        %v3834 = vpop.xlane.xlu0 %3833
        %v3835 = vadd.f32 %v3726, %v3728
        %3836 = vadd.xlane.f32.xlu0 %v3835
        %v3837 = vpop.xlane.xlu0 %3836
        %v3838 = vadd.f32 %v3730, %v3732
        %3839 = vadd.xlane.f32.xlu0 %v3838
        %v3840 = vpop.xlane.xlu0 %3839
        %v3841 = vadd.f32 %v3734, %v3736
        %3842 = vadd.xlane.f32.xlu0 %v3841
        %v3843 = vpop.xlane.xlu0 %3842
        %v3844 = vadd.f32 %v3738, %v3740
        %3845 = vadd.xlane.f32.xlu0 %v3844
        %v3846 = vpop.xlane.xlu0 %3845
        %v3847 = vadd.f32 %v3742, %v3744
        %3848 = vadd.xlane.f32.xlu0 %v3847
        %v3849 = vpop.xlane.xlu0 %3848
        %v3850 = vadd.f32 %v3746, %v3748
        %3851 = vadd.xlane.f32.xlu0 %v3850
        %v3852 = vpop.xlane.xlu0 %3851
        %v3853 = vadd.f32 %v3750, %v3752
        %3854 = vadd.xlane.f32.xlu0 %v3853
        %v3855 = vpop.xlane.xlu0 %3854
        %v3856 = vadd.f32 %v3754, %v3756
        %3857 = vadd.xlane.f32.xlu0 %v3856
        %v3858 = vpop.xlane.xlu0 %3857
        %v3859 = vadd.f32 %v3758, %v3760
        %3860 = vadd.xlane.f32.xlu0 %v3859
        %v3861 = vpop.xlane.xlu0 %3860
        %v3862 = vadd.f32 %v3762, %v3764
        %3863 = vadd.xlane.f32.xlu0 %v3862
        %v3864 = vpop.xlane.xlu0 %3863
        %v3865 = vadd.f32 %v3766, %v3768
        %3866 = vadd.xlane.f32.xlu0 %v3865
        %v3867 = vpop.xlane.xlu0 %3866
        %v3868 = vadd.f32 %v3770, %v3772
        %3869 = vadd.xlane.f32.xlu0 %v3868
        %v3870 = vpop.xlane.xlu0 %3869
        %v3871 = vadd.f32 %v3774, %v3776
        %3872 = vadd.xlane.f32.xlu0 %v3871
        %v3873 = vpop.xlane.xlu0 %3872
        %v3874 = vadd.f32 %v3778, %v3780
        %3875 = vadd.xlane.f32.xlu0 %v3874
        %v3876 = vpop.xlane.xlu0 %3875
        %v3877 = vpack.c.bf16 %v3658, %v3654
        %v3878 = vpack.c.bf16 %v3660, %v3656
        %v3879 = vpack.c.bf16 %v3666, %v3662
        %v3880 = vpack.c.bf16 %v3668, %v3664
        %v3881 = vpack.c.bf16 %v3674, %v3670
        %v3882 = vpack.c.bf16 %v3676, %v3672
        %v3883 = vpack.c.bf16 %v3682, %v3678
        %v3884 = vpack.c.bf16 %v3684, %v3680
        %v3885 = vpack.c.bf16 %v3690, %v3686
        %v3886 = vpack.c.bf16 %v3692, %v3688
        %v3887 = vpack.c.bf16 %v3698, %v3694
        %v3888 = vpack.c.bf16 %v3700, %v3696
        %v3889 = vpack.c.bf16 %v3706, %v3702
        %v3890 = vpack.c.bf16 %v3708, %v3704
        %v3891 = vpack.c.bf16 %v3714, %v3710
        %v3892 = vpack.c.bf16 %v3716, %v3712
        %v3893 = vpack.c.bf16 %v3722, %v3718
        %v3894 = vpack.c.bf16 %v3724, %v3720
        %v3895 = vpack.c.bf16 %v3730, %v3726
        %v3896 = vpack.c.bf16 %v3732, %v3728
        %v3897 = vpack.c.bf16 %v3738, %v3734
        %v3898 = vpack.c.bf16 %v3740, %v3736
        %v3899 = vpack.c.bf16 %v3746, %v3742
        %v3900 = vpack.c.bf16 %v3748, %v3744
        %v3901 = vpack.c.bf16 %v3754, %v3750
        %v3902 = vpack.c.bf16 %v3756, %v3752
        %v3903 = vpack.c.bf16 %v3762, %v3758
        %v3904 = vpack.c.bf16 %v3764, %v3760
        %v3905 = vpack.c.bf16 %v3770, %v3766
        %v3906 = vpack.c.bf16 %v3772, %v3768
        %v3907 = vpack.c.bf16 %v3778, %v3774
        %v3908 = vpack.c.bf16 %v3780, %v3776
        %3925 = vrot.lane.b32.xlu0 %v3188, 96
        %v3926 = vpop.permute.xlu0 %3925
        %3927 = vrot.lane.b32.xlu0 %v3189, 96
        %v3928 = vpop.permute.xlu0 %3927
        %3929 = vrot.lane.b32.xlu0 %v3190, 96
        %v3930 = vpop.permute.xlu0 %3929
        %3931 = vrot.lane.b32.xlu0 %v3191, 96
        %v3932 = vpop.permute.xlu0 %3931
        %3933 = vrot.lane.b32.xlu0 %v3192, 96
        %v3934 = vpop.permute.xlu0 %3933
        %3935 = vrot.lane.b32.xlu0 %v3193, 96
        %v3936 = vpop.permute.xlu0 %3935
        %3937 = vrot.lane.b32.xlu0 %v3194, 96
        %v3938 = vpop.permute.xlu0 %3937
        %3939 = vrot.lane.b32.xlu0 %v3195, 96
        %v3940 = vpop.permute.xlu0 %3939
        %3941 = vrot.lane.b32.xlu0 %v3196, 96
        %v3942 = vpop.permute.xlu0 %3941
        %3943 = vrot.lane.b32.xlu0 %v3197, 96
        %v3944 = vpop.permute.xlu0 %3943
        %3945 = vrot.lane.b32.xlu0 %v3198, 96
        %v3946 = vpop.permute.xlu0 %3945
        %3947 = vrot.lane.b32.xlu0 %v3199, 96
        %v3948 = vpop.permute.xlu0 %3947
        %3949 = vrot.lane.b32.xlu0 %v3200, 96
        %v3950 = vpop.permute.xlu0 %3949
        %3951 = vrot.lane.b32.xlu0 %v3201, 96
        %v3952 = vpop.permute.xlu0 %3951
        %3953 = vrot.lane.b32.xlu0 %v3202, 96
        %v3954 = vpop.permute.xlu0 %3953
        %3955 = vrot.lane.b32.xlu0 %v3203, 96
        %v3956 = vpop.permute.xlu0 %3955
        %3973 = vmatprep.subr.bf16.mxu0 0
        %3974 = vmatpush1.bf16.msra.mxu0 %v3926
        %3975 = vmatprep.subr.bf16.mxu0 0
        %3976 = vmatpush1.bf16.msra.mxu0 %v3928
        %3977 = vmatprep.subr.bf16.mxu0 0
        %3978 = vmatpush1.bf16.msra.mxu0 %v3930
        %3979 = vmatprep.subr.bf16.mxu0 0
        %3980 = vmatpush1.bf16.msra.mxu0 %v3932
        %3981 = vmatprep.subr.bf16.mxu0 0
        %3982 = vmatpush1.bf16.msra.mxu0 %v3934
        %3983 = vmatprep.subr.bf16.mxu0 0
        %3984 = vmatpush1.bf16.msra.mxu0 %v3936
        %3985 = vmatprep.subr.bf16.mxu0 0
        %3986 = vmatpush1.bf16.msra.mxu0 %v3938
        %3987 = vmatprep.subr.bf16.mxu0 0
        %3988 = vmatpush1.bf16.msra.mxu0 %v3940
        %3989 = vmatprep.subr.bf16.mxu0 0
        %3990 = vmatpush1.bf16.msra.mxu0 %v3942
        %3991 = vmatprep.subr.bf16.mxu0 0
        %3992 = vmatpush1.bf16.msra.mxu0 %v3944
        %3993 = vmatprep.subr.bf16.mxu0 0
        %3994 = vmatpush1.bf16.msra.mxu0 %v3946
        %3995 = vmatprep.subr.bf16.mxu0 0
        %3996 = vmatpush1.bf16.msra.mxu0 %v3948
        %3997 = vmatprep.subr.bf16.mxu0 0
        %3998 = vmatpush1.bf16.msra.mxu0 %v3950
        %3999 = vmatprep.subr.bf16.mxu0 0
        %4000 = vmatpush1.bf16.msra.mxu0 %v3952
        %4001 = vmatprep.subr.bf16.mxu0 0
        %4002 = vmatpush1.bf16.msra.mxu0 %v3954
        %4003 = vmatprep.subr.bf16.mxu0 0
        %4004 = vmatpush1.bf16.msra.mxu0 %v3956
        %4005 = vmatprep.mubr.bf16.mxu0 %v3878
        %4006 = vmatmul.mubr.bf16.gmra.mrb[0].mxu0 %v3877
        %v4007 = vpop.f32.mrb[0].mxu0
        %v4008 = vadd.f32 0.0, %v4007
        %v4009 = vpop.f32.mrb[0].mxu0
        %v4010 = vpop.f32.mrb[0].mxu0
        %v4011 = vadd.f32 0.0, %v4010
        %v4012 = vpop.f32.mrb[0].mxu0
        %4013 = vmatprep.mubr.bf16.mxu0 %v3880
        %4014 = vmatmul.mubr.bf16.gmra.mrb[0].mxu0 %v3879
        %v4015 = vpop.f32.mrb[0].mxu0
        %v4016 = vadd.f32 0.0, %v4015
        %v4017 = vpop.f32.mrb[0].mxu0
        %v4018 = vpop.f32.mrb[0].mxu0
        %v4019 = vadd.f32 0.0, %v4018
        %v4020 = vpop.f32.mrb[0].mxu0
        %4021 = vmatprep.mubr.bf16.mxu0 %v3882
        %4022 = vmatmul.mubr.bf16.gmra.mrb[0].mxu0 %v3881
        %v4023 = vpop.f32.mrb[0].mxu0
        %v4024 = vadd.f32 0.0, %v4023
        %v4025 = vpop.f32.mrb[0].mxu0
        %v4026 = vpop.f32.mrb[0].mxu0
        %v4027 = vadd.f32 0.0, %v4026
        %v4028 = vpop.f32.mrb[0].mxu0
        %4029 = vmatprep.mubr.bf16.mxu0 %v3884
        %4030 = vmatmul.mubr.bf16.gmra.mrb[0].mxu0 %v3883
        %v4031 = vpop.f32.mrb[0].mxu0
        %v4032 = vadd.f32 0.0, %v4031
        %v4033 = vpop.f32.mrb[0].mxu0
        %v4034 = vpop.f32.mrb[0].mxu0
        %v4035 = vadd.f32 0.0, %v4034
        %v4036 = vpop.f32.mrb[0].mxu0
        %4037 = vmatprep.mubr.bf16.mxu0 %v3886
        %4038 = vmatmul.mubr.bf16.gmra.mrb[0].mxu0 %v3885
        %v4039 = vpop.f32.mrb[0].mxu0
        %v4040 = vadd.f32 0.0, %v4039
        %v4041 = vpop.f32.mrb[0].mxu0
        %v4042 = vpop.f32.mrb[0].mxu0
        %v4043 = vadd.f32 0.0, %v4042
        %v4044 = vpop.f32.mrb[0].mxu0
        %4045 = vmatprep.mubr.bf16.mxu0 %v3888
        %4046 = vmatmul.mubr.bf16.gmra.mrb[0].mxu0 %v3887
        %v4047 = vpop.f32.mrb[0].mxu0
        %v4048 = vadd.f32 0.0, %v4047
        %v4049 = vpop.f32.mrb[0].mxu0
        %v4050 = vpop.f32.mrb[0].mxu0
        %v4051 = vadd.f32 0.0, %v4050
        %v4052 = vpop.f32.mrb[0].mxu0
        %4053 = vmatprep.mubr.bf16.mxu0 %v3890
        %4054 = vmatmul.mubr.bf16.gmra.mrb[0].mxu0 %v3889
        %v4055 = vpop.f32.mrb[0].mxu0
        %v4056 = vadd.f32 0.0, %v4055
        %v4057 = vpop.f32.mrb[0].mxu0
        %v4058 = vpop.f32.mrb[0].mxu0
        %v4059 = vadd.f32 0.0, %v4058
        %v4060 = vpop.f32.mrb[0].mxu0
        %4061 = vmatprep.mubr.bf16.mxu0 %v3892
        %4062 = vmatmul.mubr.bf16.gmra.mrb[0].mxu0 %v3891
        %v4063 = vpop.f32.mrb[0].mxu0
        %v4064 = vadd.f32 0.0, %v4063
        %v4065 = vpop.f32.mrb[0].mxu0
        %v4066 = vpop.f32.mrb[0].mxu0
        %v4067 = vadd.f32 0.0, %v4066
        %v4068 = vpop.f32.mrb[0].mxu0
        %4069 = vmatprep.mubr.bf16.mxu0 %v3894
        %4070 = vmatmul.mubr.bf16.gmra.mrb[0].mxu0 %v3893
        %v4071 = vpop.f32.mrb[0].mxu0
        %v4072 = vadd.f32 0.0, %v4071
        %v4073 = vpop.f32.mrb[0].mxu0
        %v4074 = vpop.f32.mrb[0].mxu0
        %v4075 = vadd.f32 0.0, %v4074
        %v4076 = vpop.f32.mrb[0].mxu0
        %4077 = vmatprep.mubr.bf16.mxu0 %v3896
        %4078 = vmatmul.mubr.bf16.gmra.mrb[0].mxu0 %v3895
        %v4079 = vpop.f32.mrb[0].mxu0
        %v4080 = vadd.f32 0.0, %v4079
        %v4081 = vpop.f32.mrb[0].mxu0
        %v4082 = vpop.f32.mrb[0].mxu0
        %v4083 = vadd.f32 0.0, %v4082
        %v4084 = vpop.f32.mrb[0].mxu0
        %4085 = vmatprep.mubr.bf16.mxu0 %v3898
        %4086 = vmatmul.mubr.bf16.gmra.mrb[0].mxu0 %v3897
        %v4087 = vpop.f32.mrb[0].mxu0
        %v4088 = vadd.f32 0.0, %v4087
        %v4089 = vpop.f32.mrb[0].mxu0
        %v4090 = vpop.f32.mrb[0].mxu0
        %v4091 = vadd.f32 0.0, %v4090
        %v4092 = vpop.f32.mrb[0].mxu0
        %4093 = vmatprep.mubr.bf16.mxu0 %v3900
        %4094 = vmatmul.mubr.bf16.gmra.mrb[0].mxu0 %v3899
        %v4095 = vpop.f32.mrb[0].mxu0
        %v4096 = vadd.f32 0.0, %v4095
        %v4097 = vpop.f32.mrb[0].mxu0
        %v4098 = vpop.f32.mrb[0].mxu0
        %v4099 = vadd.f32 0.0, %v4098
        %v4100 = vpop.f32.mrb[0].mxu0
        %4101 = vmatprep.mubr.bf16.mxu0 %v3902
        %4102 = vmatmul.mubr.bf16.gmra.mrb[0].mxu0 %v3901
        %v4103 = vpop.f32.mrb[0].mxu0
        %v4104 = vadd.f32 0.0, %v4103
        %v4105 = vpop.f32.mrb[0].mxu0
        %v4106 = vpop.f32.mrb[0].mxu0
        %v4107 = vadd.f32 0.0, %v4106
        %v4108 = vpop.f32.mrb[0].mxu0
        %4109 = vmatprep.mubr.bf16.mxu0 %v3904
        %4110 = vmatmul.mubr.bf16.gmra.mrb[0].mxu0 %v3903
        %v4111 = vpop.f32.mrb[0].mxu0
        %v4112 = vadd.f32 0.0, %v4111
        %v4113 = vpop.f32.mrb[0].mxu0
        %v4114 = vpop.f32.mrb[0].mxu0
        %v4115 = vadd.f32 0.0, %v4114
        %v4116 = vpop.f32.mrb[0].mxu0
        %4117 = vmatprep.mubr.bf16.mxu0 %v3906
        %4118 = vmatmul.mubr.bf16.gmra.mrb[0].mxu0 %v3905
        %v4119 = vpop.f32.mrb[0].mxu0
        %v4120 = vadd.f32 0.0, %v4119
        %v4121 = vpop.f32.mrb[0].mxu0
        %v4122 = vpop.f32.mrb[0].mxu0
        %v4123 = vadd.f32 0.0, %v4122
        %v4124 = vpop.f32.mrb[0].mxu0
        %4125 = vmatprep.mubr.bf16.mxu0 %v3908
        %4126 = vmatmul.mubr.bf16.gmra.mrb[0].mxu0 %v3907
        %v4127 = vpop.f32.mrb[0].mxu0
        %v4128 = vadd.f32 0.0, %v4127
        %v4129 = vpop.f32.mrb[0].mxu0
        %v4130 = vpop.f32.mrb[0].mxu0
        %v4131 = vadd.f32 0.0, %v4130
        %v4132 = vpop.f32.mrb[0].mxu0
        %4133 = vdwg.mxu0
        %v4134 = vrcp.pop %v3783
        %v4135 = vrcp.pop %v3786
        %v4136 = vrcp.pop %v3789
        %v4137 = vrcp.pop %v3792
        %v4138 = vrcp.pop %v3795
        %v4139 = vrcp.pop %v3798
        %v4140 = vrcp.pop %v3801
        %v4141 = vrcp.pop %v3804
        %v4142 = vrcp.pop %v3807
        %v4143 = vrcp.pop %v3810
        %v4144 = vrcp.pop %v3813
        %v4145 = vrcp.pop %v3816
        %v4146 = vrcp.pop %v3819
        %v4147 = vrcp.pop %v3822
        %v4148 = vrcp.pop %v3825
        %v4149 = vrcp.pop %v3828
        %v4150 = vrcp.pop %v3831
        %v4151 = vrcp.pop %v3834
        %v4152 = vrcp.pop %v3837
        %v4153 = vrcp.pop %v3840
        %v4154 = vrcp.pop %v3843
        %v4155 = vrcp.pop %v3846
        %v4156 = vrcp.pop %v3849
        %v4157 = vrcp.pop %v3852
        %v4158 = vrcp.pop %v3855
        %v4159 = vrcp.pop %v3858
        %v4160 = vrcp.pop %v3861
        %v4161 = vrcp.pop %v3864
        %v4162 = vrcp.pop %v3867
        %v4163 = vrcp.pop %v3870
        %v4164 = vrcp.pop %v3873
        %v4165 = vrcp.pop %v3876
        %v4166 = vmul.f32 %v4008, %v4134
        %v4167 = vmul.f32 %v4011, %v4135
        %v4168 = vmul.f32 %v4016, %v4136
        %v4169 = vmul.f32 %v4019, %v4137
        %v4170 = vmul.f32 %v4024, %v4138
        %v4171 = vmul.f32 %v4027, %v4139
        %v4172 = vmul.f32 %v4032, %v4140
        %v4173 = vmul.f32 %v4035, %v4141
        %v4174 = vmul.f32 %v4040, %v4142
        %v4175 = vmul.f32 %v4043, %v4143
        %v4176 = vmul.f32 %v4048, %v4144
        %v4177 = vmul.f32 %v4051, %v4145
        %v4178 = vmul.f32 %v4056, %v4146
        %v4179 = vmul.f32 %v4059, %v4147
        %v4180 = vmul.f32 %v4064, %v4148
        %v4181 = vmul.f32 %v4067, %v4149
        %v4182 = vmul.f32 %v4072, %v4150
        %v4183 = vmul.f32 %v4075, %v4151
        %v4184 = vmul.f32 %v4080, %v4152
        %v4185 = vmul.f32 %v4083, %v4153
        %v4186 = vmul.f32 %v4088, %v4154
        %v4187 = vmul.f32 %v4091, %v4155
        %v4188 = vmul.f32 %v4096, %v4156
        %v4189 = vmul.f32 %v4099, %v4157
        %v4190 = vmul.f32 %v4104, %v4158
        %v4191 = vmul.f32 %v4107, %v4159
        %v4192 = vmul.f32 %v4112, %v4160
        %v4193 = vmul.f32 %v4115, %v4161
        %v4194 = vmul.f32 %v4120, %v4162
        %v4195 = vmul.f32 %v4123, %v4163
        %v4196 = vmul.f32 %v4128, %v4164
        %v4197 = vmul.f32 %v4131, %v4165
        %4230 = vrot.lane.b32.xlu0 %v4166, 32
        %v4231 = vpop.permute.xlu0 %4230
        %4232 = vrot.lane.b32.xlu0 %v4167, 32
        %v4233 = vpop.permute.xlu0 %4232
        %4234 = vrot.lane.b32.xlu0 %v4168, 32
        %v4235 = vpop.permute.xlu0 %4234
        %4236 = vrot.lane.b32.xlu0 %v4169, 32
        %v4237 = vpop.permute.xlu0 %4236
        %4238 = vrot.lane.b32.xlu0 %v4170, 32
        %v4239 = vpop.permute.xlu0 %4238
        %4240 = vrot.lane.b32.xlu0 %v4171, 32
        %v4241 = vpop.permute.xlu0 %4240
        %4242 = vrot.lane.b32.xlu0 %v4172, 32
        %v4243 = vpop.permute.xlu0 %4242
        %4244 = vrot.lane.b32.xlu0 %v4173, 32
        %v4245 = vpop.permute.xlu0 %4244
        %4246 = vrot.lane.b32.xlu0 %v4174, 32
        %v4247 = vpop.permute.xlu0 %4246
        %4248 = vrot.lane.b32.xlu0 %v4175, 32
        %v4249 = vpop.permute.xlu0 %4248
        %4250 = vrot.lane.b32.xlu0 %v4176, 32
        %v4251 = vpop.permute.xlu0 %4250
        %4252 = vrot.lane.b32.xlu0 %v4177, 32
        %v4253 = vpop.permute.xlu0 %4252
        %4254 = vrot.lane.b32.xlu0 %v4178, 32
        %v4255 = vpop.permute.xlu0 %4254
        %4256 = vrot.lane.b32.xlu0 %v4179, 32
        %v4257 = vpop.permute.xlu0 %4256
        %4258 = vrot.lane.b32.xlu0 %v4180, 32
        %v4259 = vpop.permute.xlu0 %4258
        %4260 = vrot.lane.b32.xlu0 %v4181, 32
        %v4261 = vpop.permute.xlu0 %4260
        %4262 = vrot.lane.b32.xlu0 %v4182, 32
        %v4263 = vpop.permute.xlu0 %4262
        %4264 = vrot.lane.b32.xlu0 %v4183, 32
        %v4265 = vpop.permute.xlu0 %4264
        %4266 = vrot.lane.b32.xlu0 %v4184, 32
        %v4267 = vpop.permute.xlu0 %4266
        %4268 = vrot.lane.b32.xlu0 %v4185, 32
        %v4269 = vpop.permute.xlu0 %4268
        %4270 = vrot.lane.b32.xlu0 %v4186, 32
        %v4271 = vpop.permute.xlu0 %4270
        %4272 = vrot.lane.b32.xlu0 %v4187, 32
        %v4273 = vpop.permute.xlu0 %4272
        %4274 = vrot.lane.b32.xlu0 %v4188, 32
        %v4275 = vpop.permute.xlu0 %4274
        %4276 = vrot.lane.b32.xlu0 %v4189, 32
        %v4277 = vpop.permute.xlu0 %4276
        %4278 = vrot.lane.b32.xlu0 %v4190, 32
        %v4279 = vpop.permute.xlu0 %4278
        %4280 = vrot.lane.b32.xlu0 %v4191, 32
        %v4281 = vpop.permute.xlu0 %4280
        %4282 = vrot.lane.b32.xlu0 %v4192, 32
        %v4283 = vpop.permute.xlu0 %4282
        %4284 = vrot.lane.b32.xlu0 %v4193, 32
        %v4285 = vpop.permute.xlu0 %4284
        %4286 = vrot.lane.b32.xlu0 %v4194, 32
        %v4287 = vpop.permute.xlu0 %4286
        %4288 = vrot.lane.b32.xlu0 %v4195, 32
        %v4289 = vpop.permute.xlu0 %4288
        %4290 = vrot.lane.b32.xlu0 %v4196, 32
        %v4291 = vpop.permute.xlu0 %4290
        %4292 = vrot.lane.b32.xlu0 %v4197, 32
        %v4293 = vpop.permute.xlu0 %4292
        %vm4326 = vcmask 523520
        %4327 = vst.msk [vmem:[#allocation5] sm:$0xff] %vm4326, %v4231
        %4328 = vst.msk [vmem:[#allocation5 + $0x8] sm:$0xff] %vm4326, %v4233
        %4329 = vst.msk [vmem:[#allocation5 + $0x10] sm:$0xff] %vm4326, %v4235
        %4330 = vst.msk [vmem:[#allocation5 + $0x18] sm:$0xff] %vm4326, %v4237
        %4331 = vst.msk [vmem:[#allocation5 + $0x20] sm:$0xff] %vm4326, %v4239
        %4332 = vst.msk [vmem:[#allocation5 + $0x28] sm:$0xff] %vm4326, %v4241
        %4333 = vst.msk [vmem:[#allocation5 + $0x30] sm:$0xff] %vm4326, %v4243
        %4334 = vst.msk [vmem:[#allocation5 + $0x38] sm:$0xff] %vm4326, %v4245
        %4335 = vst.msk [vmem:[#allocation5 + $0x40] sm:$0xff] %vm4326, %v4247
        %4336 = vst.msk [vmem:[#allocation5 + $0x48] sm:$0xff] %vm4326, %v4249
        %4337 = vst.msk [vmem:[#allocation5 + $0x50] sm:$0xff] %vm4326, %v4251
        %4338 = vst.msk [vmem:[#allocation5 + $0x58] sm:$0xff] %vm4326, %v4253
        %4339 = vst.msk [vmem:[#allocation5 + $0x60] sm:$0xff] %vm4326, %v4255
        %4340 = vst.msk [vmem:[#allocation5 + $0x68] sm:$0xff] %vm4326, %v4257
        %4341 = vst.msk [vmem:[#allocation5 + $0x70] sm:$0xff] %vm4326, %v4259
        %4342 = vst.msk [vmem:[#allocation5 + $0x78] sm:$0xff] %vm4326, %v4261
        %4343 = vst.msk [vmem:[#allocation5 + $0x80] sm:$0xff] %vm4326, %v4263
        %4344 = vst.msk [vmem:[#allocation5 + $0x88] sm:$0xff] %vm4326, %v4265
        %4345 = vst.msk [vmem:[#allocation5 + $0x90] sm:$0xff] %vm4326, %v4267
        %4346 = vst.msk [vmem:[#allocation5 + $0x98] sm:$0xff] %vm4326, %v4269
        %4347 = vst.msk [vmem:[#allocation5 + $0xa0] sm:$0xff] %vm4326, %v4271
        %4348 = vst.msk [vmem:[#allocation5 + $0xa8] sm:$0xff] %vm4326, %v4273
        %4349 = vst.msk [vmem:[#allocation5 + $0xb0] sm:$0xff] %vm4326, %v4275
        %4350 = vst.msk [vmem:[#allocation5 + $0xb8] sm:$0xff] %vm4326, %v4277
        %4351 = vst.msk [vmem:[#allocation5 + $0xc0] sm:$0xff] %vm4326, %v4279
        %4352 = vst.msk [vmem:[#allocation5 + $0xc8] sm:$0xff] %vm4326, %v4281
        %4353 = vst.msk [vmem:[#allocation5 + $0xd0] sm:$0xff] %vm4326, %v4283
        %4354 = vst.msk [vmem:[#allocation5 + $0xd8] sm:$0xff] %vm4326, %v4285
        %4355 = vst.msk [vmem:[#allocation5 + $0xe0] sm:$0xff] %vm4326, %v4287
        %4356 = vst.msk [vmem:[#allocation5 + $0xe8] sm:$0xff] %vm4326, %v4289
        %4357 = vst.msk [vmem:[#allocation5 + $0xf0] sm:$0xff] %vm4326, %v4291
        %4358 = vst.msk [vmem:[#allocation5 + $0xf8] sm:$0xff] %vm4326, %v4293
        %v4359 = vld [vmem:[#allocation5] sm:$0xff]
        %v4360 = vld [vmem:[#allocation5 + $0x8] sm:$0xff]
        %v4361 = vld [vmem:[#allocation5 + $0x10] sm:$0xff]
        %v4362 = vld [vmem:[#allocation5 + $0x18] sm:$0xff]
        %v4363 = vld [vmem:[#allocation5 + $0x20] sm:$0xff]
        %v4364 = vld [vmem:[#allocation5 + $0x28] sm:$0xff]
        %v4365 = vld [vmem:[#allocation5 + $0x30] sm:$0xff]
        %v4366 = vld [vmem:[#allocation5 + $0x38] sm:$0xff]
        %v4367 = vld [vmem:[#allocation5 + $0x40] sm:$0xff]
        %v4368 = vld [vmem:[#allocation5 + $0x48] sm:$0xff]
        %v4369 = vld [vmem:[#allocation5 + $0x50] sm:$0xff]
        %v4370 = vld [vmem:[#allocation5 + $0x58] sm:$0xff]
        %v4371 = vld [vmem:[#allocation5 + $0x60] sm:$0xff]
        %v4372 = vld [vmem:[#allocation5 + $0x68] sm:$0xff]
        %v4373 = vld [vmem:[#allocation5 + $0x70] sm:$0xff]
        %v4374 = vld [vmem:[#allocation5 + $0x78] sm:$0xff]
        %v4375 = vld [vmem:[#allocation5 + $0x80] sm:$0xff]
        %v4376 = vld [vmem:[#allocation5 + $0x88] sm:$0xff]
        %v4377 = vld [vmem:[#allocation5 + $0x90] sm:$0xff]
        %v4378 = vld [vmem:[#allocation5 + $0x98] sm:$0xff]
        %v4379 = vld [vmem:[#allocation5 + $0xa0] sm:$0xff]
        %v4380 = vld [vmem:[#allocation5 + $0xa8] sm:$0xff]
        %v4381 = vld [vmem:[#allocation5 + $0xb0] sm:$0xff]
        %v4382 = vld [vmem:[#allocation5 + $0xb8] sm:$0xff]
        %v4383 = vld [vmem:[#allocation5 + $0xc0] sm:$0xff]
        %v4384 = vld [vmem:[#allocation5 + $0xc8] sm:$0xff]
        %v4385 = vld [vmem:[#allocation5 + $0xd0] sm:$0xff]
        %v4386 = vld [vmem:[#allocation5 + $0xd8] sm:$0xff]
        %v4387 = vld [vmem:[#allocation5 + $0xe0] sm:$0xff]
        %v4388 = vld [vmem:[#allocation5 + $0xe8] sm:$0xff]
        %v4389 = vld [vmem:[#allocation5 + $0xf0] sm:$0xff]
        %v4390 = vld [vmem:[#allocation5 + $0xf8] sm:$0xff]
        %v4391 = vpack.c.bf16 %v4360, %v4359
        %v4392 = vpack.c.bf16 %v4362, %v4361
        %v4393 = vpack.c.bf16 %v4364, %v4363
        %v4394 = vpack.c.bf16 %v4366, %v4365
        %v4395 = vpack.c.bf16 %v4368, %v4367
        %v4396 = vpack.c.bf16 %v4370, %v4369
        %v4397 = vpack.c.bf16 %v4372, %v4371
        %v4398 = vpack.c.bf16 %v4374, %v4373
        %v4399 = vpack.c.bf16 %v4376, %v4375
        %v4400 = vpack.c.bf16 %v4378, %v4377
        %v4401 = vpack.c.bf16 %v4380, %v4379
        %v4402 = vpack.c.bf16 %v4382, %v4381
        %v4403 = vpack.c.bf16 %v4384, %v4383
        %v4404 = vpack.c.bf16 %v4386, %v4385
        %v4405 = vpack.c.bf16 %v4388, %v4387
        %v4406 = vpack.c.bf16 %v4390, %v4389
        %v4407 = vld [vmem:[#allocation24] sm:$0xf]
        %v4408 = vld [vmem:[#allocation24 + $0x4] sm:$0xf]
        %v4409 = vld [vmem:[#allocation24 + $0x8] sm:$0xf]
        %v4410 = vld [vmem:[#allocation24 + $0xc] sm:$0xf]
        %v4411 = vld [vmem:[#allocation24 + $0x10] sm:$0xf]
        %v4412 = vld [vmem:[#allocation24 + $0x14] sm:$0xf]
        %v4413 = vld [vmem:[#allocation24 + $0x18] sm:$0xf]
        %v4414 = vld [vmem:[#allocation24 + $0x1c] sm:$0xf]
        %v4415 = vld [vmem:[#allocation26] sm:$0x1]
        %v4417 = vlaneseq
        %v4418 = vshrl.u32 %v4417, 7
        %v4419 = vsub.s32 0, %v4418
        %v4420 = vrot.slane %v4415, %v4419
        %v4430 = vunpack.c.l.b16 %v4407
        %v4431 = vunpack.c.l.b16 %v4408
        %v4432 = vunpack.c.l.b16 %v4409
        %v4433 = vunpack.c.l.b16 %v4410
        %v4434 = vunpack.c.l.b16 %v4411
        %v4435 = vunpack.c.l.b16 %v4412
        %v4436 = vunpack.c.l.b16 %v4413
        %v4437 = vunpack.c.l.b16 %v4414
        %v4438 = vpack.c.b16 %v4431, %v4430
        %v4439 = vpack.c.b16 %v4433, %v4432
        %v4440 = vpack.c.b16 %v4435, %v4434
        %v4441 = vpack.c.b16 %v4437, %v4436
        %vm4446 = vcmask 523264
        %v4448 = vsel %vm4446, %v4391, 0
        %v4451 = vsel %vm4446, %v4392, 0
        %v4454 = vsel %vm4446, %v4393, 0
        %v4457 = vsel %vm4446, %v4394, 0
        %v4460 = vsel %vm4446, %v4395, 0
        %v4463 = vsel %vm4446, %v4396, 0
        %v4466 = vsel %vm4446, %v4397, 0
        %v4469 = vsel %vm4446, %v4398, 0
        %v4472 = vsel %vm4446, %v4399, 0
        %v4475 = vsel %vm4446, %v4400, 0
        %v4478 = vsel %vm4446, %v4401, 0
        %v4481 = vsel %vm4446, %v4402, 0
        %v4484 = vsel %vm4446, %v4403, 0
        %v4487 = vsel %vm4446, %v4404, 0
        %v4490 = vsel %vm4446, %v4405, 0
        %v4493 = vsel %vm4446, %v4406, 0
        %4495 = vmatprep.subr.bf16.mxu0 0
        %4496 = vmatpush1.bf16.msra.mxu0 %v4438
        %4497 = vmatprep.subr.bf16.mxu0 0
        %4498 = vmatpush1.bf16.msra.mxu0 %v4439
        %4499 = vmatprep.subr.bf16.mxu0 0
        %4500 = vmatpush1.bf16.msra.mxu0 %v4440
        %4501 = vmatprep.subr.bf16.mxu0 0
        %4502 = vmatpush1.bf16.msra.mxu0 %v4441
        %4503 = vmatprep.subr.bf16.mxu0 0
        %4504 = vmatpush1.bf16.msra.mxu0 0
        %4505 = vmatprep.subr.bf16.mxu0 0
        %4506 = vmatpush1.bf16.msra.mxu0 0
        %4507 = vmatprep.subr.bf16.mxu0 0
        %4508 = vmatpush1.bf16.msra.mxu0 0
        %4509 = vmatprep.subr.bf16.mxu0 0
        %4510 = vmatpush1.bf16.msra.mxu0 0
        %4511 = vmatprep.subr.bf16.mxu0 0
        %4512 = vmatpush1.bf16.msra.mxu0 0
        %4513 = vmatprep.subr.bf16.mxu0 0
        %4514 = vmatpush1.bf16.msra.mxu0 0
        %4515 = vmatprep.subr.bf16.mxu0 0
        %4516 = vmatpush1.bf16.msra.mxu0 0
        %4517 = vmatprep.subr.bf16.mxu0 0
        %4518 = vmatpush1.bf16.msra.mxu0 0
        %4519 = vmatprep.subr.bf16.mxu0 0
        %4520 = vmatpush1.bf16.msra.mxu0 0
        %4521 = vmatprep.subr.bf16.mxu0 0
        %4522 = vmatpush1.bf16.msra.mxu0 0
        %4523 = vmatprep.subr.bf16.mxu0 0
        %4524 = vmatpush1.bf16.msra.mxu0 0
        %4525 = vmatprep.subr.bf16.mxu0 0
        %4526 = vmatpush1.bf16.msra.mxu0 0
        %4527 = vmatprep.mubr.bf16.mxu0 0
        %4528 = vmatmul.mubr.bf16.gmra.mrb[0].mxu0 %v4448
        %v4529 = vpop.f32.mrb[0].mxu0
        %v4530 = vadd.f32 %v4420, %v4529
        %v4531 = vpop.f32.mrb[0].mxu0
        %v4532 = vpop.f32.mrb[0].mxu0
        %v4533 = vadd.f32 %v4420, %v4532
        %v4534 = vpop.f32.mrb[0].mxu0
        %4535 = vmatprep.mubr.bf16.mxu0 0
        %4536 = vmatmul.mubr.bf16.gmra.mrb[0].mxu0 %v4451
        %v4537 = vpop.f32.mrb[0].mxu0
        %v4538 = vadd.f32 %v4420, %v4537
        %v4539 = vpop.f32.mrb[0].mxu0
        %v4540 = vpop.f32.mrb[0].mxu0
        %v4541 = vadd.f32 %v4420, %v4540
        %v4542 = vpop.f32.mrb[0].mxu0
        %4543 = vmatprep.mubr.bf16.mxu0 0
        %4544 = vmatmul.mubr.bf16.gmra.mrb[0].mxu0 %v4454
        %v4545 = vpop.f32.mrb[0].mxu0
        %v4546 = vadd.f32 %v4420, %v4545
        %v4547 = vpop.f32.mrb[0].mxu0
        %v4548 = vpop.f32.mrb[0].mxu0
        %v4549 = vadd.f32 %v4420, %v4548
        %v4550 = vpop.f32.mrb[0].mxu0
        %4551 = vmatprep.mubr.bf16.mxu0 0
        %4552 = vmatmul.mubr.bf16.gmra.mrb[0].mxu0 %v4457
        %v4553 = vpop.f32.mrb[0].mxu0
        %v4554 = vadd.f32 %v4420, %v4553
        %v4555 = vpop.f32.mrb[0].mxu0
        %v4556 = vpop.f32.mrb[0].mxu0
        %v4557 = vadd.f32 %v4420, %v4556
        %v4558 = vpop.f32.mrb[0].mxu0
        %4559 = vmatprep.mubr.bf16.mxu0 0
        %4560 = vmatmul.mubr.bf16.gmra.mrb[0].mxu0 %v4460
        %v4561 = vpop.f32.mrb[0].mxu0
        %v4562 = vadd.f32 %v4420, %v4561
        %v4563 = vpop.f32.mrb[0].mxu0
        %v4564 = vpop.f32.mrb[0].mxu0
        %v4565 = vadd.f32 %v4420, %v4564
        %v4566 = vpop.f32.mrb[0].mxu0
        %4567 = vmatprep.mubr.bf16.mxu0 0
        %4568 = vmatmul.mubr.bf16.gmra.mrb[0].mxu0 %v4463
        %v4569 = vpop.f32.mrb[0].mxu0
        %v4570 = vadd.f32 %v4420, %v4569
        %v4571 = vpop.f32.mrb[0].mxu0
        %v4572 = vpop.f32.mrb[0].mxu0
        %v4573 = vadd.f32 %v4420, %v4572
        %v4574 = vpop.f32.mrb[0].mxu0
        %4575 = vmatprep.mubr.bf16.mxu0 0
        %4576 = vmatmul.mubr.bf16.gmra.mrb[0].mxu0 %v4466
        %v4577 = vpop.f32.mrb[0].mxu0
        %v4578 = vadd.f32 %v4420, %v4577
        %v4579 = vpop.f32.mrb[0].mxu0
        %v4580 = vpop.f32.mrb[0].mxu0
        %v4581 = vadd.f32 %v4420, %v4580
        %v4582 = vpop.f32.mrb[0].mxu0
        %4583 = vmatprep.mubr.bf16.mxu0 0
        %4584 = vmatmul.mubr.bf16.gmra.mrb[0].mxu0 %v4469
        %v4585 = vpop.f32.mrb[0].mxu0
        %v4586 = vadd.f32 %v4420, %v4585
        %v4587 = vpop.f32.mrb[0].mxu0
        %v4588 = vpop.f32.mrb[0].mxu0
        %v4589 = vadd.f32 %v4420, %v4588
        %v4590 = vpop.f32.mrb[0].mxu0
        %4591 = vmatprep.mubr.bf16.mxu0 0
        %4592 = vmatmul.mubr.bf16.gmra.mrb[0].mxu0 %v4472
        %v4593 = vpop.f32.mrb[0].mxu0
        %v4594 = vadd.f32 %v4420, %v4593
        %v4595 = vpop.f32.mrb[0].mxu0
        %v4596 = vpop.f32.mrb[0].mxu0
        %v4597 = vadd.f32 %v4420, %v4596
        %v4598 = vpop.f32.mrb[0].mxu0
        %4599 = vmatprep.mubr.bf16.mxu0 0
        %4600 = vmatmul.mubr.bf16.gmra.mrb[0].mxu0 %v4475
        %v4601 = vpop.f32.mrb[0].mxu0
        %v4602 = vadd.f32 %v4420, %v4601
        %v4603 = vpop.f32.mrb[0].mxu0
        %v4604 = vpop.f32.mrb[0].mxu0
        %v4605 = vadd.f32 %v4420, %v4604
        %v4606 = vpop.f32.mrb[0].mxu0
        %4607 = vmatprep.mubr.bf16.mxu0 0
        %4608 = vmatmul.mubr.bf16.gmra.mrb[0].mxu0 %v4478
        %v4609 = vpop.f32.mrb[0].mxu0
        %v4610 = vadd.f32 %v4420, %v4609
        %v4611 = vpop.f32.mrb[0].mxu0
        %v4612 = vpop.f32.mrb[0].mxu0
        %v4613 = vadd.f32 %v4420, %v4612
        %v4614 = vpop.f32.mrb[0].mxu0
        %4615 = vmatprep.mubr.bf16.mxu0 0
        %4616 = vmatmul.mubr.bf16.gmra.mrb[0].mxu0 %v4481
        %v4617 = vpop.f32.mrb[0].mxu0
        %v4618 = vadd.f32 %v4420, %v4617
        %v4619 = vpop.f32.mrb[0].mxu0
        %v4620 = vpop.f32.mrb[0].mxu0
        %v4621 = vadd.f32 %v4420, %v4620
        %v4622 = vpop.f32.mrb[0].mxu0
        %4623 = vmatprep.mubr.bf16.mxu0 0
        %4624 = vmatmul.mubr.bf16.gmra.mrb[0].mxu0 %v4484
        %v4625 = vpop.f32.mrb[0].mxu0
        %v4626 = vadd.f32 %v4420, %v4625
        %v4627 = vpop.f32.mrb[0].mxu0
        %v4628 = vpop.f32.mrb[0].mxu0
        %v4629 = vadd.f32 %v4420, %v4628
        %v4630 = vpop.f32.mrb[0].mxu0
        %4631 = vmatprep.mubr.bf16.mxu0 0
        %4632 = vmatmul.mubr.bf16.gmra.mrb[0].mxu0 %v4487
        %v4633 = vpop.f32.mrb[0].mxu0
        %v4634 = vadd.f32 %v4420, %v4633
        %v4635 = vpop.f32.mrb[0].mxu0
        %v4636 = vpop.f32.mrb[0].mxu0
        %v4637 = vadd.f32 %v4420, %v4636
        %v4638 = vpop.f32.mrb[0].mxu0
        %4639 = vmatprep.mubr.bf16.mxu0 0
        %4640 = vmatmul.mubr.bf16.gmra.mrb[0].mxu0 %v4490
        %v4641 = vpop.f32.mrb[0].mxu0
        %v4642 = vadd.f32 %v4420, %v4641
        %v4643 = vpop.f32.mrb[0].mxu0
        %v4644 = vpop.f32.mrb[0].mxu0
        %v4645 = vadd.f32 %v4420, %v4644
        %v4646 = vpop.f32.mrb[0].mxu0
        %4647 = vmatprep.mubr.bf16.mxu0 0
        %4648 = vmatmul.mubr.bf16.gmra.mrb[0].mxu0 %v4493
        %v4649 = vpop.f32.mrb[0].mxu0
        %v4650 = vadd.f32 %v4420, %v4649
        %v4651 = vpop.f32.mrb[0].mxu0
        %v4652 = vpop.f32.mrb[0].mxu0
        %v4653 = vadd.f32 %v4420, %v4652
        %v4654 = vpop.f32.mrb[0].mxu0
        %4655 = vdwg.mxu0
        %v4656 = vadd.f32 %v4530, %v2181
        %v4657 = vadd.f32 %v4533, %v2182
        %v4658 = vadd.f32 %v4538, %v2183
        %v4659 = vadd.f32 %v4541, %v2184
        %v4660 = vadd.f32 %v4546, %v2185
        %v4661 = vadd.f32 %v4549, %v2186
        %v4662 = vadd.f32 %v4554, %v2187
        %v4663 = vadd.f32 %v4557, %v2188
        %v4664 = vadd.f32 %v4562, %v2189
        %v4665 = vadd.f32 %v4565, %v2190
        %v4666 = vadd.f32 %v4570, %v2191
        %v4667 = vadd.f32 %v4573, %v2192
        %v4668 = vadd.f32 %v4578, %v2193
        %v4669 = vadd.f32 %v4581, %v2194
        %v4670 = vadd.f32 %v4586, %v2195
        %v4671 = vadd.f32 %v4589, %v2196
        %v4672 = vadd.f32 %v4594, %v2197
        %v4673 = vadd.f32 %v4597, %v2198
        %v4674 = vadd.f32 %v4602, %v2199
        %v4675 = vadd.f32 %v4605, %v2200
        %v4676 = vadd.f32 %v4610, %v2201
        %v4677 = vadd.f32 %v4613, %v2202
        %v4678 = vadd.f32 %v4618, %v2203
        %v4679 = vadd.f32 %v4621, %v2204
        %v4680 = vadd.f32 %v4626, %v2205
        %v4681 = vadd.f32 %v4629, %v2206
        %v4682 = vadd.f32 %v4634, %v2207
        %v4683 = vadd.f32 %v4637, %v2208
        %v4684 = vadd.f32 %v4642, %v2209
        %v4685 = vadd.f32 %v4645, %v2210
        %v4686 = vadd.f32 %v4650, %v2211
        %v4687 = vadd.f32 %v4653, %v2212
        %4688 = vst.msk [vmem:[%s634] sm:$0xff] %vm4446, %v4656
        %4689 = vst.msk [vmem:[%s634 + $0x8] sm:$0xff] %vm4446, %v4657
        %4690 = vst.msk [vmem:[%s634 + $0x10] sm:$0xff] %vm4446, %v4658
        %4691 = vst.msk [vmem:[%s634 + $0x18] sm:$0xff] %vm4446, %v4659
        %4692 = vst.msk [vmem:[%s634 + $0x20] sm:$0xff] %vm4446, %v4660
        %4693 = vst.msk [vmem:[%s634 + $0x28] sm:$0xff] %vm4446, %v4661
        %4694 = vst.msk [vmem:[%s634 + $0x30] sm:$0xff] %vm4446, %v4662
        %4695 = vst.msk [vmem:[%s634 + $0x38] sm:$0xff] %vm4446, %v4663
        %4696 = vst.msk [vmem:[%s634 + $0x40] sm:$0xff] %vm4446, %v4664
        %4697 = vst.msk [vmem:[%s634 + $0x48] sm:$0xff] %vm4446, %v4665
        %4698 = vst.msk [vmem:[%s634 + $0x50] sm:$0xff] %vm4446, %v4666
        %4699 = vst.msk [vmem:[%s634 + $0x58] sm:$0xff] %vm4446, %v4667
        %4700 = vst.msk [vmem:[%s634 + $0x60] sm:$0xff] %vm4446, %v4668
        %4701 = vst.msk [vmem:[%s634 + $0x68] sm:$0xff] %vm4446, %v4669
        %4702 = vst.msk [vmem:[%s634 + $0x70] sm:$0xff] %vm4446, %v4670
        %4703 = vst.msk [vmem:[%s634 + $0x78] sm:$0xff] %vm4446, %v4671
        %4704 = vst.msk [vmem:[%s634 + $0x80] sm:$0xff] %vm4446, %v4672
        %4705 = vst.msk [vmem:[%s634 + $0x88] sm:$0xff] %vm4446, %v4673
        %4706 = vst.msk [vmem:[%s634 + $0x90] sm:$0xff] %vm4446, %v4674
        %4707 = vst.msk [vmem:[%s634 + $0x98] sm:$0xff] %vm4446, %v4675
        %4708 = vst.msk [vmem:[%s634 + $0xa0] sm:$0xff] %vm4446, %v4676
        %4709 = vst.msk [vmem:[%s634 + $0xa8] sm:$0xff] %vm4446, %v4677
        %4710 = vst.msk [vmem:[%s634 + $0xb0] sm:$0xff] %vm4446, %v4678
        %4711 = vst.msk [vmem:[%s634 + $0xb8] sm:$0xff] %vm4446, %v4679
        %4712 = vst.msk [vmem:[%s634 + $0xc0] sm:$0xff] %vm4446, %v4680
        %4713 = vst.msk [vmem:[%s634 + $0xc8] sm:$0xff] %vm4446, %v4681
        %4714 = vst.msk [vmem:[%s634 + $0xd0] sm:$0xff] %vm4446, %v4682
        %4715 = vst.msk [vmem:[%s634 + $0xd8] sm:$0xff] %vm4446, %v4683
        %4716 = vst.msk [vmem:[%s634 + $0xe0] sm:$0xff] %vm4446, %v4684
        %4717 = vst.msk [vmem:[%s634 + $0xe8] sm:$0xff] %vm4446, %v4685
        %4718 = vst.msk [vmem:[%s634 + $0xf0] sm:$0xff] %vm4446, %v4686
        %4719 = vst.msk [vmem:[%s634 + $0xf8] sm:$0xff] %vm4446, %v4687
        %s4720 = sand.u32 %s336, 1
        %s4721 = scalar_lea.sflag [#allocation8], %s4720
        %s4722 = sand.u32 %s336, 1
        %s4723 = smul.addr %s4722, 256
        %s4724 = scalar_lea.vmem [#allocation27], %s4723
        // Predicated region
        $region129: #{tpu_custom_call.1} parent=71 // pred_check
          %p4725 = pneg %p346
        $region130: #{tpu_custom_call.1} parent=71 // pred_check_branch
          %4727 = sbr.rel (%p4725) target = $region132
        $region131: #{tpu_custom_call.1} parent=71 // pred_region
          %s4728 = smul.u32 32, %s41
          %s4730 = ssub.s32 4096, 4096
          %4731 = vsyncadd %s4721, %s4730
          %s4732 = smul.addr %s40, 32
          %s4733 = sadd.s32 %s4728, %s4732
          %s4734 = smul.addr %s4733, 128
          %s4735 = scalar_lea.hbm %s13, %s4734
          %s4736 = sshll.u32 %s4724, 4
          %s4737 = int_to_ptr.vmem [resolvable:$true] %s4736
          %4742 = dma.vmem_to_hbm [thread:$0]  %s4737, 4096, %s4735, %s4721, 128, 128, 8
        $region132: #{tpu_custom_call.1} parent=71 // pred_fallthru
          _
      $region72: #{tpu_custom_call.1} parent=5 // pred_fallthru
        _
      %p4743 = scmp.le.s32.totalorder 2, %s31
      // Predicated region
      $region133: #{tpu_custom_call.1} parent=5 // pred_check
        %p4744 = pneg %p4743
      $region134: #{tpu_custom_call.1} parent=5 // pred_check_branch
        %4746 = sbr.rel (%p4744) target = $region136
      $region135: #{tpu_custom_call.1} parent=5 // pred_region
        %s4747 = ssub.s32 %s31, 2
        // Predicated region
        $region137: #{tpu_custom_call.1} parent=135 // pred_check
          %p4748 = pneg %p352
        $region138: #{tpu_custom_call.1} parent=135 // pred_check_branch
          %4750 = sbr.rel (%p4748) target = $region140
        $region139: #{tpu_custom_call.1} parent=135 // pred_region
          %s4751 = sand.u32 %s337, 1
          %s4752 = scalar_lea.sflag [#allocation8], %s4751
          %s4753 = sand.u32 %s337, 1
          %s4754 = smul.addr %s4753, 256
          %s4755 = scalar_lea.vmem [#allocation27], %s4754
          %4756 = dma.done %s4752, 4096
        $region140: #{tpu_custom_call.1} parent=135 // pred_fallthru
          _
      $region136: #{tpu_custom_call.1} parent=5 // pred_fallthru
        _
    $region6: #{tpu_custom_call.1} parent=1 // loop_footer
      %s35 = sadd.s32 1, %s31
    $region7: #{tpu_custom_call.1} parent=1 // loop_footer_branch
      %30 = sbr.rel target = $region3
    $region8: #{tpu_custom_call.1} parent=1 // loop_exit
      _
    %4757 = vsyncpa [#allocation7], 1
    %s4758 = scalar_lea.sflag [#allocation7], 1
    %4759 = vsyncpa %s4758, 1
    %4760 = vsyncpa [#allocation10], 1
    %4761 = vsyncpa [#allocation13], 1
    %4762 = vsyncpa [#allocation16], 1
    %4763 = vsyncpa [#allocation19], 1
    %4764 = vsyncpa [#allocation22], 1
    %4765 = vsyncpa [#allocation25], 1
    %4766 = vsyncpa [#allocation8], 1
    %s4767 = scalar_lea.sflag [#allocation8], 1
    %4768 = vsyncpa %s4767, 1

</llo_original>
